<compile_context>
chip_gen: v6e
topology: v6e:2x2x1
jax: 0.10.0
libtpu: 0.0.40
codegen_flags: <defaults>
</compile_context>

<pallas_src>
import numpy as np

import jax
import jax.numpy as jnp
from jax import lax
from jax.experimental import pallas as pl
from jax.experimental.pallas import tpu as pltpu


# ---------------------------------------------------------------------------
# Static network dimensions (from the PyTorch module)
# ---------------------------------------------------------------------------
C1_OC, C2_OC = 16, 32
KH = KW = 5
H0 = W0 = 28
H1 = W1 = H0 - KH + 1          # 24  (conv1 output)
H1P = W1P = H1 // 2            # 12  (pool1 output)
H2 = W2 = H1P - KH + 1         # 8   (conv2 output)
H2P = W2P = H2 // 2            # 4   (pool2 output)
FC1, FC2, NCLS = 128, 64, 10
OUT_PAD = 128                  # lane-dense logits slab

CW1 = (W1 - 1) * C1_OC         # 368: conv1 cols after in-place column pooling
CW2 = (W2 - 1) * C2_OC         # 224: conv2 cols after in-place column pooling
ROWS2 = 2 * H2                 # 16:  conv2/pool2 slab rows per sample


# ---------------------------------------------------------------------------
# The fused kernel: `blk` batch samples per grid step
# ---------------------------------------------------------------------------
def _net_kernel(x_ref, w1_ref, b1_ref, w2_ref, b2_ref,
                wf1_ref, bf1_ref, wf2_ref, bf2_ref, wo_ref, bo_ref, o_ref):
    f32, bf16 = jnp.float32, jnp.bfloat16
    B = x_ref.shape[0]

    # ---- conv1 (5x5, 1->16): 5 banded MXU matmuls, batch folded into M -----
    xw = x_ref[...].astype(f32)                                        # (B,28,28)
    acc = None
    for dy in range(KH):
        lhs = xw[:, dy:dy + H1, :].reshape(B * H1, W0).astype(bf16)    # (B*24,28)
        t = jnp.dot(lhs, w1_ref[dy], preferred_element_type=f32)       # (B*24,384)
        acc = t if acc is None else acc + t
    z = jnp.maximum(acc + b1_ref[...], 0.0)                            # (B*24,384)

    # ---- maxpool1 2x2: shifted maxes, no lane/sublane compaction ------------
    # columns: pooled value stays at even lane groups (w2b has zero rows at odd)
    zc = jnp.maximum(z[:, :CW1], z[:, C1_OC:])                         # (B*24,368)
    # rows: pooled value stays at even rows (odd rows become don't-care)
    zc3 = zc.reshape(B, H1, CW1)
    zc3_dn = jnp.concatenate([zc3[:, 1:, :], zc3[:, H1 - 1:, :]], axis=1)
    p1 = jnp.maximum(zc3, zc3_dn).astype(bf16)                         # (B,24,368)

    # ---- conv2 (5x5, 16->32): 5 banded matmuls on 16-row windows ------------
    # valid output rows land at even j of each sample's 16-row slab.
    acc2 = None
    for dy in range(KH):
        lhs = p1[:, 2 * dy:2 * dy + ROWS2, :].reshape(B * ROWS2, CW1)  # (B*16,368)
        t = jnp.dot(lhs, w2_ref[dy], preferred_element_type=f32)       # (B*16,256)
        acc2 = t if acc2 is None else acc2 + t
    z2 = jnp.maximum(acc2 + b2_ref[...], 0.0)                          # (B*16,256)

    # ---- maxpool2 2x2: shifted maxes ----------------------------------------
    z2c = jnp.maximum(z2[:, :CW2], z2[:, C2_OC:])                      # (B*16,224)
    p2 = jnp.maximum(z2c[:-2, :], z2c[2:, :]).astype(bf16)             # (B*16-2,224)
    # valid pooled row (b, qy) lives at slab row b*16 + 4*qy.

    # ---- fc1: 4 accumulated matmuls (one per pooled row qy), realigned with
    # static sublane shifts so each sample's result lands at slab row b*16.
    # (No flatten / no sublane gather; garbage rows are carried and discarded.)
    L = B * ROWS2 - 14
    h1 = None
    for qy in range(H2P):
        t = jnp.dot(p2[4 * qy:4 * qy + L, :], wf1_ref[qy],
                    preferred_element_type=f32)                        # (L,128)
        h1 = t if h1 is None else h1 + t
    h1 = h1 + bf1_ref[...]                                             # (L,128)

    # ---- fc2 -> out ----------------------------------------------------------
    # TODO(synk): Dropout / Dropout2d are identity at inference; training-mode
    # RNG masking is not implemented.
    h2 = jnp.dot(h1.astype(bf16), wf2_ref[...],
                 preferred_element_type=f32) + bf2_ref[...]            # (L,64)
    lg = jnp.dot(h2.astype(bf16), wo_ref[...],
                 preferred_element_type=f32) + bo_ref[...]             # (L,128)

    # Dense (B*16, 128) output slab; valid logits of sample b sit at row b*16.
    o_ref[...] = jnp.concatenate(
        [lg, jnp.zeros((B * ROWS2 - L, OUT_PAD), f32)], axis=0)


# ---------------------------------------------------------------------------
# Host side: parameter init (PyTorch layout) + one-time layout prep
# ---------------------------------------------------------------------------
def init_params(key):
    ks = jax.random.split(key, 10)

    def nrm(k, shape, scale):
        return (scale * jax.random.normal(k, shape)).astype(jnp.float32)

    return {
        "w1": nrm(ks[0], (16, 1, 5, 5), 0.10), "b1": nrm(ks[1], (16,), 0.10),
        "w2": nrm(ks[2], (32, 16, 5, 5), 0.05), "b2": nrm(ks[3], (32,), 0.05),
        "wf1": nrm(ks[4], (128, 512), 0.03), "bf1": nrm(ks[5], (128,), 0.03),
        "wf2": nrm(ks[6], (64, 128), 0.05), "bf2": nrm(ks[7], (64,), 0.05),
        "wo": nrm(ks[8], (10, 64), 0.10), "bo": nrm(ks[9], (10,), 0.10),
    }


def prepare_params(params):
    """One-time weight layout prep (hoisted out of the per-call forward)."""
    w1 = np.asarray(params["w1"], np.float32)    # (16, 1, 5, 5)
    b1 = np.asarray(params["b1"], np.float32)
    w2 = np.asarray(params["w2"], np.float32)    # (32, 16, 5, 5)
    b2 = np.asarray(params["b2"], np.float32)
    wf1 = np.asarray(params["wf1"], np.float32)  # (128, 512)
    bf1 = np.asarray(params["bf1"], np.float32)
    wf2 = np.asarray(params["wf2"], np.float32)  # (64, 128)
    bf2 = np.asarray(params["bf2"], np.float32)
    wo = np.asarray(params["wo"], np.float32)    # (10, 64)
    bo = np.asarray(params["bo"], np.float32)

    # conv1 banded weights: w1b[dy, ox+dx, ox*16+oc] = w1[oc, 0, dy, dx]
    w1b = np.zeros((KH, W0, W1 * C1_OC), np.float32)
    for dy in range(KH):
        for ox in range(W1):
            for dx in range(KW):
                w1b[dy, ox + dx, ox * C1_OC:(ox + 1) * C1_OC] = w1[:, 0, dy, dx]
    b1t = np.tile(b1, W1).reshape(1, W1 * C1_OC)

    # conv2 banded weights over the column-pooled (uncompacted) conv1 layout:
    # pool1 column px lives at lane group 2*px; odd groups get zero rows.
    w2b = np.zeros((KH, CW1, W2 * C2_OC), np.float32)
    for dy in range(KH):
        for ox in range(W2):
            for dx in range(KW):
                c0 = 2 * (ox + dx) * C1_OC
                w2b[dy, c0:c0 + C1_OC, ox * C2_OC:(ox + 1) * C2_OC] = \
                    w2[:, :, dy, dx].T                         # (ic, oc)
    b2t = np.tile(b2, W2).reshape(1, W2 * C2_OC)

    # fc1 split per pooled row qy over the uncompacted pool2 column layout,
    # matching PyTorch's (oc, qy, qx) flatten order.
    wf1r = wf1.reshape(FC1, C2_OC, H2P, W2P)                   # (u, oc, qy, qx)
    wf1b = np.zeros((H2P, CW2, FC1), np.float32)
    for qy in range(H2P):
        for qx in range(W2P):
            c0 = 2 * qx * C2_OC
            wf1b[qy, c0:c0 + C2_OC, :] = wf1r[:, :, qy, qx].T  # (oc, u)

    # Output layer padded to a dense 128-lane slab (zeros beyond class 10).
    wop = np.zeros((FC2, OUT_PAD), np.float32)
    wop[:, :NCLS] = wo.T
    bop = np.zeros((1, OUT_PAD), np.float32)
    bop[0, :NCLS] = bo

    bf16 = jnp.bfloat16
    return {
        "w1b": jnp.asarray(w1b, bf16), "b1t": jnp.asarray(b1t, jnp.float32),
        "w2b": jnp.asarray(w2b, bf16), "b2t": jnp.asarray(b2t, jnp.float32),
        "wf1b": jnp.asarray(wf1b, bf16),
        "bf1": jnp.asarray(bf1.reshape(1, FC1), jnp.float32),
        "wf2t": jnp.asarray(wf2.T, bf16),
        "bf2": jnp.asarray(bf2.reshape(1, FC2), jnp.float32),
        "wop": jnp.asarray(wop, bf16), "bop": jnp.asarray(bop, jnp.float32),
    }


_PREP_ORDER = ("w1b", "b1t", "w2b", "b2t", "wf1b", "bf1", "wf2t", "bf2",
               "wop", "bop")


# ---------------------------------------------------------------------------
# Forward pass: one fused pallas_call, grid over batch blocks
# ---------------------------------------------------------------------------
def net_forward(x, prep, block=64):
    n = x.shape[0]
    x2 = x.reshape(n, H0, W0).astype(jnp.bfloat16)   # half the input DMA bytes

    # Block size: 64 is safe on v5e/v6e/v7x VMEM; raise `block` on v6e.
    blk = int(max(8, min(int(block), pl.cdiv(n, 8) * 8)))
    npad = pl.cdiv(n, blk) * blk
    if npad != n:
        x2 = jnp.pad(x2, ((0, npad - n), (0, 0), (0, 0)))

    def _const_spec(arr):
        nd = arr.ndim
        return pl.BlockSpec(arr.shape, lambda i, _nd=nd: (0,) * _nd)

    in_specs = [pl.BlockSpec((blk, H0, W0), lambda i: (i, 0, 0))]
    in_specs += [_const_spec(prep[k]) for k in _PREP_ORDER]

    weight_bytes = sum(int(prep[k].size) * prep[k].dtype.itemsize
                       for k in _PREP_ORDER)
    macs_per_sample = (KH * H1 * W0 * W1 * C1_OC            # conv1 bands
                       + KH * ROWS2 * CW1 * W2 * C2_OC      # conv2 bands
                       + H2P * ROWS2 * CW2 * FC1            # fc1 (slab-resident)
                       + ROWS2 * FC1 * FC2 + ROWS2 * FC2 * OUT_PAD)
    cost = pl.CostEstimate(
        flops=2 * macs_per_sample * npad,
        transcendentals=0,
        bytes_accessed=int(npad * H0 * W0 * 2 + weight_bytes
                           + npad * ROWS2 * OUT_PAD * 4))

    out = pl.pallas_call(
        _net_kernel,
        out_shape=jax.ShapeDtypeStruct((npad * ROWS2, OUT_PAD), jnp.float32),
        grid=(npad // blk,),
        in_specs=in_specs,
        out_specs=pl.BlockSpec((blk * ROWS2, OUT_PAD), lambda i: (i, 0)),
        compiler_params=pltpu.CompilerParams(
            dimension_semantics=("parallel",),
            vmem_limit_bytes=48 * 1024 * 1024),
        cost_estimate=cost,
    )(x2, *[prep[k] for k in _PREP_ORDER])

    # Valid logits of sample s live at slab row 16*s, first NCLS lanes.
    return out[::ROWS2][:n, :NCLS]


# ---------------------------------------------------------------------------
# Pure-JAX reference (operands quantized to bf16 exactly like the kernel)
# ---------------------------------------------------------------------------
def reference_forward(x, params):
    f32, bf16 = jnp.float32, jnp.bfloat16
    q = lambda a: a.astype(bf16).astype(f32)
    n = x.shape[0]
    dn = ("NCHW", "OIHW", "NCHW")

    y = lax.conv_general_dilated(q(x.astype(f32)), q(params["w1"]), (1, 1),
                                 "VALID", dimension_numbers=dn)
    y = jnp.maximum(y + params["b1"][None, :, None, None], 0.0)
    y = y.reshape(n, C1_OC, H1P, 2, W1P, 2).max(axis=(3, 5))
    y = lax.conv_general_dilated(q(y), q(params["w2"]), (1, 1),
                                 "VALID", dimension_numbers=dn)
    y = jnp.maximum(y + params["b2"][None, :, None, None], 0.0)
    y = y.reshape(n, C2_OC, H2P, 2, W2P, 2).max(axis=(3, 5))
    feat = y.reshape(n, C2_OC * H2P * W2P)
    h1 = q(feat) @ q(params["wf1"]).T + params["bf1"]
    h2 = q(h1) @ q(params["wf2"]).T + params["bf2"]
    return q(h2) @ q(params["wo"]).T + params["bo"]


# ---------------------------------------------------------------------------
# Smoke test
# ---------------------------------------------------------------------------
if __name__ == "__main__":
    key = jax.random.PRNGKey(0)
    kx, kp = jax.random.split(key)
    # Kannada-MNIST images: 1x28x28, values in [0, 1]; batch=2.
    x = jax.random.uniform(kx, (2, 1, 28, 28), dtype=jnp.float32)
    params = init_params(kp)
    prep = prepare_params(params)     # one-time layout/banding/bf16 prep

    fwd = jax.jit(net_forward)
    logits = fwd(x, prep)
    jax.block_until_ready(logits)

    assert logits.shape == (2, NCLS) and logits.dtype == jnp.float32
    assert bool(jnp.all(jnp.isfinite(logits)))

    ref = reference_forward(x, params)
    err = float(jnp.max(jnp.abs(logits - ref)))
    assert err < 1e-2, f"kernel/reference mismatch: max abs err = {err}"
    print("KERNEL_OK")
</pallas_src>

<mosaic_0001>
module attributes {stable_mosaic.version = 11 : i64} {
  func.func @_net_kernel(%arg0: i32, %arg1: memref<8x28x28xbf16, #tpu.memory_space<vmem>>, %arg2: memref<5x28x384xbf16, #tpu.memory_space<vmem>>, %arg3: memref<1x384xf32, #tpu.memory_space<vmem>>, %arg4: memref<5x368x256xbf16, #tpu.memory_space<vmem>>, %arg5: memref<1x256xf32, #tpu.memory_space<vmem>>, %arg6: memref<4x224x128xbf16, #tpu.memory_space<vmem>>, %arg7: memref<1x128xf32, #tpu.memory_space<vmem>>, %arg8: memref<128x64xbf16, #tpu.memory_space<vmem>>, %arg9: memref<1x64xf32, #tpu.memory_space<vmem>>, %arg10: memref<64x128xbf16, #tpu.memory_space<vmem>>, %arg11: memref<1x128xf32, #tpu.memory_space<vmem>>, %arg12: memref<128x128xf32, #tpu.memory_space<vmem>>) attributes {dimension_semantics = [#tpu.dimension_semantics<parallel>], iteration_bounds = array<i64: 1>, scalar_prefetch = 0 : i64, scratch_operands = 0 : i64, tpu.core_type = #tpu.core_type<tc>, window_params = [{transform_indices = @transform_0, window_bounds = array<i64: 8, 28, 28>}, {pipeline_mode = #tpu.pipeline_mode<synchronous>, transform_indices = @transform_1, window_bounds = array<i64: 5, 28, 384>}, {pipeline_mode = #tpu.pipeline_mode<synchronous>, transform_indices = @transform_2, window_bounds = array<i64: 1, 384>}, {pipeline_mode = #tpu.pipeline_mode<synchronous>, transform_indices = @transform_3, window_bounds = array<i64: 5, 368, 256>}, {pipeline_mode = #tpu.pipeline_mode<synchronous>, transform_indices = @transform_4, window_bounds = array<i64: 1, 256>}, {pipeline_mode = #tpu.pipeline_mode<synchronous>, transform_indices = @transform_5, window_bounds = array<i64: 4, 224, 128>}, {pipeline_mode = #tpu.pipeline_mode<synchronous>, transform_indices = @transform_6, window_bounds = array<i64: 1, 128>}, {pipeline_mode = #tpu.pipeline_mode<synchronous>, transform_indices = @transform_7, window_bounds = array<i64: 128, 64>}, {pipeline_mode = #tpu.pipeline_mode<synchronous>, transform_indices = @transform_8, window_bounds = array<i64: 1, 64>}, {pipeline_mode = #tpu.pipeline_mode<synchronous>, transform_indices = @transform_9, window_bounds = array<i64: 64, 128>}, {pipeline_mode = #tpu.pipeline_mode<synchronous>, transform_indices = @transform_10, window_bounds = array<i64: 1, 128>}, {transform_indices = @transform_11, window_bounds = array<i64: 128, 128>}]} {
    %c0 = arith.constant 0 : index
    %c0_0 = arith.constant 0 : index
    %c0_1 = arith.constant 0 : index
    %0 = vector.load %arg1[%c0, %c0_0, %c0_1] : memref<8x28x28xbf16, #tpu.memory_space<vmem>>, vector<8x28x28xbf16>
    %1 = arith.extf %0 : vector<8x28x28xbf16> to vector<8x28x28xf32>
    %2 = vector.extract_strided_slice %1 {offsets = [0, 0, 0], sizes = [8, 24, 28], strides = [1, 1, 1]} : vector<8x28x28xf32> to vector<8x24x28xf32>
    %3 = vector.shape_cast %2 : vector<8x24x28xf32> to vector<192x28xf32>
    %4 = arith.truncf %3 : vector<192x28xf32> to vector<192x28xbf16>
    %c0_2 = arith.constant 0 : index
    %c0_3 = arith.constant 0 : index
    %c0_4 = arith.constant 0 : index
    %5 = vector.load %arg2[%c0_2, %c0_3, %c0_4] : memref<5x28x384xbf16, #tpu.memory_space<vmem>>, vector<1x28x384xbf16>
    %6 = vector.shape_cast %5 : vector<1x28x384xbf16> to vector<28x384xbf16>
    %cst = arith.constant dense<0.000000e+00> : vector<192x384xf32>
    %7 = tpu.matmul %4, %6, %cst {dimension_numbers = #tpu.dot_dimension_numbers<[1], [0], [0], [1], [0, 0, 1, 1], [], []>} : vector<192x28xbf16>, vector<28x384xbf16>, vector<192x384xf32> -> vector<192x384xf32>
    %8 = vector.extract_strided_slice %1 {offsets = [0, 1, 0], sizes = [8, 24, 28], strides = [1, 1, 1]} : vector<8x28x28xf32> to vector<8x24x28xf32>
    %9 = vector.shape_cast %8 : vector<8x24x28xf32> to vector<192x28xf32>
    %10 = arith.truncf %9 : vector<192x28xf32> to vector<192x28xbf16>
    %c1 = arith.constant 1 : index
    %c0_5 = arith.constant 0 : index
    %c0_6 = arith.constant 0 : index
    %11 = vector.load %arg2[%c1, %c0_5, %c0_6] : memref<5x28x384xbf16, #tpu.memory_space<vmem>>, vector<1x28x384xbf16>
    %12 = vector.shape_cast %11 : vector<1x28x384xbf16> to vector<28x384xbf16>
    %cst_7 = arith.constant dense<0.000000e+00> : vector<192x384xf32>
    %13 = tpu.matmul %10, %12, %cst_7 {dimension_numbers = #tpu.dot_dimension_numbers<[1], [0], [0], [1], [0, 0, 1, 1], [], []>} : vector<192x28xbf16>, vector<28x384xbf16>, vector<192x384xf32> -> vector<192x384xf32>
    %14 = arith.addf %7, %13 : vector<192x384xf32>
    %15 = vector.extract_strided_slice %1 {offsets = [0, 2, 0], sizes = [8, 24, 28], strides = [1, 1, 1]} : vector<8x28x28xf32> to vector<8x24x28xf32>
    %16 = vector.shape_cast %15 : vector<8x24x28xf32> to vector<192x28xf32>
    %17 = arith.truncf %16 : vector<192x28xf32> to vector<192x28xbf16>
    %c2 = arith.constant 2 : index
    %c0_8 = arith.constant 0 : index
    %c0_9 = arith.constant 0 : index
    %18 = vector.load %arg2[%c2, %c0_8, %c0_9] : memref<5x28x384xbf16, #tpu.memory_space<vmem>>, vector<1x28x384xbf16>
    %19 = vector.shape_cast %18 : vector<1x28x384xbf16> to vector<28x384xbf16>
    %cst_10 = arith.constant dense<0.000000e+00> : vector<192x384xf32>
    %20 = tpu.matmul %17, %19, %cst_10 {dimension_numbers = #tpu.dot_dimension_numbers<[1], [0], [0], [1], [0, 0, 1, 1], [], []>} : vector<192x28xbf16>, vector<28x384xbf16>, vector<192x384xf32> -> vector<192x384xf32>
    %21 = arith.addf %14, %20 : vector<192x384xf32>
    %22 = vector.extract_strided_slice %1 {offsets = [0, 3, 0], sizes = [8, 24, 28], strides = [1, 1, 1]} : vector<8x28x28xf32> to vector<8x24x28xf32>
    %23 = vector.shape_cast %22 : vector<8x24x28xf32> to vector<192x28xf32>
    %24 = arith.truncf %23 : vector<192x28xf32> to vector<192x28xbf16>
    %c3 = arith.constant 3 : index
    %c0_11 = arith.constant 0 : index
    %c0_12 = arith.constant 0 : index
    %25 = vector.load %arg2[%c3, %c0_11, %c0_12] : memref<5x28x384xbf16, #tpu.memory_space<vmem>>, vector<1x28x384xbf16>
    %26 = vector.shape_cast %25 : vector<1x28x384xbf16> to vector<28x384xbf16>
    %cst_13 = arith.constant dense<0.000000e+00> : vector<192x384xf32>
    %27 = tpu.matmul %24, %26, %cst_13 {dimension_numbers = #tpu.dot_dimension_numbers<[1], [0], [0], [1], [0, 0, 1, 1], [], []>} : vector<192x28xbf16>, vector<28x384xbf16>, vector<192x384xf32> -> vector<192x384xf32>
    %28 = arith.addf %21, %27 : vector<192x384xf32>
    %29 = vector.extract_strided_slice %1 {offsets = [0, 4, 0], sizes = [8, 24, 28], strides = [1, 1, 1]} : vector<8x28x28xf32> to vector<8x24x28xf32>
    %30 = vector.shape_cast %29 : vector<8x24x28xf32> to vector<192x28xf32>
    %31 = arith.truncf %30 : vector<192x28xf32> to vector<192x28xbf16>
    %c4 = arith.constant 4 : index
    %c0_14 = arith.constant 0 : index
    %c0_15 = arith.constant 0 : index
    %32 = vector.load %arg2[%c4, %c0_14, %c0_15] : memref<5x28x384xbf16, #tpu.memory_space<vmem>>, vector<1x28x384xbf16>
    %33 = vector.shape_cast %32 : vector<1x28x384xbf16> to vector<28x384xbf16>
    %cst_16 = arith.constant dense<0.000000e+00> : vector<192x384xf32>
    %34 = tpu.matmul %31, %33, %cst_16 {dimension_numbers = #tpu.dot_dimension_numbers<[1], [0], [0], [1], [0, 0, 1, 1], [], []>} : vector<192x28xbf16>, vector<28x384xbf16>, vector<192x384xf32> -> vector<192x384xf32>
    %35 = arith.addf %28, %34 : vector<192x384xf32>
    %c0_17 = arith.constant 0 : index
    %c0_18 = arith.constant 0 : index
    %36 = vector.load %arg3[%c0_17, %c0_18] : memref<1x384xf32, #tpu.memory_space<vmem>>, vector<1x384xf32>
    %37 = vector.broadcast %36 : vector<1x384xf32> to vector<192x384xf32>
    %38 = arith.addf %35, %37 : vector<192x384xf32>
    %cst_19 = arith.constant 0.000000e+00 : f32
    %39 = vector.broadcast %cst_19 : f32 to vector<192x384xf32>
    %40 = arith.maximumf %38, %39 : vector<192x384xf32>
    %41 = vector.extract_strided_slice %40 {offsets = [0, 0], sizes = [192, 368], strides = [1, 1]} : vector<192x384xf32> to vector<192x368xf32>
    %42 = vector.extract_strided_slice %40 {offsets = [0, 16], sizes = [192, 368], strides = [1, 1]} : vector<192x384xf32> to vector<192x368xf32>
    %43 = arith.maximumf %41, %42 : vector<192x368xf32>
    %44 = vector.shape_cast %43 : vector<192x368xf32> to vector<8x24x368xf32>
    %45 = vector.extract_strided_slice %44 {offsets = [0, 1, 0], sizes = [8, 23, 368], strides = [1, 1, 1]} : vector<8x24x368xf32> to vector<8x23x368xf32>
    %46 = vector.extract_strided_slice %44 {offsets = [0, 23, 0], sizes = [8, 1, 368], strides = [1, 1, 1]} : vector<8x24x368xf32> to vector<8x1x368xf32>
    %47 = tpu.concatenate %45, %46 in 1 : vector<8x23x368xf32>, vector<8x1x368xf32> -> vector<8x24x368xf32>
    %48 = arith.maximumf %44, %47 : vector<8x24x368xf32>
    %49 = arith.truncf %48 : vector<8x24x368xf32> to vector<8x24x368xbf16>
    %50 = vector.extract_strided_slice %49 {offsets = [0, 0, 0], sizes = [8, 16, 368], strides = [1, 1, 1]} : vector<8x24x368xbf16> to vector<8x16x368xbf16>
    %51 = vector.shape_cast %50 : vector<8x16x368xbf16> to vector<128x368xbf16>
    %c0_20 = arith.constant 0 : index
    %c0_21 = arith.constant 0 : index
    %c0_22 = arith.constant 0 : index
    %52 = vector.load %arg4[%c0_20, %c0_21, %c0_22] : memref<5x368x256xbf16, #tpu.memory_space<vmem>>, vector<1x368x256xbf16>
    %53 = vector.shape_cast %52 : vector<1x368x256xbf16> to vector<368x256xbf16>
    %cst_23 = arith.constant dense<0.000000e+00> : vector<128x256xf32>
    %54 = tpu.matmul %51, %53, %cst_23 {dimension_numbers = #tpu.dot_dimension_numbers<[1], [0], [0], [1], [0, 0, 1, 1], [], []>} : vector<128x368xbf16>, vector<368x256xbf16>, vector<128x256xf32> -> vector<128x256xf32>
    %55 = vector.extract_strided_slice %49 {offsets = [0, 2, 0], sizes = [8, 16, 368], strides = [1, 1, 1]} : vector<8x24x368xbf16> to vector<8x16x368xbf16>
    %56 = vector.shape_cast %55 : vector<8x16x368xbf16> to vector<128x368xbf16>
    %c1_24 = arith.constant 1 : index
    %c0_25 = arith.constant 0 : index
    %c0_26 = arith.constant 0 : index
    %57 = vector.load %arg4[%c1_24, %c0_25, %c0_26] : memref<5x368x256xbf16, #tpu.memory_space<vmem>>, vector<1x368x256xbf16>
    %58 = vector.shape_cast %57 : vector<1x368x256xbf16> to vector<368x256xbf16>
    %cst_27 = arith.constant dense<0.000000e+00> : vector<128x256xf32>
    %59 = tpu.matmul %56, %58, %cst_27 {dimension_numbers = #tpu.dot_dimension_numbers<[1], [0], [0], [1], [0, 0, 1, 1], [], []>} : vector<128x368xbf16>, vector<368x256xbf16>, vector<128x256xf32> -> vector<128x256xf32>
    %60 = arith.addf %54, %59 : vector<128x256xf32>
    %61 = vector.extract_strided_slice %49 {offsets = [0, 4, 0], sizes = [8, 16, 368], strides = [1, 1, 1]} : vector<8x24x368xbf16> to vector<8x16x368xbf16>
    %62 = vector.shape_cast %61 : vector<8x16x368xbf16> to vector<128x368xbf16>
    %c2_28 = arith.constant 2 : index
    %c0_29 = arith.constant 0 : index
    %c0_30 = arith.constant 0 : index
    %63 = vector.load %arg4[%c2_28, %c0_29, %c0_30] : memref<5x368x256xbf16, #tpu.memory_space<vmem>>, vector<1x368x256xbf16>
    %64 = vector.shape_cast %63 : vector<1x368x256xbf16> to vector<368x256xbf16>
    %cst_31 = arith.constant dense<0.000000e+00> : vector<128x256xf32>
    %65 = tpu.matmul %62, %64, %cst_31 {dimension_numbers = #tpu.dot_dimension_numbers<[1], [0], [0], [1], [0, 0, 1, 1], [], []>} : vector<128x368xbf16>, vector<368x256xbf16>, vector<128x256xf32> -> vector<128x256xf32>
    %66 = arith.addf %60, %65 : vector<128x256xf32>
    %67 = vector.extract_strided_slice %49 {offsets = [0, 6, 0], sizes = [8, 16, 368], strides = [1, 1, 1]} : vector<8x24x368xbf16> to vector<8x16x368xbf16>
    %68 = vector.shape_cast %67 : vector<8x16x368xbf16> to vector<128x368xbf16>
    %c3_32 = arith.constant 3 : index
    %c0_33 = arith.constant 0 : index
    %c0_34 = arith.constant 0 : index
    %69 = vector.load %arg4[%c3_32, %c0_33, %c0_34] : memref<5x368x256xbf16, #tpu.memory_space<vmem>>, vector<1x368x256xbf16>
    %70 = vector.shape_cast %69 : vector<1x368x256xbf16> to vector<368x256xbf16>
    %cst_35 = arith.constant dense<0.000000e+00> : vector<128x256xf32>
    %71 = tpu.matmul %68, %70, %cst_35 {dimension_numbers = #tpu.dot_dimension_numbers<[1], [0], [0], [1], [0, 0, 1, 1], [], []>} : vector<128x368xbf16>, vector<368x256xbf16>, vector<128x256xf32> -> vector<128x256xf32>
    %72 = arith.addf %66, %71 : vector<128x256xf32>
    %73 = vector.extract_strided_slice %49 {offsets = [0, 8, 0], sizes = [8, 16, 368], strides = [1, 1, 1]} : vector<8x24x368xbf16> to vector<8x16x368xbf16>
    %74 = vector.shape_cast %73 : vector<8x16x368xbf16> to vector<128x368xbf16>
    %c4_36 = arith.constant 4 : index
    %c0_37 = arith.constant 0 : index
    %c0_38 = arith.constant 0 : index
    %75 = vector.load %arg4[%c4_36, %c0_37, %c0_38] : memref<5x368x256xbf16, #tpu.memory_space<vmem>>, vector<1x368x256xbf16>
    %76 = vector.shape_cast %75 : vector<1x368x256xbf16> to vector<368x256xbf16>
    %cst_39 = arith.constant dense<0.000000e+00> : vector<128x256xf32>
    %77 = tpu.matmul %74, %76, %cst_39 {dimension_numbers = #tpu.dot_dimension_numbers<[1], [0], [0], [1], [0, 0, 1, 1], [], []>} : vector<128x368xbf16>, vector<368x256xbf16>, vector<128x256xf32> -> vector<128x256xf32>
    %78 = arith.addf %72, %77 : vector<128x256xf32>
    %c0_40 = arith.constant 0 : index
    %c0_41 = arith.constant 0 : index
    %79 = vector.load %arg5[%c0_40, %c0_41] : memref<1x256xf32, #tpu.memory_space<vmem>>, vector<1x256xf32>
    %80 = vector.broadcast %79 : vector<1x256xf32> to vector<128x256xf32>
    %81 = arith.addf %78, %80 : vector<128x256xf32>
    %cst_42 = arith.constant 0.000000e+00 : f32
    %82 = vector.broadcast %cst_42 : f32 to vector<128x256xf32>
    %83 = arith.maximumf %81, %82 : vector<128x256xf32>
    %84 = vector.extract_strided_slice %83 {offsets = [0, 0], sizes = [128, 224], strides = [1, 1]} : vector<128x256xf32> to vector<128x224xf32>
    %85 = vector.extract_strided_slice %83 {offsets = [0, 32], sizes = [128, 224], strides = [1, 1]} : vector<128x256xf32> to vector<128x224xf32>
    %86 = arith.maximumf %84, %85 : vector<128x224xf32>
    %87 = vector.extract_strided_slice %86 {offsets = [0, 0], sizes = [126, 224], strides = [1, 1]} : vector<128x224xf32> to vector<126x224xf32>
    %88 = vector.extract_strided_slice %86 {offsets = [2, 0], sizes = [126, 224], strides = [1, 1]} : vector<128x224xf32> to vector<126x224xf32>
    %89 = arith.maximumf %87, %88 : vector<126x224xf32>
    %90 = arith.truncf %89 : vector<126x224xf32> to vector<126x224xbf16>
    %91 = vector.extract_strided_slice %90 {offsets = [0, 0], sizes = [114, 224], strides = [1, 1]} : vector<126x224xbf16> to vector<114x224xbf16>
    %c0_43 = arith.constant 0 : index
    %c0_44 = arith.constant 0 : index
    %c0_45 = arith.constant 0 : index
    %92 = vector.load %arg6[%c0_43, %c0_44, %c0_45] : memref<4x224x128xbf16, #tpu.memory_space<vmem>>, vector<1x224x128xbf16>
    %93 = vector.shape_cast %92 : vector<1x224x128xbf16> to vector<224x128xbf16>
    %cst_46 = arith.constant dense<0.000000e+00> : vector<114x128xf32>
    %94 = tpu.matmul %91, %93, %cst_46 {dimension_numbers = #tpu.dot_dimension_numbers<[1], [0], [0], [1], [0, 0, 1, 1], [], []>} : vector<114x224xbf16>, vector<224x128xbf16>, vector<114x128xf32> -> vector<114x128xf32>
    %95 = vector.extract_strided_slice %90 {offsets = [4, 0], sizes = [114, 224], strides = [1, 1]} : vector<126x224xbf16> to vector<114x224xbf16>
    %c1_47 = arith.constant 1 : index
    %c0_48 = arith.constant 0 : index
    %c0_49 = arith.constant 0 : index
    %96 = vector.load %arg6[%c1_47, %c0_48, %c0_49] : memref<4x224x128xbf16, #tpu.memory_space<vmem>>, vector<1x224x128xbf16>
    %97 = vector.shape_cast %96 : vector<1x224x128xbf16> to vector<224x128xbf16>
    %cst_50 = arith.constant dense<0.000000e+00> : vector<114x128xf32>
    %98 = tpu.matmul %95, %97, %cst_50 {dimension_numbers = #tpu.dot_dimension_numbers<[1], [0], [0], [1], [0, 0, 1, 1], [], []>} : vector<114x224xbf16>, vector<224x128xbf16>, vector<114x128xf32> -> vector<114x128xf32>
    %99 = arith.addf %94, %98 : vector<114x128xf32>
    %100 = vector.extract_strided_slice %90 {offsets = [8, 0], sizes = [114, 224], strides = [1, 1]} : vector<126x224xbf16> to vector<114x224xbf16>
    %c2_51 = arith.constant 2 : index
    %c0_52 = arith.constant 0 : index
    %c0_53 = arith.constant 0 : index
    %101 = vector.load %arg6[%c2_51, %c0_52, %c0_53] : memref<4x224x128xbf16, #tpu.memory_space<vmem>>, vector<1x224x128xbf16>
    %102 = vector.shape_cast %101 : vector<1x224x128xbf16> to vector<224x128xbf16>
    %cst_54 = arith.constant dense<0.000000e+00> : vector<114x128xf32>
    %103 = tpu.matmul %100, %102, %cst_54 {dimension_numbers = #tpu.dot_dimension_numbers<[1], [0], [0], [1], [0, 0, 1, 1], [], []>} : vector<114x224xbf16>, vector<224x128xbf16>, vector<114x128xf32> -> vector<114x128xf32>
    %104 = arith.addf %99, %103 : vector<114x128xf32>
    %105 = vector.extract_strided_slice %90 {offsets = [12, 0], sizes = [114, 224], strides = [1, 1]} : vector<126x224xbf16> to vector<114x224xbf16>
    %c3_55 = arith.constant 3 : index
    %c0_56 = arith.constant 0 : index
    %c0_57 = arith.constant 0 : index
    %106 = vector.load %arg6[%c3_55, %c0_56, %c0_57] : memref<4x224x128xbf16, #tpu.memory_space<vmem>>, vector<1x224x128xbf16>
    %107 = vector.shape_cast %106 : vector<1x224x128xbf16> to vector<224x128xbf16>
    %cst_58 = arith.constant dense<0.000000e+00> : vector<114x128xf32>
    %108 = tpu.matmul %105, %107, %cst_58 {dimension_numbers = #tpu.dot_dimension_numbers<[1], [0], [0], [1], [0, 0, 1, 1], [], []>} : vector<114x224xbf16>, vector<224x128xbf16>, vector<114x128xf32> -> vector<114x128xf32>
    %109 = arith.addf %104, %108 : vector<114x128xf32>
    %c0_59 = arith.constant 0 : index
    %c0_60 = arith.constant 0 : index
    %110 = vector.load %arg7[%c0_59, %c0_60] : memref<1x128xf32, #tpu.memory_space<vmem>>, vector<1x128xf32>
    %111 = vector.broadcast %110 : vector<1x128xf32> to vector<114x128xf32>
    %112 = arith.addf %109, %111 : vector<114x128xf32>
    %113 = arith.truncf %112 : vector<114x128xf32> to vector<114x128xbf16>
    %c0_61 = arith.constant 0 : index
    %c0_62 = arith.constant 0 : index
    %114 = vector.load %arg8[%c0_61, %c0_62] : memref<128x64xbf16, #tpu.memory_space<vmem>>, vector<128x64xbf16>
    %cst_63 = arith.constant dense<0.000000e+00> : vector<114x64xf32>
    %115 = tpu.matmul %113, %114, %cst_63 {dimension_numbers = #tpu.dot_dimension_numbers<[1], [0], [0], [1], [0, 0, 1, 1], [], []>} : vector<114x128xbf16>, vector<128x64xbf16>, vector<114x64xf32> -> vector<114x64xf32>
    %c0_64 = arith.constant 0 : index
    %c0_65 = arith.constant 0 : index
    %116 = vector.load %arg9[%c0_64, %c0_65] : memref<1x64xf32, #tpu.memory_space<vmem>>, vector<1x64xf32>
    %117 = vector.broadcast %116 : vector<1x64xf32> to vector<114x64xf32>
    %118 = arith.addf %115, %117 : vector<114x64xf32>
    %119 = arith.truncf %118 : vector<114x64xf32> to vector<114x64xbf16>
    %c0_66 = arith.constant 0 : index
    %c0_67 = arith.constant 0 : index
    %120 = vector.load %arg10[%c0_66, %c0_67] : memref<64x128xbf16, #tpu.memory_space<vmem>>, vector<64x128xbf16>
    %cst_68 = arith.constant dense<0.000000e+00> : vector<114x128xf32>
    %121 = tpu.matmul %119, %120, %cst_68 {dimension_numbers = #tpu.dot_dimension_numbers<[1], [0], [0], [1], [0, 0, 1, 1], [], []>} : vector<114x64xbf16>, vector<64x128xbf16>, vector<114x128xf32> -> vector<114x128xf32>
    %c0_69 = arith.constant 0 : index
    %c0_70 = arith.constant 0 : index
    %122 = vector.load %arg11[%c0_69, %c0_70] : memref<1x128xf32, #tpu.memory_space<vmem>>, vector<1x128xf32>
    %123 = vector.broadcast %122 : vector<1x128xf32> to vector<114x128xf32>
    %124 = arith.addf %121, %123 : vector<114x128xf32>
    %cst_71 = arith.constant 0.000000e+00 : f32
    %125 = vector.broadcast %cst_71 : f32 to vector<14x128xf32>
    %126 = tpu.concatenate %124, %125 in 0 : vector<114x128xf32>, vector<14x128xf32> -> vector<128x128xf32>
    %c0_72 = arith.constant 0 : index
    %c0_73 = arith.constant 0 : index
    %127 = vector.load %arg12[%c0_72, %c0_73] : memref<128x128xf32, #tpu.memory_space<vmem>>, vector<128x128xf32>
    tpu.vector_store %arg12[%c0_72, %c0_73], %126 {strides = array<i32>} : memref<128x128xf32, #tpu.memory_space<vmem>>, vector<128x128xf32>,
    return
  }
  func.func @transform_0(%arg0: i32) -> (i32, i32, i32) {
    %c0_i32 = arith.constant 0 : i32
    %c0_i32_0 = arith.constant 0 : i32
    %c0_i32_1 = arith.constant 0 : i32
    return %arg0, %c0_i32, %c0_i32_0 : i32, i32, i32
  }
  func.func @transform_1(%arg0: i32) -> (i32, i32, i32) {
    %c0_i32 = arith.constant 0 : i32
    %c0_i32_0 = arith.constant 0 : i32
    %c0_i32_1 = arith.constant 0 : i32
    %c0_i32_2 = arith.constant 0 : i32
    return %c0_i32, %c0_i32_0, %c0_i32_1 : i32, i32, i32
  }
  func.func @transform_2(%arg0: i32) -> (i32, i32) {
    %c0_i32 = arith.constant 0 : i32
    %c0_i32_0 = arith.constant 0 : i32
    %c0_i32_1 = arith.constant 0 : i32
    return %c0_i32, %c0_i32_0 : i32, i32
  }
  func.func @transform_3(%arg0: i32) -> (i32, i32, i32) {
    %c0_i32 = arith.constant 0 : i32
    %c0_i32_0 = arith.constant 0 : i32
    %c0_i32_1 = arith.constant 0 : i32
    %c0_i32_2 = arith.constant 0 : i32
    return %c0_i32, %c0_i32_0, %c0_i32_1 : i32, i32, i32
  }
  func.func @transform_4(%arg0: i32) -> (i32, i32) {
    %c0_i32 = arith.constant 0 : i32
    %c0_i32_0 = arith.constant 0 : i32
    %c0_i32_1 = arith.constant 0 : i32
    return %c0_i32, %c0_i32_0 : i32, i32
  }
  func.func @transform_5(%arg0: i32) -> (i32, i32, i32) {
    %c0_i32 = arith.constant 0 : i32
    %c0_i32_0 = arith.constant 0 : i32
    %c0_i32_1 = arith.constant 0 : i32
    %c0_i32_2 = arith.constant 0 : i32
    return %c0_i32, %c0_i32_0, %c0_i32_1 : i32, i32, i32
  }
  func.func @transform_6(%arg0: i32) -> (i32, i32) {
    %c0_i32 = arith.constant 0 : i32
    %c0_i32_0 = arith.constant 0 : i32
    %c0_i32_1 = arith.constant 0 : i32
    return %c0_i32, %c0_i32_0 : i32, i32
  }
  func.func @transform_7(%arg0: i32) -> (i32, i32) {
    %c0_i32 = arith.constant 0 : i32
    %c0_i32_0 = arith.constant 0 : i32
    %c0_i32_1 = arith.constant 0 : i32
    return %c0_i32, %c0_i32_0 : i32, i32
  }
  func.func @transform_8(%arg0: i32) -> (i32, i32) {
    %c0_i32 = arith.constant 0 : i32
    %c0_i32_0 = arith.constant 0 : i32
    %c0_i32_1 = arith.constant 0 : i32
    return %c0_i32, %c0_i32_0 : i32, i32
  }
  func.func @transform_9(%arg0: i32) -> (i32, i32) {
    %c0_i32 = arith.constant 0 : i32
    %c0_i32_0 = arith.constant 0 : i32
    %c0_i32_1 = arith.constant 0 : i32
    return %c0_i32, %c0_i32_0 : i32, i32
  }
  func.func @transform_10(%arg0: i32) -> (i32, i32) {
    %c0_i32 = arith.constant 0 : i32
    %c0_i32_0 = arith.constant 0 : i32
    %c0_i32_1 = arith.constant 0 : i32
    return %c0_i32, %c0_i32_0 : i32, i32
  }
  func.func @transform_11(%arg0: i32) -> (i32, i32) {
    %c0_i32 = arith.constant 0 : i32
    %c0_i32_0 = arith.constant 0 : i32
    return %arg0, %c0_i32 : i32, i32
  }
}

</mosaic_0001>

<llo_original>
// kernel: net_forward.1
$region0: #{net_forward.1}
  #allocation0 [shape = 'u32[]', space=smem, size = 0x4, offset = 0x4, fixed_abs, tag = 'smem constant byte address 0x4 - core index']
  #allocation1 [shape = 'u32[144,128]{1,0:T(1,128)}', space=vmem, size = 0x12000, scoped, tag = 'internal scratch']
  %s0 = inlined_call_operand.vmem [shape: bf16[8,28,28], index: 0, kind: input, shape index: {}]
  %s1 = inlined_call_operand.vmem [shape: bf16[5,28,384], index: 1, kind: input, shape index: {}]
  %s2 = inlined_call_operand.vmem [shape: f32[1,384], index: 2, kind: input, shape index: {}]
  %s3 = inlined_call_operand.hbm [shape: bf16[5,368,256], index: 3, kind: input, shape index: {}]
  %s4 = inlined_call_operand.vmem [shape: f32[1,256], index: 4, kind: input, shape index: {}]
  %s5 = inlined_call_operand.hbm [shape: bf16[4,224,128], index: 5, kind: input, shape index: {}]
  %s6 = inlined_call_operand.vmem [shape: f32[1,128], index: 6, kind: input, shape index: {}]
  %s7 = inlined_call_operand.vmem [shape: bf16[128,64], index: 7, kind: input, shape index: {}]
  %s8 = inlined_call_operand.vmem [shape: f32[1,64], index: 8, kind: input, shape index: {}]
  %s9 = inlined_call_operand.vmem [shape: bf16[64,128], index: 9, kind: input, shape index: {}]
  %s10 = inlined_call_operand.vmem [shape: f32[1,128], index: 10, kind: input, shape index: {}]
  %s11 = inlined_call_operand.vmem [shape: f32[128,128], index: 11, kind: output, shape index: {}]
  %s12 = sld [smem:[#allocation0]]
  $region62: #{net_forward.1} parent=0
    _
  %s14 = ssub.s32 1, %s12
  %s15 = scalar_select 0, %s14, %s12
  $region1: #{net_forward.1} parent=0
    #allocation2 [shape = 'u8[942080]{0}', space=vmem, size = 0xe6000, scoped, tag = 'input window, operand 3, single buffered']
    #allocation3 [shape = 's32[1]{0}', space=sflag, size = 0x4, scoped, tag = 'scoped memory for net_forward.1']
    #allocation4 [shape = 'u8[229376]{0}', space=vmem, size = 0x38000, scoped, tag = 'input window, operand 5, single buffered']
    #allocation5 [shape = 's32[1]{0}', space=sflag, size = 0x4, scoped, tag = 'scoped memory for net_forward.1']
    %16 = vsyncpa [#allocation3], 0
    %17 = vsyncpa [#allocation5], 0
    // Predicated region
    $region2: #{net_forward.1} parent=1 // pred_check
      _
    $region3: #{net_forward.1} parent=1 // pred_check_branch
      %19 = sbr.rel (0) target = $region5
    $region4: #{net_forward.1} parent=1 // pred_region
      _
    $region5: #{net_forward.1} parent=1 // pred_fallthru
      _
    // Predicated region
    $region6: #{net_forward.1} parent=1 // pred_check
      _
    $region7: #{net_forward.1} parent=1 // pred_check_branch
      %21 = sbr.rel (0) target = $region9
    $region8: #{net_forward.1} parent=1 // pred_region
      _
    $region9: #{net_forward.1} parent=1 // pred_fallthru
      _
    // Predicated region
    $region10: #{net_forward.1} parent=1 // pred_check
      _
    $region11: #{net_forward.1} parent=1 // pred_check_branch
      %23 = sbr.rel (0) target = $region13
    $region12: #{net_forward.1} parent=1 // pred_region
      _
    $region13: #{net_forward.1} parent=1 // pred_fallthru
      _
    // Predicated region
    $region14: #{net_forward.1} parent=1 // pred_check
      _
    $region15: #{net_forward.1} parent=1 // pred_check_branch
      %25 = sbr.rel (0) target = $region17
    $region16: #{net_forward.1} parent=1 // pred_region
      %s27 = ssub.s32 29440, 29440
      %28 = vsyncadd [#allocation3], %s27
      %s29 = sshll.u32 [#allocation2], 4
      %s30 = int_to_ptr.vmem [resolvable:$true] %s29
      %35 = dma.hbm_to_vmem [thread:$0]  %s3, 29440, %s30, [#allocation3], 128, 128, 8
    $region17: #{net_forward.1} parent=1 // pred_fallthru
      _
    // Predicated region
    $region18: #{net_forward.1} parent=1 // pred_check
      _
    $region19: #{net_forward.1} parent=1 // pred_check_branch
      %37 = sbr.rel (0) target = $region21
    $region20: #{net_forward.1} parent=1 // pred_region
      _
    $region21: #{net_forward.1} parent=1 // pred_fallthru
      _
    // Predicated region
    $region22: #{net_forward.1} parent=1 // pred_check
      _
    $region23: #{net_forward.1} parent=1 // pred_check_branch
      %39 = sbr.rel (0) target = $region25
    $region24: #{net_forward.1} parent=1 // pred_region
      %s41 = ssub.s32 7168, 7168
      %42 = vsyncadd [#allocation5], %s41
      %s43 = sshll.u32 [#allocation4], 4
      %s44 = int_to_ptr.vmem [resolvable:$true] %s43
      %49 = dma.hbm_to_vmem [thread:$0]  %s5, 7168, %s44, [#allocation5], 64, 64, 4
    $region25: #{net_forward.1} parent=1 // pred_fallthru
      _
    // Predicated region
    $region26: #{net_forward.1} parent=1 // pred_check
      _
    $region27: #{net_forward.1} parent=1 // pred_check_branch
      %51 = sbr.rel (0) target = $region29
    $region28: #{net_forward.1} parent=1 // pred_region
      _
    $region29: #{net_forward.1} parent=1 // pred_fallthru
      _
    // Predicated region
    $region30: #{net_forward.1} parent=1 // pred_check
      _
    $region31: #{net_forward.1} parent=1 // pred_check_branch
      %53 = sbr.rel (0) target = $region33
    $region32: #{net_forward.1} parent=1 // pred_region
      _
    $region33: #{net_forward.1} parent=1 // pred_fallthru
      _
    // Predicated region
    $region34: #{net_forward.1} parent=1 // pred_check
      _
    $region35: #{net_forward.1} parent=1 // pred_check_branch
      %55 = sbr.rel (0) target = $region37
    $region36: #{net_forward.1} parent=1 // pred_region
      _
    $region37: #{net_forward.1} parent=1 // pred_fallthru
      _
    // Predicated region
    $region38: #{net_forward.1} parent=1 // pred_check
      _
    $region39: #{net_forward.1} parent=1 // pred_check_branch
      %57 = sbr.rel (0) target = $region41
    $region40: #{net_forward.1} parent=1 // pred_region
      _
    $region41: #{net_forward.1} parent=1 // pred_fallthru
      _
    // Predicated region
    $region42: #{net_forward.1} parent=1 // pred_check
      _
    $region43: #{net_forward.1} parent=1 // pred_check_branch
      %59 = sbr.rel (0) target = $region45
    $region44: #{net_forward.1} parent=1 // pred_region
      _
    $region45: #{net_forward.1} parent=1 // pred_fallthru
      _
    // Predicated region
    $region46: #{net_forward.1} parent=1 // pred_check
      _
    $region47: #{net_forward.1} parent=1 // pred_check_branch
      %61 = sbr.rel (0) target = $region49
    $region48: #{net_forward.1} parent=1 // pred_region
      %62 = dma.done [#allocation3], 29440
    $region49: #{net_forward.1} parent=1 // pred_fallthru
      _
    // Predicated region
    $region50: #{net_forward.1} parent=1 // pred_check
      _
    $region51: #{net_forward.1} parent=1 // pred_check_branch
      %64 = sbr.rel (0) target = $region53
    $region52: #{net_forward.1} parent=1 // pred_region
      %65 = dma.done [#allocation5], 7168
    $region53: #{net_forward.1} parent=1 // pred_fallthru
      _
    %v67 = vld [vmem:[%s0] sm:$0xf]
    %v68 = vld [vmem:[%s0 + $0x4] sm:$0xf]
    %v69 = vld [vmem:[%s0 + $0x8] sm:$0xf]
    %v70 = vld [vmem:[%s0 + $0xc] sm:$0x3]
    %v71 = vld [vmem:[%s0 + $0x10] sm:$0xf]
    %v72 = vld [vmem:[%s0 + $0x14] sm:$0xf]
    %v73 = vld [vmem:[%s0 + $0x18] sm:$0xf]
    %v74 = vld [vmem:[%s0 + $0x1c] sm:$0x3]
    %v75 = vld [vmem:[%s0 + $0x20] sm:$0xf]
    %v76 = vld [vmem:[%s0 + $0x24] sm:$0xf]
    %v77 = vld [vmem:[%s0 + $0x28] sm:$0xf]
    %v78 = vld [vmem:[%s0 + $0x2c] sm:$0x3]
    %v79 = vld [vmem:[%s0 + $0x30] sm:$0xf]
    %v80 = vld [vmem:[%s0 + $0x34] sm:$0xf]
    %v81 = vld [vmem:[%s0 + $0x38] sm:$0xf]
    %v82 = vld [vmem:[%s0 + $0x3c] sm:$0x3]
    %v83 = vld [vmem:[%s0 + $0x40] sm:$0xf]
    %v84 = vld [vmem:[%s0 + $0x44] sm:$0xf]
    %v85 = vld [vmem:[%s0 + $0x48] sm:$0xf]
    %v86 = vld [vmem:[%s0 + $0x4c] sm:$0x3]
    %v87 = vld [vmem:[%s0 + $0x50] sm:$0xf]
    %v88 = vld [vmem:[%s0 + $0x54] sm:$0xf]
    %v89 = vld [vmem:[%s0 + $0x58] sm:$0xf]
    %v90 = vld [vmem:[%s0 + $0x5c] sm:$0x3]
    %v91 = vld [vmem:[%s0 + $0x60] sm:$0xf]
    %v92 = vld [vmem:[%s0 + $0x64] sm:$0xf]
    %v93 = vld [vmem:[%s0 + $0x68] sm:$0xf]
    %v94 = vld [vmem:[%s0 + $0x6c] sm:$0x3]
    %v95 = vld [vmem:[%s0 + $0x70] sm:$0xf]
    %v96 = vld [vmem:[%s0 + $0x74] sm:$0xf]
    %v97 = vld [vmem:[%s0 + $0x78] sm:$0xf]
    %v98 = vld [vmem:[%s0 + $0x7c] sm:$0x3]
    %v99 = vunpack.c.l.bf16 %v67
    %v100 = vunpack.c.l.bf16 %v68
    %v101 = vunpack.c.l.bf16 %v69
    %v102 = vunpack.c.l.bf16 %v70
    %v103 = vunpack.c.l.bf16 %v71
    %v104 = vunpack.c.l.bf16 %v72
    %v105 = vunpack.c.l.bf16 %v73
    %v106 = vunpack.c.l.bf16 %v74
    %v107 = vunpack.c.l.bf16 %v75
    %v108 = vunpack.c.l.bf16 %v76
    %v109 = vunpack.c.l.bf16 %v77
    %v110 = vunpack.c.l.bf16 %v78
    %v111 = vunpack.c.l.bf16 %v79
    %v112 = vunpack.c.l.bf16 %v80
    %v113 = vunpack.c.l.bf16 %v81
    %v114 = vunpack.c.l.bf16 %v82
    %v115 = vunpack.c.l.bf16 %v83
    %v116 = vunpack.c.l.bf16 %v84
    %v117 = vunpack.c.l.bf16 %v85
    %v118 = vunpack.c.l.bf16 %v86
    %v119 = vunpack.c.l.bf16 %v87
    %v120 = vunpack.c.l.bf16 %v88
    %v121 = vunpack.c.l.bf16 %v89
    %v122 = vunpack.c.l.bf16 %v90
    %v123 = vunpack.c.l.bf16 %v91
    %v124 = vunpack.c.l.bf16 %v92
    %v125 = vunpack.c.l.bf16 %v93
    %v126 = vunpack.c.l.bf16 %v94
    %v127 = vunpack.c.l.bf16 %v95
    %v128 = vunpack.c.l.bf16 %v96
    %v129 = vunpack.c.l.bf16 %v97
    %v130 = vunpack.c.l.bf16 %v98
    %v131 = vpack.c.bf16 %v100, %v99
    %v132 = vpack.c.bf16 %v103, %v101
    %v133 = vpack.c.bf16 %v105, %v104
    %v134 = vpack.c.bf16 %v108, %v107
    %v135 = vpack.c.bf16 %v111, %v109
    %v136 = vpack.c.bf16 %v113, %v112
    %v137 = vpack.c.bf16 %v116, %v115
    %v138 = vpack.c.bf16 %v119, %v117
    %v139 = vpack.c.bf16 %v121, %v120
    %v140 = vpack.c.bf16 %v124, %v123
    %v141 = vpack.c.bf16 %v127, %v125
    %v142 = vpack.c.bf16 %v129, %v128
    %v143 = vld [vmem:[%s1] sm:$0xff]
    %v144 = vld [vmem:[%s1 + $0x8] sm:$0xf]
    %v145 = vld [vmem:[%s1 + $0xc] sm:$0xff]
    %v146 = vld [vmem:[%s1 + $0x14] sm:$0xf]
    %v147 = vld [vmem:[%s1 + $0x18] sm:$0xff]
    %v148 = vld [vmem:[%s1 + $0x20] sm:$0xf]
    %v149 = vld [vmem:[%s1 + $0x24] sm:$0x33]
    %v150 = vld [vmem:[%s1 + $0x2c] sm:$0x3]
    %vm183 = vcmask 1046528
    %v184 = vrot.slane %v99, 1
    %v185 = vrot.slane %v100, 1
    %v186 = vsel %vm183, %v184, %v185
    %v187 = vrot.slane %v101, 1
    %v188 = vsel %vm183, %v185, %v187
    %v189 = vrot.slane %v102, 1
    %v190 = vsel %vm183, %v187, %v189
    %v191 = vrot.slane %v103, 1
    %v192 = vrot.slane %v104, 1
    %v193 = vsel %vm183, %v191, %v192
    %v194 = vrot.slane %v105, 1
    %v195 = vsel %vm183, %v192, %v194
    %v196 = vrot.slane %v106, 1
    %v197 = vsel %vm183, %v194, %v196
    %v198 = vrot.slane %v107, 1
    %v199 = vrot.slane %v108, 1
    %v200 = vsel %vm183, %v198, %v199
    %v201 = vrot.slane %v109, 1
    %v202 = vsel %vm183, %v199, %v201
    %v203 = vrot.slane %v110, 1
    %v204 = vsel %vm183, %v201, %v203
    %v205 = vrot.slane %v111, 1
    %v206 = vrot.slane %v112, 1
    %v207 = vsel %vm183, %v205, %v206
    %v208 = vrot.slane %v113, 1
    %v209 = vsel %vm183, %v206, %v208
    %v210 = vrot.slane %v114, 1
    %v211 = vsel %vm183, %v208, %v210
    %v212 = vrot.slane %v115, 1
    %v213 = vrot.slane %v116, 1
    %v214 = vsel %vm183, %v212, %v213
    %v215 = vrot.slane %v117, 1
    %v216 = vsel %vm183, %v213, %v215
    %v217 = vrot.slane %v118, 1
    %v218 = vsel %vm183, %v215, %v217
    %v219 = vrot.slane %v119, 1
    %v220 = vrot.slane %v120, 1
    %v221 = vsel %vm183, %v219, %v220
    %v222 = vrot.slane %v121, 1
    %v223 = vsel %vm183, %v220, %v222
    %v224 = vrot.slane %v122, 1
    %v225 = vsel %vm183, %v222, %v224
    %v226 = vrot.slane %v123, 1
    %v227 = vrot.slane %v124, 1
    %v228 = vsel %vm183, %v226, %v227
    %v229 = vrot.slane %v125, 1
    %v230 = vsel %vm183, %v227, %v229
    %v231 = vrot.slane %v126, 1
    %v232 = vsel %vm183, %v229, %v231
    %v233 = vrot.slane %v127, 1
    %v234 = vrot.slane %v128, 1
    %v235 = vsel %vm183, %v233, %v234
    %v236 = vrot.slane %v129, 1
    %v237 = vsel %vm183, %v234, %v236
    %v238 = vrot.slane %v130, 1
    %v239 = vsel %vm183, %v236, %v238
    %v264 = vpack.c.bf16 %v188, %v186
    %v265 = vpack.c.bf16 %v193, %v190
    %v266 = vpack.c.bf16 %v197, %v195
    %v267 = vpack.c.bf16 %v202, %v200
    %v268 = vpack.c.bf16 %v207, %v204
    %v269 = vpack.c.bf16 %v211, %v209
    %v270 = vpack.c.bf16 %v216, %v214
    %v271 = vpack.c.bf16 %v221, %v218
    %v272 = vpack.c.bf16 %v225, %v223
    %v273 = vpack.c.bf16 %v230, %v228
    %v274 = vpack.c.bf16 %v235, %v232
    %v275 = vpack.c.bf16 %v239, %v237
    %s276 = scalar_lea.vmem %s1, 48
    %v277 = vld [vmem:[%s276] sm:$0xff]
    %v278 = vld [vmem:[%s276 + $0x8] sm:$0xf]
    %v279 = vld [vmem:[%s276 + $0xc] sm:$0xff]
    %v280 = vld [vmem:[%s276 + $0x14] sm:$0xf]
    %v281 = vld [vmem:[%s276 + $0x18] sm:$0xff]
    %v282 = vld [vmem:[%s276 + $0x20] sm:$0xf]
    %v283 = vld [vmem:[%s276 + $0x24] sm:$0x33]
    %v284 = vld [vmem:[%s276 + $0x2c] sm:$0x3]
    %v293 = vunpack.c.l.b16 %v277
    %v294 = vunpack.c.h.b16 %v277
    %v295 = vunpack.c.l.b16 %v278
    %v296 = vunpack.c.l.b16 %v279
    %v297 = vunpack.c.h.b16 %v279
    %v298 = vunpack.c.l.b16 %v280
    %v299 = vunpack.c.l.b16 %v281
    %v300 = vunpack.c.h.b16 %v281
    %v301 = vunpack.c.l.b16 %v282
    %v302 = vunpack.c.l.b16 %v283
    %v303 = vunpack.c.h.b16 %v283
    %v304 = vunpack.c.l.b16 %v284
    %v305 = vpack.c.b16 %v296, %v293
    %v306 = vpack.c.b16 %v297, %v294
    %v307 = vpack.c.b16 %v298, %v295
    %v308 = vpack.c.b16 %v302, %v299
    %v309 = vpack.c.b16 %v303, %v300
    %v310 = vpack.c.b16 %v304, %v301
    %vm314 = vcmask 228352
    %v316 = vsel %vm314, %v264, 0
    %v319 = vsel %vm314, %v265, 0
    %v322 = vsel %vm314, %v266, 0
    %v325 = vsel %vm314, %v267, 0
    %v328 = vsel %vm314, %v268, 0
    %v331 = vsel %vm314, %v269, 0
    %v334 = vsel %vm314, %v270, 0
    %v337 = vsel %vm314, %v271, 0
    %v340 = vsel %vm314, %v272, 0
    %v343 = vsel %vm314, %v273, 0
    %v346 = vsel %vm314, %v274, 0
    %v349 = vsel %vm314, %v275, 0
    %vm351 = vcmask 1045504
    %v353 = vsel %vm351, %v308, 0
    %v356 = vsel %vm351, %v309, 0
    %v359 = vsel %vm351, %v310, 0
    %361 = vmatprep.subr.bf16.mxu0 0
    %362 = vmatpush1.bf16.msra.mxu0 0
    %363 = vmatprep.subr.bf16.mxu0 0
    %364 = vmatpush1.bf16.msra.mxu0 0
    %365 = vmatprep.subr.bf16.mxu0 0
    %366 = vmatpush1.bf16.msra.mxu0 0
    %367 = vmatprep.subr.bf16.mxu0 0
    %368 = vmatpush1.bf16.msra.mxu0 0
    %369 = vmatprep.subr.bf16.mxu0 0
    %370 = vmatpush1.bf16.msra.mxu0 0
    %371 = vmatprep.subr.bf16.mxu0 0
    %372 = vmatpush1.bf16.msra.mxu0 0
    %373 = vmatprep.subr.bf16.mxu0 %v356
    %374 = vmatpush1.bf16.msra.mxu0 %v353
    %375 = vmatprep.subr.bf16.mxu0 %v306
    %376 = vmatpush1.bf16.msra.mxu0 %v305
    %377 = vmatprep.subr.bf16.mxu0 0
    %378 = vmatpush2.bf16.msra.mxu0 0
    %379 = vmatprep.subr.bf16.mxu0 0
    %380 = vmatpush2.bf16.msra.mxu0 0
    %381 = vmatprep.subr.bf16.mxu0 0
    %382 = vmatpush2.bf16.msra.mxu0 0
    %383 = vmatprep.subr.bf16.mxu0 0
    %384 = vmatpush2.bf16.msra.mxu0 0
    %385 = vmatprep.subr.bf16.mxu0 0
    %386 = vmatpush2.bf16.msra.mxu0 0
    %387 = vmatprep.subr.bf16.mxu0 0
    %388 = vmatpush2.bf16.msra.mxu0 0
    %389 = vmatprep.subr.bf16.mxu0 0
    %390 = vmatpush2.bf16.msra.mxu0 0
    %391 = vmatprep.subr.bf16.mxu0 0
    %392 = vmatpush2.bf16.msra.mxu0 0
    %393 = vmatprep.mubr.bf16.mxu0 0
    %394 = vmatmul.mubr.bf16.gmra.mxu0 %v316
    %v395 = vpop.f32.mrf.mxu0
    %v396 = vadd.f32 0.0, %v395
    %v397 = vpop.f32.mrf.mxu0
    %v398 = vadd.f32 0.0, %v397
    %v399 = vpop.f32.mrf.mxu0
    %v400 = vadd.f32 0.0, %v399
    %v401 = vpop.f32.mrf.mxu0
    %v402 = vadd.f32 0.0, %v401
    %403 = vmatprep.mubr.bf16.mxu0 0
    %404 = vmatmul.mubr.bf16.gmra.mxu0 %v319
    %v405 = vpop.f32.mrf.mxu0
    %v406 = vadd.f32 0.0, %v405
    %v407 = vpop.f32.mrf.mxu0
    %v408 = vadd.f32 0.0, %v407
    %v409 = vpop.f32.mrf.mxu0
    %v410 = vadd.f32 0.0, %v409
    %v411 = vpop.f32.mrf.mxu0
    %v412 = vadd.f32 0.0, %v411
    %413 = vmatprep.mubr.bf16.mxu0 0
    %414 = vmatmul.mubr.bf16.gmra.mxu0 %v322
    %v415 = vpop.f32.mrf.mxu0
    %v416 = vadd.f32 0.0, %v415
    %v417 = vpop.f32.mrf.mxu0
    %v418 = vadd.f32 0.0, %v417
    %v419 = vpop.f32.mrf.mxu0
    %v420 = vadd.f32 0.0, %v419
    %v421 = vpop.f32.mrf.mxu0
    %v422 = vadd.f32 0.0, %v421
    %423 = vmatprep.mubr.bf16.mxu0 0
    %424 = vmatmul.mubr.bf16.gmra.mxu0 %v325
    %v425 = vpop.f32.mrf.mxu0
    %v426 = vadd.f32 0.0, %v425
    %v427 = vpop.f32.mrf.mxu0
    %v428 = vadd.f32 0.0, %v427
    %v429 = vpop.f32.mrf.mxu0
    %v430 = vadd.f32 0.0, %v429
    %v431 = vpop.f32.mrf.mxu0
    %v432 = vadd.f32 0.0, %v431
    %433 = vmatprep.mubr.bf16.mxu0 0
    %434 = vmatmul.mubr.bf16.gmra.mxu0 %v328
    %v435 = vpop.f32.mrf.mxu0
    %v436 = vadd.f32 0.0, %v435
    %v437 = vpop.f32.mrf.mxu0
    %v438 = vadd.f32 0.0, %v437
    %v439 = vpop.f32.mrf.mxu0
    %v440 = vadd.f32 0.0, %v439
    %v441 = vpop.f32.mrf.mxu0
    %v442 = vadd.f32 0.0, %v441
    %443 = vmatprep.mubr.bf16.mxu0 0
    %444 = vmatmul.mubr.bf16.gmra.mxu0 %v331
    %v445 = vpop.f32.mrf.mxu0
    %v446 = vadd.f32 0.0, %v445
    %v447 = vpop.f32.mrf.mxu0
    %v448 = vadd.f32 0.0, %v447
    %v449 = vpop.f32.mrf.mxu0
    %v450 = vadd.f32 0.0, %v449
    %v451 = vpop.f32.mrf.mxu0
    %v452 = vadd.f32 0.0, %v451
    %453 = vmatprep.mubr.bf16.mxu0 0
    %454 = vmatmul.mubr.bf16.gmra.mxu0 %v334
    %v455 = vpop.f32.mrf.mxu0
    %v456 = vadd.f32 0.0, %v455
    %v457 = vpop.f32.mrf.mxu0
    %v458 = vadd.f32 0.0, %v457
    %v459 = vpop.f32.mrf.mxu0
    %v460 = vadd.f32 0.0, %v459
    %v461 = vpop.f32.mrf.mxu0
    %v462 = vadd.f32 0.0, %v461
    %463 = vmatprep.mubr.bf16.mxu0 0
    %464 = vmatmul.mubr.bf16.gmra.mxu0 %v337
    %v465 = vpop.f32.mrf.mxu0
    %v466 = vadd.f32 0.0, %v465
    %v467 = vpop.f32.mrf.mxu0
    %v468 = vadd.f32 0.0, %v467
    %v469 = vpop.f32.mrf.mxu0
    %v470 = vadd.f32 0.0, %v469
    %v471 = vpop.f32.mrf.mxu0
    %v472 = vadd.f32 0.0, %v471
    %473 = vmatprep.mubr.bf16.mxu0 0
    %474 = vmatmul.mubr.bf16.gmra.mxu0 %v340
    %v475 = vpop.f32.mrf.mxu0
    %v476 = vadd.f32 0.0, %v475
    %v477 = vpop.f32.mrf.mxu0
    %v478 = vadd.f32 0.0, %v477
    %v479 = vpop.f32.mrf.mxu0
    %v480 = vadd.f32 0.0, %v479
    %v481 = vpop.f32.mrf.mxu0
    %v482 = vadd.f32 0.0, %v481
    %483 = vmatprep.mubr.bf16.mxu0 0
    %484 = vmatmul.mubr.bf16.gmra.mxu0 %v343
    %v485 = vpop.f32.mrf.mxu0
    %v486 = vadd.f32 0.0, %v485
    %v487 = vpop.f32.mrf.mxu0
    %v488 = vadd.f32 0.0, %v487
    %v489 = vpop.f32.mrf.mxu0
    %v490 = vadd.f32 0.0, %v489
    %v491 = vpop.f32.mrf.mxu0
    %v492 = vadd.f32 0.0, %v491
    %493 = vmatprep.mubr.bf16.mxu0 0
    %494 = vmatmul.mubr.bf16.gmra.mxu0 %v346
    %v495 = vpop.f32.mrf.mxu0
    %v496 = vadd.f32 0.0, %v495
    %v497 = vpop.f32.mrf.mxu0
    %v498 = vadd.f32 0.0, %v497
    %v499 = vpop.f32.mrf.mxu0
    %v500 = vadd.f32 0.0, %v499
    %v501 = vpop.f32.mrf.mxu0
    %v502 = vadd.f32 0.0, %v501
    %503 = vmatprep.mubr.bf16.mxu0 0
    %504 = vmatmul.mubr.bf16.gmra.mxu0 %v349
    %v505 = vpop.f32.mrf.mxu0
    %v506 = vadd.f32 0.0, %v505
    %v507 = vpop.f32.mrf.mxu0
    %v508 = vadd.f32 0.0, %v507
    %v509 = vpop.f32.mrf.mxu0
    %v510 = vadd.f32 0.0, %v509
    %v511 = vpop.f32.mrf.mxu0
    %v512 = vadd.f32 0.0, %v511
    %513 = vdwg.mxu0
    %514 = vmatprep.subr.bf16.mxu0 0
    %515 = vmatpush1.bf16.msra.mxu0 0
    %516 = vmatprep.subr.bf16.mxu0 0
    %517 = vmatpush1.bf16.msra.mxu0 0
    %518 = vmatprep.subr.bf16.mxu0 0
    %519 = vmatpush1.bf16.msra.mxu0 0
    %520 = vmatprep.subr.bf16.mxu0 0
    %521 = vmatpush1.bf16.msra.mxu0 0
    %522 = vmatprep.subr.bf16.mxu0 0
    %523 = vmatpush1.bf16.msra.mxu0 0
    %524 = vmatprep.subr.bf16.mxu0 0
    %525 = vmatpush1.bf16.msra.mxu0 0
    %526 = vmatprep.subr.bf16.mxu0 0
    %527 = vmatpush1.bf16.msra.mxu0 %v359
    %528 = vmatprep.subr.bf16.mxu0 0
    %529 = vmatpush1.bf16.msra.mxu0 %v307
    %530 = vmatprep.subr.bf16.mxu0 0
    %531 = vmatpush2.bf16.msra.mxu0 0
    %532 = vmatprep.subr.bf16.mxu0 0
    %533 = vmatpush2.bf16.msra.mxu0 0
    %534 = vmatprep.subr.bf16.mxu0 0
    %535 = vmatpush2.bf16.msra.mxu0 0
    %536 = vmatprep.subr.bf16.mxu0 0
    %537 = vmatpush2.bf16.msra.mxu0 0
    %538 = vmatprep.subr.bf16.mxu0 0
    %539 = vmatpush2.bf16.msra.mxu0 0
    %540 = vmatprep.subr.bf16.mxu0 0
    %541 = vmatpush2.bf16.msra.mxu0 0
    %542 = vmatprep.subr.bf16.mxu0 0
    %543 = vmatpush2.bf16.msra.mxu0 0
    %544 = vmatprep.subr.bf16.mxu0 0
    %545 = vmatpush2.bf16.msra.mxu0 0
    %546 = vmatprep.mubr.bf16.mxu0 0
    %547 = vmatmul.mubr.bf16.gmra.mxu0 %v316
    %v548 = vpop.f32.mrf.mxu0
    %v549 = vadd.f32 0.0, %v548
    %v550 = vpop.f32.mrf.mxu0
    %v551 = vpop.f32.mrf.mxu0
    %v552 = vadd.f32 0.0, %v551
    %v553 = vpop.f32.mrf.mxu0
    %554 = vmatprep.mubr.bf16.mxu0 0
    %555 = vmatmul.mubr.bf16.gmra.mxu0 %v319
    %v556 = vpop.f32.mrf.mxu0
    %v557 = vadd.f32 0.0, %v556
    %v558 = vpop.f32.mrf.mxu0
    %v559 = vpop.f32.mrf.mxu0
    %v560 = vadd.f32 0.0, %v559
    %v561 = vpop.f32.mrf.mxu0
    %562 = vmatprep.mubr.bf16.mxu0 0
    %563 = vmatmul.mubr.bf16.gmra.mxu0 %v322
    %v564 = vpop.f32.mrf.mxu0
    %v565 = vadd.f32 0.0, %v564
    %v566 = vpop.f32.mrf.mxu0
    %v567 = vpop.f32.mrf.mxu0
    %v568 = vadd.f32 0.0, %v567
    %v569 = vpop.f32.mrf.mxu0
    %570 = vmatprep.mubr.bf16.mxu0 0
    %571 = vmatmul.mubr.bf16.gmra.mxu0 %v325
    %v572 = vpop.f32.mrf.mxu0
    %v573 = vadd.f32 0.0, %v572
    %v574 = vpop.f32.mrf.mxu0
    %v575 = vpop.f32.mrf.mxu0
    %v576 = vadd.f32 0.0, %v575
    %v577 = vpop.f32.mrf.mxu0
    %578 = vmatprep.mubr.bf16.mxu0 0
    %579 = vmatmul.mubr.bf16.gmra.mxu0 %v328
    %v580 = vpop.f32.mrf.mxu0
    %v581 = vadd.f32 0.0, %v580
    %v582 = vpop.f32.mrf.mxu0
    %v583 = vpop.f32.mrf.mxu0
    %v584 = vadd.f32 0.0, %v583
    %v585 = vpop.f32.mrf.mxu0
    %586 = vmatprep.mubr.bf16.mxu0 0
    %587 = vmatmul.mubr.bf16.gmra.mxu0 %v331
    %v588 = vpop.f32.mrf.mxu0
    %v589 = vadd.f32 0.0, %v588
    %v590 = vpop.f32.mrf.mxu0
    %v591 = vpop.f32.mrf.mxu0
    %v592 = vadd.f32 0.0, %v591
    %v593 = vpop.f32.mrf.mxu0
    %594 = vmatprep.mubr.bf16.mxu0 0
    %595 = vmatmul.mubr.bf16.gmra.mxu0 %v334
    %v596 = vpop.f32.mrf.mxu0
    %v597 = vadd.f32 0.0, %v596
    %v598 = vpop.f32.mrf.mxu0
    %v599 = vpop.f32.mrf.mxu0
    %v600 = vadd.f32 0.0, %v599
    %v601 = vpop.f32.mrf.mxu0
    %602 = vmatprep.mubr.bf16.mxu0 0
    %603 = vmatmul.mubr.bf16.gmra.mxu0 %v337
    %v604 = vpop.f32.mrf.mxu0
    %v605 = vadd.f32 0.0, %v604
    %v606 = vpop.f32.mrf.mxu0
    %v607 = vpop.f32.mrf.mxu0
    %v608 = vadd.f32 0.0, %v607
    %v609 = vpop.f32.mrf.mxu0
    %610 = vmatprep.mubr.bf16.mxu0 0
    %611 = vmatmul.mubr.bf16.gmra.mxu0 %v340
    %v612 = vpop.f32.mrf.mxu0
    %v613 = vadd.f32 0.0, %v612
    %v614 = vpop.f32.mrf.mxu0
    %v615 = vpop.f32.mrf.mxu0
    %v616 = vadd.f32 0.0, %v615
    %v617 = vpop.f32.mrf.mxu0
    %618 = vmatprep.mubr.bf16.mxu0 0
    %619 = vmatmul.mubr.bf16.gmra.mxu0 %v343
    %v620 = vpop.f32.mrf.mxu0
    %v621 = vadd.f32 0.0, %v620
    %v622 = vpop.f32.mrf.mxu0
    %v623 = vpop.f32.mrf.mxu0
    %v624 = vadd.f32 0.0, %v623
    %v625 = vpop.f32.mrf.mxu0
    %626 = vmatprep.mubr.bf16.mxu0 0
    %627 = vmatmul.mubr.bf16.gmra.mxu0 %v346
    %v628 = vpop.f32.mrf.mxu0
    %v629 = vadd.f32 0.0, %v628
    %v630 = vpop.f32.mrf.mxu0
    %v631 = vpop.f32.mrf.mxu0
    %v632 = vadd.f32 0.0, %v631
    %v633 = vpop.f32.mrf.mxu0
    %634 = vmatprep.mubr.bf16.mxu0 0
    %635 = vmatmul.mubr.bf16.gmra.mxu0 %v349
    %v636 = vpop.f32.mrf.mxu0
    %v637 = vadd.f32 0.0, %v636
    %v638 = vpop.f32.mrf.mxu0
    %v639 = vpop.f32.mrf.mxu0
    %v640 = vadd.f32 0.0, %v639
    %v641 = vpop.f32.mrf.mxu0
    %642 = vdwg.mxu0
    %v651 = vunpack.c.l.b16 %v143
    %v652 = vunpack.c.h.b16 %v143
    %v653 = vunpack.c.l.b16 %v144
    %v654 = vunpack.c.l.b16 %v145
    %v655 = vunpack.c.h.b16 %v145
    %v656 = vunpack.c.l.b16 %v146
    %v657 = vunpack.c.l.b16 %v147
    %v658 = vunpack.c.h.b16 %v147
    %v659 = vunpack.c.l.b16 %v148
    %v660 = vunpack.c.l.b16 %v149
    %v661 = vunpack.c.h.b16 %v149
    %v662 = vunpack.c.l.b16 %v150
    %v663 = vpack.c.b16 %v654, %v651
    %v664 = vpack.c.b16 %v655, %v652
    %v665 = vpack.c.b16 %v656, %v653
    %v666 = vpack.c.b16 %v660, %v657
    %v667 = vpack.c.b16 %v661, %v658
    %v668 = vpack.c.b16 %v662, %v659
    %v673 = vsel %vm314, %v131, 0
    %v676 = vsel %vm314, %v132, 0
    %v679 = vsel %vm314, %v133, 0
    %v682 = vsel %vm314, %v134, 0
    %v685 = vsel %vm314, %v135, 0
    %v688 = vsel %vm314, %v136, 0
    %v691 = vsel %vm314, %v137, 0
    %v694 = vsel %vm314, %v138, 0
    %v697 = vsel %vm314, %v139, 0
    %v700 = vsel %vm314, %v140, 0
    %v703 = vsel %vm314, %v141, 0
    %v706 = vsel %vm314, %v142, 0
    %v709 = vsel %vm351, %v666, 0
    %v712 = vsel %vm351, %v667, 0
    %v715 = vsel %vm351, %v668, 0
    %717 = vmatprep.subr.bf16.mxu0 0
    %718 = vmatpush1.bf16.msra.mxu0 0
    %719 = vmatprep.subr.bf16.mxu0 0
    %720 = vmatpush1.bf16.msra.mxu0 0
    %721 = vmatprep.subr.bf16.mxu0 0
    %722 = vmatpush1.bf16.msra.mxu0 0
    %723 = vmatprep.subr.bf16.mxu0 0
    %724 = vmatpush1.bf16.msra.mxu0 0
    %725 = vmatprep.subr.bf16.mxu0 0
    %726 = vmatpush1.bf16.msra.mxu0 0
    %727 = vmatprep.subr.bf16.mxu0 0
    %728 = vmatpush1.bf16.msra.mxu0 0
    %729 = vmatprep.subr.bf16.mxu0 %v712
    %730 = vmatpush1.bf16.msra.mxu0 %v709
    %731 = vmatprep.subr.bf16.mxu0 %v664
    %732 = vmatpush1.bf16.msra.mxu0 %v663
    %733 = vmatprep.subr.bf16.mxu0 0
    %734 = vmatpush2.bf16.msra.mxu0 0
    %735 = vmatprep.subr.bf16.mxu0 0
    %736 = vmatpush2.bf16.msra.mxu0 0
    %737 = vmatprep.subr.bf16.mxu0 0
    %738 = vmatpush2.bf16.msra.mxu0 0
    %739 = vmatprep.subr.bf16.mxu0 0
    %740 = vmatpush2.bf16.msra.mxu0 0
    %741 = vmatprep.subr.bf16.mxu0 0
    %742 = vmatpush2.bf16.msra.mxu0 0
    %743 = vmatprep.subr.bf16.mxu0 0
    %744 = vmatpush2.bf16.msra.mxu0 0
    %745 = vmatprep.subr.bf16.mxu0 0
    %746 = vmatpush2.bf16.msra.mxu0 0
    %747 = vmatprep.subr.bf16.mxu0 0
    %748 = vmatpush2.bf16.msra.mxu0 0
    %749 = vmatprep.mubr.bf16.mxu0 0
    %750 = vmatmul.mubr.bf16.gmra.mxu0 %v673
    %v751 = vpop.f32.mrf.mxu0
    %v752 = vadd.f32 %v396, %v751
    %v753 = vpop.f32.mrf.mxu0
    %v754 = vadd.f32 %v398, %v753
    %v755 = vpop.f32.mrf.mxu0
    %v756 = vadd.f32 %v400, %v755
    %v757 = vpop.f32.mrf.mxu0
    %v758 = vadd.f32 %v402, %v757
    %759 = vmatprep.mubr.bf16.mxu0 0
    %760 = vmatmul.mubr.bf16.gmra.mxu0 %v676
    %v761 = vpop.f32.mrf.mxu0
    %v762 = vadd.f32 %v406, %v761
    %v763 = vpop.f32.mrf.mxu0
    %v764 = vadd.f32 %v408, %v763
    %v765 = vpop.f32.mrf.mxu0
    %v766 = vadd.f32 %v410, %v765
    %v767 = vpop.f32.mrf.mxu0
    %v768 = vadd.f32 %v412, %v767
    %769 = vmatprep.mubr.bf16.mxu0 0
    %770 = vmatmul.mubr.bf16.gmra.mxu0 %v679
    %v771 = vpop.f32.mrf.mxu0
    %v772 = vadd.f32 %v416, %v771
    %v773 = vpop.f32.mrf.mxu0
    %v774 = vadd.f32 %v418, %v773
    %v775 = vpop.f32.mrf.mxu0
    %v776 = vadd.f32 %v420, %v775
    %v777 = vpop.f32.mrf.mxu0
    %v778 = vadd.f32 %v422, %v777
    %779 = vmatprep.mubr.bf16.mxu0 0
    %780 = vmatmul.mubr.bf16.gmra.mxu0 %v682
    %v781 = vpop.f32.mrf.mxu0
    %v782 = vadd.f32 %v426, %v781
    %v783 = vpop.f32.mrf.mxu0
    %v784 = vadd.f32 %v428, %v783
    %v785 = vpop.f32.mrf.mxu0
    %v786 = vadd.f32 %v430, %v785
    %v787 = vpop.f32.mrf.mxu0
    %v788 = vadd.f32 %v432, %v787
    %789 = vmatprep.mubr.bf16.mxu0 0
    %790 = vmatmul.mubr.bf16.gmra.mxu0 %v685
    %v791 = vpop.f32.mrf.mxu0
    %v792 = vadd.f32 %v436, %v791
    %v793 = vpop.f32.mrf.mxu0
    %v794 = vadd.f32 %v438, %v793
    %v795 = vpop.f32.mrf.mxu0
    %v796 = vadd.f32 %v440, %v795
    %v797 = vpop.f32.mrf.mxu0
    %v798 = vadd.f32 %v442, %v797
    %799 = vmatprep.mubr.bf16.mxu0 0
    %800 = vmatmul.mubr.bf16.gmra.mxu0 %v688
    %v801 = vpop.f32.mrf.mxu0
    %v802 = vadd.f32 %v446, %v801
    %v803 = vpop.f32.mrf.mxu0
    %v804 = vadd.f32 %v448, %v803
    %v805 = vpop.f32.mrf.mxu0
    %v806 = vadd.f32 %v450, %v805
    %v807 = vpop.f32.mrf.mxu0
    %v808 = vadd.f32 %v452, %v807
    %809 = vmatprep.mubr.bf16.mxu0 0
    %810 = vmatmul.mubr.bf16.gmra.mxu0 %v691
    %v811 = vpop.f32.mrf.mxu0
    %v812 = vadd.f32 %v456, %v811
    %v813 = vpop.f32.mrf.mxu0
    %v814 = vadd.f32 %v458, %v813
    %v815 = vpop.f32.mrf.mxu0
    %v816 = vadd.f32 %v460, %v815
    %v817 = vpop.f32.mrf.mxu0
    %v818 = vadd.f32 %v462, %v817
    %819 = vmatprep.mubr.bf16.mxu0 0
    %820 = vmatmul.mubr.bf16.gmra.mxu0 %v694
    %v821 = vpop.f32.mrf.mxu0
    %v822 = vadd.f32 %v466, %v821
    %v823 = vpop.f32.mrf.mxu0
    %v824 = vadd.f32 %v468, %v823
    %v825 = vpop.f32.mrf.mxu0
    %v826 = vadd.f32 %v470, %v825
    %v827 = vpop.f32.mrf.mxu0
    %v828 = vadd.f32 %v472, %v827
    %829 = vmatprep.mubr.bf16.mxu0 0
    %830 = vmatmul.mubr.bf16.gmra.mxu0 %v697
    %v831 = vpop.f32.mrf.mxu0
    %v832 = vadd.f32 %v476, %v831
    %v833 = vpop.f32.mrf.mxu0
    %v834 = vadd.f32 %v478, %v833
    %v835 = vpop.f32.mrf.mxu0
    %v836 = vadd.f32 %v480, %v835
    %v837 = vpop.f32.mrf.mxu0
    %v838 = vadd.f32 %v482, %v837
    %839 = vmatprep.mubr.bf16.mxu0 0
    %840 = vmatmul.mubr.bf16.gmra.mxu0 %v700
    %v841 = vpop.f32.mrf.mxu0
    %v842 = vadd.f32 %v486, %v841
    %v843 = vpop.f32.mrf.mxu0
    %v844 = vadd.f32 %v488, %v843
    %v845 = vpop.f32.mrf.mxu0
    %v846 = vadd.f32 %v490, %v845
    %v847 = vpop.f32.mrf.mxu0
    %v848 = vadd.f32 %v492, %v847
    %849 = vmatprep.mubr.bf16.mxu0 0
    %850 = vmatmul.mubr.bf16.gmra.mxu0 %v703
    %v851 = vpop.f32.mrf.mxu0
    %v852 = vadd.f32 %v496, %v851
    %v853 = vpop.f32.mrf.mxu0
    %v854 = vadd.f32 %v498, %v853
    %v855 = vpop.f32.mrf.mxu0
    %v856 = vadd.f32 %v500, %v855
    %v857 = vpop.f32.mrf.mxu0
    %v858 = vadd.f32 %v502, %v857
    %859 = vmatprep.mubr.bf16.mxu0 0
    %860 = vmatmul.mubr.bf16.gmra.mxu0 %v706
    %v861 = vpop.f32.mrf.mxu0
    %v862 = vadd.f32 %v506, %v861
    %v863 = vpop.f32.mrf.mxu0
    %v864 = vadd.f32 %v508, %v863
    %v865 = vpop.f32.mrf.mxu0
    %v866 = vadd.f32 %v510, %v865
    %v867 = vpop.f32.mrf.mxu0
    %v868 = vadd.f32 %v512, %v867
    %869 = vdwg.mxu0
    %870 = vmatprep.subr.bf16.mxu0 0
    %871 = vmatpush1.bf16.msra.mxu0 0
    %872 = vmatprep.subr.bf16.mxu0 0
    %873 = vmatpush1.bf16.msra.mxu0 0
    %874 = vmatprep.subr.bf16.mxu0 0
    %875 = vmatpush1.bf16.msra.mxu0 0
    %876 = vmatprep.subr.bf16.mxu0 0
    %877 = vmatpush1.bf16.msra.mxu0 0
    %878 = vmatprep.subr.bf16.mxu0 0
    %879 = vmatpush1.bf16.msra.mxu0 0
    %880 = vmatprep.subr.bf16.mxu0 0
    %881 = vmatpush1.bf16.msra.mxu0 0
    %882 = vmatprep.subr.bf16.mxu0 0
    %883 = vmatpush1.bf16.msra.mxu0 %v715
    %884 = vmatprep.subr.bf16.mxu0 0
    %885 = vmatpush1.bf16.msra.mxu0 %v665
    %886 = vmatprep.subr.bf16.mxu0 0
    %887 = vmatpush2.bf16.msra.mxu0 0
    %888 = vmatprep.subr.bf16.mxu0 0
    %889 = vmatpush2.bf16.msra.mxu0 0
    %890 = vmatprep.subr.bf16.mxu0 0
    %891 = vmatpush2.bf16.msra.mxu0 0
    %892 = vmatprep.subr.bf16.mxu0 0
    %893 = vmatpush2.bf16.msra.mxu0 0
    %894 = vmatprep.subr.bf16.mxu0 0
    %895 = vmatpush2.bf16.msra.mxu0 0
    %896 = vmatprep.subr.bf16.mxu0 0
    %897 = vmatpush2.bf16.msra.mxu0 0
    %898 = vmatprep.subr.bf16.mxu0 0
    %899 = vmatpush2.bf16.msra.mxu0 0
    %900 = vmatprep.subr.bf16.mxu0 0
    %901 = vmatpush2.bf16.msra.mxu0 0
    %902 = vmatprep.mubr.bf16.mxu0 0
    %903 = vmatmul.mubr.bf16.gmra.mxu0 %v673
    %v904 = vpop.f32.mrf.mxu0
    %v905 = vadd.f32 %v549, %v904
    %v906 = vpop.f32.mrf.mxu0
    %v907 = vpop.f32.mrf.mxu0
    %v908 = vadd.f32 %v552, %v907
    %v909 = vpop.f32.mrf.mxu0
    %910 = vmatprep.mubr.bf16.mxu0 0
    %911 = vmatmul.mubr.bf16.gmra.mxu0 %v676
    %v912 = vpop.f32.mrf.mxu0
    %v913 = vadd.f32 %v557, %v912
    %v914 = vpop.f32.mrf.mxu0
    %v915 = vpop.f32.mrf.mxu0
    %v916 = vadd.f32 %v560, %v915
    %v917 = vpop.f32.mrf.mxu0
    %918 = vmatprep.mubr.bf16.mxu0 0
    %919 = vmatmul.mubr.bf16.gmra.mxu0 %v679
    %v920 = vpop.f32.mrf.mxu0
    %v921 = vadd.f32 %v565, %v920
    %v922 = vpop.f32.mrf.mxu0
    %v923 = vpop.f32.mrf.mxu0
    %v924 = vadd.f32 %v568, %v923
    %v925 = vpop.f32.mrf.mxu0
    %926 = vmatprep.mubr.bf16.mxu0 0
    %927 = vmatmul.mubr.bf16.gmra.mxu0 %v682
    %v928 = vpop.f32.mrf.mxu0
    %v929 = vadd.f32 %v573, %v928
    %v930 = vpop.f32.mrf.mxu0
    %v931 = vpop.f32.mrf.mxu0
    %v932 = vadd.f32 %v576, %v931
    %v933 = vpop.f32.mrf.mxu0
    %934 = vmatprep.mubr.bf16.mxu0 0
    %935 = vmatmul.mubr.bf16.gmra.mxu0 %v685
    %v936 = vpop.f32.mrf.mxu0
    %v937 = vadd.f32 %v581, %v936
    %v938 = vpop.f32.mrf.mxu0
    %v939 = vpop.f32.mrf.mxu0
    %v940 = vadd.f32 %v584, %v939
    %v941 = vpop.f32.mrf.mxu0
    %942 = vmatprep.mubr.bf16.mxu0 0
    %943 = vmatmul.mubr.bf16.gmra.mxu0 %v688
    %v944 = vpop.f32.mrf.mxu0
    %v945 = vadd.f32 %v589, %v944
    %v946 = vpop.f32.mrf.mxu0
    %v947 = vpop.f32.mrf.mxu0
    %v948 = vadd.f32 %v592, %v947
    %v949 = vpop.f32.mrf.mxu0
    %950 = vmatprep.mubr.bf16.mxu0 0
    %951 = vmatmul.mubr.bf16.gmra.mxu0 %v691
    %v952 = vpop.f32.mrf.mxu0
    %v953 = vadd.f32 %v597, %v952
    %v954 = vpop.f32.mrf.mxu0
    %v955 = vpop.f32.mrf.mxu0
    %v956 = vadd.f32 %v600, %v955
    %v957 = vpop.f32.mrf.mxu0
    %958 = vmatprep.mubr.bf16.mxu0 0
    %959 = vmatmul.mubr.bf16.gmra.mxu0 %v694
    %v960 = vpop.f32.mrf.mxu0
    %v961 = vadd.f32 %v605, %v960
    %v962 = vpop.f32.mrf.mxu0
    %v963 = vpop.f32.mrf.mxu0
    %v964 = vadd.f32 %v608, %v963
    %v965 = vpop.f32.mrf.mxu0
    %966 = vmatprep.mubr.bf16.mxu0 0
    %967 = vmatmul.mubr.bf16.gmra.mxu0 %v697
    %v968 = vpop.f32.mrf.mxu0
    %v969 = vadd.f32 %v613, %v968
    %v970 = vpop.f32.mrf.mxu0
    %v971 = vpop.f32.mrf.mxu0
    %v972 = vadd.f32 %v616, %v971
    %v973 = vpop.f32.mrf.mxu0
    %974 = vmatprep.mubr.bf16.mxu0 0
    %975 = vmatmul.mubr.bf16.gmra.mxu0 %v700
    %v976 = vpop.f32.mrf.mxu0
    %v977 = vadd.f32 %v621, %v976
    %v978 = vpop.f32.mrf.mxu0
    %v979 = vpop.f32.mrf.mxu0
    %v980 = vadd.f32 %v624, %v979
    %v981 = vpop.f32.mrf.mxu0
    %982 = vmatprep.mubr.bf16.mxu0 0
    %983 = vmatmul.mubr.bf16.gmra.mxu0 %v703
    %v984 = vpop.f32.mrf.mxu0
    %v985 = vadd.f32 %v629, %v984
    %v986 = vpop.f32.mrf.mxu0
    %v987 = vpop.f32.mrf.mxu0
    %v988 = vadd.f32 %v632, %v987
    %v989 = vpop.f32.mrf.mxu0
    %990 = vmatprep.mubr.bf16.mxu0 0
    %991 = vmatmul.mubr.bf16.gmra.mxu0 %v706
    %v992 = vpop.f32.mrf.mxu0
    %v993 = vadd.f32 %v637, %v992
    %v994 = vpop.f32.mrf.mxu0
    %v995 = vpop.f32.mrf.mxu0
    %v996 = vadd.f32 %v640, %v995
    %v997 = vpop.f32.mrf.mxu0
    %998 = vdwg.mxu0
    %v999 = vrot.slane %v99, 2
    %v1000 = vrot.slane %v100, 2
    %v1001 = vsel %vm351, %v999, %v1000
    %v1002 = vrot.slane %v101, 2
    %v1003 = vsel %vm351, %v1000, %v1002
    %v1004 = vrot.slane %v102, 2
    %v1005 = vsel %vm351, %v1002, %v1004
    %v1006 = vrot.slane %v103, 2
    %v1007 = vrot.slane %v104, 2
    %v1008 = vsel %vm351, %v1006, %v1007
    %v1009 = vrot.slane %v105, 2
    %v1010 = vsel %vm351, %v1007, %v1009
    %v1011 = vrot.slane %v106, 2
    %v1012 = vsel %vm351, %v1009, %v1011
    %v1013 = vrot.slane %v107, 2
    %v1014 = vrot.slane %v108, 2
    %v1015 = vsel %vm351, %v1013, %v1014
    %v1016 = vrot.slane %v109, 2
    %v1017 = vsel %vm351, %v1014, %v1016
    %v1018 = vrot.slane %v110, 2
    %v1019 = vsel %vm351, %v1016, %v1018
    %v1020 = vrot.slane %v111, 2
    %v1021 = vrot.slane %v112, 2
    %v1022 = vsel %vm351, %v1020, %v1021
    %v1023 = vrot.slane %v113, 2
    %v1024 = vsel %vm351, %v1021, %v1023
    %v1025 = vrot.slane %v114, 2
    %v1026 = vsel %vm351, %v1023, %v1025
    %v1027 = vrot.slane %v115, 2
    %v1028 = vrot.slane %v116, 2
    %v1029 = vsel %vm351, %v1027, %v1028
    %v1030 = vrot.slane %v117, 2
    %v1031 = vsel %vm351, %v1028, %v1030
    %v1032 = vrot.slane %v118, 2
    %v1033 = vsel %vm351, %v1030, %v1032
    %v1034 = vrot.slane %v119, 2
    %v1035 = vrot.slane %v120, 2
    %v1036 = vsel %vm351, %v1034, %v1035
    %v1037 = vrot.slane %v121, 2
    %v1038 = vsel %vm351, %v1035, %v1037
    %v1039 = vrot.slane %v122, 2
    %v1040 = vsel %vm351, %v1037, %v1039
    %v1041 = vrot.slane %v123, 2
    %v1042 = vrot.slane %v124, 2
    %v1043 = vsel %vm351, %v1041, %v1042
    %v1044 = vrot.slane %v125, 2
    %v1045 = vsel %vm351, %v1042, %v1044
    %v1046 = vrot.slane %v126, 2
    %v1047 = vsel %vm351, %v1044, %v1046
    %v1048 = vrot.slane %v127, 2
    %v1049 = vrot.slane %v128, 2
    %v1050 = vsel %vm351, %v1048, %v1049
    %v1051 = vrot.slane %v129, 2
    %v1052 = vsel %vm351, %v1049, %v1051
    %v1053 = vrot.slane %v130, 2
    %v1054 = vsel %vm351, %v1051, %v1053
    %v1079 = vpack.c.bf16 %v1003, %v1001
    %v1080 = vpack.c.bf16 %v1008, %v1005
    %v1081 = vpack.c.bf16 %v1012, %v1010
    %v1082 = vpack.c.bf16 %v1017, %v1015
    %v1083 = vpack.c.bf16 %v1022, %v1019
    %v1084 = vpack.c.bf16 %v1026, %v1024
    %v1085 = vpack.c.bf16 %v1031, %v1029
    %v1086 = vpack.c.bf16 %v1036, %v1033
    %v1087 = vpack.c.bf16 %v1040, %v1038
    %v1088 = vpack.c.bf16 %v1045, %v1043
    %v1089 = vpack.c.bf16 %v1050, %v1047
    %v1090 = vpack.c.bf16 %v1054, %v1052
    %s1091 = scalar_lea.vmem %s1, 96
    %v1092 = vld [vmem:[%s1091] sm:$0xff]
    %v1093 = vld [vmem:[%s1091 + $0x8] sm:$0xf]
    %v1094 = vld [vmem:[%s1091 + $0xc] sm:$0xff]
    %v1095 = vld [vmem:[%s1091 + $0x14] sm:$0xf]
    %v1096 = vld [vmem:[%s1091 + $0x18] sm:$0xff]
    %v1097 = vld [vmem:[%s1091 + $0x20] sm:$0xf]
    %v1098 = vld [vmem:[%s1091 + $0x24] sm:$0x33]
    %v1099 = vld [vmem:[%s1091 + $0x2c] sm:$0x3]
    %v1108 = vunpack.c.l.b16 %v1092
    %v1109 = vunpack.c.h.b16 %v1092
    %v1110 = vunpack.c.l.b16 %v1093
    %v1111 = vunpack.c.l.b16 %v1094
    %v1112 = vunpack.c.h.b16 %v1094
    %v1113 = vunpack.c.l.b16 %v1095
    %v1114 = vunpack.c.l.b16 %v1096
    %v1115 = vunpack.c.h.b16 %v1096
    %v1116 = vunpack.c.l.b16 %v1097
    %v1117 = vunpack.c.l.b16 %v1098
    %v1118 = vunpack.c.h.b16 %v1098
    %v1119 = vunpack.c.l.b16 %v1099
    %v1120 = vpack.c.b16 %v1111, %v1108
    %v1121 = vpack.c.b16 %v1112, %v1109
    %v1122 = vpack.c.b16 %v1113, %v1110
    %v1123 = vpack.c.b16 %v1117, %v1114
    %v1124 = vpack.c.b16 %v1118, %v1115
    %v1125 = vpack.c.b16 %v1119, %v1116
    %v1130 = vsel %vm314, %v1079, 0
    %v1133 = vsel %vm314, %v1080, 0
    %v1136 = vsel %vm314, %v1081, 0
    %v1139 = vsel %vm314, %v1082, 0
    %v1142 = vsel %vm314, %v1083, 0
    %v1145 = vsel %vm314, %v1084, 0
    %v1148 = vsel %vm314, %v1085, 0
    %v1151 = vsel %vm314, %v1086, 0
    %v1154 = vsel %vm314, %v1087, 0
    %v1157 = vsel %vm314, %v1088, 0
    %v1160 = vsel %vm314, %v1089, 0
    %v1163 = vsel %vm314, %v1090, 0
    %v1166 = vsel %vm351, %v1123, 0
    %v1169 = vsel %vm351, %v1124, 0
    %v1172 = vsel %vm351, %v1125, 0
    %1174 = vmatprep.subr.bf16.mxu0 0
    %1175 = vmatpush1.bf16.msra.mxu0 0
    %1176 = vmatprep.subr.bf16.mxu0 0
    %1177 = vmatpush1.bf16.msra.mxu0 0
    %1178 = vmatprep.subr.bf16.mxu0 0
    %1179 = vmatpush1.bf16.msra.mxu0 0
    %1180 = vmatprep.subr.bf16.mxu0 0
    %1181 = vmatpush1.bf16.msra.mxu0 0
    %1182 = vmatprep.subr.bf16.mxu0 0
    %1183 = vmatpush1.bf16.msra.mxu0 0
    %1184 = vmatprep.subr.bf16.mxu0 0
    %1185 = vmatpush1.bf16.msra.mxu0 0
    %1186 = vmatprep.subr.bf16.mxu0 %v1169
    %1187 = vmatpush1.bf16.msra.mxu0 %v1166
    %1188 = vmatprep.subr.bf16.mxu0 %v1121
    %1189 = vmatpush1.bf16.msra.mxu0 %v1120
    %1190 = vmatprep.subr.bf16.mxu0 0
    %1191 = vmatpush2.bf16.msra.mxu0 0
    %1192 = vmatprep.subr.bf16.mxu0 0
    %1193 = vmatpush2.bf16.msra.mxu0 0
    %1194 = vmatprep.subr.bf16.mxu0 0
    %1195 = vmatpush2.bf16.msra.mxu0 0
    %1196 = vmatprep.subr.bf16.mxu0 0
    %1197 = vmatpush2.bf16.msra.mxu0 0
    %1198 = vmatprep.subr.bf16.mxu0 0
    %1199 = vmatpush2.bf16.msra.mxu0 0
    %1200 = vmatprep.subr.bf16.mxu0 0
    %1201 = vmatpush2.bf16.msra.mxu0 0
    %1202 = vmatprep.subr.bf16.mxu0 0
    %1203 = vmatpush2.bf16.msra.mxu0 0
    %1204 = vmatprep.subr.bf16.mxu0 0
    %1205 = vmatpush2.bf16.msra.mxu0 0
    %1206 = vmatprep.mubr.bf16.mxu0 0
    %1207 = vmatmul.mubr.bf16.gmra.mxu0 %v1130
    %v1208 = vpop.f32.mrf.mxu0
    %v1209 = vadd.f32 0.0, %v1208
    %v1210 = vpop.f32.mrf.mxu0
    %v1211 = vadd.f32 0.0, %v1210
    %v1212 = vpop.f32.mrf.mxu0
    %v1213 = vadd.f32 0.0, %v1212
    %v1214 = vpop.f32.mrf.mxu0
    %v1215 = vadd.f32 0.0, %v1214
    %1216 = vmatprep.mubr.bf16.mxu0 0
    %1217 = vmatmul.mubr.bf16.gmra.mxu0 %v1133
    %v1218 = vpop.f32.mrf.mxu0
    %v1219 = vadd.f32 0.0, %v1218
    %v1220 = vpop.f32.mrf.mxu0
    %v1221 = vadd.f32 0.0, %v1220
    %v1222 = vpop.f32.mrf.mxu0
    %v1223 = vadd.f32 0.0, %v1222
    %v1224 = vpop.f32.mrf.mxu0
    %v1225 = vadd.f32 0.0, %v1224
    %1226 = vmatprep.mubr.bf16.mxu0 0
    %1227 = vmatmul.mubr.bf16.gmra.mxu0 %v1136
    %v1228 = vpop.f32.mrf.mxu0
    %v1229 = vadd.f32 0.0, %v1228
    %v1230 = vpop.f32.mrf.mxu0
    %v1231 = vadd.f32 0.0, %v1230
    %v1232 = vpop.f32.mrf.mxu0
    %v1233 = vadd.f32 0.0, %v1232
    %v1234 = vpop.f32.mrf.mxu0
    %v1235 = vadd.f32 0.0, %v1234
    %1236 = vmatprep.mubr.bf16.mxu0 0
    %1237 = vmatmul.mubr.bf16.gmra.mxu0 %v1139
    %v1238 = vpop.f32.mrf.mxu0
    %v1239 = vadd.f32 0.0, %v1238
    %v1240 = vpop.f32.mrf.mxu0
    %v1241 = vadd.f32 0.0, %v1240
    %v1242 = vpop.f32.mrf.mxu0
    %v1243 = vadd.f32 0.0, %v1242
    %v1244 = vpop.f32.mrf.mxu0
    %v1245 = vadd.f32 0.0, %v1244
    %1246 = vmatprep.mubr.bf16.mxu0 0
    %1247 = vmatmul.mubr.bf16.gmra.mxu0 %v1142
    %v1248 = vpop.f32.mrf.mxu0
    %v1249 = vadd.f32 0.0, %v1248
    %v1250 = vpop.f32.mrf.mxu0
    %v1251 = vadd.f32 0.0, %v1250
    %v1252 = vpop.f32.mrf.mxu0
    %v1253 = vadd.f32 0.0, %v1252
    %v1254 = vpop.f32.mrf.mxu0
    %v1255 = vadd.f32 0.0, %v1254
    %1256 = vmatprep.mubr.bf16.mxu0 0
    %1257 = vmatmul.mubr.bf16.gmra.mxu0 %v1145
    %v1258 = vpop.f32.mrf.mxu0
    %v1259 = vadd.f32 0.0, %v1258
    %v1260 = vpop.f32.mrf.mxu0
    %v1261 = vadd.f32 0.0, %v1260
    %v1262 = vpop.f32.mrf.mxu0
    %v1263 = vadd.f32 0.0, %v1262
    %v1264 = vpop.f32.mrf.mxu0
    %v1265 = vadd.f32 0.0, %v1264
    %1266 = vmatprep.mubr.bf16.mxu0 0
    %1267 = vmatmul.mubr.bf16.gmra.mxu0 %v1148
    %v1268 = vpop.f32.mrf.mxu0
    %v1269 = vadd.f32 0.0, %v1268
    %v1270 = vpop.f32.mrf.mxu0
    %v1271 = vadd.f32 0.0, %v1270
    %v1272 = vpop.f32.mrf.mxu0
    %v1273 = vadd.f32 0.0, %v1272
    %v1274 = vpop.f32.mrf.mxu0
    %v1275 = vadd.f32 0.0, %v1274
    %1276 = vmatprep.mubr.bf16.mxu0 0
    %1277 = vmatmul.mubr.bf16.gmra.mxu0 %v1151
    %v1278 = vpop.f32.mrf.mxu0
    %v1279 = vadd.f32 0.0, %v1278
    %v1280 = vpop.f32.mrf.mxu0
    %v1281 = vadd.f32 0.0, %v1280
    %v1282 = vpop.f32.mrf.mxu0
    %v1283 = vadd.f32 0.0, %v1282
    %v1284 = vpop.f32.mrf.mxu0
    %v1285 = vadd.f32 0.0, %v1284
    %1286 = vmatprep.mubr.bf16.mxu0 0
    %1287 = vmatmul.mubr.bf16.gmra.mxu0 %v1154
    %v1288 = vpop.f32.mrf.mxu0
    %v1289 = vadd.f32 0.0, %v1288
    %v1290 = vpop.f32.mrf.mxu0
    %v1291 = vadd.f32 0.0, %v1290
    %v1292 = vpop.f32.mrf.mxu0
    %v1293 = vadd.f32 0.0, %v1292
    %v1294 = vpop.f32.mrf.mxu0
    %v1295 = vadd.f32 0.0, %v1294
    %1296 = vmatprep.mubr.bf16.mxu0 0
    %1297 = vmatmul.mubr.bf16.gmra.mxu0 %v1157
    %v1298 = vpop.f32.mrf.mxu0
    %v1299 = vadd.f32 0.0, %v1298
    %v1300 = vpop.f32.mrf.mxu0
    %v1301 = vadd.f32 0.0, %v1300
    %v1302 = vpop.f32.mrf.mxu0
    %v1303 = vadd.f32 0.0, %v1302
    %v1304 = vpop.f32.mrf.mxu0
    %v1305 = vadd.f32 0.0, %v1304
    %1306 = vmatprep.mubr.bf16.mxu0 0
    %1307 = vmatmul.mubr.bf16.gmra.mxu0 %v1160
    %v1308 = vpop.f32.mrf.mxu0
    %v1309 = vadd.f32 0.0, %v1308
    %v1310 = vpop.f32.mrf.mxu0
    %v1311 = vadd.f32 0.0, %v1310
    %v1312 = vpop.f32.mrf.mxu0
    %v1313 = vadd.f32 0.0, %v1312
    %v1314 = vpop.f32.mrf.mxu0
    %v1315 = vadd.f32 0.0, %v1314
    %1316 = vmatprep.mubr.bf16.mxu0 0
    %1317 = vmatmul.mubr.bf16.gmra.mxu0 %v1163
    %v1318 = vpop.f32.mrf.mxu0
    %v1319 = vadd.f32 0.0, %v1318
    %v1320 = vpop.f32.mrf.mxu0
    %v1321 = vadd.f32 0.0, %v1320
    %v1322 = vpop.f32.mrf.mxu0
    %v1323 = vadd.f32 0.0, %v1322
    %v1324 = vpop.f32.mrf.mxu0
    %v1325 = vadd.f32 0.0, %v1324
    %1326 = vdwg.mxu0
    %1327 = vmatprep.subr.bf16.mxu0 0
    %1328 = vmatpush1.bf16.msra.mxu0 0
    %1329 = vmatprep.subr.bf16.mxu0 0
    %1330 = vmatpush1.bf16.msra.mxu0 0
    %1331 = vmatprep.subr.bf16.mxu0 0
    %1332 = vmatpush1.bf16.msra.mxu0 0
    %1333 = vmatprep.subr.bf16.mxu0 0
    %1334 = vmatpush1.bf16.msra.mxu0 0
    %1335 = vmatprep.subr.bf16.mxu0 0
    %1336 = vmatpush1.bf16.msra.mxu0 0
    %1337 = vmatprep.subr.bf16.mxu0 0
    %1338 = vmatpush1.bf16.msra.mxu0 0
    %1339 = vmatprep.subr.bf16.mxu0 0
    %1340 = vmatpush1.bf16.msra.mxu0 %v1172
    %1341 = vmatprep.subr.bf16.mxu0 0
    %1342 = vmatpush1.bf16.msra.mxu0 %v1122
    %1343 = vmatprep.subr.bf16.mxu0 0
    %1344 = vmatpush2.bf16.msra.mxu0 0
    %1345 = vmatprep.subr.bf16.mxu0 0
    %1346 = vmatpush2.bf16.msra.mxu0 0
    %1347 = vmatprep.subr.bf16.mxu0 0
    %1348 = vmatpush2.bf16.msra.mxu0 0
    %1349 = vmatprep.subr.bf16.mxu0 0
    %1350 = vmatpush2.bf16.msra.mxu0 0
    %1351 = vmatprep.subr.bf16.mxu0 0
    %1352 = vmatpush2.bf16.msra.mxu0 0
    %1353 = vmatprep.subr.bf16.mxu0 0
    %1354 = vmatpush2.bf16.msra.mxu0 0
    %1355 = vmatprep.subr.bf16.mxu0 0
    %1356 = vmatpush2.bf16.msra.mxu0 0
    %1357 = vmatprep.subr.bf16.mxu0 0
    %1358 = vmatpush2.bf16.msra.mxu0 0
    %1359 = vmatprep.mubr.bf16.mxu0 0
    %1360 = vmatmul.mubr.bf16.gmra.mxu0 %v1130
    %v1361 = vpop.f32.mrf.mxu0
    %v1362 = vadd.f32 0.0, %v1361
    %v1363 = vpop.f32.mrf.mxu0
    %v1364 = vpop.f32.mrf.mxu0
    %v1365 = vadd.f32 0.0, %v1364
    %v1366 = vpop.f32.mrf.mxu0
    %1367 = vmatprep.mubr.bf16.mxu0 0
    %1368 = vmatmul.mubr.bf16.gmra.mxu0 %v1133
    %v1369 = vpop.f32.mrf.mxu0
    %v1370 = vadd.f32 0.0, %v1369
    %v1371 = vpop.f32.mrf.mxu0
    %v1372 = vpop.f32.mrf.mxu0
    %v1373 = vadd.f32 0.0, %v1372
    %v1374 = vpop.f32.mrf.mxu0
    %1375 = vmatprep.mubr.bf16.mxu0 0
    %1376 = vmatmul.mubr.bf16.gmra.mxu0 %v1136
    %v1377 = vpop.f32.mrf.mxu0
    %v1378 = vadd.f32 0.0, %v1377
    %v1379 = vpop.f32.mrf.mxu0
    %v1380 = vpop.f32.mrf.mxu0
    %v1381 = vadd.f32 0.0, %v1380
    %v1382 = vpop.f32.mrf.mxu0
    %1383 = vmatprep.mubr.bf16.mxu0 0
    %1384 = vmatmul.mubr.bf16.gmra.mxu0 %v1139
    %v1385 = vpop.f32.mrf.mxu0
    %v1386 = vadd.f32 0.0, %v1385
    %v1387 = vpop.f32.mrf.mxu0
    %v1388 = vpop.f32.mrf.mxu0
    %v1389 = vadd.f32 0.0, %v1388
    %v1390 = vpop.f32.mrf.mxu0
    %1391 = vmatprep.mubr.bf16.mxu0 0
    %1392 = vmatmul.mubr.bf16.gmra.mxu0 %v1142
    %v1393 = vpop.f32.mrf.mxu0
    %v1394 = vadd.f32 0.0, %v1393
    %v1395 = vpop.f32.mrf.mxu0
    %v1396 = vpop.f32.mrf.mxu0
    %v1397 = vadd.f32 0.0, %v1396
    %v1398 = vpop.f32.mrf.mxu0
    %1399 = vmatprep.mubr.bf16.mxu0 0
    %1400 = vmatmul.mubr.bf16.gmra.mxu0 %v1145
    %v1401 = vpop.f32.mrf.mxu0
    %v1402 = vadd.f32 0.0, %v1401
    %v1403 = vpop.f32.mrf.mxu0
    %v1404 = vpop.f32.mrf.mxu0
    %v1405 = vadd.f32 0.0, %v1404
    %v1406 = vpop.f32.mrf.mxu0
    %1407 = vmatprep.mubr.bf16.mxu0 0
    %1408 = vmatmul.mubr.bf16.gmra.mxu0 %v1148
    %v1409 = vpop.f32.mrf.mxu0
    %v1410 = vadd.f32 0.0, %v1409
    %v1411 = vpop.f32.mrf.mxu0
    %v1412 = vpop.f32.mrf.mxu0
    %v1413 = vadd.f32 0.0, %v1412
    %v1414 = vpop.f32.mrf.mxu0
    %1415 = vmatprep.mubr.bf16.mxu0 0
    %1416 = vmatmul.mubr.bf16.gmra.mxu0 %v1151
    %v1417 = vpop.f32.mrf.mxu0
    %v1418 = vadd.f32 0.0, %v1417
    %v1419 = vpop.f32.mrf.mxu0
    %v1420 = vpop.f32.mrf.mxu0
    %v1421 = vadd.f32 0.0, %v1420
    %v1422 = vpop.f32.mrf.mxu0
    %1423 = vmatprep.mubr.bf16.mxu0 0
    %1424 = vmatmul.mubr.bf16.gmra.mxu0 %v1154
    %v1425 = vpop.f32.mrf.mxu0
    %v1426 = vadd.f32 0.0, %v1425
    %v1427 = vpop.f32.mrf.mxu0
    %v1428 = vpop.f32.mrf.mxu0
    %v1429 = vadd.f32 0.0, %v1428
    %v1430 = vpop.f32.mrf.mxu0
    %1431 = vmatprep.mubr.bf16.mxu0 0
    %1432 = vmatmul.mubr.bf16.gmra.mxu0 %v1157
    %v1433 = vpop.f32.mrf.mxu0
    %v1434 = vadd.f32 0.0, %v1433
    %v1435 = vpop.f32.mrf.mxu0
    %v1436 = vpop.f32.mrf.mxu0
    %v1437 = vadd.f32 0.0, %v1436
    %v1438 = vpop.f32.mrf.mxu0
    %1439 = vmatprep.mubr.bf16.mxu0 0
    %1440 = vmatmul.mubr.bf16.gmra.mxu0 %v1160
    %v1441 = vpop.f32.mrf.mxu0
    %v1442 = vadd.f32 0.0, %v1441
    %v1443 = vpop.f32.mrf.mxu0
    %v1444 = vpop.f32.mrf.mxu0
    %v1445 = vadd.f32 0.0, %v1444
    %v1446 = vpop.f32.mrf.mxu0
    %1447 = vmatprep.mubr.bf16.mxu0 0
    %1448 = vmatmul.mubr.bf16.gmra.mxu0 %v1163
    %v1449 = vpop.f32.mrf.mxu0
    %v1450 = vadd.f32 0.0, %v1449
    %v1451 = vpop.f32.mrf.mxu0
    %v1452 = vpop.f32.mrf.mxu0
    %v1453 = vadd.f32 0.0, %v1452
    %v1454 = vpop.f32.mrf.mxu0
    %1455 = vdwg.mxu0
    %v1456 = vadd.f32 %v752, %v1209
    %v1457 = vadd.f32 %v754, %v1211
    %v1458 = vadd.f32 %v905, %v1362
    %v1459 = vadd.f32 %v756, %v1213
    %v1460 = vadd.f32 %v758, %v1215
    %v1461 = vadd.f32 %v908, %v1365
    %v1462 = vadd.f32 %v762, %v1219
    %v1463 = vadd.f32 %v764, %v1221
    %v1464 = vadd.f32 %v913, %v1370
    %v1465 = vadd.f32 %v766, %v1223
    %v1466 = vadd.f32 %v768, %v1225
    %v1467 = vadd.f32 %v916, %v1373
    %v1468 = vadd.f32 %v772, %v1229
    %v1469 = vadd.f32 %v774, %v1231
    %v1470 = vadd.f32 %v921, %v1378
    %v1471 = vadd.f32 %v776, %v1233
    %v1472 = vadd.f32 %v778, %v1235
    %v1473 = vadd.f32 %v924, %v1381
    %v1474 = vadd.f32 %v782, %v1239
    %v1475 = vadd.f32 %v784, %v1241
    %v1476 = vadd.f32 %v929, %v1386
    %v1477 = vadd.f32 %v786, %v1243
    %v1478 = vadd.f32 %v788, %v1245
    %v1479 = vadd.f32 %v932, %v1389
    %v1480 = vadd.f32 %v792, %v1249
    %v1481 = vadd.f32 %v794, %v1251
    %v1482 = vadd.f32 %v937, %v1394
    %v1483 = vadd.f32 %v796, %v1253
    %v1484 = vadd.f32 %v798, %v1255
    %v1485 = vadd.f32 %v940, %v1397
    %v1486 = vadd.f32 %v802, %v1259
    %v1487 = vadd.f32 %v804, %v1261
    %v1488 = vadd.f32 %v945, %v1402
    %v1489 = vadd.f32 %v806, %v1263
    %v1490 = vadd.f32 %v808, %v1265
    %v1491 = vadd.f32 %v948, %v1405
    %v1492 = vadd.f32 %v812, %v1269
    %v1493 = vadd.f32 %v814, %v1271
    %v1494 = vadd.f32 %v953, %v1410
    %v1495 = vadd.f32 %v816, %v1273
    %v1496 = vadd.f32 %v818, %v1275
    %v1497 = vadd.f32 %v956, %v1413
    %v1498 = vadd.f32 %v822, %v1279
    %v1499 = vadd.f32 %v824, %v1281
    %v1500 = vadd.f32 %v961, %v1418
    %v1501 = vadd.f32 %v826, %v1283
    %v1502 = vadd.f32 %v828, %v1285
    %v1503 = vadd.f32 %v964, %v1421
    %v1504 = vadd.f32 %v832, %v1289
    %v1505 = vadd.f32 %v834, %v1291
    %v1506 = vadd.f32 %v969, %v1426
    %v1507 = vadd.f32 %v836, %v1293
    %v1508 = vadd.f32 %v838, %v1295
    %v1509 = vadd.f32 %v972, %v1429
    %v1510 = vadd.f32 %v842, %v1299
    %v1511 = vadd.f32 %v844, %v1301
    %v1512 = vadd.f32 %v977, %v1434
    %v1513 = vadd.f32 %v846, %v1303
    %v1514 = vadd.f32 %v848, %v1305
    %v1515 = vadd.f32 %v980, %v1437
    %v1516 = vadd.f32 %v852, %v1309
    %v1517 = vadd.f32 %v854, %v1311
    %v1518 = vadd.f32 %v985, %v1442
    %v1519 = vadd.f32 %v856, %v1313
    %v1520 = vadd.f32 %v858, %v1315
    %v1521 = vadd.f32 %v988, %v1445
    %v1522 = vadd.f32 %v862, %v1319
    %v1523 = vadd.f32 %v864, %v1321
    %v1524 = vadd.f32 %v993, %v1450
    %v1525 = vadd.f32 %v866, %v1323
    %v1526 = vadd.f32 %v868, %v1325
    %v1527 = vadd.f32 %v996, %v1453
    %vm1528 = vcmask 1044480
    %v1529 = vrot.slane %v99, 3
    %v1530 = vrot.slane %v100, 3
    %v1531 = vsel %vm1528, %v1529, %v1530
    %v1532 = vrot.slane %v101, 3
    %v1533 = vsel %vm1528, %v1530, %v1532
    %v1534 = vrot.slane %v102, 3
    %v1535 = vsel %vm1528, %v1532, %v1534
    %v1536 = vrot.slane %v103, 3
    %v1537 = vrot.slane %v104, 3
    %v1538 = vsel %vm1528, %v1536, %v1537
    %v1539 = vrot.slane %v105, 3
    %v1540 = vsel %vm1528, %v1537, %v1539
    %v1541 = vrot.slane %v106, 3
    %v1542 = vsel %vm1528, %v1539, %v1541
    %v1543 = vrot.slane %v107, 3
    %v1544 = vrot.slane %v108, 3
    %v1545 = vsel %vm1528, %v1543, %v1544
    %v1546 = vrot.slane %v109, 3
    %v1547 = vsel %vm1528, %v1544, %v1546
    %v1548 = vrot.slane %v110, 3
    %v1549 = vsel %vm1528, %v1546, %v1548
    %v1550 = vrot.slane %v111, 3
    %v1551 = vrot.slane %v112, 3
    %v1552 = vsel %vm1528, %v1550, %v1551
    %v1553 = vrot.slane %v113, 3
    %v1554 = vsel %vm1528, %v1551, %v1553
    %v1555 = vrot.slane %v114, 3
    %v1556 = vsel %vm1528, %v1553, %v1555
    %v1557 = vrot.slane %v115, 3
    %v1558 = vrot.slane %v116, 3
    %v1559 = vsel %vm1528, %v1557, %v1558
    %v1560 = vrot.slane %v117, 3
    %v1561 = vsel %vm1528, %v1558, %v1560
    %v1562 = vrot.slane %v118, 3
    %v1563 = vsel %vm1528, %v1560, %v1562
    %v1564 = vrot.slane %v119, 3
    %v1565 = vrot.slane %v120, 3
    %v1566 = vsel %vm1528, %v1564, %v1565
    %v1567 = vrot.slane %v121, 3
    %v1568 = vsel %vm1528, %v1565, %v1567
    %v1569 = vrot.slane %v122, 3
    %v1570 = vsel %vm1528, %v1567, %v1569
    %v1571 = vrot.slane %v123, 3
    %v1572 = vrot.slane %v124, 3
    %v1573 = vsel %vm1528, %v1571, %v1572
    %v1574 = vrot.slane %v125, 3
    %v1575 = vsel %vm1528, %v1572, %v1574
    %v1576 = vrot.slane %v126, 3
    %v1577 = vsel %vm1528, %v1574, %v1576
    %v1578 = vrot.slane %v127, 3
    %v1579 = vrot.slane %v128, 3
    %v1580 = vsel %vm1528, %v1578, %v1579
    %v1581 = vrot.slane %v129, 3
    %v1582 = vsel %vm1528, %v1579, %v1581
    %v1583 = vrot.slane %v130, 3
    %v1584 = vsel %vm1528, %v1581, %v1583
    %v1609 = vpack.c.bf16 %v1533, %v1531
    %v1610 = vpack.c.bf16 %v1538, %v1535
    %v1611 = vpack.c.bf16 %v1542, %v1540
    %v1612 = vpack.c.bf16 %v1547, %v1545
    %v1613 = vpack.c.bf16 %v1552, %v1549
    %v1614 = vpack.c.bf16 %v1556, %v1554
    %v1615 = vpack.c.bf16 %v1561, %v1559
    %v1616 = vpack.c.bf16 %v1566, %v1563
    %v1617 = vpack.c.bf16 %v1570, %v1568
    %v1618 = vpack.c.bf16 %v1575, %v1573
    %v1619 = vpack.c.bf16 %v1580, %v1577
    %v1620 = vpack.c.bf16 %v1584, %v1582
    %s1621 = scalar_lea.vmem %s1, 144
    %v1622 = vld [vmem:[%s1621] sm:$0xff]
    %v1623 = vld [vmem:[%s1621 + $0x8] sm:$0xf]
    %v1624 = vld [vmem:[%s1621 + $0xc] sm:$0xff]
    %v1625 = vld [vmem:[%s1621 + $0x14] sm:$0xf]
    %v1626 = vld [vmem:[%s1621 + $0x18] sm:$0xff]
    %v1627 = vld [vmem:[%s1621 + $0x20] sm:$0xf]
    %v1628 = vld [vmem:[%s1621 + $0x24] sm:$0x33]
    %v1629 = vld [vmem:[%s1621 + $0x2c] sm:$0x3]
    %v1638 = vunpack.c.l.b16 %v1622
    %v1639 = vunpack.c.h.b16 %v1622
    %v1640 = vunpack.c.l.b16 %v1623
    %v1641 = vunpack.c.l.b16 %v1624
    %v1642 = vunpack.c.h.b16 %v1624
    %v1643 = vunpack.c.l.b16 %v1625
    %v1644 = vunpack.c.l.b16 %v1626
    %v1645 = vunpack.c.h.b16 %v1626
    %v1646 = vunpack.c.l.b16 %v1627
    %v1647 = vunpack.c.l.b16 %v1628
    %v1648 = vunpack.c.h.b16 %v1628
    %v1649 = vunpack.c.l.b16 %v1629
    %v1650 = vpack.c.b16 %v1641, %v1638
    %v1651 = vpack.c.b16 %v1642, %v1639
    %v1652 = vpack.c.b16 %v1643, %v1640
    %v1653 = vpack.c.b16 %v1647, %v1644
    %v1654 = vpack.c.b16 %v1648, %v1645
    %v1655 = vpack.c.b16 %v1649, %v1646
    %v1660 = vsel %vm314, %v1609, 0
    %v1663 = vsel %vm314, %v1610, 0
    %v1666 = vsel %vm314, %v1611, 0
    %v1669 = vsel %vm314, %v1612, 0
    %v1672 = vsel %vm314, %v1613, 0
    %v1675 = vsel %vm314, %v1614, 0
    %v1678 = vsel %vm314, %v1615, 0
    %v1681 = vsel %vm314, %v1616, 0
    %v1684 = vsel %vm314, %v1617, 0
    %v1687 = vsel %vm314, %v1618, 0
    %v1690 = vsel %vm314, %v1619, 0
    %v1693 = vsel %vm314, %v1620, 0
    %v1696 = vsel %vm351, %v1653, 0
    %v1699 = vsel %vm351, %v1654, 0
    %v1702 = vsel %vm351, %v1655, 0
    %1704 = vmatprep.subr.bf16.mxu0 0
    %1705 = vmatpush1.bf16.msra.mxu0 0
    %1706 = vmatprep.subr.bf16.mxu0 0
    %1707 = vmatpush1.bf16.msra.mxu0 0
    %1708 = vmatprep.subr.bf16.mxu0 0
    %1709 = vmatpush1.bf16.msra.mxu0 0
    %1710 = vmatprep.subr.bf16.mxu0 0
    %1711 = vmatpush1.bf16.msra.mxu0 0
    %1712 = vmatprep.subr.bf16.mxu0 0
    %1713 = vmatpush1.bf16.msra.mxu0 0
    %1714 = vmatprep.subr.bf16.mxu0 0
    %1715 = vmatpush1.bf16.msra.mxu0 0
    %1716 = vmatprep.subr.bf16.mxu0 %v1699
    %1717 = vmatpush1.bf16.msra.mxu0 %v1696
    %1718 = vmatprep.subr.bf16.mxu0 %v1651
    %1719 = vmatpush1.bf16.msra.mxu0 %v1650
    %1720 = vmatprep.subr.bf16.mxu0 0
    %1721 = vmatpush2.bf16.msra.mxu0 0
    %1722 = vmatprep.subr.bf16.mxu0 0
    %1723 = vmatpush2.bf16.msra.mxu0 0
    %1724 = vmatprep.subr.bf16.mxu0 0
    %1725 = vmatpush2.bf16.msra.mxu0 0
    %1726 = vmatprep.subr.bf16.mxu0 0
    %1727 = vmatpush2.bf16.msra.mxu0 0
    %1728 = vmatprep.subr.bf16.mxu0 0
    %1729 = vmatpush2.bf16.msra.mxu0 0
    %1730 = vmatprep.subr.bf16.mxu0 0
    %1731 = vmatpush2.bf16.msra.mxu0 0
    %1732 = vmatprep.subr.bf16.mxu0 0
    %1733 = vmatpush2.bf16.msra.mxu0 0
    %1734 = vmatprep.subr.bf16.mxu0 0
    %1735 = vmatpush2.bf16.msra.mxu0 0
    %1736 = vmatprep.mubr.bf16.mxu0 0
    %1737 = vmatmul.mubr.bf16.gmra.mxu0 %v1660
    %v1738 = vpop.f32.mrf.mxu0
    %v1739 = vadd.f32 0.0, %v1738
    %v1740 = vpop.f32.mrf.mxu0
    %v1741 = vadd.f32 0.0, %v1740
    %v1742 = vpop.f32.mrf.mxu0
    %v1743 = vadd.f32 0.0, %v1742
    %v1744 = vpop.f32.mrf.mxu0
    %v1745 = vadd.f32 0.0, %v1744
    %1746 = vmatprep.mubr.bf16.mxu0 0
    %1747 = vmatmul.mubr.bf16.gmra.mxu0 %v1663
    %v1748 = vpop.f32.mrf.mxu0
    %v1749 = vadd.f32 0.0, %v1748
    %v1750 = vpop.f32.mrf.mxu0
    %v1751 = vadd.f32 0.0, %v1750
    %v1752 = vpop.f32.mrf.mxu0
    %v1753 = vadd.f32 0.0, %v1752
    %v1754 = vpop.f32.mrf.mxu0
    %v1755 = vadd.f32 0.0, %v1754
    %1756 = vmatprep.mubr.bf16.mxu0 0
    %1757 = vmatmul.mubr.bf16.gmra.mxu0 %v1666
    %v1758 = vpop.f32.mrf.mxu0
    %v1759 = vadd.f32 0.0, %v1758
    %v1760 = vpop.f32.mrf.mxu0
    %v1761 = vadd.f32 0.0, %v1760
    %v1762 = vpop.f32.mrf.mxu0
    %v1763 = vadd.f32 0.0, %v1762
    %v1764 = vpop.f32.mrf.mxu0
    %v1765 = vadd.f32 0.0, %v1764
    %1766 = vmatprep.mubr.bf16.mxu0 0
    %1767 = vmatmul.mubr.bf16.gmra.mxu0 %v1669
    %v1768 = vpop.f32.mrf.mxu0
    %v1769 = vadd.f32 0.0, %v1768
    %v1770 = vpop.f32.mrf.mxu0
    %v1771 = vadd.f32 0.0, %v1770
    %v1772 = vpop.f32.mrf.mxu0
    %v1773 = vadd.f32 0.0, %v1772
    %v1774 = vpop.f32.mrf.mxu0
    %v1775 = vadd.f32 0.0, %v1774
    %1776 = vmatprep.mubr.bf16.mxu0 0
    %1777 = vmatmul.mubr.bf16.gmra.mxu0 %v1672
    %v1778 = vpop.f32.mrf.mxu0
    %v1779 = vadd.f32 0.0, %v1778
    %v1780 = vpop.f32.mrf.mxu0
    %v1781 = vadd.f32 0.0, %v1780
    %v1782 = vpop.f32.mrf.mxu0
    %v1783 = vadd.f32 0.0, %v1782
    %v1784 = vpop.f32.mrf.mxu0
    %v1785 = vadd.f32 0.0, %v1784
    %1786 = vmatprep.mubr.bf16.mxu0 0
    %1787 = vmatmul.mubr.bf16.gmra.mxu0 %v1675
    %v1788 = vpop.f32.mrf.mxu0
    %v1789 = vadd.f32 0.0, %v1788
    %v1790 = vpop.f32.mrf.mxu0
    %v1791 = vadd.f32 0.0, %v1790
    %v1792 = vpop.f32.mrf.mxu0
    %v1793 = vadd.f32 0.0, %v1792
    %v1794 = vpop.f32.mrf.mxu0
    %v1795 = vadd.f32 0.0, %v1794
    %1796 = vmatprep.mubr.bf16.mxu0 0
    %1797 = vmatmul.mubr.bf16.gmra.mxu0 %v1678
    %v1798 = vpop.f32.mrf.mxu0
    %v1799 = vadd.f32 0.0, %v1798
    %v1800 = vpop.f32.mrf.mxu0
    %v1801 = vadd.f32 0.0, %v1800
    %v1802 = vpop.f32.mrf.mxu0
    %v1803 = vadd.f32 0.0, %v1802
    %v1804 = vpop.f32.mrf.mxu0
    %v1805 = vadd.f32 0.0, %v1804
    %1806 = vmatprep.mubr.bf16.mxu0 0
    %1807 = vmatmul.mubr.bf16.gmra.mxu0 %v1681
    %v1808 = vpop.f32.mrf.mxu0
    %v1809 = vadd.f32 0.0, %v1808
    %v1810 = vpop.f32.mrf.mxu0
    %v1811 = vadd.f32 0.0, %v1810
    %v1812 = vpop.f32.mrf.mxu0
    %v1813 = vadd.f32 0.0, %v1812
    %v1814 = vpop.f32.mrf.mxu0
    %v1815 = vadd.f32 0.0, %v1814
    %1816 = vmatprep.mubr.bf16.mxu0 0
    %1817 = vmatmul.mubr.bf16.gmra.mxu0 %v1684
    %v1818 = vpop.f32.mrf.mxu0
    %v1819 = vadd.f32 0.0, %v1818
    %v1820 = vpop.f32.mrf.mxu0
    %v1821 = vadd.f32 0.0, %v1820
    %v1822 = vpop.f32.mrf.mxu0
    %v1823 = vadd.f32 0.0, %v1822
    %v1824 = vpop.f32.mrf.mxu0
    %v1825 = vadd.f32 0.0, %v1824
    %1826 = vmatprep.mubr.bf16.mxu0 0
    %1827 = vmatmul.mubr.bf16.gmra.mxu0 %v1687
    %v1828 = vpop.f32.mrf.mxu0
    %v1829 = vadd.f32 0.0, %v1828
    %v1830 = vpop.f32.mrf.mxu0
    %v1831 = vadd.f32 0.0, %v1830
    %v1832 = vpop.f32.mrf.mxu0
    %v1833 = vadd.f32 0.0, %v1832
    %v1834 = vpop.f32.mrf.mxu0
    %v1835 = vadd.f32 0.0, %v1834
    %1836 = vmatprep.mubr.bf16.mxu0 0
    %1837 = vmatmul.mubr.bf16.gmra.mxu0 %v1690
    %v1838 = vpop.f32.mrf.mxu0
    %v1839 = vadd.f32 0.0, %v1838
    %v1840 = vpop.f32.mrf.mxu0
    %v1841 = vadd.f32 0.0, %v1840
    %v1842 = vpop.f32.mrf.mxu0
    %v1843 = vadd.f32 0.0, %v1842
    %v1844 = vpop.f32.mrf.mxu0
    %v1845 = vadd.f32 0.0, %v1844
    %1846 = vmatprep.mubr.bf16.mxu0 0
    %1847 = vmatmul.mubr.bf16.gmra.mxu0 %v1693
    %v1848 = vpop.f32.mrf.mxu0
    %v1849 = vadd.f32 0.0, %v1848
    %v1850 = vpop.f32.mrf.mxu0
    %v1851 = vadd.f32 0.0, %v1850
    %v1852 = vpop.f32.mrf.mxu0
    %v1853 = vadd.f32 0.0, %v1852
    %v1854 = vpop.f32.mrf.mxu0
    %v1855 = vadd.f32 0.0, %v1854
    %1856 = vdwg.mxu0
    %1857 = vmatprep.subr.bf16.mxu0 0
    %1858 = vmatpush1.bf16.msra.mxu0 0
    %1859 = vmatprep.subr.bf16.mxu0 0
    %1860 = vmatpush1.bf16.msra.mxu0 0
    %1861 = vmatprep.subr.bf16.mxu0 0
    %1862 = vmatpush1.bf16.msra.mxu0 0
    %1863 = vmatprep.subr.bf16.mxu0 0
    %1864 = vmatpush1.bf16.msra.mxu0 0
    %1865 = vmatprep.subr.bf16.mxu0 0
    %1866 = vmatpush1.bf16.msra.mxu0 0
    %1867 = vmatprep.subr.bf16.mxu0 0
    %1868 = vmatpush1.bf16.msra.mxu0 0
    %1869 = vmatprep.subr.bf16.mxu0 0
    %1870 = vmatpush1.bf16.msra.mxu0 %v1702
    %1871 = vmatprep.subr.bf16.mxu0 0
    %1872 = vmatpush1.bf16.msra.mxu0 %v1652
    %1873 = vmatprep.subr.bf16.mxu0 0
    %1874 = vmatpush2.bf16.msra.mxu0 0
    %1875 = vmatprep.subr.bf16.mxu0 0
    %1876 = vmatpush2.bf16.msra.mxu0 0
    %1877 = vmatprep.subr.bf16.mxu0 0
    %1878 = vmatpush2.bf16.msra.mxu0 0
    %1879 = vmatprep.subr.bf16.mxu0 0
    %1880 = vmatpush2.bf16.msra.mxu0 0
    %1881 = vmatprep.subr.bf16.mxu0 0
    %1882 = vmatpush2.bf16.msra.mxu0 0
    %1883 = vmatprep.subr.bf16.mxu0 0
    %1884 = vmatpush2.bf16.msra.mxu0 0
    %1885 = vmatprep.subr.bf16.mxu0 0
    %1886 = vmatpush2.bf16.msra.mxu0 0
    %1887 = vmatprep.subr.bf16.mxu0 0
    %1888 = vmatpush2.bf16.msra.mxu0 0
    %1889 = vmatprep.mubr.bf16.mxu0 0
    %1890 = vmatmul.mubr.bf16.gmra.mxu0 %v1660
    %v1891 = vpop.f32.mrf.mxu0
    %v1892 = vadd.f32 0.0, %v1891
    %v1893 = vpop.f32.mrf.mxu0
    %v1894 = vpop.f32.mrf.mxu0
    %v1895 = vadd.f32 0.0, %v1894
    %v1896 = vpop.f32.mrf.mxu0
    %1897 = vmatprep.mubr.bf16.mxu0 0
    %1898 = vmatmul.mubr.bf16.gmra.mxu0 %v1663
    %v1899 = vpop.f32.mrf.mxu0
    %v1900 = vadd.f32 0.0, %v1899
    %v1901 = vpop.f32.mrf.mxu0
    %v1902 = vpop.f32.mrf.mxu0
    %v1903 = vadd.f32 0.0, %v1902
    %v1904 = vpop.f32.mrf.mxu0
    %1905 = vmatprep.mubr.bf16.mxu0 0
    %1906 = vmatmul.mubr.bf16.gmra.mxu0 %v1666
    %v1907 = vpop.f32.mrf.mxu0
    %v1908 = vadd.f32 0.0, %v1907
    %v1909 = vpop.f32.mrf.mxu0
    %v1910 = vpop.f32.mrf.mxu0
    %v1911 = vadd.f32 0.0, %v1910
    %v1912 = vpop.f32.mrf.mxu0
    %1913 = vmatprep.mubr.bf16.mxu0 0
    %1914 = vmatmul.mubr.bf16.gmra.mxu0 %v1669
    %v1915 = vpop.f32.mrf.mxu0
    %v1916 = vadd.f32 0.0, %v1915
    %v1917 = vpop.f32.mrf.mxu0
    %v1918 = vpop.f32.mrf.mxu0
    %v1919 = vadd.f32 0.0, %v1918
    %v1920 = vpop.f32.mrf.mxu0
    %1921 = vmatprep.mubr.bf16.mxu0 0
    %1922 = vmatmul.mubr.bf16.gmra.mxu0 %v1672
    %v1923 = vpop.f32.mrf.mxu0
    %v1924 = vadd.f32 0.0, %v1923
    %v1925 = vpop.f32.mrf.mxu0
    %v1926 = vpop.f32.mrf.mxu0
    %v1927 = vadd.f32 0.0, %v1926
    %v1928 = vpop.f32.mrf.mxu0
    %1929 = vmatprep.mubr.bf16.mxu0 0
    %1930 = vmatmul.mubr.bf16.gmra.mxu0 %v1675
    %v1931 = vpop.f32.mrf.mxu0
    %v1932 = vadd.f32 0.0, %v1931
    %v1933 = vpop.f32.mrf.mxu0
    %v1934 = vpop.f32.mrf.mxu0
    %v1935 = vadd.f32 0.0, %v1934
    %v1936 = vpop.f32.mrf.mxu0
    %1937 = vmatprep.mubr.bf16.mxu0 0
    %1938 = vmatmul.mubr.bf16.gmra.mxu0 %v1678
    %v1939 = vpop.f32.mrf.mxu0
    %v1940 = vadd.f32 0.0, %v1939
    %v1941 = vpop.f32.mrf.mxu0
    %v1942 = vpop.f32.mrf.mxu0
    %v1943 = vadd.f32 0.0, %v1942
    %v1944 = vpop.f32.mrf.mxu0
    %1945 = vmatprep.mubr.bf16.mxu0 0
    %1946 = vmatmul.mubr.bf16.gmra.mxu0 %v1681
    %v1947 = vpop.f32.mrf.mxu0
    %v1948 = vadd.f32 0.0, %v1947
    %v1949 = vpop.f32.mrf.mxu0
    %v1950 = vpop.f32.mrf.mxu0
    %v1951 = vadd.f32 0.0, %v1950
    %v1952 = vpop.f32.mrf.mxu0
    %1953 = vmatprep.mubr.bf16.mxu0 0
    %1954 = vmatmul.mubr.bf16.gmra.mxu0 %v1684
    %v1955 = vpop.f32.mrf.mxu0
    %v1956 = vadd.f32 0.0, %v1955
    %v1957 = vpop.f32.mrf.mxu0
    %v1958 = vpop.f32.mrf.mxu0
    %v1959 = vadd.f32 0.0, %v1958
    %v1960 = vpop.f32.mrf.mxu0
    %1961 = vmatprep.mubr.bf16.mxu0 0
    %1962 = vmatmul.mubr.bf16.gmra.mxu0 %v1687
    %v1963 = vpop.f32.mrf.mxu0
    %v1964 = vadd.f32 0.0, %v1963
    %v1965 = vpop.f32.mrf.mxu0
    %v1966 = vpop.f32.mrf.mxu0
    %v1967 = vadd.f32 0.0, %v1966
    %v1968 = vpop.f32.mrf.mxu0
    %1969 = vmatprep.mubr.bf16.mxu0 0
    %1970 = vmatmul.mubr.bf16.gmra.mxu0 %v1690
    %v1971 = vpop.f32.mrf.mxu0
    %v1972 = vadd.f32 0.0, %v1971
    %v1973 = vpop.f32.mrf.mxu0
    %v1974 = vpop.f32.mrf.mxu0
    %v1975 = vadd.f32 0.0, %v1974
    %v1976 = vpop.f32.mrf.mxu0
    %1977 = vmatprep.mubr.bf16.mxu0 0
    %1978 = vmatmul.mubr.bf16.gmra.mxu0 %v1693
    %v1979 = vpop.f32.mrf.mxu0
    %v1980 = vadd.f32 0.0, %v1979
    %v1981 = vpop.f32.mrf.mxu0
    %v1982 = vpop.f32.mrf.mxu0
    %v1983 = vadd.f32 0.0, %v1982
    %v1984 = vpop.f32.mrf.mxu0
    %1985 = vdwg.mxu0
    %v1986 = vadd.f32 %v1456, %v1739
    %v1987 = vadd.f32 %v1457, %v1741
    %v1988 = vadd.f32 %v1458, %v1892
    %v1989 = vadd.f32 %v1459, %v1743
    %v1990 = vadd.f32 %v1460, %v1745
    %v1991 = vadd.f32 %v1461, %v1895
    %v1992 = vadd.f32 %v1462, %v1749
    %v1993 = vadd.f32 %v1463, %v1751
    %v1994 = vadd.f32 %v1464, %v1900
    %v1995 = vadd.f32 %v1465, %v1753
    %v1996 = vadd.f32 %v1466, %v1755
    %v1997 = vadd.f32 %v1467, %v1903
    %v1998 = vadd.f32 %v1468, %v1759
    %v1999 = vadd.f32 %v1469, %v1761
    %v2000 = vadd.f32 %v1470, %v1908
    %v2001 = vadd.f32 %v1471, %v1763
    %v2002 = vadd.f32 %v1472, %v1765
    %v2003 = vadd.f32 %v1473, %v1911
    %v2004 = vadd.f32 %v1474, %v1769
    %v2005 = vadd.f32 %v1475, %v1771
    %v2006 = vadd.f32 %v1476, %v1916
    %v2007 = vadd.f32 %v1477, %v1773
    %v2008 = vadd.f32 %v1478, %v1775
    %v2009 = vadd.f32 %v1479, %v1919
    %v2010 = vadd.f32 %v1480, %v1779
    %v2011 = vadd.f32 %v1481, %v1781
    %v2012 = vadd.f32 %v1482, %v1924
    %v2013 = vadd.f32 %v1483, %v1783
    %v2014 = vadd.f32 %v1484, %v1785
    %v2015 = vadd.f32 %v1485, %v1927
    %v2016 = vadd.f32 %v1486, %v1789
    %v2017 = vadd.f32 %v1487, %v1791
    %v2018 = vadd.f32 %v1488, %v1932
    %v2019 = vadd.f32 %v1489, %v1793
    %v2020 = vadd.f32 %v1490, %v1795
    %v2021 = vadd.f32 %v1491, %v1935
    %v2022 = vadd.f32 %v1492, %v1799
    %v2023 = vadd.f32 %v1493, %v1801
    %v2024 = vadd.f32 %v1494, %v1940
    %v2025 = vadd.f32 %v1495, %v1803
    %v2026 = vadd.f32 %v1496, %v1805
    %v2027 = vadd.f32 %v1497, %v1943
    %v2028 = vadd.f32 %v1498, %v1809
    %v2029 = vadd.f32 %v1499, %v1811
    %v2030 = vadd.f32 %v1500, %v1948
    %v2031 = vadd.f32 %v1501, %v1813
    %v2032 = vadd.f32 %v1502, %v1815
    %v2033 = vadd.f32 %v1503, %v1951
    %v2034 = vadd.f32 %v1504, %v1819
    %v2035 = vadd.f32 %v1505, %v1821
    %v2036 = vadd.f32 %v1506, %v1956
    %v2037 = vadd.f32 %v1507, %v1823
    %v2038 = vadd.f32 %v1508, %v1825
    %v2039 = vadd.f32 %v1509, %v1959
    %v2040 = vadd.f32 %v1510, %v1829
    %v2041 = vadd.f32 %v1511, %v1831
    %v2042 = vadd.f32 %v1512, %v1964
    %v2043 = vadd.f32 %v1513, %v1833
    %v2044 = vadd.f32 %v1514, %v1835
    %v2045 = vadd.f32 %v1515, %v1967
    %v2046 = vadd.f32 %v1516, %v1839
    %v2047 = vadd.f32 %v1517, %v1841
    %v2048 = vadd.f32 %v1518, %v1972
    %v2049 = vadd.f32 %v1519, %v1843
    %v2050 = vadd.f32 %v1520, %v1845
    %v2051 = vadd.f32 %v1521, %v1975
    %v2052 = vadd.f32 %v1522, %v1849
    %v2053 = vadd.f32 %v1523, %v1851
    %v2054 = vadd.f32 %v1524, %v1980
    %v2055 = vadd.f32 %v1525, %v1853
    %v2056 = vadd.f32 %v1526, %v1855
    %v2057 = vadd.f32 %v1527, %v1983
    %vm2058 = vcmask 1043456
    %v2059 = vrot.slane %v99, 4
    %v2060 = vrot.slane %v100, 4
    %v2061 = vsel %vm2058, %v2059, %v2060
    %v2062 = vrot.slane %v101, 4
    %v2063 = vsel %vm2058, %v2060, %v2062
    %v2064 = vrot.slane %v102, 4
    %v2065 = vsel %vm2058, %v2062, %v2064
    %v2066 = vrot.slane %v103, 4
    %v2067 = vrot.slane %v104, 4
    %v2068 = vsel %vm2058, %v2066, %v2067
    %v2069 = vrot.slane %v105, 4
    %v2070 = vsel %vm2058, %v2067, %v2069
    %v2071 = vrot.slane %v106, 4
    %v2072 = vsel %vm2058, %v2069, %v2071
    %v2073 = vrot.slane %v107, 4
    %v2074 = vrot.slane %v108, 4
    %v2075 = vsel %vm2058, %v2073, %v2074
    %v2076 = vrot.slane %v109, 4
    %v2077 = vsel %vm2058, %v2074, %v2076
    %v2078 = vrot.slane %v110, 4
    %v2079 = vsel %vm2058, %v2076, %v2078
    %v2080 = vrot.slane %v111, 4
    %v2081 = vrot.slane %v112, 4
    %v2082 = vsel %vm2058, %v2080, %v2081
    %v2083 = vrot.slane %v113, 4
    %v2084 = vsel %vm2058, %v2081, %v2083
    %v2085 = vrot.slane %v114, 4
    %v2086 = vsel %vm2058, %v2083, %v2085
    %v2087 = vrot.slane %v115, 4
    %v2088 = vrot.slane %v116, 4
    %v2089 = vsel %vm2058, %v2087, %v2088
    %v2090 = vrot.slane %v117, 4
    %v2091 = vsel %vm2058, %v2088, %v2090
    %v2092 = vrot.slane %v118, 4
    %v2093 = vsel %vm2058, %v2090, %v2092
    %v2094 = vrot.slane %v119, 4
    %v2095 = vrot.slane %v120, 4
    %v2096 = vsel %vm2058, %v2094, %v2095
    %v2097 = vrot.slane %v121, 4
    %v2098 = vsel %vm2058, %v2095, %v2097
    %v2099 = vrot.slane %v122, 4
    %v2100 = vsel %vm2058, %v2097, %v2099
    %v2101 = vrot.slane %v123, 4
    %v2102 = vrot.slane %v124, 4
    %v2103 = vsel %vm2058, %v2101, %v2102
    %v2104 = vrot.slane %v125, 4
    %v2105 = vsel %vm2058, %v2102, %v2104
    %v2106 = vrot.slane %v126, 4
    %v2107 = vsel %vm2058, %v2104, %v2106
    %v2108 = vrot.slane %v127, 4
    %v2109 = vrot.slane %v128, 4
    %v2110 = vsel %vm2058, %v2108, %v2109
    %v2111 = vrot.slane %v129, 4
    %v2112 = vsel %vm2058, %v2109, %v2111
    %v2113 = vrot.slane %v130, 4
    %v2114 = vsel %vm2058, %v2111, %v2113
    %v2139 = vpack.c.bf16 %v2063, %v2061
    %v2140 = vpack.c.bf16 %v2068, %v2065
    %v2141 = vpack.c.bf16 %v2072, %v2070
    %v2142 = vpack.c.bf16 %v2077, %v2075
    %v2143 = vpack.c.bf16 %v2082, %v2079
    %v2144 = vpack.c.bf16 %v2086, %v2084
    %v2145 = vpack.c.bf16 %v2091, %v2089
    %v2146 = vpack.c.bf16 %v2096, %v2093
    %v2147 = vpack.c.bf16 %v2100, %v2098
    %v2148 = vpack.c.bf16 %v2105, %v2103
    %v2149 = vpack.c.bf16 %v2110, %v2107
    %v2150 = vpack.c.bf16 %v2114, %v2112
    %s2151 = scalar_lea.vmem %s1, 192
    %v2152 = vld [vmem:[%s2151] sm:$0xff]
    %v2153 = vld [vmem:[%s2151 + $0x8] sm:$0xf]
    %v2154 = vld [vmem:[%s2151 + $0xc] sm:$0xff]
    %v2155 = vld [vmem:[%s2151 + $0x14] sm:$0xf]
    %v2156 = vld [vmem:[%s2151 + $0x18] sm:$0xff]
    %v2157 = vld [vmem:[%s2151 + $0x20] sm:$0xf]
    %v2158 = vld [vmem:[%s2151 + $0x24] sm:$0x33]
    %v2159 = vld [vmem:[%s2151 + $0x2c] sm:$0x3]
    %v2168 = vunpack.c.l.b16 %v2152
    %v2169 = vunpack.c.h.b16 %v2152
    %v2170 = vunpack.c.l.b16 %v2153
    %v2171 = vunpack.c.l.b16 %v2154
    %v2172 = vunpack.c.h.b16 %v2154
    %v2173 = vunpack.c.l.b16 %v2155
    %v2174 = vunpack.c.l.b16 %v2156
    %v2175 = vunpack.c.h.b16 %v2156
    %v2176 = vunpack.c.l.b16 %v2157
    %v2177 = vunpack.c.l.b16 %v2158
    %v2178 = vunpack.c.h.b16 %v2158
    %v2179 = vunpack.c.l.b16 %v2159
    %v2180 = vpack.c.b16 %v2171, %v2168
    %v2181 = vpack.c.b16 %v2172, %v2169
    %v2182 = vpack.c.b16 %v2173, %v2170
    %v2183 = vpack.c.b16 %v2177, %v2174
    %v2184 = vpack.c.b16 %v2178, %v2175
    %v2185 = vpack.c.b16 %v2179, %v2176
    %v2190 = vsel %vm314, %v2139, 0
    %v2193 = vsel %vm314, %v2140, 0
    %v2196 = vsel %vm314, %v2141, 0
    %v2199 = vsel %vm314, %v2142, 0
    %v2202 = vsel %vm314, %v2143, 0
    %v2205 = vsel %vm314, %v2144, 0
    %v2208 = vsel %vm314, %v2145, 0
    %v2211 = vsel %vm314, %v2146, 0
    %v2214 = vsel %vm314, %v2147, 0
    %v2217 = vsel %vm314, %v2148, 0
    %v2220 = vsel %vm314, %v2149, 0
    %v2223 = vsel %vm314, %v2150, 0
    %v2226 = vsel %vm351, %v2183, 0
    %v2229 = vsel %vm351, %v2184, 0
    %v2232 = vsel %vm351, %v2185, 0
    %2234 = vmatprep.subr.bf16.mxu0 0
    %2235 = vmatpush1.bf16.msra.mxu0 0
    %2236 = vmatprep.subr.bf16.mxu0 0
    %2237 = vmatpush1.bf16.msra.mxu0 0
    %2238 = vmatprep.subr.bf16.mxu0 0
    %2239 = vmatpush1.bf16.msra.mxu0 0
    %2240 = vmatprep.subr.bf16.mxu0 0
    %2241 = vmatpush1.bf16.msra.mxu0 0
    %2242 = vmatprep.subr.bf16.mxu0 0
    %2243 = vmatpush1.bf16.msra.mxu0 0
    %2244 = vmatprep.subr.bf16.mxu0 0
    %2245 = vmatpush1.bf16.msra.mxu0 0
    %2246 = vmatprep.subr.bf16.mxu0 %v2229
    %2247 = vmatpush1.bf16.msra.mxu0 %v2226
    %2248 = vmatprep.subr.bf16.mxu0 %v2181
    %2249 = vmatpush1.bf16.msra.mxu0 %v2180
    %2250 = vmatprep.subr.bf16.mxu0 0
    %2251 = vmatpush2.bf16.msra.mxu0 0
    %2252 = vmatprep.subr.bf16.mxu0 0
    %2253 = vmatpush2.bf16.msra.mxu0 0
    %2254 = vmatprep.subr.bf16.mxu0 0
    %2255 = vmatpush2.bf16.msra.mxu0 0
    %2256 = vmatprep.subr.bf16.mxu0 0
    %2257 = vmatpush2.bf16.msra.mxu0 0
    %2258 = vmatprep.subr.bf16.mxu0 0
    %2259 = vmatpush2.bf16.msra.mxu0 0
    %2260 = vmatprep.subr.bf16.mxu0 0
    %2261 = vmatpush2.bf16.msra.mxu0 0
    %2262 = vmatprep.subr.bf16.mxu0 0
    %2263 = vmatpush2.bf16.msra.mxu0 0
    %2264 = vmatprep.subr.bf16.mxu0 0
    %2265 = vmatpush2.bf16.msra.mxu0 0
    %2266 = vmatprep.mubr.bf16.mxu0 0
    %2267 = vmatmul.mubr.bf16.gmra.mxu0 %v2190
    %v2268 = vpop.f32.mrf.mxu0
    %v2269 = vadd.f32 0.0, %v2268
    %v2270 = vpop.f32.mrf.mxu0
    %v2271 = vadd.f32 0.0, %v2270
    %v2272 = vpop.f32.mrf.mxu0
    %v2273 = vadd.f32 0.0, %v2272
    %v2274 = vpop.f32.mrf.mxu0
    %v2275 = vadd.f32 0.0, %v2274
    %2276 = vmatprep.mubr.bf16.mxu0 0
    %2277 = vmatmul.mubr.bf16.gmra.mxu0 %v2193
    %v2278 = vpop.f32.mrf.mxu0
    %v2279 = vadd.f32 0.0, %v2278
    %v2280 = vpop.f32.mrf.mxu0
    %v2281 = vadd.f32 0.0, %v2280
    %v2282 = vpop.f32.mrf.mxu0
    %v2283 = vadd.f32 0.0, %v2282
    %v2284 = vpop.f32.mrf.mxu0
    %v2285 = vadd.f32 0.0, %v2284
    %2286 = vmatprep.mubr.bf16.mxu0 0
    %2287 = vmatmul.mubr.bf16.gmra.mxu0 %v2196
    %v2288 = vpop.f32.mrf.mxu0
    %v2289 = vadd.f32 0.0, %v2288
    %v2290 = vpop.f32.mrf.mxu0
    %v2291 = vadd.f32 0.0, %v2290
    %v2292 = vpop.f32.mrf.mxu0
    %v2293 = vadd.f32 0.0, %v2292
    %v2294 = vpop.f32.mrf.mxu0
    %v2295 = vadd.f32 0.0, %v2294
    %2296 = vmatprep.mubr.bf16.mxu0 0
    %2297 = vmatmul.mubr.bf16.gmra.mxu0 %v2199
    %v2298 = vpop.f32.mrf.mxu0
    %v2299 = vadd.f32 0.0, %v2298
    %v2300 = vpop.f32.mrf.mxu0
    %v2301 = vadd.f32 0.0, %v2300
    %v2302 = vpop.f32.mrf.mxu0
    %v2303 = vadd.f32 0.0, %v2302
    %v2304 = vpop.f32.mrf.mxu0
    %v2305 = vadd.f32 0.0, %v2304
    %2306 = vmatprep.mubr.bf16.mxu0 0
    %2307 = vmatmul.mubr.bf16.gmra.mxu0 %v2202
    %v2308 = vpop.f32.mrf.mxu0
    %v2309 = vadd.f32 0.0, %v2308
    %v2310 = vpop.f32.mrf.mxu0
    %v2311 = vadd.f32 0.0, %v2310
    %v2312 = vpop.f32.mrf.mxu0
    %v2313 = vadd.f32 0.0, %v2312
    %v2314 = vpop.f32.mrf.mxu0
    %v2315 = vadd.f32 0.0, %v2314
    %2316 = vmatprep.mubr.bf16.mxu0 0
    %2317 = vmatmul.mubr.bf16.gmra.mxu0 %v2205
    %v2318 = vpop.f32.mrf.mxu0
    %v2319 = vadd.f32 0.0, %v2318
    %v2320 = vpop.f32.mrf.mxu0
    %v2321 = vadd.f32 0.0, %v2320
    %v2322 = vpop.f32.mrf.mxu0
    %v2323 = vadd.f32 0.0, %v2322
    %v2324 = vpop.f32.mrf.mxu0
    %v2325 = vadd.f32 0.0, %v2324
    %2326 = vmatprep.mubr.bf16.mxu0 0
    %2327 = vmatmul.mubr.bf16.gmra.mxu0 %v2208
    %v2328 = vpop.f32.mrf.mxu0
    %v2329 = vadd.f32 0.0, %v2328
    %v2330 = vpop.f32.mrf.mxu0
    %v2331 = vadd.f32 0.0, %v2330
    %v2332 = vpop.f32.mrf.mxu0
    %v2333 = vadd.f32 0.0, %v2332
    %v2334 = vpop.f32.mrf.mxu0
    %v2335 = vadd.f32 0.0, %v2334
    %2336 = vmatprep.mubr.bf16.mxu0 0
    %2337 = vmatmul.mubr.bf16.gmra.mxu0 %v2211
    %v2338 = vpop.f32.mrf.mxu0
    %v2339 = vadd.f32 0.0, %v2338
    %v2340 = vpop.f32.mrf.mxu0
    %v2341 = vadd.f32 0.0, %v2340
    %v2342 = vpop.f32.mrf.mxu0
    %v2343 = vadd.f32 0.0, %v2342
    %v2344 = vpop.f32.mrf.mxu0
    %v2345 = vadd.f32 0.0, %v2344
    %2346 = vmatprep.mubr.bf16.mxu0 0
    %2347 = vmatmul.mubr.bf16.gmra.mxu0 %v2214
    %v2348 = vpop.f32.mrf.mxu0
    %v2349 = vadd.f32 0.0, %v2348
    %v2350 = vpop.f32.mrf.mxu0
    %v2351 = vadd.f32 0.0, %v2350
    %v2352 = vpop.f32.mrf.mxu0
    %v2353 = vadd.f32 0.0, %v2352
    %v2354 = vpop.f32.mrf.mxu0
    %v2355 = vadd.f32 0.0, %v2354
    %2356 = vmatprep.mubr.bf16.mxu0 0
    %2357 = vmatmul.mubr.bf16.gmra.mxu0 %v2217
    %v2358 = vpop.f32.mrf.mxu0
    %v2359 = vadd.f32 0.0, %v2358
    %v2360 = vpop.f32.mrf.mxu0
    %v2361 = vadd.f32 0.0, %v2360
    %v2362 = vpop.f32.mrf.mxu0
    %v2363 = vadd.f32 0.0, %v2362
    %v2364 = vpop.f32.mrf.mxu0
    %v2365 = vadd.f32 0.0, %v2364
    %2366 = vmatprep.mubr.bf16.mxu0 0
    %2367 = vmatmul.mubr.bf16.gmra.mxu0 %v2220
    %v2368 = vpop.f32.mrf.mxu0
    %v2369 = vadd.f32 0.0, %v2368
    %v2370 = vpop.f32.mrf.mxu0
    %v2371 = vadd.f32 0.0, %v2370
    %v2372 = vpop.f32.mrf.mxu0
    %v2373 = vadd.f32 0.0, %v2372
    %v2374 = vpop.f32.mrf.mxu0
    %v2375 = vadd.f32 0.0, %v2374
    %2376 = vmatprep.mubr.bf16.mxu0 0
    %2377 = vmatmul.mubr.bf16.gmra.mxu0 %v2223
    %v2378 = vpop.f32.mrf.mxu0
    %v2379 = vadd.f32 0.0, %v2378
    %v2380 = vpop.f32.mrf.mxu0
    %v2381 = vadd.f32 0.0, %v2380
    %v2382 = vpop.f32.mrf.mxu0
    %v2383 = vadd.f32 0.0, %v2382
    %v2384 = vpop.f32.mrf.mxu0
    %v2385 = vadd.f32 0.0, %v2384
    %2386 = vdwg.mxu0
    %2387 = vmatprep.subr.bf16.mxu0 0
    %2388 = vmatpush1.bf16.msra.mxu0 0
    %2389 = vmatprep.subr.bf16.mxu0 0
    %2390 = vmatpush1.bf16.msra.mxu0 0
    %2391 = vmatprep.subr.bf16.mxu0 0
    %2392 = vmatpush1.bf16.msra.mxu0 0
    %2393 = vmatprep.subr.bf16.mxu0 0
    %2394 = vmatpush1.bf16.msra.mxu0 0
    %2395 = vmatprep.subr.bf16.mxu0 0
    %2396 = vmatpush1.bf16.msra.mxu0 0
    %2397 = vmatprep.subr.bf16.mxu0 0
    %2398 = vmatpush1.bf16.msra.mxu0 0
    %2399 = vmatprep.subr.bf16.mxu0 0
    %2400 = vmatpush1.bf16.msra.mxu0 %v2232
    %2401 = vmatprep.subr.bf16.mxu0 0
    %2402 = vmatpush1.bf16.msra.mxu0 %v2182
    %2403 = vmatprep.subr.bf16.mxu0 0
    %2404 = vmatpush2.bf16.msra.mxu0 0
    %2405 = vmatprep.subr.bf16.mxu0 0
    %2406 = vmatpush2.bf16.msra.mxu0 0
    %2407 = vmatprep.subr.bf16.mxu0 0
    %2408 = vmatpush2.bf16.msra.mxu0 0
    %2409 = vmatprep.subr.bf16.mxu0 0
    %2410 = vmatpush2.bf16.msra.mxu0 0
    %2411 = vmatprep.subr.bf16.mxu0 0
    %2412 = vmatpush2.bf16.msra.mxu0 0
    %2413 = vmatprep.subr.bf16.mxu0 0
    %2414 = vmatpush2.bf16.msra.mxu0 0
    %2415 = vmatprep.subr.bf16.mxu0 0
    %2416 = vmatpush2.bf16.msra.mxu0 0
    %2417 = vmatprep.subr.bf16.mxu0 0
    %2418 = vmatpush2.bf16.msra.mxu0 0
    %2419 = vmatprep.mubr.bf16.mxu0 0
    %2420 = vmatmul.mubr.bf16.gmra.mxu0 %v2190
    %v2421 = vpop.f32.mrf.mxu0
    %v2422 = vadd.f32 0.0, %v2421
    %v2423 = vpop.f32.mrf.mxu0
    %v2424 = vpop.f32.mrf.mxu0
    %v2425 = vadd.f32 0.0, %v2424
    %v2426 = vpop.f32.mrf.mxu0
    %2427 = vmatprep.mubr.bf16.mxu0 0
    %2428 = vmatmul.mubr.bf16.gmra.mxu0 %v2193
    %v2429 = vpop.f32.mrf.mxu0
    %v2430 = vadd.f32 0.0, %v2429
    %v2431 = vpop.f32.mrf.mxu0
    %v2432 = vpop.f32.mrf.mxu0
    %v2433 = vadd.f32 0.0, %v2432
    %v2434 = vpop.f32.mrf.mxu0
    %2435 = vmatprep.mubr.bf16.mxu0 0
    %2436 = vmatmul.mubr.bf16.gmra.mxu0 %v2196
    %v2437 = vpop.f32.mrf.mxu0
    %v2438 = vadd.f32 0.0, %v2437
    %v2439 = vpop.f32.mrf.mxu0
    %v2440 = vpop.f32.mrf.mxu0
    %v2441 = vadd.f32 0.0, %v2440
    %v2442 = vpop.f32.mrf.mxu0
    %2443 = vmatprep.mubr.bf16.mxu0 0
    %2444 = vmatmul.mubr.bf16.gmra.mxu0 %v2199
    %v2445 = vpop.f32.mrf.mxu0
    %v2446 = vadd.f32 0.0, %v2445
    %v2447 = vpop.f32.mrf.mxu0
    %v2448 = vpop.f32.mrf.mxu0
    %v2449 = vadd.f32 0.0, %v2448
    %v2450 = vpop.f32.mrf.mxu0
    %2451 = vmatprep.mubr.bf16.mxu0 0
    %2452 = vmatmul.mubr.bf16.gmra.mxu0 %v2202
    %v2453 = vpop.f32.mrf.mxu0
    %v2454 = vadd.f32 0.0, %v2453
    %v2455 = vpop.f32.mrf.mxu0
    %v2456 = vpop.f32.mrf.mxu0
    %v2457 = vadd.f32 0.0, %v2456
    %v2458 = vpop.f32.mrf.mxu0
    %2459 = vmatprep.mubr.bf16.mxu0 0
    %2460 = vmatmul.mubr.bf16.gmra.mxu0 %v2205
    %v2461 = vpop.f32.mrf.mxu0
    %v2462 = vadd.f32 0.0, %v2461
    %v2463 = vpop.f32.mrf.mxu0
    %v2464 = vpop.f32.mrf.mxu0
    %v2465 = vadd.f32 0.0, %v2464
    %v2466 = vpop.f32.mrf.mxu0
    %2467 = vmatprep.mubr.bf16.mxu0 0
    %2468 = vmatmul.mubr.bf16.gmra.mxu0 %v2208
    %v2469 = vpop.f32.mrf.mxu0
    %v2470 = vadd.f32 0.0, %v2469
    %v2471 = vpop.f32.mrf.mxu0
    %v2472 = vpop.f32.mrf.mxu0
    %v2473 = vadd.f32 0.0, %v2472
    %v2474 = vpop.f32.mrf.mxu0
    %2475 = vmatprep.mubr.bf16.mxu0 0
    %2476 = vmatmul.mubr.bf16.gmra.mxu0 %v2211
    %v2477 = vpop.f32.mrf.mxu0
    %v2478 = vadd.f32 0.0, %v2477
    %v2479 = vpop.f32.mrf.mxu0
    %v2480 = vpop.f32.mrf.mxu0
    %v2481 = vadd.f32 0.0, %v2480
    %v2482 = vpop.f32.mrf.mxu0
    %2483 = vmatprep.mubr.bf16.mxu0 0
    %2484 = vmatmul.mubr.bf16.gmra.mxu0 %v2214
    %v2485 = vpop.f32.mrf.mxu0
    %v2486 = vadd.f32 0.0, %v2485
    %v2487 = vpop.f32.mrf.mxu0
    %v2488 = vpop.f32.mrf.mxu0
    %v2489 = vadd.f32 0.0, %v2488
    %v2490 = vpop.f32.mrf.mxu0
    %2491 = vmatprep.mubr.bf16.mxu0 0
    %2492 = vmatmul.mubr.bf16.gmra.mxu0 %v2217
    %v2493 = vpop.f32.mrf.mxu0
    %v2494 = vadd.f32 0.0, %v2493
    %v2495 = vpop.f32.mrf.mxu0
    %v2496 = vpop.f32.mrf.mxu0
    %v2497 = vadd.f32 0.0, %v2496
    %v2498 = vpop.f32.mrf.mxu0
    %2499 = vmatprep.mubr.bf16.mxu0 0
    %2500 = vmatmul.mubr.bf16.gmra.mxu0 %v2220
    %v2501 = vpop.f32.mrf.mxu0
    %v2502 = vadd.f32 0.0, %v2501
    %v2503 = vpop.f32.mrf.mxu0
    %v2504 = vpop.f32.mrf.mxu0
    %v2505 = vadd.f32 0.0, %v2504
    %v2506 = vpop.f32.mrf.mxu0
    %2507 = vmatprep.mubr.bf16.mxu0 0
    %2508 = vmatmul.mubr.bf16.gmra.mxu0 %v2223
    %v2509 = vpop.f32.mrf.mxu0
    %v2510 = vadd.f32 0.0, %v2509
    %v2511 = vpop.f32.mrf.mxu0
    %v2512 = vpop.f32.mrf.mxu0
    %v2513 = vadd.f32 0.0, %v2512
    %v2514 = vpop.f32.mrf.mxu0
    %2515 = vdwg.mxu0
    %v2516 = vadd.f32 %v1986, %v2269
    %v2517 = vadd.f32 %v1987, %v2271
    %v2518 = vadd.f32 %v1988, %v2422
    %v2519 = vadd.f32 %v1989, %v2273
    %v2520 = vadd.f32 %v1990, %v2275
    %v2521 = vadd.f32 %v1991, %v2425
    %v2522 = vadd.f32 %v1992, %v2279
    %v2523 = vadd.f32 %v1993, %v2281
    %v2524 = vadd.f32 %v1994, %v2430
    %v2525 = vadd.f32 %v1995, %v2283
    %v2526 = vadd.f32 %v1996, %v2285
    %v2527 = vadd.f32 %v1997, %v2433
    %v2528 = vadd.f32 %v1998, %v2289
    %v2529 = vadd.f32 %v1999, %v2291
    %v2530 = vadd.f32 %v2000, %v2438
    %v2531 = vadd.f32 %v2001, %v2293
    %v2532 = vadd.f32 %v2002, %v2295
    %v2533 = vadd.f32 %v2003, %v2441
    %v2534 = vadd.f32 %v2004, %v2299
    %v2535 = vadd.f32 %v2005, %v2301
    %v2536 = vadd.f32 %v2006, %v2446
    %v2537 = vadd.f32 %v2007, %v2303
    %v2538 = vadd.f32 %v2008, %v2305
    %v2539 = vadd.f32 %v2009, %v2449
    %v2540 = vadd.f32 %v2010, %v2309
    %v2541 = vadd.f32 %v2011, %v2311
    %v2542 = vadd.f32 %v2012, %v2454
    %v2543 = vadd.f32 %v2013, %v2313
    %v2544 = vadd.f32 %v2014, %v2315
    %v2545 = vadd.f32 %v2015, %v2457
    %v2546 = vadd.f32 %v2016, %v2319
    %v2547 = vadd.f32 %v2017, %v2321
    %v2548 = vadd.f32 %v2018, %v2462
    %v2549 = vadd.f32 %v2019, %v2323
    %v2550 = vadd.f32 %v2020, %v2325
    %v2551 = vadd.f32 %v2021, %v2465
    %v2552 = vadd.f32 %v2022, %v2329
    %v2553 = vadd.f32 %v2023, %v2331
    %v2554 = vadd.f32 %v2024, %v2470
    %v2555 = vadd.f32 %v2025, %v2333
    %v2556 = vadd.f32 %v2026, %v2335
    %v2557 = vadd.f32 %v2027, %v2473
    %v2558 = vadd.f32 %v2028, %v2339
    %v2559 = vadd.f32 %v2029, %v2341
    %v2560 = vadd.f32 %v2030, %v2478
    %v2561 = vadd.f32 %v2031, %v2343
    %v2562 = vadd.f32 %v2032, %v2345
    %v2563 = vadd.f32 %v2033, %v2481
    %v2564 = vadd.f32 %v2034, %v2349
    %v2565 = vadd.f32 %v2035, %v2351
    %v2566 = vadd.f32 %v2036, %v2486
    %v2567 = vadd.f32 %v2037, %v2353
    %v2568 = vadd.f32 %v2038, %v2355
    %v2569 = vadd.f32 %v2039, %v2489
    %v2570 = vadd.f32 %v2040, %v2359
    %v2571 = vadd.f32 %v2041, %v2361
    %v2572 = vadd.f32 %v2042, %v2494
    %v2573 = vadd.f32 %v2043, %v2363
    %v2574 = vadd.f32 %v2044, %v2365
    %v2575 = vadd.f32 %v2045, %v2497
    %v2576 = vadd.f32 %v2046, %v2369
    %v2577 = vadd.f32 %v2047, %v2371
    %v2578 = vadd.f32 %v2048, %v2502
    %v2579 = vadd.f32 %v2049, %v2373
    %v2580 = vadd.f32 %v2050, %v2375
    %v2581 = vadd.f32 %v2051, %v2505
    %v2582 = vadd.f32 %v2052, %v2379
    %v2583 = vadd.f32 %v2053, %v2381
    %v2584 = vadd.f32 %v2054, %v2510
    %v2585 = vadd.f32 %v2055, %v2383
    %v2586 = vadd.f32 %v2056, %v2385
    %v2587 = vadd.f32 %v2057, %v2513
    %v2588 = vld [vmem:[%s2] sm:$0x7]
    %v2590 = vlaneseq
    %v2591 = vshrl.u32 %v2590, 7
    %v2592 = vsub.s32 0, %v2591
    %v2593 = vrot.slane %v2588, %v2592
    %v2594 = vlaneseq
    %v2595 = vshrl.u32 %v2594, 7
    %v2596 = vsub.s32 1, %v2595
    %v2597 = vrot.slane %v2588, %v2596
    %v2598 = vlaneseq
    %v2599 = vshrl.u32 %v2598, 7
    %v2600 = vsub.s32 2, %v2599
    %v2601 = vrot.slane %v2588, %v2600
    %v2605 = vadd.f32 %v2516, %v2593
    %v2606 = vadd.f32 %v2517, %v2597
    %v2607 = vadd.f32 %v2518, %v2601
    %v2608 = vadd.f32 %v2519, %v2593
    %v2609 = vadd.f32 %v2520, %v2597
    %v2610 = vadd.f32 %v2521, %v2601
    %v2611 = vadd.f32 %v2522, %v2593
    %v2612 = vadd.f32 %v2523, %v2597
    %v2613 = vadd.f32 %v2524, %v2601
    %v2614 = vadd.f32 %v2525, %v2593
    %v2615 = vadd.f32 %v2526, %v2597
    %v2616 = vadd.f32 %v2527, %v2601
    %v2617 = vadd.f32 %v2528, %v2593
    %v2618 = vadd.f32 %v2529, %v2597
    %v2619 = vadd.f32 %v2530, %v2601
    %v2620 = vadd.f32 %v2531, %v2593
    %v2621 = vadd.f32 %v2532, %v2597
    %v2622 = vadd.f32 %v2533, %v2601
    %v2623 = vadd.f32 %v2534, %v2593
    %v2624 = vadd.f32 %v2535, %v2597
    %v2625 = vadd.f32 %v2536, %v2601
    %v2626 = vadd.f32 %v2537, %v2593
    %v2627 = vadd.f32 %v2538, %v2597
    %v2628 = vadd.f32 %v2539, %v2601
    %v2629 = vadd.f32 %v2540, %v2593
    %v2630 = vadd.f32 %v2541, %v2597
    %v2631 = vadd.f32 %v2542, %v2601
    %v2632 = vadd.f32 %v2543, %v2593
    %v2633 = vadd.f32 %v2544, %v2597
    %v2634 = vadd.f32 %v2545, %v2601
    %v2635 = vadd.f32 %v2546, %v2593
    %v2636 = vadd.f32 %v2547, %v2597
    %v2637 = vadd.f32 %v2548, %v2601
    %v2638 = vadd.f32 %v2549, %v2593
    %v2639 = vadd.f32 %v2550, %v2597
    %v2640 = vadd.f32 %v2551, %v2601
    %v2641 = vadd.f32 %v2552, %v2593
    %v2642 = vadd.f32 %v2553, %v2597
    %v2643 = vadd.f32 %v2554, %v2601
    %v2644 = vadd.f32 %v2555, %v2593
    %v2645 = vadd.f32 %v2556, %v2597
    %v2646 = vadd.f32 %v2557, %v2601
    %v2647 = vadd.f32 %v2558, %v2593
    %v2648 = vadd.f32 %v2559, %v2597
    %v2649 = vadd.f32 %v2560, %v2601
    %v2650 = vadd.f32 %v2561, %v2593
    %v2651 = vadd.f32 %v2562, %v2597
    %v2652 = vadd.f32 %v2563, %v2601
    %v2653 = vadd.f32 %v2564, %v2593
    %v2654 = vadd.f32 %v2565, %v2597
    %v2655 = vadd.f32 %v2566, %v2601
    %v2656 = vadd.f32 %v2567, %v2593
    %v2657 = vadd.f32 %v2568, %v2597
    %v2658 = vadd.f32 %v2569, %v2601
    %v2659 = vadd.f32 %v2570, %v2593
    %v2660 = vadd.f32 %v2571, %v2597
    %v2661 = vadd.f32 %v2572, %v2601
    %v2662 = vadd.f32 %v2573, %v2593
    %v2663 = vadd.f32 %v2574, %v2597
    %v2664 = vadd.f32 %v2575, %v2601
    %v2665 = vadd.f32 %v2576, %v2593
    %v2666 = vadd.f32 %v2577, %v2597
    %v2667 = vadd.f32 %v2578, %v2601
    %v2668 = vadd.f32 %v2579, %v2593
    %v2669 = vadd.f32 %v2580, %v2597
    %v2670 = vadd.f32 %v2581, %v2601
    %v2671 = vadd.f32 %v2582, %v2593
    %v2672 = vadd.f32 %v2583, %v2597
    %v2673 = vadd.f32 %v2584, %v2601
    %v2674 = vadd.f32 %v2585, %v2593
    %v2675 = vadd.f32 %v2586, %v2597
    %v2676 = vadd.f32 %v2587, %v2601
    %v2677 = vmax.f32 %v2605, 0.0
    %v2678 = vmax.f32 %v2606, 0.0
    %v2679 = vmax.f32 %v2607, 0.0
    %v2680 = vmax.f32 %v2608, 0.0
    %v2681 = vmax.f32 %v2609, 0.0
    %v2682 = vmax.f32 %v2610, 0.0
    %v2683 = vmax.f32 %v2611, 0.0
    %v2684 = vmax.f32 %v2612, 0.0
    %v2685 = vmax.f32 %v2613, 0.0
    %v2686 = vmax.f32 %v2614, 0.0
    %v2687 = vmax.f32 %v2615, 0.0
    %v2688 = vmax.f32 %v2616, 0.0
    %v2689 = vmax.f32 %v2617, 0.0
    %v2690 = vmax.f32 %v2618, 0.0
    %v2691 = vmax.f32 %v2619, 0.0
    %v2692 = vmax.f32 %v2620, 0.0
    %v2693 = vmax.f32 %v2621, 0.0
    %v2694 = vmax.f32 %v2622, 0.0
    %v2695 = vmax.f32 %v2623, 0.0
    %v2696 = vmax.f32 %v2624, 0.0
    %v2697 = vmax.f32 %v2625, 0.0
    %v2698 = vmax.f32 %v2626, 0.0
    %v2699 = vmax.f32 %v2627, 0.0
    %v2700 = vmax.f32 %v2628, 0.0
    %v2701 = vmax.f32 %v2629, 0.0
    %v2702 = vmax.f32 %v2630, 0.0
    %v2703 = vmax.f32 %v2631, 0.0
    %v2704 = vmax.f32 %v2632, 0.0
    %v2705 = vmax.f32 %v2633, 0.0
    %v2706 = vmax.f32 %v2634, 0.0
    %v2707 = vmax.f32 %v2635, 0.0
    %v2708 = vmax.f32 %v2636, 0.0
    %v2709 = vmax.f32 %v2637, 0.0
    %v2710 = vmax.f32 %v2638, 0.0
    %v2711 = vmax.f32 %v2639, 0.0
    %v2712 = vmax.f32 %v2640, 0.0
    %v2713 = vmax.f32 %v2641, 0.0
    %v2714 = vmax.f32 %v2642, 0.0
    %v2715 = vmax.f32 %v2643, 0.0
    %v2716 = vmax.f32 %v2644, 0.0
    %v2717 = vmax.f32 %v2645, 0.0
    %v2718 = vmax.f32 %v2646, 0.0
    %v2719 = vmax.f32 %v2647, 0.0
    %v2720 = vmax.f32 %v2648, 0.0
    %v2721 = vmax.f32 %v2649, 0.0
    %v2722 = vmax.f32 %v2650, 0.0
    %v2723 = vmax.f32 %v2651, 0.0
    %v2724 = vmax.f32 %v2652, 0.0
    %v2725 = vmax.f32 %v2653, 0.0
    %v2726 = vmax.f32 %v2654, 0.0
    %v2727 = vmax.f32 %v2655, 0.0
    %v2728 = vmax.f32 %v2656, 0.0
    %v2729 = vmax.f32 %v2657, 0.0
    %v2730 = vmax.f32 %v2658, 0.0
    %v2731 = vmax.f32 %v2659, 0.0
    %v2732 = vmax.f32 %v2660, 0.0
    %v2733 = vmax.f32 %v2661, 0.0
    %v2734 = vmax.f32 %v2662, 0.0
    %v2735 = vmax.f32 %v2663, 0.0
    %v2736 = vmax.f32 %v2664, 0.0
    %v2737 = vmax.f32 %v2665, 0.0
    %v2738 = vmax.f32 %v2666, 0.0
    %v2739 = vmax.f32 %v2667, 0.0
    %v2740 = vmax.f32 %v2668, 0.0
    %v2741 = vmax.f32 %v2669, 0.0
    %v2742 = vmax.f32 %v2670, 0.0
    %v2743 = vmax.f32 %v2671, 0.0
    %v2744 = vmax.f32 %v2672, 0.0
    %v2745 = vmax.f32 %v2673, 0.0
    %v2746 = vmax.f32 %v2674, 0.0
    %v2747 = vmax.f32 %v2675, 0.0
    %v2748 = vmax.f32 %v2676, 0.0
    %2821 = vrot.lane.b32.xlu0 %v2677, 112
    %v2822 = vpop.permute.xlu0 %2821
    %2823 = vrot.lane.b32.xlu0 %v2678, 112
    %v2824 = vpop.permute.xlu0 %2823
    %2825 = vrot.lane.b32.xlu0 %v2679, 112
    %v2826 = vpop.permute.xlu0 %2825
    %2827 = vrot.lane.b32.xlu0 %v2680, 112
    %v2828 = vpop.permute.xlu0 %2827
    %2829 = vrot.lane.b32.xlu0 %v2681, 112
    %v2830 = vpop.permute.xlu0 %2829
    %2831 = vrot.lane.b32.xlu0 %v2682, 112
    %v2832 = vpop.permute.xlu0 %2831
    %2833 = vrot.lane.b32.xlu0 %v2683, 112
    %v2834 = vpop.permute.xlu0 %2833
    %2835 = vrot.lane.b32.xlu0 %v2684, 112
    %v2836 = vpop.permute.xlu0 %2835
    %2837 = vrot.lane.b32.xlu0 %v2685, 112
    %v2838 = vpop.permute.xlu0 %2837
    %2839 = vrot.lane.b32.xlu0 %v2686, 112
    %v2840 = vpop.permute.xlu0 %2839
    %2841 = vrot.lane.b32.xlu0 %v2687, 112
    %v2842 = vpop.permute.xlu0 %2841
    %2843 = vrot.lane.b32.xlu0 %v2688, 112
    %v2844 = vpop.permute.xlu0 %2843
    %2845 = vrot.lane.b32.xlu0 %v2689, 112
    %v2846 = vpop.permute.xlu0 %2845
    %2847 = vrot.lane.b32.xlu0 %v2690, 112
    %v2848 = vpop.permute.xlu0 %2847
    %2849 = vrot.lane.b32.xlu0 %v2691, 112
    %v2850 = vpop.permute.xlu0 %2849
    %2851 = vrot.lane.b32.xlu0 %v2692, 112
    %v2852 = vpop.permute.xlu0 %2851
    %2853 = vrot.lane.b32.xlu0 %v2693, 112
    %v2854 = vpop.permute.xlu0 %2853
    %2855 = vrot.lane.b32.xlu0 %v2694, 112
    %v2856 = vpop.permute.xlu0 %2855
    %2857 = vrot.lane.b32.xlu0 %v2695, 112
    %v2858 = vpop.permute.xlu0 %2857
    %2859 = vrot.lane.b32.xlu0 %v2696, 112
    %v2860 = vpop.permute.xlu0 %2859
    %2861 = vrot.lane.b32.xlu0 %v2697, 112
    %v2862 = vpop.permute.xlu0 %2861
    %2863 = vrot.lane.b32.xlu0 %v2698, 112
    %v2864 = vpop.permute.xlu0 %2863
    %2865 = vrot.lane.b32.xlu0 %v2699, 112
    %v2866 = vpop.permute.xlu0 %2865
    %2867 = vrot.lane.b32.xlu0 %v2700, 112
    %v2868 = vpop.permute.xlu0 %2867
    %2869 = vrot.lane.b32.xlu0 %v2701, 112
    %v2870 = vpop.permute.xlu0 %2869
    %2871 = vrot.lane.b32.xlu0 %v2702, 112
    %v2872 = vpop.permute.xlu0 %2871
    %2873 = vrot.lane.b32.xlu0 %v2703, 112
    %v2874 = vpop.permute.xlu0 %2873
    %2875 = vrot.lane.b32.xlu0 %v2704, 112
    %v2876 = vpop.permute.xlu0 %2875
    %2877 = vrot.lane.b32.xlu0 %v2705, 112
    %v2878 = vpop.permute.xlu0 %2877
    %2879 = vrot.lane.b32.xlu0 %v2706, 112
    %v2880 = vpop.permute.xlu0 %2879
    %2881 = vrot.lane.b32.xlu0 %v2707, 112
    %v2882 = vpop.permute.xlu0 %2881
    %2883 = vrot.lane.b32.xlu0 %v2708, 112
    %v2884 = vpop.permute.xlu0 %2883
    %2885 = vrot.lane.b32.xlu0 %v2709, 112
    %v2886 = vpop.permute.xlu0 %2885
    %2887 = vrot.lane.b32.xlu0 %v2710, 112
    %v2888 = vpop.permute.xlu0 %2887
    %2889 = vrot.lane.b32.xlu0 %v2711, 112
    %v2890 = vpop.permute.xlu0 %2889
    %2891 = vrot.lane.b32.xlu0 %v2712, 112
    %v2892 = vpop.permute.xlu0 %2891
    %2893 = vrot.lane.b32.xlu0 %v2713, 112
    %v2894 = vpop.permute.xlu0 %2893
    %2895 = vrot.lane.b32.xlu0 %v2714, 112
    %v2896 = vpop.permute.xlu0 %2895
    %2897 = vrot.lane.b32.xlu0 %v2715, 112
    %v2898 = vpop.permute.xlu0 %2897
    %2899 = vrot.lane.b32.xlu0 %v2716, 112
    %v2900 = vpop.permute.xlu0 %2899
    %2901 = vrot.lane.b32.xlu0 %v2717, 112
    %v2902 = vpop.permute.xlu0 %2901
    %2903 = vrot.lane.b32.xlu0 %v2718, 112
    %v2904 = vpop.permute.xlu0 %2903
    %2905 = vrot.lane.b32.xlu0 %v2719, 112
    %v2906 = vpop.permute.xlu0 %2905
    %2907 = vrot.lane.b32.xlu0 %v2720, 112
    %v2908 = vpop.permute.xlu0 %2907
    %2909 = vrot.lane.b32.xlu0 %v2721, 112
    %v2910 = vpop.permute.xlu0 %2909
    %2911 = vrot.lane.b32.xlu0 %v2722, 112
    %v2912 = vpop.permute.xlu0 %2911
    %2913 = vrot.lane.b32.xlu0 %v2723, 112
    %v2914 = vpop.permute.xlu0 %2913
    %2915 = vrot.lane.b32.xlu0 %v2724, 112
    %v2916 = vpop.permute.xlu0 %2915
    %2917 = vrot.lane.b32.xlu0 %v2725, 112
    %v2918 = vpop.permute.xlu0 %2917
    %2919 = vrot.lane.b32.xlu0 %v2726, 112
    %v2920 = vpop.permute.xlu0 %2919
    %2921 = vrot.lane.b32.xlu0 %v2727, 112
    %v2922 = vpop.permute.xlu0 %2921
    %2923 = vrot.lane.b32.xlu0 %v2728, 112
    %v2924 = vpop.permute.xlu0 %2923
    %2925 = vrot.lane.b32.xlu0 %v2729, 112
    %v2926 = vpop.permute.xlu0 %2925
    %2927 = vrot.lane.b32.xlu0 %v2730, 112
    %v2928 = vpop.permute.xlu0 %2927
    %2929 = vrot.lane.b32.xlu0 %v2731, 112
    %v2930 = vpop.permute.xlu0 %2929
    %2931 = vrot.lane.b32.xlu0 %v2732, 112
    %v2932 = vpop.permute.xlu0 %2931
    %2933 = vrot.lane.b32.xlu0 %v2733, 112
    %v2934 = vpop.permute.xlu0 %2933
    %2935 = vrot.lane.b32.xlu0 %v2734, 112
    %v2936 = vpop.permute.xlu0 %2935
    %2937 = vrot.lane.b32.xlu0 %v2735, 112
    %v2938 = vpop.permute.xlu0 %2937
    %2939 = vrot.lane.b32.xlu0 %v2736, 112
    %v2940 = vpop.permute.xlu0 %2939
    %2941 = vrot.lane.b32.xlu0 %v2737, 112
    %v2942 = vpop.permute.xlu0 %2941
    %2943 = vrot.lane.b32.xlu0 %v2738, 112
    %v2944 = vpop.permute.xlu0 %2943
    %2945 = vrot.lane.b32.xlu0 %v2739, 112
    %v2946 = vpop.permute.xlu0 %2945
    %2947 = vrot.lane.b32.xlu0 %v2740, 112
    %v2948 = vpop.permute.xlu0 %2947
    %2949 = vrot.lane.b32.xlu0 %v2741, 112
    %v2950 = vpop.permute.xlu0 %2949
    %2951 = vrot.lane.b32.xlu0 %v2742, 112
    %v2952 = vpop.permute.xlu0 %2951
    %2953 = vrot.lane.b32.xlu0 %v2743, 112
    %v2954 = vpop.permute.xlu0 %2953
    %2955 = vrot.lane.b32.xlu0 %v2744, 112
    %v2956 = vpop.permute.xlu0 %2955
    %2957 = vrot.lane.b32.xlu0 %v2745, 112
    %v2958 = vpop.permute.xlu0 %2957
    %2959 = vrot.lane.b32.xlu0 %v2746, 112
    %v2960 = vpop.permute.xlu0 %2959
    %2961 = vrot.lane.b32.xlu0 %v2747, 112
    %v2962 = vpop.permute.xlu0 %2961
    %2963 = vrot.lane.b32.xlu0 %v2748, 112
    %v2964 = vpop.permute.xlu0 %2963
    %vm2965 = vcmask 916480
    %v2966 = vsel %vm2965, %v2822, %v2824
    %v2967 = vsel %vm2965, %v2824, %v2826
    %v2968 = vsel %vm2965, %v2828, %v2830
    %v2969 = vsel %vm2965, %v2830, %v2832
    %v2970 = vsel %vm2965, %v2834, %v2836
    %v2971 = vsel %vm2965, %v2836, %v2838
    %v2972 = vsel %vm2965, %v2840, %v2842
    %v2973 = vsel %vm2965, %v2842, %v2844
    %v2974 = vsel %vm2965, %v2846, %v2848
    %v2975 = vsel %vm2965, %v2848, %v2850
    %v2976 = vsel %vm2965, %v2852, %v2854
    %v2977 = vsel %vm2965, %v2854, %v2856
    %v2978 = vsel %vm2965, %v2858, %v2860
    %v2979 = vsel %vm2965, %v2860, %v2862
    %v2980 = vsel %vm2965, %v2864, %v2866
    %v2981 = vsel %vm2965, %v2866, %v2868
    %v2982 = vsel %vm2965, %v2870, %v2872
    %v2983 = vsel %vm2965, %v2872, %v2874
    %v2984 = vsel %vm2965, %v2876, %v2878
    %v2985 = vsel %vm2965, %v2878, %v2880
    %v2986 = vsel %vm2965, %v2882, %v2884
    %v2987 = vsel %vm2965, %v2884, %v2886
    %v2988 = vsel %vm2965, %v2888, %v2890
    %v2989 = vsel %vm2965, %v2890, %v2892
    %v2990 = vsel %vm2965, %v2894, %v2896
    %v2991 = vsel %vm2965, %v2896, %v2898
    %v2992 = vsel %vm2965, %v2900, %v2902
    %v2993 = vsel %vm2965, %v2902, %v2904
    %v2994 = vsel %vm2965, %v2906, %v2908
    %v2995 = vsel %vm2965, %v2908, %v2910
    %v2996 = vsel %vm2965, %v2912, %v2914
    %v2997 = vsel %vm2965, %v2914, %v2916
    %v2998 = vsel %vm2965, %v2918, %v2920
    %v2999 = vsel %vm2965, %v2920, %v2922
    %v3000 = vsel %vm2965, %v2924, %v2926
    %v3001 = vsel %vm2965, %v2926, %v2928
    %v3002 = vsel %vm2965, %v2930, %v2932
    %v3003 = vsel %vm2965, %v2932, %v2934
    %v3004 = vsel %vm2965, %v2936, %v2938
    %v3005 = vsel %vm2965, %v2938, %v2940
    %v3006 = vsel %vm2965, %v2942, %v2944
    %v3007 = vsel %vm2965, %v2944, %v2946
    %v3008 = vsel %vm2965, %v2948, %v2950
    %v3009 = vsel %vm2965, %v2950, %v2952
    %v3010 = vsel %vm2965, %v2954, %v2956
    %v3011 = vsel %vm2965, %v2956, %v2958
    %v3012 = vsel %vm2965, %v2960, %v2962
    %v3013 = vsel %vm2965, %v2962, %v2964
    %v3086 = vmax.f32 %v2677, %v2966
    %v3087 = vmax.f32 %v2678, %v2967
    %v3088 = vmax.f32 %v2679, %v2826
    %v3089 = vmax.f32 %v2680, %v2968
    %v3090 = vmax.f32 %v2681, %v2969
    %v3091 = vmax.f32 %v2682, %v2832
    %v3092 = vmax.f32 %v2683, %v2970
    %v3093 = vmax.f32 %v2684, %v2971
    %v3094 = vmax.f32 %v2685, %v2838
    %v3095 = vmax.f32 %v2686, %v2972
    %v3096 = vmax.f32 %v2687, %v2973
    %v3097 = vmax.f32 %v2688, %v2844
    %v3098 = vmax.f32 %v2689, %v2974
    %v3099 = vmax.f32 %v2690, %v2975
    %v3100 = vmax.f32 %v2691, %v2850
    %v3101 = vmax.f32 %v2692, %v2976
    %v3102 = vmax.f32 %v2693, %v2977
    %v3103 = vmax.f32 %v2694, %v2856
    %v3104 = vmax.f32 %v2695, %v2978
    %v3105 = vmax.f32 %v2696, %v2979
    %v3106 = vmax.f32 %v2697, %v2862
    %v3107 = vmax.f32 %v2698, %v2980
    %v3108 = vmax.f32 %v2699, %v2981
    %v3109 = vmax.f32 %v2700, %v2868
    %v3110 = vmax.f32 %v2701, %v2982
    %v3111 = vmax.f32 %v2702, %v2983
    %v3112 = vmax.f32 %v2703, %v2874
    %v3113 = vmax.f32 %v2704, %v2984
    %v3114 = vmax.f32 %v2705, %v2985
    %v3115 = vmax.f32 %v2706, %v2880
    %v3116 = vmax.f32 %v2707, %v2986
    %v3117 = vmax.f32 %v2708, %v2987
    %v3118 = vmax.f32 %v2709, %v2886
    %v3119 = vmax.f32 %v2710, %v2988
    %v3120 = vmax.f32 %v2711, %v2989
    %v3121 = vmax.f32 %v2712, %v2892
    %v3122 = vmax.f32 %v2713, %v2990
    %v3123 = vmax.f32 %v2714, %v2991
    %v3124 = vmax.f32 %v2715, %v2898
    %v3125 = vmax.f32 %v2716, %v2992
    %v3126 = vmax.f32 %v2717, %v2993
    %v3127 = vmax.f32 %v2718, %v2904
    %v3128 = vmax.f32 %v2719, %v2994
    %v3129 = vmax.f32 %v2720, %v2995
    %v3130 = vmax.f32 %v2721, %v2910
    %v3131 = vmax.f32 %v2722, %v2996
    %v3132 = vmax.f32 %v2723, %v2997
    %v3133 = vmax.f32 %v2724, %v2916
    %v3134 = vmax.f32 %v2725, %v2998
    %v3135 = vmax.f32 %v2726, %v2999
    %v3136 = vmax.f32 %v2727, %v2922
    %v3137 = vmax.f32 %v2728, %v3000
    %v3138 = vmax.f32 %v2729, %v3001
    %v3139 = vmax.f32 %v2730, %v2928
    %v3140 = vmax.f32 %v2731, %v3002
    %v3141 = vmax.f32 %v2732, %v3003
    %v3142 = vmax.f32 %v2733, %v2934
    %v3143 = vmax.f32 %v2734, %v3004
    %v3144 = vmax.f32 %v2735, %v3005
    %v3145 = vmax.f32 %v2736, %v2940
    %v3146 = vmax.f32 %v2737, %v3006
    %v3147 = vmax.f32 %v2738, %v3007
    %v3148 = vmax.f32 %v2739, %v2946
    %v3149 = vmax.f32 %v2740, %v3008
    %v3150 = vmax.f32 %v2741, %v3009
    %v3151 = vmax.f32 %v2742, %v2952
    %v3152 = vmax.f32 %v2743, %v3010
    %v3153 = vmax.f32 %v2744, %v3011
    %v3154 = vmax.f32 %v2745, %v2958
    %v3155 = vmax.f32 %v2746, %v3012
    %v3156 = vmax.f32 %v2747, %v3013
    %v3157 = vmax.f32 %v2748, %v2964
    %v3230 = vrot.slane %v3086, 1
    %v3231 = vrot.slane %v3089, 1
    %v3232 = vsel %vm183, %v3230, %v3231
    %v3233 = vrot.slane %v3087, 1
    %v3234 = vrot.slane %v3090, 1
    %v3235 = vsel %vm183, %v3233, %v3234
    %v3236 = vrot.slane %v3088, 1
    %v3237 = vrot.slane %v3091, 1
    %v3238 = vsel %vm183, %v3236, %v3237
    %v3239 = vrot.slane %v3092, 1
    %v3240 = vsel %vm183, %v3231, %v3239
    %v3241 = vrot.slane %v3093, 1
    %v3242 = vsel %vm183, %v3234, %v3241
    %v3243 = vrot.slane %v3094, 1
    %v3244 = vsel %vm183, %v3237, %v3243
    %v3245 = vrot.slane %v3095, 1
    %v3246 = vrot.slane %v3098, 1
    %v3247 = vsel %vm183, %v3245, %v3246
    %v3248 = vrot.slane %v3096, 1
    %v3249 = vrot.slane %v3099, 1
    %v3250 = vsel %vm183, %v3248, %v3249
    %v3251 = vrot.slane %v3097, 1
    %v3252 = vrot.slane %v3100, 1
    %v3253 = vsel %vm183, %v3251, %v3252
    %v3254 = vrot.slane %v3101, 1
    %v3255 = vsel %vm183, %v3246, %v3254
    %v3256 = vrot.slane %v3102, 1
    %v3257 = vsel %vm183, %v3249, %v3256
    %v3258 = vrot.slane %v3103, 1
    %v3259 = vsel %vm183, %v3252, %v3258
    %v3260 = vrot.slane %v3104, 1
    %v3261 = vrot.slane %v3107, 1
    %v3262 = vsel %vm183, %v3260, %v3261
    %v3263 = vrot.slane %v3105, 1
    %v3264 = vrot.slane %v3108, 1
    %v3265 = vsel %vm183, %v3263, %v3264
    %v3266 = vrot.slane %v3106, 1
    %v3267 = vrot.slane %v3109, 1
    %v3268 = vsel %vm183, %v3266, %v3267
    %v3269 = vrot.slane %v3110, 1
    %v3270 = vsel %vm183, %v3261, %v3269
    %v3271 = vrot.slane %v3111, 1
    %v3272 = vsel %vm183, %v3264, %v3271
    %v3273 = vrot.slane %v3112, 1
    %v3274 = vsel %vm183, %v3267, %v3273
    %v3275 = vrot.slane %v3113, 1
    %v3276 = vrot.slane %v3116, 1
    %v3277 = vsel %vm183, %v3275, %v3276
    %v3278 = vrot.slane %v3114, 1
    %v3279 = vrot.slane %v3117, 1
    %v3280 = vsel %vm183, %v3278, %v3279
    %v3281 = vrot.slane %v3115, 1
    %v3282 = vrot.slane %v3118, 1
    %v3283 = vsel %vm183, %v3281, %v3282
    %v3284 = vrot.slane %v3119, 1
    %v3285 = vsel %vm183, %v3276, %v3284
    %v3286 = vrot.slane %v3120, 1
    %v3287 = vsel %vm183, %v3279, %v3286
    %v3288 = vrot.slane %v3121, 1
    %v3289 = vsel %vm183, %v3282, %v3288
    %v3290 = vrot.slane %v3122, 1
    %v3291 = vrot.slane %v3125, 1
    %v3292 = vsel %vm183, %v3290, %v3291
    %v3293 = vrot.slane %v3123, 1
    %v3294 = vrot.slane %v3126, 1
    %v3295 = vsel %vm183, %v3293, %v3294
    %v3296 = vrot.slane %v3124, 1
    %v3297 = vrot.slane %v3127, 1
    %v3298 = vsel %vm183, %v3296, %v3297
    %v3299 = vrot.slane %v3128, 1
    %v3300 = vsel %vm183, %v3291, %v3299
    %v3301 = vrot.slane %v3129, 1
    %v3302 = vsel %vm183, %v3294, %v3301
    %v3303 = vrot.slane %v3130, 1
    %v3304 = vsel %vm183, %v3297, %v3303
    %v3305 = vrot.slane %v3131, 1
    %v3306 = vrot.slane %v3134, 1
    %v3307 = vsel %vm183, %v3305, %v3306
    %v3308 = vrot.slane %v3132, 1
    %v3309 = vrot.slane %v3135, 1
    %v3310 = vsel %vm183, %v3308, %v3309
    %v3311 = vrot.slane %v3133, 1
    %v3312 = vrot.slane %v3136, 1
    %v3313 = vsel %vm183, %v3311, %v3312
    %v3314 = vrot.slane %v3137, 1
    %v3315 = vsel %vm183, %v3306, %v3314
    %v3316 = vrot.slane %v3138, 1
    %v3317 = vsel %vm183, %v3309, %v3316
    %v3318 = vrot.slane %v3139, 1
    %v3319 = vsel %vm183, %v3312, %v3318
    %v3320 = vrot.slane %v3140, 1
    %v3321 = vrot.slane %v3143, 1
    %v3322 = vsel %vm183, %v3320, %v3321
    %v3323 = vrot.slane %v3141, 1
    %v3324 = vrot.slane %v3144, 1
    %v3325 = vsel %vm183, %v3323, %v3324
    %v3326 = vrot.slane %v3142, 1
    %v3327 = vrot.slane %v3145, 1
    %v3328 = vsel %vm183, %v3326, %v3327
    %v3329 = vrot.slane %v3146, 1
    %v3330 = vsel %vm183, %v3321, %v3329
    %v3331 = vrot.slane %v3147, 1
    %v3332 = vsel %vm183, %v3324, %v3331
    %v3333 = vrot.slane %v3148, 1
    %v3334 = vsel %vm183, %v3327, %v3333
    %v3335 = vrot.slane %v3149, 1
    %v3336 = vrot.slane %v3152, 1
    %v3337 = vsel %vm183, %v3335, %v3336
    %v3338 = vrot.slane %v3150, 1
    %v3339 = vrot.slane %v3153, 1
    %v3340 = vsel %vm183, %v3338, %v3339
    %v3341 = vrot.slane %v3151, 1
    %v3342 = vrot.slane %v3154, 1
    %v3343 = vsel %vm183, %v3341, %v3342
    %v3344 = vrot.slane %v3155, 1
    %v3345 = vsel %vm183, %v3336, %v3344
    %v3346 = vrot.slane %v3156, 1
    %v3347 = vsel %vm183, %v3339, %v3346
    %v3348 = vrot.slane %v3157, 1
    %v3349 = vsel %vm183, %v3342, %v3348
    %v3422 = vsel %vm183, %v3239, %v3092
    %v3423 = vsel %vm183, %v3241, %v3093
    %v3424 = vsel %vm183, %v3243, %v3094
    %v3425 = vsel %vm183, %v3254, %v3101
    %v3426 = vsel %vm183, %v3256, %v3102
    %v3427 = vsel %vm183, %v3258, %v3103
    %v3428 = vsel %vm183, %v3269, %v3110
    %v3429 = vsel %vm183, %v3271, %v3111
    %v3430 = vsel %vm183, %v3273, %v3112
    %v3431 = vsel %vm183, %v3284, %v3119
    %v3432 = vsel %vm183, %v3286, %v3120
    %v3433 = vsel %vm183, %v3288, %v3121
    %v3434 = vsel %vm183, %v3299, %v3128
    %v3435 = vsel %vm183, %v3301, %v3129
    %v3436 = vsel %vm183, %v3303, %v3130
    %v3437 = vsel %vm183, %v3314, %v3137
    %v3438 = vsel %vm183, %v3316, %v3138
    %v3439 = vsel %vm183, %v3318, %v3139
    %v3440 = vsel %vm183, %v3329, %v3146
    %v3441 = vsel %vm183, %v3331, %v3147
    %v3442 = vsel %vm183, %v3333, %v3148
    %v3443 = vsel %vm183, %v3344, %v3155
    %v3444 = vsel %vm183, %v3346, %v3156
    %v3445 = vsel %vm183, %v3348, %v3157
    %v3446 = vmax.f32 %v3086, %v3232
    %v3447 = vmax.f32 %v3087, %v3235
    %v3448 = vmax.f32 %v3088, %v3238
    %v3449 = vmax.f32 %v3089, %v3240
    %v3450 = vmax.f32 %v3090, %v3242
    %v3451 = vmax.f32 %v3091, %v3244
    %v3452 = vmax.f32 %v3092, %v3422
    %v3453 = vmax.f32 %v3093, %v3423
    %v3454 = vmax.f32 %v3094, %v3424
    %v3455 = vmax.f32 %v3095, %v3247
    %v3456 = vmax.f32 %v3096, %v3250
    %v3457 = vmax.f32 %v3097, %v3253
    %v3458 = vmax.f32 %v3098, %v3255
    %v3459 = vmax.f32 %v3099, %v3257
    %v3460 = vmax.f32 %v3100, %v3259
    %v3461 = vmax.f32 %v3101, %v3425
    %v3462 = vmax.f32 %v3102, %v3426
    %v3463 = vmax.f32 %v3103, %v3427
    %v3464 = vmax.f32 %v3104, %v3262
    %v3465 = vmax.f32 %v3105, %v3265
    %v3466 = vmax.f32 %v3106, %v3268
    %v3467 = vmax.f32 %v3107, %v3270
    %v3468 = vmax.f32 %v3108, %v3272
    %v3469 = vmax.f32 %v3109, %v3274
    %v3470 = vmax.f32 %v3110, %v3428
    %v3471 = vmax.f32 %v3111, %v3429
    %v3472 = vmax.f32 %v3112, %v3430
    %v3473 = vmax.f32 %v3113, %v3277
    %v3474 = vmax.f32 %v3114, %v3280
    %v3475 = vmax.f32 %v3115, %v3283
    %v3476 = vmax.f32 %v3116, %v3285
    %v3477 = vmax.f32 %v3117, %v3287
    %v3478 = vmax.f32 %v3118, %v3289
    %v3479 = vmax.f32 %v3119, %v3431
    %v3480 = vmax.f32 %v3120, %v3432
    %v3481 = vmax.f32 %v3121, %v3433
    %v3482 = vmax.f32 %v3122, %v3292
    %v3483 = vmax.f32 %v3123, %v3295
    %v3484 = vmax.f32 %v3124, %v3298
    %v3485 = vmax.f32 %v3125, %v3300
    %v3486 = vmax.f32 %v3126, %v3302
    %v3487 = vmax.f32 %v3127, %v3304
    %v3488 = vmax.f32 %v3128, %v3434
    %v3489 = vmax.f32 %v3129, %v3435
    %v3490 = vmax.f32 %v3130, %v3436
    %v3491 = vmax.f32 %v3131, %v3307
    %v3492 = vmax.f32 %v3132, %v3310
    %v3493 = vmax.f32 %v3133, %v3313
    %v3494 = vmax.f32 %v3134, %v3315
    %v3495 = vmax.f32 %v3135, %v3317
    %v3496 = vmax.f32 %v3136, %v3319
    %v3497 = vmax.f32 %v3137, %v3437
    %v3498 = vmax.f32 %v3138, %v3438
    %v3499 = vmax.f32 %v3139, %v3439
    %v3500 = vmax.f32 %v3140, %v3322
    %v3501 = vmax.f32 %v3141, %v3325
    %v3502 = vmax.f32 %v3142, %v3328
    %v3503 = vmax.f32 %v3143, %v3330
    %v3504 = vmax.f32 %v3144, %v3332
    %v3505 = vmax.f32 %v3145, %v3334
    %v3506 = vmax.f32 %v3146, %v3440
    %v3507 = vmax.f32 %v3147, %v3441
    %v3508 = vmax.f32 %v3148, %v3442
    %v3509 = vmax.f32 %v3149, %v3337
    %v3510 = vmax.f32 %v3150, %v3340
    %v3511 = vmax.f32 %v3151, %v3343
    %v3512 = vmax.f32 %v3152, %v3345
    %v3513 = vmax.f32 %v3153, %v3347
    %v3514 = vmax.f32 %v3154, %v3349
    %v3515 = vmax.f32 %v3155, %v3443
    %v3516 = vmax.f32 %v3156, %v3444
    %v3517 = vmax.f32 %v3157, %v3445
    %v3518 = vpack.c.bf16 %v3449, %v3446
    %v3519 = vpack.c.bf16 %v3450, %v3447
    %v3520 = vpack.c.bf16 %v3451, %v3448
    %v3521 = vpack.c.bf16 %v3452, %v3452
    %v3522 = vpack.c.bf16 %v3453, %v3453
    %v3523 = vpack.c.bf16 %v3454, %v3454
    %v3524 = vpack.c.bf16 %v3458, %v3455
    %v3525 = vpack.c.bf16 %v3459, %v3456
    %v3526 = vpack.c.bf16 %v3460, %v3457
    %v3527 = vpack.c.bf16 %v3461, %v3461
    %v3528 = vpack.c.bf16 %v3462, %v3462
    %v3529 = vpack.c.bf16 %v3463, %v3463
    %v3530 = vpack.c.bf16 %v3467, %v3464
    %v3531 = vpack.c.bf16 %v3468, %v3465
    %v3532 = vpack.c.bf16 %v3469, %v3466
    %v3533 = vpack.c.bf16 %v3470, %v3470
    %v3534 = vpack.c.bf16 %v3471, %v3471
    %v3535 = vpack.c.bf16 %v3472, %v3472
    %v3536 = vpack.c.bf16 %v3476, %v3473
    %v3537 = vpack.c.bf16 %v3477, %v3474
    %v3538 = vpack.c.bf16 %v3478, %v3475
    %v3539 = vpack.c.bf16 %v3479, %v3479
    %v3540 = vpack.c.bf16 %v3480, %v3480
    %v3541 = vpack.c.bf16 %v3481, %v3481
    %v3542 = vpack.c.bf16 %v3485, %v3482
    %v3543 = vpack.c.bf16 %v3486, %v3483
    %v3544 = vpack.c.bf16 %v3487, %v3484
    %v3545 = vpack.c.bf16 %v3488, %v3488
    %v3546 = vpack.c.bf16 %v3489, %v3489
    %v3547 = vpack.c.bf16 %v3490, %v3490
    %v3548 = vpack.c.bf16 %v3494, %v3491
    %v3549 = vpack.c.bf16 %v3495, %v3492
    %v3550 = vpack.c.bf16 %v3496, %v3493
    %v3551 = vpack.c.bf16 %v3497, %v3497
    %v3552 = vpack.c.bf16 %v3498, %v3498
    %v3553 = vpack.c.bf16 %v3499, %v3499
    %v3554 = vpack.c.bf16 %v3503, %v3500
    %v3555 = vpack.c.bf16 %v3504, %v3501
    %v3556 = vpack.c.bf16 %v3505, %v3502
    %v3557 = vpack.c.bf16 %v3506, %v3506
    %v3558 = vpack.c.bf16 %v3507, %v3507
    %v3559 = vpack.c.bf16 %v3508, %v3508
    %v3560 = vpack.c.bf16 %v3512, %v3509
    %v3561 = vpack.c.bf16 %v3513, %v3510
    %v3562 = vpack.c.bf16 %v3514, %v3511
    %v3563 = vpack.c.bf16 %v3515, %v3515
    %v3564 = vpack.c.bf16 %v3516, %v3516
    %v3565 = vpack.c.bf16 %v3517, %v3517
    %v3566 = vld [vmem:[#allocation2] sm:$0xff]
    %v3567 = vld [vmem:[#allocation2 + $0x8] sm:$0xff]
    %v3568 = vld [vmem:[#allocation2 + $0x10] sm:$0xff]
    %v3569 = vld [vmem:[#allocation2 + $0x18] sm:$0xff]
    %v3570 = vld [vmem:[#allocation2 + $0x20] sm:$0xff]
    %v3571 = vld [vmem:[#allocation2 + $0x28] sm:$0xff]
    %v3572 = vld [vmem:[#allocation2 + $0x30] sm:$0xff]
    %v3573 = vld [vmem:[#allocation2 + $0x38] sm:$0xff]
    %v3574 = vld [vmem:[#allocation2 + $0x40] sm:$0xff]
    %v3575 = vld [vmem:[#allocation2 + $0x48] sm:$0xff]
    %v3576 = vld [vmem:[#allocation2 + $0x50] sm:$0xff]
    %v3577 = vld [vmem:[#allocation2 + $0x58] sm:$0xff]
    %v3578 = vld [vmem:[#allocation2 + $0x60] sm:$0xff]
    %v3579 = vld [vmem:[#allocation2 + $0x68] sm:$0xff]
    %v3580 = vld [vmem:[#allocation2 + $0x70] sm:$0xff]
    %v3581 = vld [vmem:[#allocation2 + $0x78] sm:$0xff]
    %v3582 = vld [vmem:[#allocation2 + $0x80] sm:$0xff]
    %v3583 = vld [vmem:[#allocation2 + $0x88] sm:$0xff]
    %v3584 = vld [vmem:[#allocation2 + $0x90] sm:$0xff]
    %v3585 = vld [vmem:[#allocation2 + $0x98] sm:$0xff]
    %v3586 = vld [vmem:[#allocation2 + $0xa0] sm:$0xff]
    %v3587 = vld [vmem:[#allocation2 + $0xa8] sm:$0xff]
    %v3588 = vld [vmem:[#allocation2 + $0xb0] sm:$0xff]
    %v3589 = vld [vmem:[#allocation2 + $0xb8] sm:$0xff]
    %v3590 = vld [vmem:[#allocation2 + $0xc0] sm:$0xff]
    %v3591 = vld [vmem:[#allocation2 + $0xc8] sm:$0xff]
    %v3592 = vld [vmem:[#allocation2 + $0xd0] sm:$0xff]
    %v3593 = vld [vmem:[#allocation2 + $0xd8] sm:$0xff]
    %v3594 = vld [vmem:[#allocation2 + $0xe0] sm:$0xff]
    %v3595 = vld [vmem:[#allocation2 + $0xe8] sm:$0xff]
    %v3596 = vld [vmem:[#allocation2 + $0xf0] sm:$0xff]
    %v3597 = vld [vmem:[#allocation2 + $0xf8] sm:$0xff]
    %v3598 = vld [vmem:[#allocation2 + $0x100] sm:$0xff]
    %v3599 = vld [vmem:[#allocation2 + $0x108] sm:$0xff]
    %v3600 = vld [vmem:[#allocation2 + $0x110] sm:$0xff]
    %v3601 = vld [vmem:[#allocation2 + $0x118] sm:$0xff]
    %v3602 = vld [vmem:[#allocation2 + $0x120] sm:$0xff]
    %v3603 = vld [vmem:[#allocation2 + $0x128] sm:$0xff]
    %v3604 = vld [vmem:[#allocation2 + $0x130] sm:$0xff]
    %v3605 = vld [vmem:[#allocation2 + $0x138] sm:$0xff]
    %v3606 = vld [vmem:[#allocation2 + $0x140] sm:$0xff]
    %v3607 = vld [vmem:[#allocation2 + $0x148] sm:$0xff]
    %v3608 = vld [vmem:[#allocation2 + $0x150] sm:$0xff]
    %v3609 = vld [vmem:[#allocation2 + $0x158] sm:$0xff]
    %v3610 = vld [vmem:[#allocation2 + $0x160] sm:$0xff]
    %v3611 = vld [vmem:[#allocation2 + $0x168] sm:$0xff]
    %vm3660 = vcmask 1046528
    %v3661 = vrot.slane %v3518, 1
    %v3662 = vrot.slane %v3521, 1
    %v3663 = vsel %vm3660, %v3661, %v3662
    %v3664 = vrot.slane %v3519, 1
    %v3665 = vrot.slane %v3522, 1
    %v3666 = vsel %vm3660, %v3664, %v3665
    %v3667 = vrot.slane %v3520, 1
    %v3668 = vrot.slane %v3523, 1
    %v3669 = vsel %vm3660, %v3667, %v3668
    %v3670 = vrot.slane %v3524, 1
    %v3671 = vrot.slane %v3527, 1
    %v3672 = vsel %vm3660, %v3670, %v3671
    %v3673 = vrot.slane %v3525, 1
    %v3674 = vrot.slane %v3528, 1
    %v3675 = vsel %vm3660, %v3673, %v3674
    %v3676 = vrot.slane %v3526, 1
    %v3677 = vrot.slane %v3529, 1
    %v3678 = vsel %vm3660, %v3676, %v3677
    %v3679 = vrot.slane %v3530, 1
    %v3680 = vrot.slane %v3533, 1
    %v3681 = vsel %vm3660, %v3679, %v3680
    %v3682 = vrot.slane %v3531, 1
    %v3683 = vrot.slane %v3534, 1
    %v3684 = vsel %vm3660, %v3682, %v3683
    %v3685 = vrot.slane %v3532, 1
    %v3686 = vrot.slane %v3535, 1
    %v3687 = vsel %vm3660, %v3685, %v3686
    %v3688 = vrot.slane %v3536, 1
    %v3689 = vrot.slane %v3539, 1
    %v3690 = vsel %vm3660, %v3688, %v3689
    %v3691 = vrot.slane %v3537, 1
    %v3692 = vrot.slane %v3540, 1
    %v3693 = vsel %vm3660, %v3691, %v3692
    %v3694 = vrot.slane %v3538, 1
    %v3695 = vrot.slane %v3541, 1
    %v3696 = vsel %vm3660, %v3694, %v3695
    %v3697 = vrot.slane %v3542, 1
    %v3698 = vrot.slane %v3545, 1
    %v3699 = vsel %vm3660, %v3697, %v3698
    %v3700 = vrot.slane %v3543, 1
    %v3701 = vrot.slane %v3546, 1
    %v3702 = vsel %vm3660, %v3700, %v3701
    %v3703 = vrot.slane %v3544, 1
    %v3704 = vrot.slane %v3547, 1
    %v3705 = vsel %vm3660, %v3703, %v3704
    %v3706 = vrot.slane %v3548, 1
    %v3707 = vrot.slane %v3551, 1
    %v3708 = vsel %vm3660, %v3706, %v3707
    %v3709 = vrot.slane %v3549, 1
    %v3710 = vrot.slane %v3552, 1
    %v3711 = vsel %vm3660, %v3709, %v3710
    %v3712 = vrot.slane %v3550, 1
    %v3713 = vrot.slane %v3553, 1
    %v3714 = vsel %vm3660, %v3712, %v3713
    %v3715 = vrot.slane %v3554, 1
    %v3716 = vrot.slane %v3557, 1
    %v3717 = vsel %vm3660, %v3715, %v3716
    %v3718 = vrot.slane %v3555, 1
    %v3719 = vrot.slane %v3558, 1
    %v3720 = vsel %vm3660, %v3718, %v3719
    %v3721 = vrot.slane %v3556, 1
    %v3722 = vrot.slane %v3559, 1
    %v3723 = vsel %vm3660, %v3721, %v3722
    %v3724 = vrot.slane %v3560, 1
    %v3725 = vrot.slane %v3563, 1
    %v3726 = vsel %vm3660, %v3724, %v3725
    %v3727 = vrot.slane %v3561, 1
    %v3728 = vrot.slane %v3564, 1
    %v3729 = vsel %vm3660, %v3727, %v3728
    %v3730 = vrot.slane %v3562, 1
    %v3731 = vrot.slane %v3565, 1
    %v3732 = vsel %vm3660, %v3730, %v3731
    %s3749 = scalar_lea.vmem [#allocation2], 368
    %v3750 = vld [vmem:[%s3749] sm:$0xff]
    %v3751 = vld [vmem:[%s3749 + $0x8] sm:$0xff]
    %v3752 = vld [vmem:[%s3749 + $0x10] sm:$0xff]
    %v3753 = vld [vmem:[%s3749 + $0x18] sm:$0xff]
    %v3754 = vld [vmem:[%s3749 + $0x20] sm:$0xff]
    %v3755 = vld [vmem:[%s3749 + $0x28] sm:$0xff]
    %v3756 = vld [vmem:[%s3749 + $0x30] sm:$0xff]
    %v3757 = vld [vmem:[%s3749 + $0x38] sm:$0xff]
    %v3758 = vld [vmem:[%s3749 + $0x40] sm:$0xff]
    %v3759 = vld [vmem:[%s3749 + $0x48] sm:$0xff]
    %v3760 = vld [vmem:[%s3749 + $0x50] sm:$0xff]
    %v3761 = vld [vmem:[%s3749 + $0x58] sm:$0xff]
    %v3762 = vld [vmem:[%s3749 + $0x60] sm:$0xff]
    %v3763 = vld [vmem:[%s3749 + $0x68] sm:$0xff]
    %v3764 = vld [vmem:[%s3749 + $0x70] sm:$0xff]
    %v3765 = vld [vmem:[%s3749 + $0x78] sm:$0xff]
    %v3766 = vld [vmem:[%s3749 + $0x80] sm:$0xff]
    %v3767 = vld [vmem:[%s3749 + $0x88] sm:$0xff]
    %v3768 = vld [vmem:[%s3749 + $0x90] sm:$0xff]
    %v3769 = vld [vmem:[%s3749 + $0x98] sm:$0xff]
    %v3770 = vld [vmem:[%s3749 + $0xa0] sm:$0xff]
    %v3771 = vld [vmem:[%s3749 + $0xa8] sm:$0xff]
    %v3772 = vld [vmem:[%s3749 + $0xb0] sm:$0xff]
    %v3773 = vld [vmem:[%s3749 + $0xb8] sm:$0xff]
    %v3774 = vld [vmem:[%s3749 + $0xc0] sm:$0xff]
    %v3775 = vld [vmem:[%s3749 + $0xc8] sm:$0xff]
    %v3776 = vld [vmem:[%s3749 + $0xd0] sm:$0xff]
    %v3777 = vld [vmem:[%s3749 + $0xd8] sm:$0xff]
    %v3778 = vld [vmem:[%s3749 + $0xe0] sm:$0xff]
    %v3779 = vld [vmem:[%s3749 + $0xe8] sm:$0xff]
    %v3780 = vld [vmem:[%s3749 + $0xf0] sm:$0xff]
    %v3781 = vld [vmem:[%s3749 + $0xf8] sm:$0xff]
    %v3782 = vld [vmem:[%s3749 + $0x100] sm:$0xff]
    %v3783 = vld [vmem:[%s3749 + $0x108] sm:$0xff]
    %v3784 = vld [vmem:[%s3749 + $0x110] sm:$0xff]
    %v3785 = vld [vmem:[%s3749 + $0x118] sm:$0xff]
    %v3786 = vld [vmem:[%s3749 + $0x120] sm:$0xff]
    %v3787 = vld [vmem:[%s3749 + $0x128] sm:$0xff]
    %v3788 = vld [vmem:[%s3749 + $0x130] sm:$0xff]
    %v3789 = vld [vmem:[%s3749 + $0x138] sm:$0xff]
    %v3790 = vld [vmem:[%s3749 + $0x140] sm:$0xff]
    %v3791 = vld [vmem:[%s3749 + $0x148] sm:$0xff]
    %v3792 = vld [vmem:[%s3749 + $0x150] sm:$0xff]
    %v3793 = vld [vmem:[%s3749 + $0x158] sm:$0xff]
    %v3794 = vld [vmem:[%s3749 + $0x160] sm:$0xff]
    %v3795 = vld [vmem:[%s3749 + $0x168] sm:$0xff]
    %v3842 = vunpack.c.l.b16 %v3750
    %v3843 = vunpack.c.h.b16 %v3750
    %v3844 = vunpack.c.l.b16 %v3751
    %v3845 = vunpack.c.h.b16 %v3751
    %v3846 = vunpack.c.l.b16 %v3752
    %v3847 = vunpack.c.h.b16 %v3752
    %v3848 = vunpack.c.l.b16 %v3753
    %v3849 = vunpack.c.h.b16 %v3753
    %v3850 = vunpack.c.l.b16 %v3754
    %v3851 = vunpack.c.h.b16 %v3754
    %v3852 = vunpack.c.l.b16 %v3755
    %v3853 = vunpack.c.h.b16 %v3755
    %v3854 = vunpack.c.l.b16 %v3756
    %v3855 = vunpack.c.h.b16 %v3756
    %v3856 = vunpack.c.l.b16 %v3757
    %v3857 = vunpack.c.h.b16 %v3757
    %v3858 = vunpack.c.l.b16 %v3758
    %v3859 = vunpack.c.h.b16 %v3758
    %v3860 = vunpack.c.l.b16 %v3759
    %v3861 = vunpack.c.h.b16 %v3759
    %v3862 = vunpack.c.l.b16 %v3760
    %v3863 = vunpack.c.h.b16 %v3760
    %v3864 = vunpack.c.l.b16 %v3761
    %v3865 = vunpack.c.h.b16 %v3761
    %v3866 = vunpack.c.l.b16 %v3762
    %v3867 = vunpack.c.h.b16 %v3762
    %v3868 = vunpack.c.l.b16 %v3763
    %v3869 = vunpack.c.h.b16 %v3763
    %v3870 = vunpack.c.l.b16 %v3764
    %v3871 = vunpack.c.h.b16 %v3764
    %v3872 = vunpack.c.l.b16 %v3765
    %v3873 = vunpack.c.h.b16 %v3765
    %v3874 = vunpack.c.l.b16 %v3766
    %v3875 = vunpack.c.h.b16 %v3766
    %v3876 = vunpack.c.l.b16 %v3767
    %v3877 = vunpack.c.h.b16 %v3767
    %v3878 = vunpack.c.l.b16 %v3768
    %v3879 = vunpack.c.h.b16 %v3768
    %v3880 = vunpack.c.l.b16 %v3769
    %v3881 = vunpack.c.h.b16 %v3769
    %v3882 = vunpack.c.l.b16 %v3770
    %v3883 = vunpack.c.h.b16 %v3770
    %v3884 = vunpack.c.l.b16 %v3771
    %v3885 = vunpack.c.h.b16 %v3771
    %v3886 = vunpack.c.l.b16 %v3772
    %v3887 = vunpack.c.h.b16 %v3772
    %v3888 = vunpack.c.l.b16 %v3773
    %v3889 = vunpack.c.h.b16 %v3773
    %v3890 = vunpack.c.l.b16 %v3774
    %v3891 = vunpack.c.h.b16 %v3774
    %v3892 = vunpack.c.l.b16 %v3775
    %v3893 = vunpack.c.h.b16 %v3775
    %v3894 = vunpack.c.l.b16 %v3776
    %v3895 = vunpack.c.h.b16 %v3776
    %v3896 = vunpack.c.l.b16 %v3777
    %v3897 = vunpack.c.h.b16 %v3777
    %v3898 = vunpack.c.l.b16 %v3778
    %v3899 = vunpack.c.h.b16 %v3778
    %v3900 = vunpack.c.l.b16 %v3779
    %v3901 = vunpack.c.h.b16 %v3779
    %v3902 = vunpack.c.l.b16 %v3780
    %v3903 = vunpack.c.h.b16 %v3780
    %v3904 = vunpack.c.l.b16 %v3781
    %v3905 = vunpack.c.h.b16 %v3781
    %v3906 = vunpack.c.l.b16 %v3782
    %v3907 = vunpack.c.h.b16 %v3782
    %v3908 = vunpack.c.l.b16 %v3783
    %v3909 = vunpack.c.h.b16 %v3783
    %v3910 = vunpack.c.l.b16 %v3784
    %v3911 = vunpack.c.h.b16 %v3784
    %v3912 = vunpack.c.l.b16 %v3785
    %v3913 = vunpack.c.h.b16 %v3785
    %v3914 = vunpack.c.l.b16 %v3786
    %v3915 = vunpack.c.h.b16 %v3786
    %v3916 = vunpack.c.l.b16 %v3787
    %v3917 = vunpack.c.h.b16 %v3787
    %v3918 = vunpack.c.l.b16 %v3788
    %v3919 = vunpack.c.h.b16 %v3788
    %v3920 = vunpack.c.l.b16 %v3789
    %v3921 = vunpack.c.h.b16 %v3789
    %v3922 = vunpack.c.l.b16 %v3790
    %v3923 = vunpack.c.h.b16 %v3790
    %v3924 = vunpack.c.l.b16 %v3791
    %v3925 = vunpack.c.h.b16 %v3791
    %v3926 = vunpack.c.l.b16 %v3792
    %v3927 = vunpack.c.h.b16 %v3792
    %v3928 = vunpack.c.l.b16 %v3793
    %v3929 = vunpack.c.h.b16 %v3793
    %v3930 = vunpack.c.l.b16 %v3794
    %v3931 = vunpack.c.h.b16 %v3794
    %v3932 = vunpack.c.l.b16 %v3795
    %v3933 = vunpack.c.h.b16 %v3795
    %v3934 = vpack.c.b16 %v3844, %v3842
    %v3935 = vpack.c.b16 %v3845, %v3843
    %v3936 = vpack.c.b16 %v3848, %v3846
    %v3937 = vpack.c.b16 %v3849, %v3847
    %v3938 = vpack.c.b16 %v3852, %v3850
    %v3939 = vpack.c.b16 %v3853, %v3851
    %v3940 = vpack.c.b16 %v3856, %v3854
    %v3941 = vpack.c.b16 %v3857, %v3855
    %v3942 = vpack.c.b16 %v3860, %v3858
    %v3943 = vpack.c.b16 %v3861, %v3859
    %v3944 = vpack.c.b16 %v3864, %v3862
    %v3945 = vpack.c.b16 %v3865, %v3863
    %v3946 = vpack.c.b16 %v3868, %v3866
    %v3947 = vpack.c.b16 %v3869, %v3867
    %v3948 = vpack.c.b16 %v3872, %v3870
    %v3949 = vpack.c.b16 %v3873, %v3871
    %v3950 = vpack.c.b16 %v3876, %v3874
    %v3951 = vpack.c.b16 %v3877, %v3875
    %v3952 = vpack.c.b16 %v3880, %v3878
    %v3953 = vpack.c.b16 %v3881, %v3879
    %v3954 = vpack.c.b16 %v3884, %v3882
    %v3955 = vpack.c.b16 %v3885, %v3883
    %v3956 = vpack.c.b16 %v3888, %v3886
    %v3957 = vpack.c.b16 %v3889, %v3887
    %v3958 = vpack.c.b16 %v3892, %v3890
    %v3959 = vpack.c.b16 %v3893, %v3891
    %v3960 = vpack.c.b16 %v3896, %v3894
    %v3961 = vpack.c.b16 %v3897, %v3895
    %v3962 = vpack.c.b16 %v3900, %v3898
    %v3963 = vpack.c.b16 %v3901, %v3899
    %v3964 = vpack.c.b16 %v3904, %v3902
    %v3965 = vpack.c.b16 %v3905, %v3903
    %v3966 = vpack.c.b16 %v3908, %v3906
    %v3967 = vpack.c.b16 %v3909, %v3907
    %v3968 = vpack.c.b16 %v3912, %v3910
    %v3969 = vpack.c.b16 %v3913, %v3911
    %v3970 = vpack.c.b16 %v3916, %v3914
    %v3971 = vpack.c.b16 %v3917, %v3915
    %v3972 = vpack.c.b16 %v3920, %v3918
    %v3973 = vpack.c.b16 %v3921, %v3919
    %v3974 = vpack.c.b16 %v3924, %v3922
    %v3975 = vpack.c.b16 %v3925, %v3923
    %v3976 = vpack.c.b16 %v3928, %v3926
    %v3977 = vpack.c.b16 %v3929, %v3927
    %v3978 = vpack.c.b16 %v3932, %v3930
    %v3979 = vpack.c.b16 %v3933, %v3931
    %v4027 = vsel %vm2965, %v3669, 0
    %v4030 = vsel %vm2965, %v3678, 0
    %v4033 = vsel %vm2965, %v3687, 0
    %v4036 = vsel %vm2965, %v3696, 0
    %v4039 = vsel %vm2965, %v3705, 0
    %v4042 = vsel %vm2965, %v3714, 0
    %v4045 = vsel %vm2965, %v3723, 0
    %v4048 = vsel %vm2965, %v3732, 0
    %4050 = vmatprep.subr.bf16.mxu0 %v3949
    %4051 = vmatpush1.bf16.msra.mxu0 %v3948
    %4052 = vmatprep.subr.bf16.mxu0 %v3947
    %4053 = vmatpush1.bf16.msra.mxu0 %v3946
    %4054 = vmatprep.subr.bf16.mxu0 %v3945
    %4055 = vmatpush1.bf16.msra.mxu0 %v3944
    %4056 = vmatprep.subr.bf16.mxu0 %v3943
    %4057 = vmatpush1.bf16.msra.mxu0 %v3942
    %4058 = vmatprep.subr.bf16.mxu0 %v3941
    %4059 = vmatpush1.bf16.msra.mxu0 %v3940
    %4060 = vmatprep.subr.bf16.mxu0 %v3939
    %4061 = vmatpush1.bf16.msra.mxu0 %v3938
    %4062 = vmatprep.subr.bf16.mxu0 %v3937
    %4063 = vmatpush1.bf16.msra.mxu0 %v3936
    %4064 = vmatprep.subr.bf16.mxu0 %v3935
    %4065 = vmatpush1.bf16.msra.mxu0 %v3934
    %4066 = vmatprep.subr.bf16.mxu0 %v3965
    %4067 = vmatpush2.bf16.msra.mxu0 %v3964
    %4068 = vmatprep.subr.bf16.mxu0 %v3963
    %4069 = vmatpush2.bf16.msra.mxu0 %v3962
    %4070 = vmatprep.subr.bf16.mxu0 %v3961
    %4071 = vmatpush2.bf16.msra.mxu0 %v3960
    %4072 = vmatprep.subr.bf16.mxu0 %v3959
    %4073 = vmatpush2.bf16.msra.mxu0 %v3958
    %4074 = vmatprep.subr.bf16.mxu0 %v3957
    %4075 = vmatpush2.bf16.msra.mxu0 %v3956
    %4076 = vmatprep.subr.bf16.mxu0 %v3955
    %4077 = vmatpush2.bf16.msra.mxu0 %v3954
    %4078 = vmatprep.subr.bf16.mxu0 %v3953
    %4079 = vmatpush2.bf16.msra.mxu0 %v3952
    %4080 = vmatprep.subr.bf16.mxu0 %v3951
    %4081 = vmatpush2.bf16.msra.mxu0 %v3950
    %4082 = vmatprep.mubr.bf16.mxu0 %v3666
    %4083 = vmatmul.mubr.bf16.gmra.mxu0 %v3663
    %v4084 = vpop.f32.mrf.mxu0
    %v4085 = vadd.f32 0.0, %v4084
    %v4086 = vpop.f32.mrf.mxu0
    %v4087 = vadd.f32 0.0, %v4086
    %v4088 = vpop.f32.mrf.mxu0
    %v4089 = vadd.f32 0.0, %v4088
    %v4090 = vpop.f32.mrf.mxu0
    %v4091 = vadd.f32 0.0, %v4090
    %4092 = vmatprep.mubr.bf16.mxu0 %v3675
    %4093 = vmatmul.mubr.bf16.gmra.mxu0 %v3672
    %v4094 = vpop.f32.mrf.mxu0
    %v4095 = vadd.f32 0.0, %v4094
    %v4096 = vpop.f32.mrf.mxu0
    %v4097 = vadd.f32 0.0, %v4096
    %v4098 = vpop.f32.mrf.mxu0
    %v4099 = vadd.f32 0.0, %v4098
    %v4100 = vpop.f32.mrf.mxu0
    %v4101 = vadd.f32 0.0, %v4100
    %4102 = vmatprep.mubr.bf16.mxu0 %v3684
    %4103 = vmatmul.mubr.bf16.gmra.mxu0 %v3681
    %v4104 = vpop.f32.mrf.mxu0
    %v4105 = vadd.f32 0.0, %v4104
    %v4106 = vpop.f32.mrf.mxu0
    %v4107 = vadd.f32 0.0, %v4106
    %v4108 = vpop.f32.mrf.mxu0
    %v4109 = vadd.f32 0.0, %v4108
    %v4110 = vpop.f32.mrf.mxu0
    %v4111 = vadd.f32 0.0, %v4110
    %4112 = vmatprep.mubr.bf16.mxu0 %v3693
    %4113 = vmatmul.mubr.bf16.gmra.mxu0 %v3690
    %v4114 = vpop.f32.mrf.mxu0
    %v4115 = vadd.f32 0.0, %v4114
    %v4116 = vpop.f32.mrf.mxu0
    %v4117 = vadd.f32 0.0, %v4116
    %v4118 = vpop.f32.mrf.mxu0
    %v4119 = vadd.f32 0.0, %v4118
    %v4120 = vpop.f32.mrf.mxu0
    %v4121 = vadd.f32 0.0, %v4120
    %4122 = vmatprep.mubr.bf16.mxu0 %v3702
    %4123 = vmatmul.mubr.bf16.gmra.mxu0 %v3699
    %v4124 = vpop.f32.mrf.mxu0
    %v4125 = vadd.f32 0.0, %v4124
    %v4126 = vpop.f32.mrf.mxu0
    %v4127 = vadd.f32 0.0, %v4126
    %v4128 = vpop.f32.mrf.mxu0
    %v4129 = vadd.f32 0.0, %v4128
    %v4130 = vpop.f32.mrf.mxu0
    %v4131 = vadd.f32 0.0, %v4130
    %4132 = vmatprep.mubr.bf16.mxu0 %v3711
    %4133 = vmatmul.mubr.bf16.gmra.mxu0 %v3708
    %v4134 = vpop.f32.mrf.mxu0
    %v4135 = vadd.f32 0.0, %v4134
    %v4136 = vpop.f32.mrf.mxu0
    %v4137 = vadd.f32 0.0, %v4136
    %v4138 = vpop.f32.mrf.mxu0
    %v4139 = vadd.f32 0.0, %v4138
    %v4140 = vpop.f32.mrf.mxu0
    %v4141 = vadd.f32 0.0, %v4140
    %4142 = vmatprep.mubr.bf16.mxu0 %v3720
    %4143 = vmatmul.mubr.bf16.gmra.mxu0 %v3717
    %v4144 = vpop.f32.mrf.mxu0
    %v4145 = vadd.f32 0.0, %v4144
    %v4146 = vpop.f32.mrf.mxu0
    %v4147 = vadd.f32 0.0, %v4146
    %v4148 = vpop.f32.mrf.mxu0
    %v4149 = vadd.f32 0.0, %v4148
    %v4150 = vpop.f32.mrf.mxu0
    %v4151 = vadd.f32 0.0, %v4150
    %4152 = vmatprep.mubr.bf16.mxu0 %v3729
    %4153 = vmatmul.mubr.bf16.gmra.mxu0 %v3726
    %v4154 = vpop.f32.mrf.mxu0
    %v4155 = vadd.f32 0.0, %v4154
    %v4156 = vpop.f32.mrf.mxu0
    %v4157 = vadd.f32 0.0, %v4156
    %v4158 = vpop.f32.mrf.mxu0
    %v4159 = vadd.f32 0.0, %v4158
    %v4160 = vpop.f32.mrf.mxu0
    %v4161 = vadd.f32 0.0, %v4160
    %4162 = vdwg.mxu0
    %4163 = vmatprep.subr.bf16.mxu0 0
    %4164 = vmatpush1.bf16.msra.mxu0 0
    %4165 = vmatprep.subr.bf16.mxu0 %v3979
    %4166 = vmatpush1.bf16.msra.mxu0 %v3978
    %4167 = vmatprep.subr.bf16.mxu0 %v3977
    %4168 = vmatpush1.bf16.msra.mxu0 %v3976
    %4169 = vmatprep.subr.bf16.mxu0 %v3975
    %4170 = vmatpush1.bf16.msra.mxu0 %v3974
    %4171 = vmatprep.subr.bf16.mxu0 %v3973
    %4172 = vmatpush1.bf16.msra.mxu0 %v3972
    %4173 = vmatprep.subr.bf16.mxu0 %v3971
    %4174 = vmatpush1.bf16.msra.mxu0 %v3970
    %4175 = vmatprep.subr.bf16.mxu0 %v3969
    %4176 = vmatpush1.bf16.msra.mxu0 %v3968
    %4177 = vmatprep.subr.bf16.mxu0 %v3967
    %4178 = vmatpush1.bf16.msra.mxu0 %v3966
    %4179 = vmatprep.subr.bf16.mxu0 0
    %4180 = vmatpush2.bf16.msra.mxu0 0
    %4181 = vmatprep.subr.bf16.mxu0 0
    %4182 = vmatpush2.bf16.msra.mxu0 0
    %4183 = vmatprep.subr.bf16.mxu0 0
    %4184 = vmatpush2.bf16.msra.mxu0 0
    %4185 = vmatprep.subr.bf16.mxu0 0
    %4186 = vmatpush2.bf16.msra.mxu0 0
    %4187 = vmatprep.subr.bf16.mxu0 0
    %4188 = vmatpush2.bf16.msra.mxu0 0
    %4189 = vmatprep.subr.bf16.mxu0 0
    %4190 = vmatpush2.bf16.msra.mxu0 0
    %4191 = vmatprep.subr.bf16.mxu0 0
    %4192 = vmatpush2.bf16.msra.mxu0 0
    %4193 = vmatprep.subr.bf16.mxu0 0
    %4194 = vmatpush2.bf16.msra.mxu0 0
    %4195 = vmatprep.mubr.bf16.mxu0 0
    %4196 = vmatmul.mubr.bf16.gmra.mxu0 %v4027
    %v4197 = vpop.f32.mrf.mxu0
    %v4198 = vadd.f32 %v4085, %v4197
    %v4199 = vpop.f32.mrf.mxu0
    %v4200 = vadd.f32 %v4087, %v4199
    %v4201 = vpop.f32.mrf.mxu0
    %v4202 = vadd.f32 %v4089, %v4201
    %v4203 = vpop.f32.mrf.mxu0
    %v4204 = vadd.f32 %v4091, %v4203
    %4205 = vmatprep.mubr.bf16.mxu0 0
    %4206 = vmatmul.mubr.bf16.gmra.mxu0 %v4030
    %v4207 = vpop.f32.mrf.mxu0
    %v4208 = vadd.f32 %v4095, %v4207
    %v4209 = vpop.f32.mrf.mxu0
    %v4210 = vadd.f32 %v4097, %v4209
    %v4211 = vpop.f32.mrf.mxu0
    %v4212 = vadd.f32 %v4099, %v4211
    %v4213 = vpop.f32.mrf.mxu0
    %v4214 = vadd.f32 %v4101, %v4213
    %4215 = vmatprep.mubr.bf16.mxu0 0
    %4216 = vmatmul.mubr.bf16.gmra.mxu0 %v4033
    %v4217 = vpop.f32.mrf.mxu0
    %v4218 = vadd.f32 %v4105, %v4217
    %v4219 = vpop.f32.mrf.mxu0
    %v4220 = vadd.f32 %v4107, %v4219
    %v4221 = vpop.f32.mrf.mxu0
    %v4222 = vadd.f32 %v4109, %v4221
    %v4223 = vpop.f32.mrf.mxu0
    %v4224 = vadd.f32 %v4111, %v4223
    %4225 = vmatprep.mubr.bf16.mxu0 0
    %4226 = vmatmul.mubr.bf16.gmra.mxu0 %v4036
    %v4227 = vpop.f32.mrf.mxu0
    %v4228 = vadd.f32 %v4115, %v4227
    %v4229 = vpop.f32.mrf.mxu0
    %v4230 = vadd.f32 %v4117, %v4229
    %v4231 = vpop.f32.mrf.mxu0
    %v4232 = vadd.f32 %v4119, %v4231
    %v4233 = vpop.f32.mrf.mxu0
    %v4234 = vadd.f32 %v4121, %v4233
    %4235 = vmatprep.mubr.bf16.mxu0 0
    %4236 = vmatmul.mubr.bf16.gmra.mxu0 %v4039
    %v4237 = vpop.f32.mrf.mxu0
    %v4238 = vadd.f32 %v4125, %v4237
    %v4239 = vpop.f32.mrf.mxu0
    %v4240 = vadd.f32 %v4127, %v4239
    %v4241 = vpop.f32.mrf.mxu0
    %v4242 = vadd.f32 %v4129, %v4241
    %v4243 = vpop.f32.mrf.mxu0
    %v4244 = vadd.f32 %v4131, %v4243
    %4245 = vmatprep.mubr.bf16.mxu0 0
    %4246 = vmatmul.mubr.bf16.gmra.mxu0 %v4042
    %v4247 = vpop.f32.mrf.mxu0
    %v4248 = vadd.f32 %v4135, %v4247
    %v4249 = vpop.f32.mrf.mxu0
    %v4250 = vadd.f32 %v4137, %v4249
    %v4251 = vpop.f32.mrf.mxu0
    %v4252 = vadd.f32 %v4139, %v4251
    %v4253 = vpop.f32.mrf.mxu0
    %v4254 = vadd.f32 %v4141, %v4253
    %4255 = vmatprep.mubr.bf16.mxu0 0
    %4256 = vmatmul.mubr.bf16.gmra.mxu0 %v4045
    %v4257 = vpop.f32.mrf.mxu0
    %v4258 = vadd.f32 %v4145, %v4257
    %v4259 = vpop.f32.mrf.mxu0
    %v4260 = vadd.f32 %v4147, %v4259
    %v4261 = vpop.f32.mrf.mxu0
    %v4262 = vadd.f32 %v4149, %v4261
    %v4263 = vpop.f32.mrf.mxu0
    %v4264 = vadd.f32 %v4151, %v4263
    %4265 = vmatprep.mubr.bf16.mxu0 0
    %4266 = vmatmul.mubr.bf16.gmra.mxu0 %v4048
    %v4267 = vpop.f32.mrf.mxu0
    %v4268 = vadd.f32 %v4155, %v4267
    %v4269 = vpop.f32.mrf.mxu0
    %v4270 = vadd.f32 %v4157, %v4269
    %v4271 = vpop.f32.mrf.mxu0
    %v4272 = vadd.f32 %v4159, %v4271
    %v4273 = vpop.f32.mrf.mxu0
    %v4274 = vadd.f32 %v4161, %v4273
    %4275 = vdwg.mxu0
    %v4322 = vunpack.c.l.b16 %v3566
    %v4323 = vunpack.c.h.b16 %v3566
    %v4324 = vunpack.c.l.b16 %v3567
    %v4325 = vunpack.c.h.b16 %v3567
    %v4326 = vunpack.c.l.b16 %v3568
    %v4327 = vunpack.c.h.b16 %v3568
    %v4328 = vunpack.c.l.b16 %v3569
    %v4329 = vunpack.c.h.b16 %v3569
    %v4330 = vunpack.c.l.b16 %v3570
    %v4331 = vunpack.c.h.b16 %v3570
    %v4332 = vunpack.c.l.b16 %v3571
    %v4333 = vunpack.c.h.b16 %v3571
    %v4334 = vunpack.c.l.b16 %v3572
    %v4335 = vunpack.c.h.b16 %v3572
    %v4336 = vunpack.c.l.b16 %v3573
    %v4337 = vunpack.c.h.b16 %v3573
    %v4338 = vunpack.c.l.b16 %v3574
    %v4339 = vunpack.c.h.b16 %v3574
    %v4340 = vunpack.c.l.b16 %v3575
    %v4341 = vunpack.c.h.b16 %v3575
    %v4342 = vunpack.c.l.b16 %v3576
    %v4343 = vunpack.c.h.b16 %v3576
    %v4344 = vunpack.c.l.b16 %v3577
    %v4345 = vunpack.c.h.b16 %v3577
    %v4346 = vunpack.c.l.b16 %v3578
    %v4347 = vunpack.c.h.b16 %v3578
    %v4348 = vunpack.c.l.b16 %v3579
    %v4349 = vunpack.c.h.b16 %v3579
    %v4350 = vunpack.c.l.b16 %v3580
    %v4351 = vunpack.c.h.b16 %v3580
    %v4352 = vunpack.c.l.b16 %v3581
    %v4353 = vunpack.c.h.b16 %v3581
    %v4354 = vunpack.c.l.b16 %v3582
    %v4355 = vunpack.c.h.b16 %v3582
    %v4356 = vunpack.c.l.b16 %v3583
    %v4357 = vunpack.c.h.b16 %v3583
    %v4358 = vunpack.c.l.b16 %v3584
    %v4359 = vunpack.c.h.b16 %v3584
    %v4360 = vunpack.c.l.b16 %v3585
    %v4361 = vunpack.c.h.b16 %v3585
    %v4362 = vunpack.c.l.b16 %v3586
    %v4363 = vunpack.c.h.b16 %v3586
    %v4364 = vunpack.c.l.b16 %v3587
    %v4365 = vunpack.c.h.b16 %v3587
    %v4366 = vunpack.c.l.b16 %v3588
    %v4367 = vunpack.c.h.b16 %v3588
    %v4368 = vunpack.c.l.b16 %v3589
    %v4369 = vunpack.c.h.b16 %v3589
    %v4370 = vunpack.c.l.b16 %v3590
    %v4371 = vunpack.c.h.b16 %v3590
    %v4372 = vunpack.c.l.b16 %v3591
    %v4373 = vunpack.c.h.b16 %v3591
    %v4374 = vunpack.c.l.b16 %v3592
    %v4375 = vunpack.c.h.b16 %v3592
    %v4376 = vunpack.c.l.b16 %v3593
    %v4377 = vunpack.c.h.b16 %v3593
    %v4378 = vunpack.c.l.b16 %v3594
    %v4379 = vunpack.c.h.b16 %v3594
    %v4380 = vunpack.c.l.b16 %v3595
    %v4381 = vunpack.c.h.b16 %v3595
    %v4382 = vunpack.c.l.b16 %v3596
    %v4383 = vunpack.c.h.b16 %v3596
    %v4384 = vunpack.c.l.b16 %v3597
    %v4385 = vunpack.c.h.b16 %v3597
    %v4386 = vunpack.c.l.b16 %v3598
    %v4387 = vunpack.c.h.b16 %v3598
    %v4388 = vunpack.c.l.b16 %v3599
    %v4389 = vunpack.c.h.b16 %v3599
    %v4390 = vunpack.c.l.b16 %v3600
    %v4391 = vunpack.c.h.b16 %v3600
    %v4392 = vunpack.c.l.b16 %v3601
    %v4393 = vunpack.c.h.b16 %v3601
    %v4394 = vunpack.c.l.b16 %v3602
    %v4395 = vunpack.c.h.b16 %v3602
    %v4396 = vunpack.c.l.b16 %v3603
    %v4397 = vunpack.c.h.b16 %v3603
    %v4398 = vunpack.c.l.b16 %v3604
    %v4399 = vunpack.c.h.b16 %v3604
    %v4400 = vunpack.c.l.b16 %v3605
    %v4401 = vunpack.c.h.b16 %v3605
    %v4402 = vunpack.c.l.b16 %v3606
    %v4403 = vunpack.c.h.b16 %v3606
    %v4404 = vunpack.c.l.b16 %v3607
    %v4405 = vunpack.c.h.b16 %v3607
    %v4406 = vunpack.c.l.b16 %v3608
    %v4407 = vunpack.c.h.b16 %v3608
    %v4408 = vunpack.c.l.b16 %v3609
    %v4409 = vunpack.c.h.b16 %v3609
    %v4410 = vunpack.c.l.b16 %v3610
    %v4411 = vunpack.c.h.b16 %v3610
    %v4412 = vunpack.c.l.b16 %v3611
    %v4413 = vunpack.c.h.b16 %v3611
    %v4414 = vpack.c.b16 %v4324, %v4322
    %v4415 = vpack.c.b16 %v4325, %v4323
    %v4416 = vpack.c.b16 %v4328, %v4326
    %v4417 = vpack.c.b16 %v4329, %v4327
    %v4418 = vpack.c.b16 %v4332, %v4330
    %v4419 = vpack.c.b16 %v4333, %v4331
    %v4420 = vpack.c.b16 %v4336, %v4334
    %v4421 = vpack.c.b16 %v4337, %v4335
    %v4422 = vpack.c.b16 %v4340, %v4338
    %v4423 = vpack.c.b16 %v4341, %v4339
    %v4424 = vpack.c.b16 %v4344, %v4342
    %v4425 = vpack.c.b16 %v4345, %v4343
    %v4426 = vpack.c.b16 %v4348, %v4346
    %v4427 = vpack.c.b16 %v4349, %v4347
    %v4428 = vpack.c.b16 %v4352, %v4350
    %v4429 = vpack.c.b16 %v4353, %v4351
    %v4430 = vpack.c.b16 %v4356, %v4354
    %v4431 = vpack.c.b16 %v4357, %v4355
    %v4432 = vpack.c.b16 %v4360, %v4358
    %v4433 = vpack.c.b16 %v4361, %v4359
    %v4434 = vpack.c.b16 %v4364, %v4362
    %v4435 = vpack.c.b16 %v4365, %v4363
    %v4436 = vpack.c.b16 %v4368, %v4366
    %v4437 = vpack.c.b16 %v4369, %v4367
    %v4438 = vpack.c.b16 %v4372, %v4370
    %v4439 = vpack.c.b16 %v4373, %v4371
    %v4440 = vpack.c.b16 %v4376, %v4374
    %v4441 = vpack.c.b16 %v4377, %v4375
    %v4442 = vpack.c.b16 %v4380, %v4378
    %v4443 = vpack.c.b16 %v4381, %v4379
    %v4444 = vpack.c.b16 %v4384, %v4382
    %v4445 = vpack.c.b16 %v4385, %v4383
    %v4446 = vpack.c.b16 %v4388, %v4386
    %v4447 = vpack.c.b16 %v4389, %v4387
    %v4448 = vpack.c.b16 %v4392, %v4390
    %v4449 = vpack.c.b16 %v4393, %v4391
    %v4450 = vpack.c.b16 %v4396, %v4394
    %v4451 = vpack.c.b16 %v4397, %v4395
    %v4452 = vpack.c.b16 %v4400, %v4398
    %v4453 = vpack.c.b16 %v4401, %v4399
    %v4454 = vpack.c.b16 %v4404, %v4402
    %v4455 = vpack.c.b16 %v4405, %v4403
    %v4456 = vpack.c.b16 %v4408, %v4406
    %v4457 = vpack.c.b16 %v4409, %v4407
    %v4458 = vpack.c.b16 %v4412, %v4410
    %v4459 = vpack.c.b16 %v4413, %v4411
    %v4507 = vsel %vm2965, %v3520, 0
    %v4510 = vsel %vm2965, %v3526, 0
    %v4513 = vsel %vm2965, %v3532, 0
    %v4516 = vsel %vm2965, %v3538, 0
    %v4519 = vsel %vm2965, %v3544, 0
    %v4522 = vsel %vm2965, %v3550, 0
    %v4525 = vsel %vm2965, %v3556, 0
    %v4528 = vsel %vm2965, %v3562, 0
    %4530 = vmatprep.subr.bf16.mxu0 %v4429
    %4531 = vmatpush1.bf16.msra.mxu0 %v4428
    %4532 = vmatprep.subr.bf16.mxu0 %v4427
    %4533 = vmatpush1.bf16.msra.mxu0 %v4426
    %4534 = vmatprep.subr.bf16.mxu0 %v4425
    %4535 = vmatpush1.bf16.msra.mxu0 %v4424
    %4536 = vmatprep.subr.bf16.mxu0 %v4423
    %4537 = vmatpush1.bf16.msra.mxu0 %v4422
    %4538 = vmatprep.subr.bf16.mxu0 %v4421
    %4539 = vmatpush1.bf16.msra.mxu0 %v4420
    %4540 = vmatprep.subr.bf16.mxu0 %v4419
    %4541 = vmatpush1.bf16.msra.mxu0 %v4418
    %4542 = vmatprep.subr.bf16.mxu0 %v4417
    %4543 = vmatpush1.bf16.msra.mxu0 %v4416
    %4544 = vmatprep.subr.bf16.mxu0 %v4415
    %4545 = vmatpush1.bf16.msra.mxu0 %v4414
    %4546 = vmatprep.subr.bf16.mxu0 %v4445
    %4547 = vmatpush2.bf16.msra.mxu0 %v4444
    %4548 = vmatprep.subr.bf16.mxu0 %v4443
    %4549 = vmatpush2.bf16.msra.mxu0 %v4442
    %4550 = vmatprep.subr.bf16.mxu0 %v4441
    %4551 = vmatpush2.bf16.msra.mxu0 %v4440
    %4552 = vmatprep.subr.bf16.mxu0 %v4439
    %4553 = vmatpush2.bf16.msra.mxu0 %v4438
    %4554 = vmatprep.subr.bf16.mxu0 %v4437
    %4555 = vmatpush2.bf16.msra.mxu0 %v4436
    %4556 = vmatprep.subr.bf16.mxu0 %v4435
    %4557 = vmatpush2.bf16.msra.mxu0 %v4434
    %4558 = vmatprep.subr.bf16.mxu0 %v4433
    %4559 = vmatpush2.bf16.msra.mxu0 %v4432
    %4560 = vmatprep.subr.bf16.mxu0 %v4431
    %4561 = vmatpush2.bf16.msra.mxu0 %v4430
    %4562 = vmatprep.mubr.bf16.mxu0 %v3519
    %4563 = vmatmul.mubr.bf16.gmra.mxu0 %v3518
    %v4564 = vpop.f32.mrf.mxu0
    %v4565 = vadd.f32 %v4198, %v4564
    %v4566 = vpop.f32.mrf.mxu0
    %v4567 = vadd.f32 %v4200, %v4566
    %v4568 = vpop.f32.mrf.mxu0
    %v4569 = vadd.f32 %v4202, %v4568
    %v4570 = vpop.f32.mrf.mxu0
    %v4571 = vadd.f32 %v4204, %v4570
    %4572 = vmatprep.mubr.bf16.mxu0 %v3525
    %4573 = vmatmul.mubr.bf16.gmra.mxu0 %v3524
    %v4574 = vpop.f32.mrf.mxu0
    %v4575 = vadd.f32 %v4208, %v4574
    %v4576 = vpop.f32.mrf.mxu0
    %v4577 = vadd.f32 %v4210, %v4576
    %v4578 = vpop.f32.mrf.mxu0
    %v4579 = vadd.f32 %v4212, %v4578
    %v4580 = vpop.f32.mrf.mxu0
    %v4581 = vadd.f32 %v4214, %v4580
    %4582 = vmatprep.mubr.bf16.mxu0 %v3531
    %4583 = vmatmul.mubr.bf16.gmra.mxu0 %v3530
    %v4584 = vpop.f32.mrf.mxu0
    %v4585 = vadd.f32 %v4218, %v4584
    %v4586 = vpop.f32.mrf.mxu0
    %v4587 = vadd.f32 %v4220, %v4586
    %v4588 = vpop.f32.mrf.mxu0
    %v4589 = vadd.f32 %v4222, %v4588
    %v4590 = vpop.f32.mrf.mxu0
    %v4591 = vadd.f32 %v4224, %v4590
    %4592 = vmatprep.mubr.bf16.mxu0 %v3537
    %4593 = vmatmul.mubr.bf16.gmra.mxu0 %v3536
    %v4594 = vpop.f32.mrf.mxu0
    %v4595 = vadd.f32 %v4228, %v4594
    %v4596 = vpop.f32.mrf.mxu0
    %v4597 = vadd.f32 %v4230, %v4596
    %v4598 = vpop.f32.mrf.mxu0
    %v4599 = vadd.f32 %v4232, %v4598
    %v4600 = vpop.f32.mrf.mxu0
    %v4601 = vadd.f32 %v4234, %v4600
    %4602 = vmatprep.mubr.bf16.mxu0 %v3543
    %4603 = vmatmul.mubr.bf16.gmra.mxu0 %v3542
    %v4604 = vpop.f32.mrf.mxu0
    %v4605 = vadd.f32 %v4238, %v4604
    %v4606 = vpop.f32.mrf.mxu0
    %v4607 = vadd.f32 %v4240, %v4606
    %v4608 = vpop.f32.mrf.mxu0
    %v4609 = vadd.f32 %v4242, %v4608
    %v4610 = vpop.f32.mrf.mxu0
    %v4611 = vadd.f32 %v4244, %v4610
    %4612 = vmatprep.mubr.bf16.mxu0 %v3549
    %4613 = vmatmul.mubr.bf16.gmra.mxu0 %v3548
    %v4614 = vpop.f32.mrf.mxu0
    %v4615 = vadd.f32 %v4248, %v4614
    %v4616 = vpop.f32.mrf.mxu0
    %v4617 = vadd.f32 %v4250, %v4616
    %v4618 = vpop.f32.mrf.mxu0
    %v4619 = vadd.f32 %v4252, %v4618
    %v4620 = vpop.f32.mrf.mxu0
    %v4621 = vadd.f32 %v4254, %v4620
    %4622 = vmatprep.mubr.bf16.mxu0 %v3555
    %4623 = vmatmul.mubr.bf16.gmra.mxu0 %v3554
    %v4624 = vpop.f32.mrf.mxu0
    %v4625 = vadd.f32 %v4258, %v4624
    %v4626 = vpop.f32.mrf.mxu0
    %v4627 = vadd.f32 %v4260, %v4626
    %v4628 = vpop.f32.mrf.mxu0
    %v4629 = vadd.f32 %v4262, %v4628
    %v4630 = vpop.f32.mrf.mxu0
    %v4631 = vadd.f32 %v4264, %v4630
    %4632 = vmatprep.mubr.bf16.mxu0 %v3561
    %4633 = vmatmul.mubr.bf16.gmra.mxu0 %v3560
    %v4634 = vpop.f32.mrf.mxu0
    %v4635 = vadd.f32 %v4268, %v4634
    %v4636 = vpop.f32.mrf.mxu0
    %v4637 = vadd.f32 %v4270, %v4636
    %v4638 = vpop.f32.mrf.mxu0
    %v4639 = vadd.f32 %v4272, %v4638
    %v4640 = vpop.f32.mrf.mxu0
    %v4641 = vadd.f32 %v4274, %v4640
    %4642 = vdwg.mxu0
    %4643 = vmatprep.subr.bf16.mxu0 0
    %4644 = vmatpush1.bf16.msra.mxu0 0
    %4645 = vmatprep.subr.bf16.mxu0 %v4459
    %4646 = vmatpush1.bf16.msra.mxu0 %v4458
    %4647 = vmatprep.subr.bf16.mxu0 %v4457
    %4648 = vmatpush1.bf16.msra.mxu0 %v4456
    %4649 = vmatprep.subr.bf16.mxu0 %v4455
    %4650 = vmatpush1.bf16.msra.mxu0 %v4454
    %4651 = vmatprep.subr.bf16.mxu0 %v4453
    %4652 = vmatpush1.bf16.msra.mxu0 %v4452
    %4653 = vmatprep.subr.bf16.mxu0 %v4451
    %4654 = vmatpush1.bf16.msra.mxu0 %v4450
    %4655 = vmatprep.subr.bf16.mxu0 %v4449
    %4656 = vmatpush1.bf16.msra.mxu0 %v4448
    %4657 = vmatprep.subr.bf16.mxu0 %v4447
    %4658 = vmatpush1.bf16.msra.mxu0 %v4446
    %4659 = vmatprep.subr.bf16.mxu0 0
    %4660 = vmatpush2.bf16.msra.mxu0 0
    %4661 = vmatprep.subr.bf16.mxu0 0
    %4662 = vmatpush2.bf16.msra.mxu0 0
    %4663 = vmatprep.subr.bf16.mxu0 0
    %4664 = vmatpush2.bf16.msra.mxu0 0
    %4665 = vmatprep.subr.bf16.mxu0 0
    %4666 = vmatpush2.bf16.msra.mxu0 0
    %4667 = vmatprep.subr.bf16.mxu0 0
    %4668 = vmatpush2.bf16.msra.mxu0 0
    %4669 = vmatprep.subr.bf16.mxu0 0
    %4670 = vmatpush2.bf16.msra.mxu0 0
    %4671 = vmatprep.subr.bf16.mxu0 0
    %4672 = vmatpush2.bf16.msra.mxu0 0
    %4673 = vmatprep.subr.bf16.mxu0 0
    %4674 = vmatpush2.bf16.msra.mxu0 0
    %4675 = vmatprep.mubr.bf16.mxu0 0
    %4676 = vmatmul.mubr.bf16.gmra.mxu0 %v4507
    %v4677 = vpop.f32.mrf.mxu0
    %v4678 = vadd.f32 %v4565, %v4677
    %v4679 = vpop.f32.mrf.mxu0
    %v4680 = vadd.f32 %v4567, %v4679
    %v4681 = vpop.f32.mrf.mxu0
    %v4682 = vadd.f32 %v4569, %v4681
    %v4683 = vpop.f32.mrf.mxu0
    %v4684 = vadd.f32 %v4571, %v4683
    %4685 = vmatprep.mubr.bf16.mxu0 0
    %4686 = vmatmul.mubr.bf16.gmra.mxu0 %v4510
    %v4687 = vpop.f32.mrf.mxu0
    %v4688 = vadd.f32 %v4575, %v4687
    %v4689 = vpop.f32.mrf.mxu0
    %v4690 = vadd.f32 %v4577, %v4689
    %v4691 = vpop.f32.mrf.mxu0
    %v4692 = vadd.f32 %v4579, %v4691
    %v4693 = vpop.f32.mrf.mxu0
    %v4694 = vadd.f32 %v4581, %v4693
    %4695 = vmatprep.mubr.bf16.mxu0 0
    %4696 = vmatmul.mubr.bf16.gmra.mxu0 %v4513
    %v4697 = vpop.f32.mrf.mxu0
    %v4698 = vadd.f32 %v4585, %v4697
    %v4699 = vpop.f32.mrf.mxu0
    %v4700 = vadd.f32 %v4587, %v4699
    %v4701 = vpop.f32.mrf.mxu0
    %v4702 = vadd.f32 %v4589, %v4701
    %v4703 = vpop.f32.mrf.mxu0
    %v4704 = vadd.f32 %v4591, %v4703
    %4705 = vmatprep.mubr.bf16.mxu0 0
    %4706 = vmatmul.mubr.bf16.gmra.mxu0 %v4516
    %v4707 = vpop.f32.mrf.mxu0
    %v4708 = vadd.f32 %v4595, %v4707
    %v4709 = vpop.f32.mrf.mxu0
    %v4710 = vadd.f32 %v4597, %v4709
    %v4711 = vpop.f32.mrf.mxu0
    %v4712 = vadd.f32 %v4599, %v4711
    %v4713 = vpop.f32.mrf.mxu0
    %v4714 = vadd.f32 %v4601, %v4713
    %4715 = vmatprep.mubr.bf16.mxu0 0
    %4716 = vmatmul.mubr.bf16.gmra.mxu0 %v4519
    %v4717 = vpop.f32.mrf.mxu0
    %v4718 = vadd.f32 %v4605, %v4717
    %v4719 = vpop.f32.mrf.mxu0
    %v4720 = vadd.f32 %v4607, %v4719
    %v4721 = vpop.f32.mrf.mxu0
    %v4722 = vadd.f32 %v4609, %v4721
    %v4723 = vpop.f32.mrf.mxu0
    %v4724 = vadd.f32 %v4611, %v4723
    %4725 = vmatprep.mubr.bf16.mxu0 0
    %4726 = vmatmul.mubr.bf16.gmra.mxu0 %v4522
    %v4727 = vpop.f32.mrf.mxu0
    %v4728 = vadd.f32 %v4615, %v4727
    %v4729 = vpop.f32.mrf.mxu0
    %v4730 = vadd.f32 %v4617, %v4729
    %v4731 = vpop.f32.mrf.mxu0
    %v4732 = vadd.f32 %v4619, %v4731
    %v4733 = vpop.f32.mrf.mxu0
    %v4734 = vadd.f32 %v4621, %v4733
    %4735 = vmatprep.mubr.bf16.mxu0 0
    %4736 = vmatmul.mubr.bf16.gmra.mxu0 %v4525
    %v4737 = vpop.f32.mrf.mxu0
    %v4738 = vadd.f32 %v4625, %v4737
    %v4739 = vpop.f32.mrf.mxu0
    %v4740 = vadd.f32 %v4627, %v4739
    %v4741 = vpop.f32.mrf.mxu0
    %v4742 = vadd.f32 %v4629, %v4741
    %v4743 = vpop.f32.mrf.mxu0
    %v4744 = vadd.f32 %v4631, %v4743
    %4745 = vmatprep.mubr.bf16.mxu0 0
    %4746 = vmatmul.mubr.bf16.gmra.mxu0 %v4528
    %v4747 = vpop.f32.mrf.mxu0
    %v4748 = vadd.f32 %v4635, %v4747
    %v4749 = vpop.f32.mrf.mxu0
    %v4750 = vadd.f32 %v4637, %v4749
    %v4751 = vpop.f32.mrf.mxu0
    %v4752 = vadd.f32 %v4639, %v4751
    %v4753 = vpop.f32.mrf.mxu0
    %v4754 = vadd.f32 %v4641, %v4753
    %4755 = vdwg.mxu0
    %vm4756 = vcmask 1045504
    %v4757 = vrot.slane %v3518, 2
    %v4758 = vrot.slane %v3521, 2
    %v4759 = vsel %vm4756, %v4757, %v4758
    %v4760 = vrot.slane %v3519, 2
    %v4761 = vrot.slane %v3522, 2
    %v4762 = vsel %vm4756, %v4760, %v4761
    %v4763 = vrot.slane %v3520, 2
    %v4764 = vrot.slane %v3523, 2
    %v4765 = vsel %vm4756, %v4763, %v4764
    %v4766 = vrot.slane %v3524, 2
    %v4767 = vrot.slane %v3527, 2
    %v4768 = vsel %vm4756, %v4766, %v4767
    %v4769 = vrot.slane %v3525, 2
    %v4770 = vrot.slane %v3528, 2
    %v4771 = vsel %vm4756, %v4769, %v4770
    %v4772 = vrot.slane %v3526, 2
    %v4773 = vrot.slane %v3529, 2
    %v4774 = vsel %vm4756, %v4772, %v4773
    %v4775 = vrot.slane %v3530, 2
    %v4776 = vrot.slane %v3533, 2
    %v4777 = vsel %vm4756, %v4775, %v4776
    %v4778 = vrot.slane %v3531, 2
    %v4779 = vrot.slane %v3534, 2
    %v4780 = vsel %vm4756, %v4778, %v4779
    %v4781 = vrot.slane %v3532, 2
    %v4782 = vrot.slane %v3535, 2
    %v4783 = vsel %vm4756, %v4781, %v4782
    %v4784 = vrot.slane %v3536, 2
    %v4785 = vrot.slane %v3539, 2
    %v4786 = vsel %vm4756, %v4784, %v4785
    %v4787 = vrot.slane %v3537, 2
    %v4788 = vrot.slane %v3540, 2
    %v4789 = vsel %vm4756, %v4787, %v4788
    %v4790 = vrot.slane %v3538, 2
    %v4791 = vrot.slane %v3541, 2
    %v4792 = vsel %vm4756, %v4790, %v4791
    %v4793 = vrot.slane %v3542, 2
    %v4794 = vrot.slane %v3545, 2
    %v4795 = vsel %vm4756, %v4793, %v4794
    %v4796 = vrot.slane %v3543, 2
    %v4797 = vrot.slane %v3546, 2
    %v4798 = vsel %vm4756, %v4796, %v4797
    %v4799 = vrot.slane %v3544, 2
    %v4800 = vrot.slane %v3547, 2
    %v4801 = vsel %vm4756, %v4799, %v4800
    %v4802 = vrot.slane %v3548, 2
    %v4803 = vrot.slane %v3551, 2
    %v4804 = vsel %vm4756, %v4802, %v4803
    %v4805 = vrot.slane %v3549, 2
    %v4806 = vrot.slane %v3552, 2
    %v4807 = vsel %vm4756, %v4805, %v4806
    %v4808 = vrot.slane %v3550, 2
    %v4809 = vrot.slane %v3553, 2
    %v4810 = vsel %vm4756, %v4808, %v4809
    %v4811 = vrot.slane %v3554, 2
    %v4812 = vrot.slane %v3557, 2
    %v4813 = vsel %vm4756, %v4811, %v4812
    %v4814 = vrot.slane %v3555, 2
    %v4815 = vrot.slane %v3558, 2
    %v4816 = vsel %vm4756, %v4814, %v4815
    %v4817 = vrot.slane %v3556, 2
    %v4818 = vrot.slane %v3559, 2
    %v4819 = vsel %vm4756, %v4817, %v4818
    %v4820 = vrot.slane %v3560, 2
    %v4821 = vrot.slane %v3563, 2
    %v4822 = vsel %vm4756, %v4820, %v4821
    %v4823 = vrot.slane %v3561, 2
    %v4824 = vrot.slane %v3564, 2
    %v4825 = vsel %vm4756, %v4823, %v4824
    %v4826 = vrot.slane %v3562, 2
    %v4827 = vrot.slane %v3565, 2
    %v4828 = vsel %vm4756, %v4826, %v4827
    %s4845 = scalar_lea.vmem [#allocation2], 736
    %v4846 = vld [vmem:[%s4845] sm:$0xff]
    %v4847 = vld [vmem:[%s4845 + $0x8] sm:$0xff]
    %v4848 = vld [vmem:[%s4845 + $0x10] sm:$0xff]
    %v4849 = vld [vmem:[%s4845 + $0x18] sm:$0xff]
    %v4850 = vld [vmem:[%s4845 + $0x20] sm:$0xff]
    %v4851 = vld [vmem:[%s4845 + $0x28] sm:$0xff]
    %v4852 = vld [vmem:[%s4845 + $0x30] sm:$0xff]
    %v4853 = vld [vmem:[%s4845 + $0x38] sm:$0xff]
    %v4854 = vld [vmem:[%s4845 + $0x40] sm:$0xff]
    %v4855 = vld [vmem:[%s4845 + $0x48] sm:$0xff]
    %v4856 = vld [vmem:[%s4845 + $0x50] sm:$0xff]
    %v4857 = vld [vmem:[%s4845 + $0x58] sm:$0xff]
    %v4858 = vld [vmem:[%s4845 + $0x60] sm:$0xff]
    %v4859 = vld [vmem:[%s4845 + $0x68] sm:$0xff]
    %v4860 = vld [vmem:[%s4845 + $0x70] sm:$0xff]
    %v4861 = vld [vmem:[%s4845 + $0x78] sm:$0xff]
    %v4862 = vld [vmem:[%s4845 + $0x80] sm:$0xff]
    %v4863 = vld [vmem:[%s4845 + $0x88] sm:$0xff]
    %v4864 = vld [vmem:[%s4845 + $0x90] sm:$0xff]
    %v4865 = vld [vmem:[%s4845 + $0x98] sm:$0xff]
    %v4866 = vld [vmem:[%s4845 + $0xa0] sm:$0xff]
    %v4867 = vld [vmem:[%s4845 + $0xa8] sm:$0xff]
    %v4868 = vld [vmem:[%s4845 + $0xb0] sm:$0xff]
    %v4869 = vld [vmem:[%s4845 + $0xb8] sm:$0xff]
    %v4870 = vld [vmem:[%s4845 + $0xc0] sm:$0xff]
    %v4871 = vld [vmem:[%s4845 + $0xc8] sm:$0xff]
    %v4872 = vld [vmem:[%s4845 + $0xd0] sm:$0xff]
    %v4873 = vld [vmem:[%s4845 + $0xd8] sm:$0xff]
    %v4874 = vld [vmem:[%s4845 + $0xe0] sm:$0xff]
    %v4875 = vld [vmem:[%s4845 + $0xe8] sm:$0xff]
    %v4876 = vld [vmem:[%s4845 + $0xf0] sm:$0xff]
    %v4877 = vld [vmem:[%s4845 + $0xf8] sm:$0xff]
    %v4878 = vld [vmem:[%s4845 + $0x100] sm:$0xff]
    %v4879 = vld [vmem:[%s4845 + $0x108] sm:$0xff]
    %v4880 = vld [vmem:[%s4845 + $0x110] sm:$0xff]
    %v4881 = vld [vmem:[%s4845 + $0x118] sm:$0xff]
    %v4882 = vld [vmem:[%s4845 + $0x120] sm:$0xff]
    %v4883 = vld [vmem:[%s4845 + $0x128] sm:$0xff]
    %v4884 = vld [vmem:[%s4845 + $0x130] sm:$0xff]
    %v4885 = vld [vmem:[%s4845 + $0x138] sm:$0xff]
    %v4886 = vld [vmem:[%s4845 + $0x140] sm:$0xff]
    %v4887 = vld [vmem:[%s4845 + $0x148] sm:$0xff]
    %v4888 = vld [vmem:[%s4845 + $0x150] sm:$0xff]
    %v4889 = vld [vmem:[%s4845 + $0x158] sm:$0xff]
    %v4890 = vld [vmem:[%s4845 + $0x160] sm:$0xff]
    %v4891 = vld [vmem:[%s4845 + $0x168] sm:$0xff]
    %v4938 = vunpack.c.l.b16 %v4846
    %v4939 = vunpack.c.h.b16 %v4846
    %v4940 = vunpack.c.l.b16 %v4847
    %v4941 = vunpack.c.h.b16 %v4847
    %v4942 = vunpack.c.l.b16 %v4848
    %v4943 = vunpack.c.h.b16 %v4848
    %v4944 = vunpack.c.l.b16 %v4849
    %v4945 = vunpack.c.h.b16 %v4849
    %v4946 = vunpack.c.l.b16 %v4850
    %v4947 = vunpack.c.h.b16 %v4850
    %v4948 = vunpack.c.l.b16 %v4851
    %v4949 = vunpack.c.h.b16 %v4851
    %v4950 = vunpack.c.l.b16 %v4852
    %v4951 = vunpack.c.h.b16 %v4852
    %v4952 = vunpack.c.l.b16 %v4853
    %v4953 = vunpack.c.h.b16 %v4853
    %v4954 = vunpack.c.l.b16 %v4854
    %v4955 = vunpack.c.h.b16 %v4854
    %v4956 = vunpack.c.l.b16 %v4855
    %v4957 = vunpack.c.h.b16 %v4855
    %v4958 = vunpack.c.l.b16 %v4856
    %v4959 = vunpack.c.h.b16 %v4856
    %v4960 = vunpack.c.l.b16 %v4857
    %v4961 = vunpack.c.h.b16 %v4857
    %v4962 = vunpack.c.l.b16 %v4858
    %v4963 = vunpack.c.h.b16 %v4858
    %v4964 = vunpack.c.l.b16 %v4859
    %v4965 = vunpack.c.h.b16 %v4859
    %v4966 = vunpack.c.l.b16 %v4860
    %v4967 = vunpack.c.h.b16 %v4860
    %v4968 = vunpack.c.l.b16 %v4861
    %v4969 = vunpack.c.h.b16 %v4861
    %v4970 = vunpack.c.l.b16 %v4862
    %v4971 = vunpack.c.h.b16 %v4862
    %v4972 = vunpack.c.l.b16 %v4863
    %v4973 = vunpack.c.h.b16 %v4863
    %v4974 = vunpack.c.l.b16 %v4864
    %v4975 = vunpack.c.h.b16 %v4864
    %v4976 = vunpack.c.l.b16 %v4865
    %v4977 = vunpack.c.h.b16 %v4865
    %v4978 = vunpack.c.l.b16 %v4866
    %v4979 = vunpack.c.h.b16 %v4866
    %v4980 = vunpack.c.l.b16 %v4867
    %v4981 = vunpack.c.h.b16 %v4867
    %v4982 = vunpack.c.l.b16 %v4868
    %v4983 = vunpack.c.h.b16 %v4868
    %v4984 = vunpack.c.l.b16 %v4869
    %v4985 = vunpack.c.h.b16 %v4869
    %v4986 = vunpack.c.l.b16 %v4870
    %v4987 = vunpack.c.h.b16 %v4870
    %v4988 = vunpack.c.l.b16 %v4871
    %v4989 = vunpack.c.h.b16 %v4871
    %v4990 = vunpack.c.l.b16 %v4872
    %v4991 = vunpack.c.h.b16 %v4872
    %v4992 = vunpack.c.l.b16 %v4873
    %v4993 = vunpack.c.h.b16 %v4873
    %v4994 = vunpack.c.l.b16 %v4874
    %v4995 = vunpack.c.h.b16 %v4874
    %v4996 = vunpack.c.l.b16 %v4875
    %v4997 = vunpack.c.h.b16 %v4875
    %v4998 = vunpack.c.l.b16 %v4876
    %v4999 = vunpack.c.h.b16 %v4876
    %v5000 = vunpack.c.l.b16 %v4877
    %v5001 = vunpack.c.h.b16 %v4877
    %v5002 = vunpack.c.l.b16 %v4878
    %v5003 = vunpack.c.h.b16 %v4878
    %v5004 = vunpack.c.l.b16 %v4879
    %v5005 = vunpack.c.h.b16 %v4879
    %v5006 = vunpack.c.l.b16 %v4880
    %v5007 = vunpack.c.h.b16 %v4880
    %v5008 = vunpack.c.l.b16 %v4881
    %v5009 = vunpack.c.h.b16 %v4881
    %v5010 = vunpack.c.l.b16 %v4882
    %v5011 = vunpack.c.h.b16 %v4882
    %v5012 = vunpack.c.l.b16 %v4883
    %v5013 = vunpack.c.h.b16 %v4883
    %v5014 = vunpack.c.l.b16 %v4884
    %v5015 = vunpack.c.h.b16 %v4884
    %v5016 = vunpack.c.l.b16 %v4885
    %v5017 = vunpack.c.h.b16 %v4885
    %v5018 = vunpack.c.l.b16 %v4886
    %v5019 = vunpack.c.h.b16 %v4886
    %v5020 = vunpack.c.l.b16 %v4887
    %v5021 = vunpack.c.h.b16 %v4887
    %v5022 = vunpack.c.l.b16 %v4888
    %v5023 = vunpack.c.h.b16 %v4888
    %v5024 = vunpack.c.l.b16 %v4889
    %v5025 = vunpack.c.h.b16 %v4889
    %v5026 = vunpack.c.l.b16 %v4890
    %v5027 = vunpack.c.h.b16 %v4890
    %v5028 = vunpack.c.l.b16 %v4891
    %v5029 = vunpack.c.h.b16 %v4891
    %v5030 = vpack.c.b16 %v4940, %v4938
    %v5031 = vpack.c.b16 %v4941, %v4939
    %v5032 = vpack.c.b16 %v4944, %v4942
    %v5033 = vpack.c.b16 %v4945, %v4943
    %v5034 = vpack.c.b16 %v4948, %v4946
    %v5035 = vpack.c.b16 %v4949, %v4947
    %v5036 = vpack.c.b16 %v4952, %v4950
    %v5037 = vpack.c.b16 %v4953, %v4951
    %v5038 = vpack.c.b16 %v4956, %v4954
    %v5039 = vpack.c.b16 %v4957, %v4955
    %v5040 = vpack.c.b16 %v4960, %v4958
    %v5041 = vpack.c.b16 %v4961, %v4959
    %v5042 = vpack.c.b16 %v4964, %v4962
    %v5043 = vpack.c.b16 %v4965, %v4963
    %v5044 = vpack.c.b16 %v4968, %v4966
    %v5045 = vpack.c.b16 %v4969, %v4967
    %v5046 = vpack.c.b16 %v4972, %v4970
    %v5047 = vpack.c.b16 %v4973, %v4971
    %v5048 = vpack.c.b16 %v4976, %v4974
    %v5049 = vpack.c.b16 %v4977, %v4975
    %v5050 = vpack.c.b16 %v4980, %v4978
    %v5051 = vpack.c.b16 %v4981, %v4979
    %v5052 = vpack.c.b16 %v4984, %v4982
    %v5053 = vpack.c.b16 %v4985, %v4983
    %v5054 = vpack.c.b16 %v4988, %v4986
    %v5055 = vpack.c.b16 %v4989, %v4987
    %v5056 = vpack.c.b16 %v4992, %v4990
    %v5057 = vpack.c.b16 %v4993, %v4991
    %v5058 = vpack.c.b16 %v4996, %v4994
    %v5059 = vpack.c.b16 %v4997, %v4995
    %v5060 = vpack.c.b16 %v5000, %v4998
    %v5061 = vpack.c.b16 %v5001, %v4999
    %v5062 = vpack.c.b16 %v5004, %v5002
    %v5063 = vpack.c.b16 %v5005, %v5003
    %v5064 = vpack.c.b16 %v5008, %v5006
    %v5065 = vpack.c.b16 %v5009, %v5007
    %v5066 = vpack.c.b16 %v5012, %v5010
    %v5067 = vpack.c.b16 %v5013, %v5011
    %v5068 = vpack.c.b16 %v5016, %v5014
    %v5069 = vpack.c.b16 %v5017, %v5015
    %v5070 = vpack.c.b16 %v5020, %v5018
    %v5071 = vpack.c.b16 %v5021, %v5019
    %v5072 = vpack.c.b16 %v5024, %v5022
    %v5073 = vpack.c.b16 %v5025, %v5023
    %v5074 = vpack.c.b16 %v5028, %v5026
    %v5075 = vpack.c.b16 %v5029, %v5027
    %v5123 = vsel %vm2965, %v4765, 0
    %v5126 = vsel %vm2965, %v4774, 0
    %v5129 = vsel %vm2965, %v4783, 0
    %v5132 = vsel %vm2965, %v4792, 0
    %v5135 = vsel %vm2965, %v4801, 0
    %v5138 = vsel %vm2965, %v4810, 0
    %v5141 = vsel %vm2965, %v4819, 0
    %v5144 = vsel %vm2965, %v4828, 0
    %5146 = vmatprep.subr.bf16.mxu0 %v5045
    %5147 = vmatpush1.bf16.msra.mxu0 %v5044
    %5148 = vmatprep.subr.bf16.mxu0 %v5043
    %5149 = vmatpush1.bf16.msra.mxu0 %v5042
    %5150 = vmatprep.subr.bf16.mxu0 %v5041
    %5151 = vmatpush1.bf16.msra.mxu0 %v5040
    %5152 = vmatprep.subr.bf16.mxu0 %v5039
    %5153 = vmatpush1.bf16.msra.mxu0 %v5038
    %5154 = vmatprep.subr.bf16.mxu0 %v5037
    %5155 = vmatpush1.bf16.msra.mxu0 %v5036
    %5156 = vmatprep.subr.bf16.mxu0 %v5035
    %5157 = vmatpush1.bf16.msra.mxu0 %v5034
    %5158 = vmatprep.subr.bf16.mxu0 %v5033
    %5159 = vmatpush1.bf16.msra.mxu0 %v5032
    %5160 = vmatprep.subr.bf16.mxu0 %v5031
    %5161 = vmatpush1.bf16.msra.mxu0 %v5030
    %5162 = vmatprep.subr.bf16.mxu0 %v5061
    %5163 = vmatpush2.bf16.msra.mxu0 %v5060
    %5164 = vmatprep.subr.bf16.mxu0 %v5059
    %5165 = vmatpush2.bf16.msra.mxu0 %v5058
    %5166 = vmatprep.subr.bf16.mxu0 %v5057
    %5167 = vmatpush2.bf16.msra.mxu0 %v5056
    %5168 = vmatprep.subr.bf16.mxu0 %v5055
    %5169 = vmatpush2.bf16.msra.mxu0 %v5054
    %5170 = vmatprep.subr.bf16.mxu0 %v5053
    %5171 = vmatpush2.bf16.msra.mxu0 %v5052
    %5172 = vmatprep.subr.bf16.mxu0 %v5051
    %5173 = vmatpush2.bf16.msra.mxu0 %v5050
    %5174 = vmatprep.subr.bf16.mxu0 %v5049
    %5175 = vmatpush2.bf16.msra.mxu0 %v5048
    %5176 = vmatprep.subr.bf16.mxu0 %v5047
    %5177 = vmatpush2.bf16.msra.mxu0 %v5046
    %5178 = vmatprep.mubr.bf16.mxu0 %v4762
    %5179 = vmatmul.mubr.bf16.gmra.mxu0 %v4759
    %v5180 = vpop.f32.mrf.mxu0
    %v5181 = vadd.f32 0.0, %v5180
    %v5182 = vpop.f32.mrf.mxu0
    %v5183 = vadd.f32 0.0, %v5182
    %v5184 = vpop.f32.mrf.mxu0
    %v5185 = vadd.f32 0.0, %v5184
    %v5186 = vpop.f32.mrf.mxu0
    %v5187 = vadd.f32 0.0, %v5186
    %5188 = vmatprep.mubr.bf16.mxu0 %v4771
    %5189 = vmatmul.mubr.bf16.gmra.mxu0 %v4768
    %v5190 = vpop.f32.mrf.mxu0
    %v5191 = vadd.f32 0.0, %v5190
    %v5192 = vpop.f32.mrf.mxu0
    %v5193 = vadd.f32 0.0, %v5192
    %v5194 = vpop.f32.mrf.mxu0
    %v5195 = vadd.f32 0.0, %v5194
    %v5196 = vpop.f32.mrf.mxu0
    %v5197 = vadd.f32 0.0, %v5196
    %5198 = vmatprep.mubr.bf16.mxu0 %v4780
    %5199 = vmatmul.mubr.bf16.gmra.mxu0 %v4777
    %v5200 = vpop.f32.mrf.mxu0
    %v5201 = vadd.f32 0.0, %v5200
    %v5202 = vpop.f32.mrf.mxu0
    %v5203 = vadd.f32 0.0, %v5202
    %v5204 = vpop.f32.mrf.mxu0
    %v5205 = vadd.f32 0.0, %v5204
    %v5206 = vpop.f32.mrf.mxu0
    %v5207 = vadd.f32 0.0, %v5206
    %5208 = vmatprep.mubr.bf16.mxu0 %v4789
    %5209 = vmatmul.mubr.bf16.gmra.mxu0 %v4786
    %v5210 = vpop.f32.mrf.mxu0
    %v5211 = vadd.f32 0.0, %v5210
    %v5212 = vpop.f32.mrf.mxu0
    %v5213 = vadd.f32 0.0, %v5212
    %v5214 = vpop.f32.mrf.mxu0
    %v5215 = vadd.f32 0.0, %v5214
    %v5216 = vpop.f32.mrf.mxu0
    %v5217 = vadd.f32 0.0, %v5216
    %5218 = vmatprep.mubr.bf16.mxu0 %v4798
    %5219 = vmatmul.mubr.bf16.gmra.mxu0 %v4795
    %v5220 = vpop.f32.mrf.mxu0
    %v5221 = vadd.f32 0.0, %v5220
    %v5222 = vpop.f32.mrf.mxu0
    %v5223 = vadd.f32 0.0, %v5222
    %v5224 = vpop.f32.mrf.mxu0
    %v5225 = vadd.f32 0.0, %v5224
    %v5226 = vpop.f32.mrf.mxu0
    %v5227 = vadd.f32 0.0, %v5226
    %5228 = vmatprep.mubr.bf16.mxu0 %v4807
    %5229 = vmatmul.mubr.bf16.gmra.mxu0 %v4804
    %v5230 = vpop.f32.mrf.mxu0
    %v5231 = vadd.f32 0.0, %v5230
    %v5232 = vpop.f32.mrf.mxu0
    %v5233 = vadd.f32 0.0, %v5232
    %v5234 = vpop.f32.mrf.mxu0
    %v5235 = vadd.f32 0.0, %v5234
    %v5236 = vpop.f32.mrf.mxu0
    %v5237 = vadd.f32 0.0, %v5236
    %5238 = vmatprep.mubr.bf16.mxu0 %v4816
    %5239 = vmatmul.mubr.bf16.gmra.mxu0 %v4813
    %v5240 = vpop.f32.mrf.mxu0
    %v5241 = vadd.f32 0.0, %v5240
    %v5242 = vpop.f32.mrf.mxu0
    %v5243 = vadd.f32 0.0, %v5242
    %v5244 = vpop.f32.mrf.mxu0
    %v5245 = vadd.f32 0.0, %v5244
    %v5246 = vpop.f32.mrf.mxu0
    %v5247 = vadd.f32 0.0, %v5246
    %5248 = vmatprep.mubr.bf16.mxu0 %v4825
    %5249 = vmatmul.mubr.bf16.gmra.mxu0 %v4822
    %v5250 = vpop.f32.mrf.mxu0
    %v5251 = vadd.f32 0.0, %v5250
    %v5252 = vpop.f32.mrf.mxu0
    %v5253 = vadd.f32 0.0, %v5252
    %v5254 = vpop.f32.mrf.mxu0
    %v5255 = vadd.f32 0.0, %v5254
    %v5256 = vpop.f32.mrf.mxu0
    %v5257 = vadd.f32 0.0, %v5256
    %5258 = vdwg.mxu0
    %5259 = vmatprep.subr.bf16.mxu0 0
    %5260 = vmatpush1.bf16.msra.mxu0 0
    %5261 = vmatprep.subr.bf16.mxu0 %v5075
    %5262 = vmatpush1.bf16.msra.mxu0 %v5074
    %5263 = vmatprep.subr.bf16.mxu0 %v5073
    %5264 = vmatpush1.bf16.msra.mxu0 %v5072
    %5265 = vmatprep.subr.bf16.mxu0 %v5071
    %5266 = vmatpush1.bf16.msra.mxu0 %v5070
    %5267 = vmatprep.subr.bf16.mxu0 %v5069
    %5268 = vmatpush1.bf16.msra.mxu0 %v5068
    %5269 = vmatprep.subr.bf16.mxu0 %v5067
    %5270 = vmatpush1.bf16.msra.mxu0 %v5066
    %5271 = vmatprep.subr.bf16.mxu0 %v5065
    %5272 = vmatpush1.bf16.msra.mxu0 %v5064
    %5273 = vmatprep.subr.bf16.mxu0 %v5063
    %5274 = vmatpush1.bf16.msra.mxu0 %v5062
    %5275 = vmatprep.subr.bf16.mxu0 0
    %5276 = vmatpush2.bf16.msra.mxu0 0
    %5277 = vmatprep.subr.bf16.mxu0 0
    %5278 = vmatpush2.bf16.msra.mxu0 0
    %5279 = vmatprep.subr.bf16.mxu0 0
    %5280 = vmatpush2.bf16.msra.mxu0 0
    %5281 = vmatprep.subr.bf16.mxu0 0
    %5282 = vmatpush2.bf16.msra.mxu0 0
    %5283 = vmatprep.subr.bf16.mxu0 0
    %5284 = vmatpush2.bf16.msra.mxu0 0
    %5285 = vmatprep.subr.bf16.mxu0 0
    %5286 = vmatpush2.bf16.msra.mxu0 0
    %5287 = vmatprep.subr.bf16.mxu0 0
    %5288 = vmatpush2.bf16.msra.mxu0 0
    %5289 = vmatprep.subr.bf16.mxu0 0
    %5290 = vmatpush2.bf16.msra.mxu0 0
    %5291 = vmatprep.mubr.bf16.mxu0 0
    %5292 = vmatmul.mubr.bf16.gmra.mxu0 %v5123
    %v5293 = vpop.f32.mrf.mxu0
    %v5294 = vadd.f32 %v5181, %v5293
    %v5295 = vpop.f32.mrf.mxu0
    %v5296 = vadd.f32 %v5183, %v5295
    %v5297 = vpop.f32.mrf.mxu0
    %v5298 = vadd.f32 %v5185, %v5297
    %v5299 = vpop.f32.mrf.mxu0
    %v5300 = vadd.f32 %v5187, %v5299
    %5301 = vmatprep.mubr.bf16.mxu0 0
    %5302 = vmatmul.mubr.bf16.gmra.mxu0 %v5126
    %v5303 = vpop.f32.mrf.mxu0
    %v5304 = vadd.f32 %v5191, %v5303
    %v5305 = vpop.f32.mrf.mxu0
    %v5306 = vadd.f32 %v5193, %v5305
    %v5307 = vpop.f32.mrf.mxu0
    %v5308 = vadd.f32 %v5195, %v5307
    %v5309 = vpop.f32.mrf.mxu0
    %v5310 = vadd.f32 %v5197, %v5309
    %5311 = vmatprep.mubr.bf16.mxu0 0
    %5312 = vmatmul.mubr.bf16.gmra.mxu0 %v5129
    %v5313 = vpop.f32.mrf.mxu0
    %v5314 = vadd.f32 %v5201, %v5313
    %v5315 = vpop.f32.mrf.mxu0
    %v5316 = vadd.f32 %v5203, %v5315
    %v5317 = vpop.f32.mrf.mxu0
    %v5318 = vadd.f32 %v5205, %v5317
    %v5319 = vpop.f32.mrf.mxu0
    %v5320 = vadd.f32 %v5207, %v5319
    %5321 = vmatprep.mubr.bf16.mxu0 0
    %5322 = vmatmul.mubr.bf16.gmra.mxu0 %v5132
    %v5323 = vpop.f32.mrf.mxu0
    %v5324 = vadd.f32 %v5211, %v5323
    %v5325 = vpop.f32.mrf.mxu0
    %v5326 = vadd.f32 %v5213, %v5325
    %v5327 = vpop.f32.mrf.mxu0
    %v5328 = vadd.f32 %v5215, %v5327
    %v5329 = vpop.f32.mrf.mxu0
    %v5330 = vadd.f32 %v5217, %v5329
    %5331 = vmatprep.mubr.bf16.mxu0 0
    %5332 = vmatmul.mubr.bf16.gmra.mxu0 %v5135
    %v5333 = vpop.f32.mrf.mxu0
    %v5334 = vadd.f32 %v5221, %v5333
    %v5335 = vpop.f32.mrf.mxu0
    %v5336 = vadd.f32 %v5223, %v5335
    %v5337 = vpop.f32.mrf.mxu0
    %v5338 = vadd.f32 %v5225, %v5337
    %v5339 = vpop.f32.mrf.mxu0
    %v5340 = vadd.f32 %v5227, %v5339
    %5341 = vmatprep.mubr.bf16.mxu0 0
    %5342 = vmatmul.mubr.bf16.gmra.mxu0 %v5138
    %v5343 = vpop.f32.mrf.mxu0
    %v5344 = vadd.f32 %v5231, %v5343
    %v5345 = vpop.f32.mrf.mxu0
    %v5346 = vadd.f32 %v5233, %v5345
    %v5347 = vpop.f32.mrf.mxu0
    %v5348 = vadd.f32 %v5235, %v5347
    %v5349 = vpop.f32.mrf.mxu0
    %v5350 = vadd.f32 %v5237, %v5349
    %5351 = vmatprep.mubr.bf16.mxu0 0
    %5352 = vmatmul.mubr.bf16.gmra.mxu0 %v5141
    %v5353 = vpop.f32.mrf.mxu0
    %v5354 = vadd.f32 %v5241, %v5353
    %v5355 = vpop.f32.mrf.mxu0
    %v5356 = vadd.f32 %v5243, %v5355
    %v5357 = vpop.f32.mrf.mxu0
    %v5358 = vadd.f32 %v5245, %v5357
    %v5359 = vpop.f32.mrf.mxu0
    %v5360 = vadd.f32 %v5247, %v5359
    %5361 = vmatprep.mubr.bf16.mxu0 0
    %5362 = vmatmul.mubr.bf16.gmra.mxu0 %v5144
    %v5363 = vpop.f32.mrf.mxu0
    %v5364 = vadd.f32 %v5251, %v5363
    %v5365 = vpop.f32.mrf.mxu0
    %v5366 = vadd.f32 %v5253, %v5365
    %v5367 = vpop.f32.mrf.mxu0
    %v5368 = vadd.f32 %v5255, %v5367
    %v5369 = vpop.f32.mrf.mxu0
    %v5370 = vadd.f32 %v5257, %v5369
    %5371 = vdwg.mxu0
    %v5372 = vadd.f32 %v4678, %v5294
    %v5373 = vadd.f32 %v4680, %v5296
    %v5374 = vadd.f32 %v4682, %v5298
    %v5375 = vadd.f32 %v4684, %v5300
    %v5376 = vadd.f32 %v4688, %v5304
    %v5377 = vadd.f32 %v4690, %v5306
    %v5378 = vadd.f32 %v4692, %v5308
    %v5379 = vadd.f32 %v4694, %v5310
    %v5380 = vadd.f32 %v4698, %v5314
    %v5381 = vadd.f32 %v4700, %v5316
    %v5382 = vadd.f32 %v4702, %v5318
    %v5383 = vadd.f32 %v4704, %v5320
    %v5384 = vadd.f32 %v4708, %v5324
    %v5385 = vadd.f32 %v4710, %v5326
    %v5386 = vadd.f32 %v4712, %v5328
    %v5387 = vadd.f32 %v4714, %v5330
    %v5388 = vadd.f32 %v4718, %v5334
    %v5389 = vadd.f32 %v4720, %v5336
    %v5390 = vadd.f32 %v4722, %v5338
    %v5391 = vadd.f32 %v4724, %v5340
    %v5392 = vadd.f32 %v4728, %v5344
    %v5393 = vadd.f32 %v4730, %v5346
    %v5394 = vadd.f32 %v4732, %v5348
    %v5395 = vadd.f32 %v4734, %v5350
    %v5396 = vadd.f32 %v4738, %v5354
    %v5397 = vadd.f32 %v4740, %v5356
    %v5398 = vadd.f32 %v4742, %v5358
    %v5399 = vadd.f32 %v4744, %v5360
    %v5400 = vadd.f32 %v4748, %v5364
    %v5401 = vadd.f32 %v4750, %v5366
    %v5402 = vadd.f32 %v4752, %v5368
    %v5403 = vadd.f32 %v4754, %v5370
    %vm5404 = vcmask 1044480
    %v5405 = vrot.slane %v3518, 3
    %v5406 = vrot.slane %v3521, 3
    %v5407 = vsel %vm5404, %v5405, %v5406
    %v5408 = vrot.slane %v3519, 3
    %v5409 = vrot.slane %v3522, 3
    %v5410 = vsel %vm5404, %v5408, %v5409
    %v5411 = vrot.slane %v3520, 3
    %v5412 = vrot.slane %v3523, 3
    %v5413 = vsel %vm5404, %v5411, %v5412
    %v5414 = vrot.slane %v3524, 3
    %v5415 = vrot.slane %v3527, 3
    %v5416 = vsel %vm5404, %v5414, %v5415
    %v5417 = vrot.slane %v3525, 3
    %v5418 = vrot.slane %v3528, 3
    %v5419 = vsel %vm5404, %v5417, %v5418
    %v5420 = vrot.slane %v3526, 3
    %v5421 = vrot.slane %v3529, 3
    %v5422 = vsel %vm5404, %v5420, %v5421
    %v5423 = vrot.slane %v3530, 3
    %v5424 = vrot.slane %v3533, 3
    %v5425 = vsel %vm5404, %v5423, %v5424
    %v5426 = vrot.slane %v3531, 3
    %v5427 = vrot.slane %v3534, 3
    %v5428 = vsel %vm5404, %v5426, %v5427
    %v5429 = vrot.slane %v3532, 3
    %v5430 = vrot.slane %v3535, 3
    %v5431 = vsel %vm5404, %v5429, %v5430
    %v5432 = vrot.slane %v3536, 3
    %v5433 = vrot.slane %v3539, 3
    %v5434 = vsel %vm5404, %v5432, %v5433
    %v5435 = vrot.slane %v3537, 3
    %v5436 = vrot.slane %v3540, 3
    %v5437 = vsel %vm5404, %v5435, %v5436
    %v5438 = vrot.slane %v3538, 3
    %v5439 = vrot.slane %v3541, 3
    %v5440 = vsel %vm5404, %v5438, %v5439
    %v5441 = vrot.slane %v3542, 3
    %v5442 = vrot.slane %v3545, 3
    %v5443 = vsel %vm5404, %v5441, %v5442
    %v5444 = vrot.slane %v3543, 3
    %v5445 = vrot.slane %v3546, 3
    %v5446 = vsel %vm5404, %v5444, %v5445
    %v5447 = vrot.slane %v3544, 3
    %v5448 = vrot.slane %v3547, 3
    %v5449 = vsel %vm5404, %v5447, %v5448
    %v5450 = vrot.slane %v3548, 3
    %v5451 = vrot.slane %v3551, 3
    %v5452 = vsel %vm5404, %v5450, %v5451
    %v5453 = vrot.slane %v3549, 3
    %v5454 = vrot.slane %v3552, 3
    %v5455 = vsel %vm5404, %v5453, %v5454
    %v5456 = vrot.slane %v3550, 3
    %v5457 = vrot.slane %v3553, 3
    %v5458 = vsel %vm5404, %v5456, %v5457
    %v5459 = vrot.slane %v3554, 3
    %v5460 = vrot.slane %v3557, 3
    %v5461 = vsel %vm5404, %v5459, %v5460
    %v5462 = vrot.slane %v3555, 3
    %v5463 = vrot.slane %v3558, 3
    %v5464 = vsel %vm5404, %v5462, %v5463
    %v5465 = vrot.slane %v3556, 3
    %v5466 = vrot.slane %v3559, 3
    %v5467 = vsel %vm5404, %v5465, %v5466
    %v5468 = vrot.slane %v3560, 3
    %v5469 = vrot.slane %v3563, 3
    %v5470 = vsel %vm5404, %v5468, %v5469
    %v5471 = vrot.slane %v3561, 3
    %v5472 = vrot.slane %v3564, 3
    %v5473 = vsel %vm5404, %v5471, %v5472
    %v5474 = vrot.slane %v3562, 3
    %v5475 = vrot.slane %v3565, 3
    %v5476 = vsel %vm5404, %v5474, %v5475
    %s5493 = scalar_lea.vmem [#allocation2], 1104
    %v5494 = vld [vmem:[%s5493] sm:$0xff]
    %v5495 = vld [vmem:[%s5493 + $0x8] sm:$0xff]
    %v5496 = vld [vmem:[%s5493 + $0x10] sm:$0xff]
    %v5497 = vld [vmem:[%s5493 + $0x18] sm:$0xff]
    %v5498 = vld [vmem:[%s5493 + $0x20] sm:$0xff]
    %v5499 = vld [vmem:[%s5493 + $0x28] sm:$0xff]
    %v5500 = vld [vmem:[%s5493 + $0x30] sm:$0xff]
    %v5501 = vld [vmem:[%s5493 + $0x38] sm:$0xff]
    %v5502 = vld [vmem:[%s5493 + $0x40] sm:$0xff]
    %v5503 = vld [vmem:[%s5493 + $0x48] sm:$0xff]
    %v5504 = vld [vmem:[%s5493 + $0x50] sm:$0xff]
    %v5505 = vld [vmem:[%s5493 + $0x58] sm:$0xff]
    %v5506 = vld [vmem:[%s5493 + $0x60] sm:$0xff]
    %v5507 = vld [vmem:[%s5493 + $0x68] sm:$0xff]
    %v5508 = vld [vmem:[%s5493 + $0x70] sm:$0xff]
    %v5509 = vld [vmem:[%s5493 + $0x78] sm:$0xff]
    %v5510 = vld [vmem:[%s5493 + $0x80] sm:$0xff]
    %v5511 = vld [vmem:[%s5493 + $0x88] sm:$0xff]
    %v5512 = vld [vmem:[%s5493 + $0x90] sm:$0xff]
    %v5513 = vld [vmem:[%s5493 + $0x98] sm:$0xff]
    %v5514 = vld [vmem:[%s5493 + $0xa0] sm:$0xff]
    %v5515 = vld [vmem:[%s5493 + $0xa8] sm:$0xff]
    %v5516 = vld [vmem:[%s5493 + $0xb0] sm:$0xff]
    %v5517 = vld [vmem:[%s5493 + $0xb8] sm:$0xff]
    %v5518 = vld [vmem:[%s5493 + $0xc0] sm:$0xff]
    %v5519 = vld [vmem:[%s5493 + $0xc8] sm:$0xff]
    %v5520 = vld [vmem:[%s5493 + $0xd0] sm:$0xff]
    %v5521 = vld [vmem:[%s5493 + $0xd8] sm:$0xff]
    %v5522 = vld [vmem:[%s5493 + $0xe0] sm:$0xff]
    %v5523 = vld [vmem:[%s5493 + $0xe8] sm:$0xff]
    %v5524 = vld [vmem:[%s5493 + $0xf0] sm:$0xff]
    %v5525 = vld [vmem:[%s5493 + $0xf8] sm:$0xff]
    %v5526 = vld [vmem:[%s5493 + $0x100] sm:$0xff]
    %v5527 = vld [vmem:[%s5493 + $0x108] sm:$0xff]
    %v5528 = vld [vmem:[%s5493 + $0x110] sm:$0xff]
    %v5529 = vld [vmem:[%s5493 + $0x118] sm:$0xff]
    %v5530 = vld [vmem:[%s5493 + $0x120] sm:$0xff]
    %v5531 = vld [vmem:[%s5493 + $0x128] sm:$0xff]
    %v5532 = vld [vmem:[%s5493 + $0x130] sm:$0xff]
    %v5533 = vld [vmem:[%s5493 + $0x138] sm:$0xff]
    %v5534 = vld [vmem:[%s5493 + $0x140] sm:$0xff]
    %v5535 = vld [vmem:[%s5493 + $0x148] sm:$0xff]
    %v5536 = vld [vmem:[%s5493 + $0x150] sm:$0xff]
    %v5537 = vld [vmem:[%s5493 + $0x158] sm:$0xff]
    %v5538 = vld [vmem:[%s5493 + $0x160] sm:$0xff]
    %v5539 = vld [vmem:[%s5493 + $0x168] sm:$0xff]
    %v5586 = vunpack.c.l.b16 %v5494
    %v5587 = vunpack.c.h.b16 %v5494
    %v5588 = vunpack.c.l.b16 %v5495
    %v5589 = vunpack.c.h.b16 %v5495
    %v5590 = vunpack.c.l.b16 %v5496
    %v5591 = vunpack.c.h.b16 %v5496
    %v5592 = vunpack.c.l.b16 %v5497
    %v5593 = vunpack.c.h.b16 %v5497
    %v5594 = vunpack.c.l.b16 %v5498
    %v5595 = vunpack.c.h.b16 %v5498
    %v5596 = vunpack.c.l.b16 %v5499
    %v5597 = vunpack.c.h.b16 %v5499
    %v5598 = vunpack.c.l.b16 %v5500
    %v5599 = vunpack.c.h.b16 %v5500
    %v5600 = vunpack.c.l.b16 %v5501
    %v5601 = vunpack.c.h.b16 %v5501
    %v5602 = vunpack.c.l.b16 %v5502
    %v5603 = vunpack.c.h.b16 %v5502
    %v5604 = vunpack.c.l.b16 %v5503
    %v5605 = vunpack.c.h.b16 %v5503
    %v5606 = vunpack.c.l.b16 %v5504
    %v5607 = vunpack.c.h.b16 %v5504
    %v5608 = vunpack.c.l.b16 %v5505
    %v5609 = vunpack.c.h.b16 %v5505
    %v5610 = vunpack.c.l.b16 %v5506
    %v5611 = vunpack.c.h.b16 %v5506
    %v5612 = vunpack.c.l.b16 %v5507
    %v5613 = vunpack.c.h.b16 %v5507
    %v5614 = vunpack.c.l.b16 %v5508
    %v5615 = vunpack.c.h.b16 %v5508
    %v5616 = vunpack.c.l.b16 %v5509
    %v5617 = vunpack.c.h.b16 %v5509
    %v5618 = vunpack.c.l.b16 %v5510
    %v5619 = vunpack.c.h.b16 %v5510
    %v5620 = vunpack.c.l.b16 %v5511
    %v5621 = vunpack.c.h.b16 %v5511
    %v5622 = vunpack.c.l.b16 %v5512
    %v5623 = vunpack.c.h.b16 %v5512
    %v5624 = vunpack.c.l.b16 %v5513
    %v5625 = vunpack.c.h.b16 %v5513
    %v5626 = vunpack.c.l.b16 %v5514
    %v5627 = vunpack.c.h.b16 %v5514
    %v5628 = vunpack.c.l.b16 %v5515
    %v5629 = vunpack.c.h.b16 %v5515
    %v5630 = vunpack.c.l.b16 %v5516
    %v5631 = vunpack.c.h.b16 %v5516
    %v5632 = vunpack.c.l.b16 %v5517
    %v5633 = vunpack.c.h.b16 %v5517
    %v5634 = vunpack.c.l.b16 %v5518
    %v5635 = vunpack.c.h.b16 %v5518
    %v5636 = vunpack.c.l.b16 %v5519
    %v5637 = vunpack.c.h.b16 %v5519
    %v5638 = vunpack.c.l.b16 %v5520
    %v5639 = vunpack.c.h.b16 %v5520
    %v5640 = vunpack.c.l.b16 %v5521
    %v5641 = vunpack.c.h.b16 %v5521
    %v5642 = vunpack.c.l.b16 %v5522
    %v5643 = vunpack.c.h.b16 %v5522
    %v5644 = vunpack.c.l.b16 %v5523
    %v5645 = vunpack.c.h.b16 %v5523
    %v5646 = vunpack.c.l.b16 %v5524
    %v5647 = vunpack.c.h.b16 %v5524
    %v5648 = vunpack.c.l.b16 %v5525
    %v5649 = vunpack.c.h.b16 %v5525
    %v5650 = vunpack.c.l.b16 %v5526
    %v5651 = vunpack.c.h.b16 %v5526
    %v5652 = vunpack.c.l.b16 %v5527
    %v5653 = vunpack.c.h.b16 %v5527
    %v5654 = vunpack.c.l.b16 %v5528
    %v5655 = vunpack.c.h.b16 %v5528
    %v5656 = vunpack.c.l.b16 %v5529
    %v5657 = vunpack.c.h.b16 %v5529
    %v5658 = vunpack.c.l.b16 %v5530
    %v5659 = vunpack.c.h.b16 %v5530
    %v5660 = vunpack.c.l.b16 %v5531
    %v5661 = vunpack.c.h.b16 %v5531
    %v5662 = vunpack.c.l.b16 %v5532
    %v5663 = vunpack.c.h.b16 %v5532
    %v5664 = vunpack.c.l.b16 %v5533
    %v5665 = vunpack.c.h.b16 %v5533
    %v5666 = vunpack.c.l.b16 %v5534
    %v5667 = vunpack.c.h.b16 %v5534
    %v5668 = vunpack.c.l.b16 %v5535
    %v5669 = vunpack.c.h.b16 %v5535
    %v5670 = vunpack.c.l.b16 %v5536
    %v5671 = vunpack.c.h.b16 %v5536
    %v5672 = vunpack.c.l.b16 %v5537
    %v5673 = vunpack.c.h.b16 %v5537
    %v5674 = vunpack.c.l.b16 %v5538
    %v5675 = vunpack.c.h.b16 %v5538
    %v5676 = vunpack.c.l.b16 %v5539
    %v5677 = vunpack.c.h.b16 %v5539
    %v5678 = vpack.c.b16 %v5588, %v5586
    %v5679 = vpack.c.b16 %v5589, %v5587
    %v5680 = vpack.c.b16 %v5592, %v5590
    %v5681 = vpack.c.b16 %v5593, %v5591
    %v5682 = vpack.c.b16 %v5596, %v5594
    %v5683 = vpack.c.b16 %v5597, %v5595
    %v5684 = vpack.c.b16 %v5600, %v5598
    %v5685 = vpack.c.b16 %v5601, %v5599
    %v5686 = vpack.c.b16 %v5604, %v5602
    %v5687 = vpack.c.b16 %v5605, %v5603
    %v5688 = vpack.c.b16 %v5608, %v5606
    %v5689 = vpack.c.b16 %v5609, %v5607
    %v5690 = vpack.c.b16 %v5612, %v5610
    %v5691 = vpack.c.b16 %v5613, %v5611
    %v5692 = vpack.c.b16 %v5616, %v5614
    %v5693 = vpack.c.b16 %v5617, %v5615
    %v5694 = vpack.c.b16 %v5620, %v5618
    %v5695 = vpack.c.b16 %v5621, %v5619
    %v5696 = vpack.c.b16 %v5624, %v5622
    %v5697 = vpack.c.b16 %v5625, %v5623
    %v5698 = vpack.c.b16 %v5628, %v5626
    %v5699 = vpack.c.b16 %v5629, %v5627
    %v5700 = vpack.c.b16 %v5632, %v5630
    %v5701 = vpack.c.b16 %v5633, %v5631
    %v5702 = vpack.c.b16 %v5636, %v5634
    %v5703 = vpack.c.b16 %v5637, %v5635
    %v5704 = vpack.c.b16 %v5640, %v5638
    %v5705 = vpack.c.b16 %v5641, %v5639
    %v5706 = vpack.c.b16 %v5644, %v5642
    %v5707 = vpack.c.b16 %v5645, %v5643
    %v5708 = vpack.c.b16 %v5648, %v5646
    %v5709 = vpack.c.b16 %v5649, %v5647
    %v5710 = vpack.c.b16 %v5652, %v5650
    %v5711 = vpack.c.b16 %v5653, %v5651
    %v5712 = vpack.c.b16 %v5656, %v5654
    %v5713 = vpack.c.b16 %v5657, %v5655
    %v5714 = vpack.c.b16 %v5660, %v5658
    %v5715 = vpack.c.b16 %v5661, %v5659
    %v5716 = vpack.c.b16 %v5664, %v5662
    %v5717 = vpack.c.b16 %v5665, %v5663
    %v5718 = vpack.c.b16 %v5668, %v5666
    %v5719 = vpack.c.b16 %v5669, %v5667
    %v5720 = vpack.c.b16 %v5672, %v5670
    %v5721 = vpack.c.b16 %v5673, %v5671
    %v5722 = vpack.c.b16 %v5676, %v5674
    %v5723 = vpack.c.b16 %v5677, %v5675
    %v5771 = vsel %vm2965, %v5413, 0
    %v5774 = vsel %vm2965, %v5422, 0
    %v5777 = vsel %vm2965, %v5431, 0
    %v5780 = vsel %vm2965, %v5440, 0
    %v5783 = vsel %vm2965, %v5449, 0
    %v5786 = vsel %vm2965, %v5458, 0
    %v5789 = vsel %vm2965, %v5467, 0
    %v5792 = vsel %vm2965, %v5476, 0
    %5794 = vmatprep.subr.bf16.mxu0 %v5693
    %5795 = vmatpush1.bf16.msra.mxu0 %v5692
    %5796 = vmatprep.subr.bf16.mxu0 %v5691
    %5797 = vmatpush1.bf16.msra.mxu0 %v5690
    %5798 = vmatprep.subr.bf16.mxu0 %v5689
    %5799 = vmatpush1.bf16.msra.mxu0 %v5688
    %5800 = vmatprep.subr.bf16.mxu0 %v5687
    %5801 = vmatpush1.bf16.msra.mxu0 %v5686
    %5802 = vmatprep.subr.bf16.mxu0 %v5685
    %5803 = vmatpush1.bf16.msra.mxu0 %v5684
    %5804 = vmatprep.subr.bf16.mxu0 %v5683
    %5805 = vmatpush1.bf16.msra.mxu0 %v5682
    %5806 = vmatprep.subr.bf16.mxu0 %v5681
    %5807 = vmatpush1.bf16.msra.mxu0 %v5680
    %5808 = vmatprep.subr.bf16.mxu0 %v5679
    %5809 = vmatpush1.bf16.msra.mxu0 %v5678
    %5810 = vmatprep.subr.bf16.mxu0 %v5709
    %5811 = vmatpush2.bf16.msra.mxu0 %v5708
    %5812 = vmatprep.subr.bf16.mxu0 %v5707
    %5813 = vmatpush2.bf16.msra.mxu0 %v5706
    %5814 = vmatprep.subr.bf16.mxu0 %v5705
    %5815 = vmatpush2.bf16.msra.mxu0 %v5704
    %5816 = vmatprep.subr.bf16.mxu0 %v5703
    %5817 = vmatpush2.bf16.msra.mxu0 %v5702
    %5818 = vmatprep.subr.bf16.mxu0 %v5701
    %5819 = vmatpush2.bf16.msra.mxu0 %v5700
    %5820 = vmatprep.subr.bf16.mxu0 %v5699
    %5821 = vmatpush2.bf16.msra.mxu0 %v5698
    %5822 = vmatprep.subr.bf16.mxu0 %v5697
    %5823 = vmatpush2.bf16.msra.mxu0 %v5696
    %5824 = vmatprep.subr.bf16.mxu0 %v5695
    %5825 = vmatpush2.bf16.msra.mxu0 %v5694
    %5826 = vmatprep.mubr.bf16.mxu0 %v5410
    %5827 = vmatmul.mubr.bf16.gmra.mxu0 %v5407
    %v5828 = vpop.f32.mrf.mxu0
    %v5829 = vadd.f32 0.0, %v5828
    %v5830 = vpop.f32.mrf.mxu0
    %v5831 = vadd.f32 0.0, %v5830
    %v5832 = vpop.f32.mrf.mxu0
    %v5833 = vadd.f32 0.0, %v5832
    %v5834 = vpop.f32.mrf.mxu0
    %v5835 = vadd.f32 0.0, %v5834
    %5836 = vmatprep.mubr.bf16.mxu0 %v5419
    %5837 = vmatmul.mubr.bf16.gmra.mxu0 %v5416
    %v5838 = vpop.f32.mrf.mxu0
    %v5839 = vadd.f32 0.0, %v5838
    %v5840 = vpop.f32.mrf.mxu0
    %v5841 = vadd.f32 0.0, %v5840
    %v5842 = vpop.f32.mrf.mxu0
    %v5843 = vadd.f32 0.0, %v5842
    %v5844 = vpop.f32.mrf.mxu0
    %v5845 = vadd.f32 0.0, %v5844
    %5846 = vmatprep.mubr.bf16.mxu0 %v5428
    %5847 = vmatmul.mubr.bf16.gmra.mxu0 %v5425
    %v5848 = vpop.f32.mrf.mxu0
    %v5849 = vadd.f32 0.0, %v5848
    %v5850 = vpop.f32.mrf.mxu0
    %v5851 = vadd.f32 0.0, %v5850
    %v5852 = vpop.f32.mrf.mxu0
    %v5853 = vadd.f32 0.0, %v5852
    %v5854 = vpop.f32.mrf.mxu0
    %v5855 = vadd.f32 0.0, %v5854
    %5856 = vmatprep.mubr.bf16.mxu0 %v5437
    %5857 = vmatmul.mubr.bf16.gmra.mxu0 %v5434
    %v5858 = vpop.f32.mrf.mxu0
    %v5859 = vadd.f32 0.0, %v5858
    %v5860 = vpop.f32.mrf.mxu0
    %v5861 = vadd.f32 0.0, %v5860
    %v5862 = vpop.f32.mrf.mxu0
    %v5863 = vadd.f32 0.0, %v5862
    %v5864 = vpop.f32.mrf.mxu0
    %v5865 = vadd.f32 0.0, %v5864
    %5866 = vmatprep.mubr.bf16.mxu0 %v5446
    %5867 = vmatmul.mubr.bf16.gmra.mxu0 %v5443
    %v5868 = vpop.f32.mrf.mxu0
    %v5869 = vadd.f32 0.0, %v5868
    %v5870 = vpop.f32.mrf.mxu0
    %v5871 = vadd.f32 0.0, %v5870
    %v5872 = vpop.f32.mrf.mxu0
    %v5873 = vadd.f32 0.0, %v5872
    %v5874 = vpop.f32.mrf.mxu0
    %v5875 = vadd.f32 0.0, %v5874
    %5876 = vmatprep.mubr.bf16.mxu0 %v5455
    %5877 = vmatmul.mubr.bf16.gmra.mxu0 %v5452
    %v5878 = vpop.f32.mrf.mxu0
    %v5879 = vadd.f32 0.0, %v5878
    %v5880 = vpop.f32.mrf.mxu0
    %v5881 = vadd.f32 0.0, %v5880
    %v5882 = vpop.f32.mrf.mxu0
    %v5883 = vadd.f32 0.0, %v5882
    %v5884 = vpop.f32.mrf.mxu0
    %v5885 = vadd.f32 0.0, %v5884
    %5886 = vmatprep.mubr.bf16.mxu0 %v5464
    %5887 = vmatmul.mubr.bf16.gmra.mxu0 %v5461
    %v5888 = vpop.f32.mrf.mxu0
    %v5889 = vadd.f32 0.0, %v5888
    %v5890 = vpop.f32.mrf.mxu0
    %v5891 = vadd.f32 0.0, %v5890
    %v5892 = vpop.f32.mrf.mxu0
    %v5893 = vadd.f32 0.0, %v5892
    %v5894 = vpop.f32.mrf.mxu0
    %v5895 = vadd.f32 0.0, %v5894
    %5896 = vmatprep.mubr.bf16.mxu0 %v5473
    %5897 = vmatmul.mubr.bf16.gmra.mxu0 %v5470
    %v5898 = vpop.f32.mrf.mxu0
    %v5899 = vadd.f32 0.0, %v5898
    %v5900 = vpop.f32.mrf.mxu0
    %v5901 = vadd.f32 0.0, %v5900
    %v5902 = vpop.f32.mrf.mxu0
    %v5903 = vadd.f32 0.0, %v5902
    %v5904 = vpop.f32.mrf.mxu0
    %v5905 = vadd.f32 0.0, %v5904
    %5906 = vdwg.mxu0
    %5907 = vmatprep.subr.bf16.mxu0 0
    %5908 = vmatpush1.bf16.msra.mxu0 0
    %5909 = vmatprep.subr.bf16.mxu0 %v5723
    %5910 = vmatpush1.bf16.msra.mxu0 %v5722
    %5911 = vmatprep.subr.bf16.mxu0 %v5721
    %5912 = vmatpush1.bf16.msra.mxu0 %v5720
    %5913 = vmatprep.subr.bf16.mxu0 %v5719
    %5914 = vmatpush1.bf16.msra.mxu0 %v5718
    %5915 = vmatprep.subr.bf16.mxu0 %v5717
    %5916 = vmatpush1.bf16.msra.mxu0 %v5716
    %5917 = vmatprep.subr.bf16.mxu0 %v5715
    %5918 = vmatpush1.bf16.msra.mxu0 %v5714
    %5919 = vmatprep.subr.bf16.mxu0 %v5713
    %5920 = vmatpush1.bf16.msra.mxu0 %v5712
    %5921 = vmatprep.subr.bf16.mxu0 %v5711
    %5922 = vmatpush1.bf16.msra.mxu0 %v5710
    %5923 = vmatprep.subr.bf16.mxu0 0
    %5924 = vmatpush2.bf16.msra.mxu0 0
    %5925 = vmatprep.subr.bf16.mxu0 0
    %5926 = vmatpush2.bf16.msra.mxu0 0
    %5927 = vmatprep.subr.bf16.mxu0 0
    %5928 = vmatpush2.bf16.msra.mxu0 0
    %5929 = vmatprep.subr.bf16.mxu0 0
    %5930 = vmatpush2.bf16.msra.mxu0 0
    %5931 = vmatprep.subr.bf16.mxu0 0
    %5932 = vmatpush2.bf16.msra.mxu0 0
    %5933 = vmatprep.subr.bf16.mxu0 0
    %5934 = vmatpush2.bf16.msra.mxu0 0
    %5935 = vmatprep.subr.bf16.mxu0 0
    %5936 = vmatpush2.bf16.msra.mxu0 0
    %5937 = vmatprep.subr.bf16.mxu0 0
    %5938 = vmatpush2.bf16.msra.mxu0 0
    %5939 = vmatprep.mubr.bf16.mxu0 0
    %5940 = vmatmul.mubr.bf16.gmra.mxu0 %v5771
    %v5941 = vpop.f32.mrf.mxu0
    %v5942 = vadd.f32 %v5829, %v5941
    %v5943 = vpop.f32.mrf.mxu0
    %v5944 = vadd.f32 %v5831, %v5943
    %v5945 = vpop.f32.mrf.mxu0
    %v5946 = vadd.f32 %v5833, %v5945
    %v5947 = vpop.f32.mrf.mxu0
    %v5948 = vadd.f32 %v5835, %v5947
    %5949 = vmatprep.mubr.bf16.mxu0 0
    %5950 = vmatmul.mubr.bf16.gmra.mxu0 %v5774
    %v5951 = vpop.f32.mrf.mxu0
    %v5952 = vadd.f32 %v5839, %v5951
    %v5953 = vpop.f32.mrf.mxu0
    %v5954 = vadd.f32 %v5841, %v5953
    %v5955 = vpop.f32.mrf.mxu0
    %v5956 = vadd.f32 %v5843, %v5955
    %v5957 = vpop.f32.mrf.mxu0
    %v5958 = vadd.f32 %v5845, %v5957
    %5959 = vmatprep.mubr.bf16.mxu0 0
    %5960 = vmatmul.mubr.bf16.gmra.mxu0 %v5777
    %v5961 = vpop.f32.mrf.mxu0
    %v5962 = vadd.f32 %v5849, %v5961
    %v5963 = vpop.f32.mrf.mxu0
    %v5964 = vadd.f32 %v5851, %v5963
    %v5965 = vpop.f32.mrf.mxu0
    %v5966 = vadd.f32 %v5853, %v5965
    %v5967 = vpop.f32.mrf.mxu0
    %v5968 = vadd.f32 %v5855, %v5967
    %5969 = vmatprep.mubr.bf16.mxu0 0
    %5970 = vmatmul.mubr.bf16.gmra.mxu0 %v5780
    %v5971 = vpop.f32.mrf.mxu0
    %v5972 = vadd.f32 %v5859, %v5971
    %v5973 = vpop.f32.mrf.mxu0
    %v5974 = vadd.f32 %v5861, %v5973
    %v5975 = vpop.f32.mrf.mxu0
    %v5976 = vadd.f32 %v5863, %v5975
    %v5977 = vpop.f32.mrf.mxu0
    %v5978 = vadd.f32 %v5865, %v5977
    %5979 = vmatprep.mubr.bf16.mxu0 0
    %5980 = vmatmul.mubr.bf16.gmra.mxu0 %v5783
    %v5981 = vpop.f32.mrf.mxu0
    %v5982 = vadd.f32 %v5869, %v5981
    %v5983 = vpop.f32.mrf.mxu0
    %v5984 = vadd.f32 %v5871, %v5983
    %v5985 = vpop.f32.mrf.mxu0
    %v5986 = vadd.f32 %v5873, %v5985
    %v5987 = vpop.f32.mrf.mxu0
    %v5988 = vadd.f32 %v5875, %v5987
    %5989 = vmatprep.mubr.bf16.mxu0 0
    %5990 = vmatmul.mubr.bf16.gmra.mxu0 %v5786
    %v5991 = vpop.f32.mrf.mxu0
    %v5992 = vadd.f32 %v5879, %v5991
    %v5993 = vpop.f32.mrf.mxu0
    %v5994 = vadd.f32 %v5881, %v5993
    %v5995 = vpop.f32.mrf.mxu0
    %v5996 = vadd.f32 %v5883, %v5995
    %v5997 = vpop.f32.mrf.mxu0
    %v5998 = vadd.f32 %v5885, %v5997
    %5999 = vmatprep.mubr.bf16.mxu0 0
    %6000 = vmatmul.mubr.bf16.gmra.mxu0 %v5789
    %v6001 = vpop.f32.mrf.mxu0
    %v6002 = vadd.f32 %v5889, %v6001
    %v6003 = vpop.f32.mrf.mxu0
    %v6004 = vadd.f32 %v5891, %v6003
    %v6005 = vpop.f32.mrf.mxu0
    %v6006 = vadd.f32 %v5893, %v6005
    %v6007 = vpop.f32.mrf.mxu0
    %v6008 = vadd.f32 %v5895, %v6007
    %6009 = vmatprep.mubr.bf16.mxu0 0
    %6010 = vmatmul.mubr.bf16.gmra.mxu0 %v5792
    %v6011 = vpop.f32.mrf.mxu0
    %v6012 = vadd.f32 %v5899, %v6011
    %v6013 = vpop.f32.mrf.mxu0
    %v6014 = vadd.f32 %v5901, %v6013
    %v6015 = vpop.f32.mrf.mxu0
    %v6016 = vadd.f32 %v5903, %v6015
    %v6017 = vpop.f32.mrf.mxu0
    %v6018 = vadd.f32 %v5905, %v6017
    %6019 = vdwg.mxu0
    %v6020 = vadd.f32 %v5372, %v5942
    %v6021 = vadd.f32 %v5373, %v5944
    %v6022 = vadd.f32 %v5374, %v5946
    %v6023 = vadd.f32 %v5375, %v5948
    %v6024 = vadd.f32 %v5376, %v5952
    %v6025 = vadd.f32 %v5377, %v5954
    %v6026 = vadd.f32 %v5378, %v5956
    %v6027 = vadd.f32 %v5379, %v5958
    %v6028 = vadd.f32 %v5380, %v5962
    %v6029 = vadd.f32 %v5381, %v5964
    %v6030 = vadd.f32 %v5382, %v5966
    %v6031 = vadd.f32 %v5383, %v5968
    %v6032 = vadd.f32 %v5384, %v5972
    %v6033 = vadd.f32 %v5385, %v5974
    %v6034 = vadd.f32 %v5386, %v5976
    %v6035 = vadd.f32 %v5387, %v5978
    %v6036 = vadd.f32 %v5388, %v5982
    %v6037 = vadd.f32 %v5389, %v5984
    %v6038 = vadd.f32 %v5390, %v5986
    %v6039 = vadd.f32 %v5391, %v5988
    %v6040 = vadd.f32 %v5392, %v5992
    %v6041 = vadd.f32 %v5393, %v5994
    %v6042 = vadd.f32 %v5394, %v5996
    %v6043 = vadd.f32 %v5395, %v5998
    %v6044 = vadd.f32 %v5396, %v6002
    %v6045 = vadd.f32 %v5397, %v6004
    %v6046 = vadd.f32 %v5398, %v6006
    %v6047 = vadd.f32 %v5399, %v6008
    %v6048 = vadd.f32 %v5400, %v6012
    %v6049 = vadd.f32 %v5401, %v6014
    %v6050 = vadd.f32 %v5402, %v6016
    %v6051 = vadd.f32 %v5403, %v6018
    %vm6052 = vcmask 1043456
    %v6053 = vrot.slane %v3518, 4
    %v6054 = vrot.slane %v3521, 4
    %v6055 = vsel %vm6052, %v6053, %v6054
    %v6056 = vrot.slane %v3519, 4
    %v6057 = vrot.slane %v3522, 4
    %v6058 = vsel %vm6052, %v6056, %v6057
    %v6059 = vrot.slane %v3520, 4
    %v6060 = vrot.slane %v3523, 4
    %v6061 = vsel %vm6052, %v6059, %v6060
    %v6062 = vrot.slane %v3524, 4
    %v6063 = vrot.slane %v3527, 4
    %v6064 = vsel %vm6052, %v6062, %v6063
    %v6065 = vrot.slane %v3525, 4
    %v6066 = vrot.slane %v3528, 4
    %v6067 = vsel %vm6052, %v6065, %v6066
    %v6068 = vrot.slane %v3526, 4
    %v6069 = vrot.slane %v3529, 4
    %v6070 = vsel %vm6052, %v6068, %v6069
    %v6071 = vrot.slane %v3530, 4
    %v6072 = vrot.slane %v3533, 4
    %v6073 = vsel %vm6052, %v6071, %v6072
    %v6074 = vrot.slane %v3531, 4
    %v6075 = vrot.slane %v3534, 4
    %v6076 = vsel %vm6052, %v6074, %v6075
    %v6077 = vrot.slane %v3532, 4
    %v6078 = vrot.slane %v3535, 4
    %v6079 = vsel %vm6052, %v6077, %v6078
    %v6080 = vrot.slane %v3536, 4
    %v6081 = vrot.slane %v3539, 4
    %v6082 = vsel %vm6052, %v6080, %v6081
    %v6083 = vrot.slane %v3537, 4
    %v6084 = vrot.slane %v3540, 4
    %v6085 = vsel %vm6052, %v6083, %v6084
    %v6086 = vrot.slane %v3538, 4
    %v6087 = vrot.slane %v3541, 4
    %v6088 = vsel %vm6052, %v6086, %v6087
    %v6089 = vrot.slane %v3542, 4
    %v6090 = vrot.slane %v3545, 4
    %v6091 = vsel %vm6052, %v6089, %v6090
    %v6092 = vrot.slane %v3543, 4
    %v6093 = vrot.slane %v3546, 4
    %v6094 = vsel %vm6052, %v6092, %v6093
    %v6095 = vrot.slane %v3544, 4
    %v6096 = vrot.slane %v3547, 4
    %v6097 = vsel %vm6052, %v6095, %v6096
    %v6098 = vrot.slane %v3548, 4
    %v6099 = vrot.slane %v3551, 4
    %v6100 = vsel %vm6052, %v6098, %v6099
    %v6101 = vrot.slane %v3549, 4
    %v6102 = vrot.slane %v3552, 4
    %v6103 = vsel %vm6052, %v6101, %v6102
    %v6104 = vrot.slane %v3550, 4
    %v6105 = vrot.slane %v3553, 4
    %v6106 = vsel %vm6052, %v6104, %v6105
    %v6107 = vrot.slane %v3554, 4
    %v6108 = vrot.slane %v3557, 4
    %v6109 = vsel %vm6052, %v6107, %v6108
    %v6110 = vrot.slane %v3555, 4
    %v6111 = vrot.slane %v3558, 4
    %v6112 = vsel %vm6052, %v6110, %v6111
    %v6113 = vrot.slane %v3556, 4
    %v6114 = vrot.slane %v3559, 4
    %v6115 = vsel %vm6052, %v6113, %v6114
    %v6116 = vrot.slane %v3560, 4
    %v6117 = vrot.slane %v3563, 4
    %v6118 = vsel %vm6052, %v6116, %v6117
    %v6119 = vrot.slane %v3561, 4
    %v6120 = vrot.slane %v3564, 4
    %v6121 = vsel %vm6052, %v6119, %v6120
    %v6122 = vrot.slane %v3562, 4
    %v6123 = vrot.slane %v3565, 4
    %v6124 = vsel %vm6052, %v6122, %v6123
    %s6141 = scalar_lea.vmem [#allocation2], 1472
    %v6142 = vld [vmem:[%s6141] sm:$0xff]
    %v6143 = vld [vmem:[%s6141 + $0x8] sm:$0xff]
    %v6144 = vld [vmem:[%s6141 + $0x10] sm:$0xff]
    %v6145 = vld [vmem:[%s6141 + $0x18] sm:$0xff]
    %v6146 = vld [vmem:[%s6141 + $0x20] sm:$0xff]
    %v6147 = vld [vmem:[%s6141 + $0x28] sm:$0xff]
    %v6148 = vld [vmem:[%s6141 + $0x30] sm:$0xff]
    %v6149 = vld [vmem:[%s6141 + $0x38] sm:$0xff]
    %v6150 = vld [vmem:[%s6141 + $0x40] sm:$0xff]
    %v6151 = vld [vmem:[%s6141 + $0x48] sm:$0xff]
    %v6152 = vld [vmem:[%s6141 + $0x50] sm:$0xff]
    %v6153 = vld [vmem:[%s6141 + $0x58] sm:$0xff]
    %v6154 = vld [vmem:[%s6141 + $0x60] sm:$0xff]
    %v6155 = vld [vmem:[%s6141 + $0x68] sm:$0xff]
    %v6156 = vld [vmem:[%s6141 + $0x70] sm:$0xff]
    %v6157 = vld [vmem:[%s6141 + $0x78] sm:$0xff]
    %v6158 = vld [vmem:[%s6141 + $0x80] sm:$0xff]
    %v6159 = vld [vmem:[%s6141 + $0x88] sm:$0xff]
    %v6160 = vld [vmem:[%s6141 + $0x90] sm:$0xff]
    %v6161 = vld [vmem:[%s6141 + $0x98] sm:$0xff]
    %v6162 = vld [vmem:[%s6141 + $0xa0] sm:$0xff]
    %v6163 = vld [vmem:[%s6141 + $0xa8] sm:$0xff]
    %v6164 = vld [vmem:[%s6141 + $0xb0] sm:$0xff]
    %v6165 = vld [vmem:[%s6141 + $0xb8] sm:$0xff]
    %v6166 = vld [vmem:[%s6141 + $0xc0] sm:$0xff]
    %v6167 = vld [vmem:[%s6141 + $0xc8] sm:$0xff]
    %v6168 = vld [vmem:[%s6141 + $0xd0] sm:$0xff]
    %v6169 = vld [vmem:[%s6141 + $0xd8] sm:$0xff]
    %v6170 = vld [vmem:[%s6141 + $0xe0] sm:$0xff]
    %v6171 = vld [vmem:[%s6141 + $0xe8] sm:$0xff]
    %v6172 = vld [vmem:[%s6141 + $0xf0] sm:$0xff]
    %v6173 = vld [vmem:[%s6141 + $0xf8] sm:$0xff]
    %v6174 = vld [vmem:[%s6141 + $0x100] sm:$0xff]
    %v6175 = vld [vmem:[%s6141 + $0x108] sm:$0xff]
    %v6176 = vld [vmem:[%s6141 + $0x110] sm:$0xff]
    %v6177 = vld [vmem:[%s6141 + $0x118] sm:$0xff]
    %v6178 = vld [vmem:[%s6141 + $0x120] sm:$0xff]
    %v6179 = vld [vmem:[%s6141 + $0x128] sm:$0xff]
    %v6180 = vld [vmem:[%s6141 + $0x130] sm:$0xff]
    %v6181 = vld [vmem:[%s6141 + $0x138] sm:$0xff]
    %v6182 = vld [vmem:[%s6141 + $0x140] sm:$0xff]
    %v6183 = vld [vmem:[%s6141 + $0x148] sm:$0xff]
    %v6184 = vld [vmem:[%s6141 + $0x150] sm:$0xff]
    %v6185 = vld [vmem:[%s6141 + $0x158] sm:$0xff]
    %v6186 = vld [vmem:[%s6141 + $0x160] sm:$0xff]
    %v6187 = vld [vmem:[%s6141 + $0x168] sm:$0xff]
    %v6234 = vunpack.c.l.b16 %v6142
    %v6235 = vunpack.c.h.b16 %v6142
    %v6236 = vunpack.c.l.b16 %v6143
    %v6237 = vunpack.c.h.b16 %v6143
    %v6238 = vunpack.c.l.b16 %v6144
    %v6239 = vunpack.c.h.b16 %v6144
    %v6240 = vunpack.c.l.b16 %v6145
    %v6241 = vunpack.c.h.b16 %v6145
    %v6242 = vunpack.c.l.b16 %v6146
    %v6243 = vunpack.c.h.b16 %v6146
    %v6244 = vunpack.c.l.b16 %v6147
    %v6245 = vunpack.c.h.b16 %v6147
    %v6246 = vunpack.c.l.b16 %v6148
    %v6247 = vunpack.c.h.b16 %v6148
    %v6248 = vunpack.c.l.b16 %v6149
    %v6249 = vunpack.c.h.b16 %v6149
    %v6250 = vunpack.c.l.b16 %v6150
    %v6251 = vunpack.c.h.b16 %v6150
    %v6252 = vunpack.c.l.b16 %v6151
    %v6253 = vunpack.c.h.b16 %v6151
    %v6254 = vunpack.c.l.b16 %v6152
    %v6255 = vunpack.c.h.b16 %v6152
    %v6256 = vunpack.c.l.b16 %v6153
    %v6257 = vunpack.c.h.b16 %v6153
    %v6258 = vunpack.c.l.b16 %v6154
    %v6259 = vunpack.c.h.b16 %v6154
    %v6260 = vunpack.c.l.b16 %v6155
    %v6261 = vunpack.c.h.b16 %v6155
    %v6262 = vunpack.c.l.b16 %v6156
    %v6263 = vunpack.c.h.b16 %v6156
    %v6264 = vunpack.c.l.b16 %v6157
    %v6265 = vunpack.c.h.b16 %v6157
    %v6266 = vunpack.c.l.b16 %v6158
    %v6267 = vunpack.c.h.b16 %v6158
    %v6268 = vunpack.c.l.b16 %v6159
    %v6269 = vunpack.c.h.b16 %v6159
    %v6270 = vunpack.c.l.b16 %v6160
    %v6271 = vunpack.c.h.b16 %v6160
    %v6272 = vunpack.c.l.b16 %v6161
    %v6273 = vunpack.c.h.b16 %v6161
    %v6274 = vunpack.c.l.b16 %v6162
    %v6275 = vunpack.c.h.b16 %v6162
    %v6276 = vunpack.c.l.b16 %v6163
    %v6277 = vunpack.c.h.b16 %v6163
    %v6278 = vunpack.c.l.b16 %v6164
    %v6279 = vunpack.c.h.b16 %v6164
    %v6280 = vunpack.c.l.b16 %v6165
    %v6281 = vunpack.c.h.b16 %v6165
    %v6282 = vunpack.c.l.b16 %v6166
    %v6283 = vunpack.c.h.b16 %v6166
    %v6284 = vunpack.c.l.b16 %v6167
    %v6285 = vunpack.c.h.b16 %v6167
    %v6286 = vunpack.c.l.b16 %v6168
    %v6287 = vunpack.c.h.b16 %v6168
    %v6288 = vunpack.c.l.b16 %v6169
    %v6289 = vunpack.c.h.b16 %v6169
    %v6290 = vunpack.c.l.b16 %v6170
    %v6291 = vunpack.c.h.b16 %v6170
    %v6292 = vunpack.c.l.b16 %v6171
    %v6293 = vunpack.c.h.b16 %v6171
    %v6294 = vunpack.c.l.b16 %v6172
    %v6295 = vunpack.c.h.b16 %v6172
    %v6296 = vunpack.c.l.b16 %v6173
    %v6297 = vunpack.c.h.b16 %v6173
    %v6298 = vunpack.c.l.b16 %v6174
    %v6299 = vunpack.c.h.b16 %v6174
    %v6300 = vunpack.c.l.b16 %v6175
    %v6301 = vunpack.c.h.b16 %v6175
    %v6302 = vunpack.c.l.b16 %v6176
    %v6303 = vunpack.c.h.b16 %v6176
    %v6304 = vunpack.c.l.b16 %v6177
    %v6305 = vunpack.c.h.b16 %v6177
    %v6306 = vunpack.c.l.b16 %v6178
    %v6307 = vunpack.c.h.b16 %v6178
    %v6308 = vunpack.c.l.b16 %v6179
    %v6309 = vunpack.c.h.b16 %v6179
    %v6310 = vunpack.c.l.b16 %v6180
    %v6311 = vunpack.c.h.b16 %v6180
    %v6312 = vunpack.c.l.b16 %v6181
    %v6313 = vunpack.c.h.b16 %v6181
    %v6314 = vunpack.c.l.b16 %v6182
    %v6315 = vunpack.c.h.b16 %v6182
    %v6316 = vunpack.c.l.b16 %v6183
    %v6317 = vunpack.c.h.b16 %v6183
    %v6318 = vunpack.c.l.b16 %v6184
    %v6319 = vunpack.c.h.b16 %v6184
    %v6320 = vunpack.c.l.b16 %v6185
    %v6321 = vunpack.c.h.b16 %v6185
    %v6322 = vunpack.c.l.b16 %v6186
    %v6323 = vunpack.c.h.b16 %v6186
    %v6324 = vunpack.c.l.b16 %v6187
    %v6325 = vunpack.c.h.b16 %v6187
    %v6326 = vpack.c.b16 %v6236, %v6234
    %v6327 = vpack.c.b16 %v6237, %v6235
    %v6328 = vpack.c.b16 %v6240, %v6238
    %v6329 = vpack.c.b16 %v6241, %v6239
    %v6330 = vpack.c.b16 %v6244, %v6242
    %v6331 = vpack.c.b16 %v6245, %v6243
    %v6332 = vpack.c.b16 %v6248, %v6246
    %v6333 = vpack.c.b16 %v6249, %v6247
    %v6334 = vpack.c.b16 %v6252, %v6250
    %v6335 = vpack.c.b16 %v6253, %v6251
    %v6336 = vpack.c.b16 %v6256, %v6254
    %v6337 = vpack.c.b16 %v6257, %v6255
    %v6338 = vpack.c.b16 %v6260, %v6258
    %v6339 = vpack.c.b16 %v6261, %v6259
    %v6340 = vpack.c.b16 %v6264, %v6262
    %v6341 = vpack.c.b16 %v6265, %v6263
    %v6342 = vpack.c.b16 %v6268, %v6266
    %v6343 = vpack.c.b16 %v6269, %v6267
    %v6344 = vpack.c.b16 %v6272, %v6270
    %v6345 = vpack.c.b16 %v6273, %v6271
    %v6346 = vpack.c.b16 %v6276, %v6274
    %v6347 = vpack.c.b16 %v6277, %v6275
    %v6348 = vpack.c.b16 %v6280, %v6278
    %v6349 = vpack.c.b16 %v6281, %v6279
    %v6350 = vpack.c.b16 %v6284, %v6282
    %v6351 = vpack.c.b16 %v6285, %v6283
    %v6352 = vpack.c.b16 %v6288, %v6286
    %v6353 = vpack.c.b16 %v6289, %v6287
    %v6354 = vpack.c.b16 %v6292, %v6290
    %v6355 = vpack.c.b16 %v6293, %v6291
    %v6356 = vpack.c.b16 %v6296, %v6294
    %v6357 = vpack.c.b16 %v6297, %v6295
    %v6358 = vpack.c.b16 %v6300, %v6298
    %v6359 = vpack.c.b16 %v6301, %v6299
    %v6360 = vpack.c.b16 %v6304, %v6302
    %v6361 = vpack.c.b16 %v6305, %v6303
    %v6362 = vpack.c.b16 %v6308, %v6306
    %v6363 = vpack.c.b16 %v6309, %v6307
    %v6364 = vpack.c.b16 %v6312, %v6310
    %v6365 = vpack.c.b16 %v6313, %v6311
    %v6366 = vpack.c.b16 %v6316, %v6314
    %v6367 = vpack.c.b16 %v6317, %v6315
    %v6368 = vpack.c.b16 %v6320, %v6318
    %v6369 = vpack.c.b16 %v6321, %v6319
    %v6370 = vpack.c.b16 %v6324, %v6322
    %v6371 = vpack.c.b16 %v6325, %v6323
    %v6419 = vsel %vm2965, %v6061, 0
    %v6422 = vsel %vm2965, %v6070, 0
    %v6425 = vsel %vm2965, %v6079, 0
    %v6428 = vsel %vm2965, %v6088, 0
    %v6431 = vsel %vm2965, %v6097, 0
    %v6434 = vsel %vm2965, %v6106, 0
    %v6437 = vsel %vm2965, %v6115, 0
    %v6440 = vsel %vm2965, %v6124, 0
    %6442 = vmatprep.subr.bf16.mxu0 %v6341
    %6443 = vmatpush1.bf16.msra.mxu0 %v6340
    %6444 = vmatprep.subr.bf16.mxu0 %v6339
    %6445 = vmatpush1.bf16.msra.mxu0 %v6338
    %6446 = vmatprep.subr.bf16.mxu0 %v6337
    %6447 = vmatpush1.bf16.msra.mxu0 %v6336
    %6448 = vmatprep.subr.bf16.mxu0 %v6335
    %6449 = vmatpush1.bf16.msra.mxu0 %v6334
    %6450 = vmatprep.subr.bf16.mxu0 %v6333
    %6451 = vmatpush1.bf16.msra.mxu0 %v6332
    %6452 = vmatprep.subr.bf16.mxu0 %v6331
    %6453 = vmatpush1.bf16.msra.mxu0 %v6330
    %6454 = vmatprep.subr.bf16.mxu0 %v6329
    %6455 = vmatpush1.bf16.msra.mxu0 %v6328
    %6456 = vmatprep.subr.bf16.mxu0 %v6327
    %6457 = vmatpush1.bf16.msra.mxu0 %v6326
    %6458 = vmatprep.subr.bf16.mxu0 %v6357
    %6459 = vmatpush2.bf16.msra.mxu0 %v6356
    %6460 = vmatprep.subr.bf16.mxu0 %v6355
    %6461 = vmatpush2.bf16.msra.mxu0 %v6354
    %6462 = vmatprep.subr.bf16.mxu0 %v6353
    %6463 = vmatpush2.bf16.msra.mxu0 %v6352
    %6464 = vmatprep.subr.bf16.mxu0 %v6351
    %6465 = vmatpush2.bf16.msra.mxu0 %v6350
    %6466 = vmatprep.subr.bf16.mxu0 %v6349
    %6467 = vmatpush2.bf16.msra.mxu0 %v6348
    %6468 = vmatprep.subr.bf16.mxu0 %v6347
    %6469 = vmatpush2.bf16.msra.mxu0 %v6346
    %6470 = vmatprep.subr.bf16.mxu0 %v6345
    %6471 = vmatpush2.bf16.msra.mxu0 %v6344
    %6472 = vmatprep.subr.bf16.mxu0 %v6343
    %6473 = vmatpush2.bf16.msra.mxu0 %v6342
    %6474 = vmatprep.mubr.bf16.mxu0 %v6058
    %6475 = vmatmul.mubr.bf16.gmra.mxu0 %v6055
    %v6476 = vpop.f32.mrf.mxu0
    %v6477 = vadd.f32 0.0, %v6476
    %v6478 = vpop.f32.mrf.mxu0
    %v6479 = vadd.f32 0.0, %v6478
    %v6480 = vpop.f32.mrf.mxu0
    %v6481 = vadd.f32 0.0, %v6480
    %v6482 = vpop.f32.mrf.mxu0
    %v6483 = vadd.f32 0.0, %v6482
    %6484 = vmatprep.mubr.bf16.mxu0 %v6067
    %6485 = vmatmul.mubr.bf16.gmra.mxu0 %v6064
    %v6486 = vpop.f32.mrf.mxu0
    %v6487 = vadd.f32 0.0, %v6486
    %v6488 = vpop.f32.mrf.mxu0
    %v6489 = vadd.f32 0.0, %v6488
    %v6490 = vpop.f32.mrf.mxu0
    %v6491 = vadd.f32 0.0, %v6490
    %v6492 = vpop.f32.mrf.mxu0
    %v6493 = vadd.f32 0.0, %v6492
    %6494 = vmatprep.mubr.bf16.mxu0 %v6076
    %6495 = vmatmul.mubr.bf16.gmra.mxu0 %v6073
    %v6496 = vpop.f32.mrf.mxu0
    %v6497 = vadd.f32 0.0, %v6496
    %v6498 = vpop.f32.mrf.mxu0
    %v6499 = vadd.f32 0.0, %v6498
    %v6500 = vpop.f32.mrf.mxu0
    %v6501 = vadd.f32 0.0, %v6500
    %v6502 = vpop.f32.mrf.mxu0
    %v6503 = vadd.f32 0.0, %v6502
    %6504 = vmatprep.mubr.bf16.mxu0 %v6085
    %6505 = vmatmul.mubr.bf16.gmra.mxu0 %v6082
    %v6506 = vpop.f32.mrf.mxu0
    %v6507 = vadd.f32 0.0, %v6506
    %v6508 = vpop.f32.mrf.mxu0
    %v6509 = vadd.f32 0.0, %v6508
    %v6510 = vpop.f32.mrf.mxu0
    %v6511 = vadd.f32 0.0, %v6510
    %v6512 = vpop.f32.mrf.mxu0
    %v6513 = vadd.f32 0.0, %v6512
    %6514 = vmatprep.mubr.bf16.mxu0 %v6094
    %6515 = vmatmul.mubr.bf16.gmra.mxu0 %v6091
    %v6516 = vpop.f32.mrf.mxu0
    %v6517 = vadd.f32 0.0, %v6516
    %v6518 = vpop.f32.mrf.mxu0
    %v6519 = vadd.f32 0.0, %v6518
    %v6520 = vpop.f32.mrf.mxu0
    %v6521 = vadd.f32 0.0, %v6520
    %v6522 = vpop.f32.mrf.mxu0
    %v6523 = vadd.f32 0.0, %v6522
    %6524 = vmatprep.mubr.bf16.mxu0 %v6103
    %6525 = vmatmul.mubr.bf16.gmra.mxu0 %v6100
    %v6526 = vpop.f32.mrf.mxu0
    %v6527 = vadd.f32 0.0, %v6526
    %v6528 = vpop.f32.mrf.mxu0
    %v6529 = vadd.f32 0.0, %v6528
    %v6530 = vpop.f32.mrf.mxu0
    %v6531 = vadd.f32 0.0, %v6530
    %v6532 = vpop.f32.mrf.mxu0
    %v6533 = vadd.f32 0.0, %v6532
    %6534 = vmatprep.mubr.bf16.mxu0 %v6112
    %6535 = vmatmul.mubr.bf16.gmra.mxu0 %v6109
    %v6536 = vpop.f32.mrf.mxu0
    %v6537 = vadd.f32 0.0, %v6536
    %v6538 = vpop.f32.mrf.mxu0
    %v6539 = vadd.f32 0.0, %v6538
    %v6540 = vpop.f32.mrf.mxu0
    %v6541 = vadd.f32 0.0, %v6540
    %v6542 = vpop.f32.mrf.mxu0
    %v6543 = vadd.f32 0.0, %v6542
    %6544 = vmatprep.mubr.bf16.mxu0 %v6121
    %6545 = vmatmul.mubr.bf16.gmra.mxu0 %v6118
    %v6546 = vpop.f32.mrf.mxu0
    %v6547 = vadd.f32 0.0, %v6546
    %v6548 = vpop.f32.mrf.mxu0
    %v6549 = vadd.f32 0.0, %v6548
    %v6550 = vpop.f32.mrf.mxu0
    %v6551 = vadd.f32 0.0, %v6550
    %v6552 = vpop.f32.mrf.mxu0
    %v6553 = vadd.f32 0.0, %v6552
    %6554 = vdwg.mxu0
    %6555 = vmatprep.subr.bf16.mxu0 0
    %6556 = vmatpush1.bf16.msra.mxu0 0
    %6557 = vmatprep.subr.bf16.mxu0 %v6371
    %6558 = vmatpush1.bf16.msra.mxu0 %v6370
    %6559 = vmatprep.subr.bf16.mxu0 %v6369
    %6560 = vmatpush1.bf16.msra.mxu0 %v6368
    %6561 = vmatprep.subr.bf16.mxu0 %v6367
    %6562 = vmatpush1.bf16.msra.mxu0 %v6366
    %6563 = vmatprep.subr.bf16.mxu0 %v6365
    %6564 = vmatpush1.bf16.msra.mxu0 %v6364
    %6565 = vmatprep.subr.bf16.mxu0 %v6363
    %6566 = vmatpush1.bf16.msra.mxu0 %v6362
    %6567 = vmatprep.subr.bf16.mxu0 %v6361
    %6568 = vmatpush1.bf16.msra.mxu0 %v6360
    %6569 = vmatprep.subr.bf16.mxu0 %v6359
    %6570 = vmatpush1.bf16.msra.mxu0 %v6358
    %6571 = vmatprep.subr.bf16.mxu0 0
    %6572 = vmatpush2.bf16.msra.mxu0 0
    %6573 = vmatprep.subr.bf16.mxu0 0
    %6574 = vmatpush2.bf16.msra.mxu0 0
    %6575 = vmatprep.subr.bf16.mxu0 0
    %6576 = vmatpush2.bf16.msra.mxu0 0
    %6577 = vmatprep.subr.bf16.mxu0 0
    %6578 = vmatpush2.bf16.msra.mxu0 0
    %6579 = vmatprep.subr.bf16.mxu0 0
    %6580 = vmatpush2.bf16.msra.mxu0 0
    %6581 = vmatprep.subr.bf16.mxu0 0
    %6582 = vmatpush2.bf16.msra.mxu0 0
    %6583 = vmatprep.subr.bf16.mxu0 0
    %6584 = vmatpush2.bf16.msra.mxu0 0
    %6585 = vmatprep.subr.bf16.mxu0 0
    %6586 = vmatpush2.bf16.msra.mxu0 0
    %6587 = vmatprep.mubr.bf16.mxu0 0
    %6588 = vmatmul.mubr.bf16.gmra.mxu0 %v6419
    %v6589 = vpop.f32.mrf.mxu0
    %v6590 = vadd.f32 %v6477, %v6589
    %v6591 = vpop.f32.mrf.mxu0
    %v6592 = vadd.f32 %v6479, %v6591
    %v6593 = vpop.f32.mrf.mxu0
    %v6594 = vadd.f32 %v6481, %v6593
    %v6595 = vpop.f32.mrf.mxu0
    %v6596 = vadd.f32 %v6483, %v6595
    %6597 = vmatprep.mubr.bf16.mxu0 0
    %6598 = vmatmul.mubr.bf16.gmra.mxu0 %v6422
    %v6599 = vpop.f32.mrf.mxu0
    %v6600 = vadd.f32 %v6487, %v6599
    %v6601 = vpop.f32.mrf.mxu0
    %v6602 = vadd.f32 %v6489, %v6601
    %v6603 = vpop.f32.mrf.mxu0
    %v6604 = vadd.f32 %v6491, %v6603
    %v6605 = vpop.f32.mrf.mxu0
    %v6606 = vadd.f32 %v6493, %v6605
    %6607 = vmatprep.mubr.bf16.mxu0 0
    %6608 = vmatmul.mubr.bf16.gmra.mxu0 %v6425
    %v6609 = vpop.f32.mrf.mxu0
    %v6610 = vadd.f32 %v6497, %v6609
    %v6611 = vpop.f32.mrf.mxu0
    %v6612 = vadd.f32 %v6499, %v6611
    %v6613 = vpop.f32.mrf.mxu0
    %v6614 = vadd.f32 %v6501, %v6613
    %v6615 = vpop.f32.mrf.mxu0
    %v6616 = vadd.f32 %v6503, %v6615
    %6617 = vmatprep.mubr.bf16.mxu0 0
    %6618 = vmatmul.mubr.bf16.gmra.mxu0 %v6428
    %v6619 = vpop.f32.mrf.mxu0
    %v6620 = vadd.f32 %v6507, %v6619
    %v6621 = vpop.f32.mrf.mxu0
    %v6622 = vadd.f32 %v6509, %v6621
    %v6623 = vpop.f32.mrf.mxu0
    %v6624 = vadd.f32 %v6511, %v6623
    %v6625 = vpop.f32.mrf.mxu0
    %v6626 = vadd.f32 %v6513, %v6625
    %6627 = vmatprep.mubr.bf16.mxu0 0
    %6628 = vmatmul.mubr.bf16.gmra.mxu0 %v6431
    %v6629 = vpop.f32.mrf.mxu0
    %v6630 = vadd.f32 %v6517, %v6629
    %v6631 = vpop.f32.mrf.mxu0
    %v6632 = vadd.f32 %v6519, %v6631
    %v6633 = vpop.f32.mrf.mxu0
    %v6634 = vadd.f32 %v6521, %v6633
    %v6635 = vpop.f32.mrf.mxu0
    %v6636 = vadd.f32 %v6523, %v6635
    %6637 = vmatprep.mubr.bf16.mxu0 0
    %6638 = vmatmul.mubr.bf16.gmra.mxu0 %v6434
    %v6639 = vpop.f32.mrf.mxu0
    %v6640 = vadd.f32 %v6527, %v6639
    %v6641 = vpop.f32.mrf.mxu0
    %v6642 = vadd.f32 %v6529, %v6641
    %v6643 = vpop.f32.mrf.mxu0
    %v6644 = vadd.f32 %v6531, %v6643
    %v6645 = vpop.f32.mrf.mxu0
    %v6646 = vadd.f32 %v6533, %v6645
    %6647 = vmatprep.mubr.bf16.mxu0 0
    %6648 = vmatmul.mubr.bf16.gmra.mxu0 %v6437
    %v6649 = vpop.f32.mrf.mxu0
    %v6650 = vadd.f32 %v6537, %v6649
    %v6651 = vpop.f32.mrf.mxu0
    %v6652 = vadd.f32 %v6539, %v6651
    %v6653 = vpop.f32.mrf.mxu0
    %v6654 = vadd.f32 %v6541, %v6653
    %v6655 = vpop.f32.mrf.mxu0
    %v6656 = vadd.f32 %v6543, %v6655
    %6657 = vmatprep.mubr.bf16.mxu0 0
    %6658 = vmatmul.mubr.bf16.gmra.mxu0 %v6440
    %v6659 = vpop.f32.mrf.mxu0
    %v6660 = vadd.f32 %v6547, %v6659
    %v6661 = vpop.f32.mrf.mxu0
    %v6662 = vadd.f32 %v6549, %v6661
    %v6663 = vpop.f32.mrf.mxu0
    %v6664 = vadd.f32 %v6551, %v6663
    %v6665 = vpop.f32.mrf.mxu0
    %v6666 = vadd.f32 %v6553, %v6665
    %6667 = vdwg.mxu0
    %v6668 = vadd.f32 %v6020, %v6590
    %v6669 = vadd.f32 %v6021, %v6592
    %v6670 = vadd.f32 %v6022, %v6594
    %v6671 = vadd.f32 %v6023, %v6596
    %v6672 = vadd.f32 %v6024, %v6600
    %v6673 = vadd.f32 %v6025, %v6602
    %v6674 = vadd.f32 %v6026, %v6604
    %v6675 = vadd.f32 %v6027, %v6606
    %v6676 = vadd.f32 %v6028, %v6610
    %v6677 = vadd.f32 %v6029, %v6612
    %v6678 = vadd.f32 %v6030, %v6614
    %v6679 = vadd.f32 %v6031, %v6616
    %v6680 = vadd.f32 %v6032, %v6620
    %v6681 = vadd.f32 %v6033, %v6622
    %v6682 = vadd.f32 %v6034, %v6624
    %v6683 = vadd.f32 %v6035, %v6626
    %v6684 = vadd.f32 %v6036, %v6630
    %v6685 = vadd.f32 %v6037, %v6632
    %v6686 = vadd.f32 %v6038, %v6634
    %v6687 = vadd.f32 %v6039, %v6636
    %v6688 = vadd.f32 %v6040, %v6640
    %v6689 = vadd.f32 %v6041, %v6642
    %v6690 = vadd.f32 %v6042, %v6644
    %v6691 = vadd.f32 %v6043, %v6646
    %v6692 = vadd.f32 %v6044, %v6650
    %v6693 = vadd.f32 %v6045, %v6652
    %v6694 = vadd.f32 %v6046, %v6654
    %v6695 = vadd.f32 %v6047, %v6656
    %v6696 = vadd.f32 %v6048, %v6660
    %v6697 = vadd.f32 %v6049, %v6662
    %v6698 = vadd.f32 %v6050, %v6664
    %v6699 = vadd.f32 %v6051, %v6666
    %v6700 = vld [vmem:[%s4] sm:$0x3]
    %v6702 = vlaneseq
    %v6703 = vshrl.u32 %v6702, 7
    %v6704 = vsub.s32 0, %v6703
    %v6705 = vrot.slane %v6700, %v6704
    %v6706 = vlaneseq
    %v6707 = vshrl.u32 %v6706, 7
    %v6708 = vsub.s32 1, %v6707
    %v6709 = vrot.slane %v6700, %v6708
    %v6712 = vadd.f32 %v6668, %v6705
    %v6713 = vadd.f32 %v6669, %v6709
    %v6714 = vadd.f32 %v6670, %v6705
    %v6715 = vadd.f32 %v6671, %v6709
    %v6716 = vadd.f32 %v6672, %v6705
    %v6717 = vadd.f32 %v6673, %v6709
    %v6718 = vadd.f32 %v6674, %v6705
    %v6719 = vadd.f32 %v6675, %v6709
    %v6720 = vadd.f32 %v6676, %v6705
    %v6721 = vadd.f32 %v6677, %v6709
    %v6722 = vadd.f32 %v6678, %v6705
    %v6723 = vadd.f32 %v6679, %v6709
    %v6724 = vadd.f32 %v6680, %v6705
    %v6725 = vadd.f32 %v6681, %v6709
    %v6726 = vadd.f32 %v6682, %v6705
    %v6727 = vadd.f32 %v6683, %v6709
    %v6728 = vadd.f32 %v6684, %v6705
    %v6729 = vadd.f32 %v6685, %v6709
    %v6730 = vadd.f32 %v6686, %v6705
    %v6731 = vadd.f32 %v6687, %v6709
    %v6732 = vadd.f32 %v6688, %v6705
    %v6733 = vadd.f32 %v6689, %v6709
    %v6734 = vadd.f32 %v6690, %v6705
    %v6735 = vadd.f32 %v6691, %v6709
    %v6736 = vadd.f32 %v6692, %v6705
    %v6737 = vadd.f32 %v6693, %v6709
    %v6738 = vadd.f32 %v6694, %v6705
    %v6739 = vadd.f32 %v6695, %v6709
    %v6740 = vadd.f32 %v6696, %v6705
    %v6741 = vadd.f32 %v6697, %v6709
    %v6742 = vadd.f32 %v6698, %v6705
    %v6743 = vadd.f32 %v6699, %v6709
    %v6744 = vmax.f32 %v6712, 0.0
    %v6745 = vmax.f32 %v6713, 0.0
    %v6746 = vmax.f32 %v6714, 0.0
    %v6747 = vmax.f32 %v6715, 0.0
    %v6748 = vmax.f32 %v6716, 0.0
    %v6749 = vmax.f32 %v6717, 0.0
    %v6750 = vmax.f32 %v6718, 0.0
    %v6751 = vmax.f32 %v6719, 0.0
    %v6752 = vmax.f32 %v6720, 0.0
    %v6753 = vmax.f32 %v6721, 0.0
    %v6754 = vmax.f32 %v6722, 0.0
    %v6755 = vmax.f32 %v6723, 0.0
    %v6756 = vmax.f32 %v6724, 0.0
    %v6757 = vmax.f32 %v6725, 0.0
    %v6758 = vmax.f32 %v6726, 0.0
    %v6759 = vmax.f32 %v6727, 0.0
    %v6760 = vmax.f32 %v6728, 0.0
    %v6761 = vmax.f32 %v6729, 0.0
    %v6762 = vmax.f32 %v6730, 0.0
    %v6763 = vmax.f32 %v6731, 0.0
    %v6764 = vmax.f32 %v6732, 0.0
    %v6765 = vmax.f32 %v6733, 0.0
    %v6766 = vmax.f32 %v6734, 0.0
    %v6767 = vmax.f32 %v6735, 0.0
    %v6768 = vmax.f32 %v6736, 0.0
    %v6769 = vmax.f32 %v6737, 0.0
    %v6770 = vmax.f32 %v6738, 0.0
    %v6771 = vmax.f32 %v6739, 0.0
    %v6772 = vmax.f32 %v6740, 0.0
    %v6773 = vmax.f32 %v6741, 0.0
    %v6774 = vmax.f32 %v6742, 0.0
    %v6775 = vmax.f32 %v6743, 0.0
    %6808 = vrot.lane.b32.xlu0 %v6744, 96
    %v6809 = vpop.permute.xlu0 %6808
    %6810 = vrot.lane.b32.xlu0 %v6745, 96
    %v6811 = vpop.permute.xlu0 %6810
    %6812 = vrot.lane.b32.xlu0 %v6746, 96
    %v6813 = vpop.permute.xlu0 %6812
    %6814 = vrot.lane.b32.xlu0 %v6747, 96
    %v6815 = vpop.permute.xlu0 %6814
    %6816 = vrot.lane.b32.xlu0 %v6748, 96
    %v6817 = vpop.permute.xlu0 %6816
    %6818 = vrot.lane.b32.xlu0 %v6749, 96
    %v6819 = vpop.permute.xlu0 %6818
    %6820 = vrot.lane.b32.xlu0 %v6750, 96
    %v6821 = vpop.permute.xlu0 %6820
    %6822 = vrot.lane.b32.xlu0 %v6751, 96
    %v6823 = vpop.permute.xlu0 %6822
    %6824 = vrot.lane.b32.xlu0 %v6752, 96
    %v6825 = vpop.permute.xlu0 %6824
    %6826 = vrot.lane.b32.xlu0 %v6753, 96
    %v6827 = vpop.permute.xlu0 %6826
    %6828 = vrot.lane.b32.xlu0 %v6754, 96
    %v6829 = vpop.permute.xlu0 %6828
    %6830 = vrot.lane.b32.xlu0 %v6755, 96
    %v6831 = vpop.permute.xlu0 %6830
    %6832 = vrot.lane.b32.xlu0 %v6756, 96
    %v6833 = vpop.permute.xlu0 %6832
    %6834 = vrot.lane.b32.xlu0 %v6757, 96
    %v6835 = vpop.permute.xlu0 %6834
    %6836 = vrot.lane.b32.xlu0 %v6758, 96
    %v6837 = vpop.permute.xlu0 %6836
    %6838 = vrot.lane.b32.xlu0 %v6759, 96
    %v6839 = vpop.permute.xlu0 %6838
    %6840 = vrot.lane.b32.xlu0 %v6760, 96
    %v6841 = vpop.permute.xlu0 %6840
    %6842 = vrot.lane.b32.xlu0 %v6761, 96
    %v6843 = vpop.permute.xlu0 %6842
    %6844 = vrot.lane.b32.xlu0 %v6762, 96
    %v6845 = vpop.permute.xlu0 %6844
    %6846 = vrot.lane.b32.xlu0 %v6763, 96
    %v6847 = vpop.permute.xlu0 %6846
    %6848 = vrot.lane.b32.xlu0 %v6764, 96
    %v6849 = vpop.permute.xlu0 %6848
    %6850 = vrot.lane.b32.xlu0 %v6765, 96
    %v6851 = vpop.permute.xlu0 %6850
    %6852 = vrot.lane.b32.xlu0 %v6766, 96
    %v6853 = vpop.permute.xlu0 %6852
    %6854 = vrot.lane.b32.xlu0 %v6767, 96
    %v6855 = vpop.permute.xlu0 %6854
    %6856 = vrot.lane.b32.xlu0 %v6768, 96
    %v6857 = vpop.permute.xlu0 %6856
    %6858 = vrot.lane.b32.xlu0 %v6769, 96
    %v6859 = vpop.permute.xlu0 %6858
    %6860 = vrot.lane.b32.xlu0 %v6770, 96
    %v6861 = vpop.permute.xlu0 %6860
    %6862 = vrot.lane.b32.xlu0 %v6771, 96
    %v6863 = vpop.permute.xlu0 %6862
    %6864 = vrot.lane.b32.xlu0 %v6772, 96
    %v6865 = vpop.permute.xlu0 %6864
    %6866 = vrot.lane.b32.xlu0 %v6773, 96
    %v6867 = vpop.permute.xlu0 %6866
    %6868 = vrot.lane.b32.xlu0 %v6774, 96
    %v6869 = vpop.permute.xlu0 %6868
    %6870 = vrot.lane.b32.xlu0 %v6775, 96
    %v6871 = vpop.permute.xlu0 %6870
    %vm6872 = vcmask 785408
    %v6873 = vsel %vm6872, %v6809, %v6811
    %v6874 = vsel %vm6872, %v6813, %v6815
    %v6875 = vsel %vm6872, %v6817, %v6819
    %v6876 = vsel %vm6872, %v6821, %v6823
    %v6877 = vsel %vm6872, %v6825, %v6827
    %v6878 = vsel %vm6872, %v6829, %v6831
    %v6879 = vsel %vm6872, %v6833, %v6835
    %v6880 = vsel %vm6872, %v6837, %v6839
    %v6881 = vsel %vm6872, %v6841, %v6843
    %v6882 = vsel %vm6872, %v6845, %v6847
    %v6883 = vsel %vm6872, %v6849, %v6851
    %v6884 = vsel %vm6872, %v6853, %v6855
    %v6885 = vsel %vm6872, %v6857, %v6859
    %v6886 = vsel %vm6872, %v6861, %v6863
    %v6887 = vsel %vm6872, %v6865, %v6867
    %v6888 = vsel %vm6872, %v6869, %v6871
    %v6921 = vmax.f32 %v6744, %v6873
    %v6922 = vmax.f32 %v6745, %v6811
    %v6923 = vmax.f32 %v6746, %v6874
    %v6924 = vmax.f32 %v6747, %v6815
    %v6925 = vmax.f32 %v6748, %v6875
    %v6926 = vmax.f32 %v6749, %v6819
    %v6927 = vmax.f32 %v6750, %v6876
    %v6928 = vmax.f32 %v6751, %v6823
    %v6929 = vmax.f32 %v6752, %v6877
    %v6930 = vmax.f32 %v6753, %v6827
    %v6931 = vmax.f32 %v6754, %v6878
    %v6932 = vmax.f32 %v6755, %v6831
    %v6933 = vmax.f32 %v6756, %v6879
    %v6934 = vmax.f32 %v6757, %v6835
    %v6935 = vmax.f32 %v6758, %v6880
    %v6936 = vmax.f32 %v6759, %v6839
    %v6937 = vmax.f32 %v6760, %v6881
    %v6938 = vmax.f32 %v6761, %v6843
    %v6939 = vmax.f32 %v6762, %v6882
    %v6940 = vmax.f32 %v6763, %v6847
    %v6941 = vmax.f32 %v6764, %v6883
    %v6942 = vmax.f32 %v6765, %v6851
    %v6943 = vmax.f32 %v6766, %v6884
    %v6944 = vmax.f32 %v6767, %v6855
    %v6945 = vmax.f32 %v6768, %v6885
    %v6946 = vmax.f32 %v6769, %v6859
    %v6947 = vmax.f32 %v6770, %v6886
    %v6948 = vmax.f32 %v6771, %v6863
    %v6949 = vmax.f32 %v6772, %v6887
    %v6950 = vmax.f32 %v6773, %v6867
    %v6951 = vmax.f32 %v6774, %v6888
    %v6952 = vmax.f32 %v6775, %v6871
    %v6985 = vrot.slane %v6921, 2
    %v6986 = vrot.slane %v6923, 2
    %v6987 = vsel %vm351, %v6985, %v6986
    %v6988 = vrot.slane %v6922, 2
    %v6989 = vrot.slane %v6924, 2
    %v6990 = vsel %vm351, %v6988, %v6989
    %v6991 = vrot.slane %v6925, 2
    %v6992 = vsel %vm351, %v6986, %v6991
    %v6993 = vrot.slane %v6926, 2
    %v6994 = vsel %vm351, %v6989, %v6993
    %v6995 = vrot.slane %v6927, 2
    %v6996 = vsel %vm351, %v6991, %v6995
    %v6997 = vrot.slane %v6928, 2
    %v6998 = vsel %vm351, %v6993, %v6997
    %v6999 = vrot.slane %v6929, 2
    %v7000 = vsel %vm351, %v6995, %v6999
    %v7001 = vrot.slane %v6930, 2
    %v7002 = vsel %vm351, %v6997, %v7001
    %v7003 = vrot.slane %v6931, 2
    %v7004 = vsel %vm351, %v6999, %v7003
    %v7005 = vrot.slane %v6932, 2
    %v7006 = vsel %vm351, %v7001, %v7005
    %v7007 = vrot.slane %v6933, 2
    %v7008 = vsel %vm351, %v7003, %v7007
    %v7009 = vrot.slane %v6934, 2
    %v7010 = vsel %vm351, %v7005, %v7009
    %v7011 = vrot.slane %v6935, 2
    %v7012 = vsel %vm351, %v7007, %v7011
    %v7013 = vrot.slane %v6936, 2
    %v7014 = vsel %vm351, %v7009, %v7013
    %v7015 = vrot.slane %v6937, 2
    %v7016 = vsel %vm351, %v7011, %v7015
    %v7017 = vrot.slane %v6938, 2
    %v7018 = vsel %vm351, %v7013, %v7017
    %v7019 = vrot.slane %v6939, 2
    %v7020 = vsel %vm351, %v7015, %v7019
    %v7021 = vrot.slane %v6940, 2
    %v7022 = vsel %vm351, %v7017, %v7021
    %v7023 = vrot.slane %v6941, 2
    %v7024 = vsel %vm351, %v7019, %v7023
    %v7025 = vrot.slane %v6942, 2
    %v7026 = vsel %vm351, %v7021, %v7025
    %v7027 = vrot.slane %v6943, 2
    %v7028 = vsel %vm351, %v7023, %v7027
    %v7029 = vrot.slane %v6944, 2
    %v7030 = vsel %vm351, %v7025, %v7029
    %v7031 = vrot.slane %v6945, 2
    %v7032 = vsel %vm351, %v7027, %v7031
    %v7033 = vrot.slane %v6946, 2
    %v7034 = vsel %vm351, %v7029, %v7033
    %v7035 = vrot.slane %v6947, 2
    %v7036 = vsel %vm351, %v7031, %v7035
    %v7037 = vrot.slane %v6948, 2
    %v7038 = vsel %vm351, %v7033, %v7037
    %v7039 = vrot.slane %v6949, 2
    %v7040 = vsel %vm351, %v7035, %v7039
    %v7041 = vrot.slane %v6950, 2
    %v7042 = vsel %vm351, %v7037, %v7041
    %v7043 = vrot.slane %v6951, 2
    %v7044 = vsel %vm351, %v7039, %v7043
    %v7045 = vrot.slane %v6952, 2
    %v7046 = vsel %vm351, %v7041, %v7045
    %v7079 = vmax.f32 %v6921, %v6987
    %v7080 = vmax.f32 %v6922, %v6990
    %v7081 = vmax.f32 %v6923, %v6992
    %v7082 = vmax.f32 %v6924, %v6994
    %v7083 = vmax.f32 %v6925, %v6996
    %v7084 = vmax.f32 %v6926, %v6998
    %v7085 = vmax.f32 %v6927, %v7000
    %v7086 = vmax.f32 %v6928, %v7002
    %v7087 = vmax.f32 %v6929, %v7004
    %v7088 = vmax.f32 %v6930, %v7006
    %v7089 = vmax.f32 %v6931, %v7008
    %v7090 = vmax.f32 %v6932, %v7010
    %v7091 = vmax.f32 %v6933, %v7012
    %v7092 = vmax.f32 %v6934, %v7014
    %v7093 = vmax.f32 %v6935, %v7016
    %v7094 = vmax.f32 %v6936, %v7018
    %v7095 = vmax.f32 %v6937, %v7020
    %v7096 = vmax.f32 %v6938, %v7022
    %v7097 = vmax.f32 %v6939, %v7024
    %v7098 = vmax.f32 %v6940, %v7026
    %v7099 = vmax.f32 %v6941, %v7028
    %v7100 = vmax.f32 %v6942, %v7030
    %v7101 = vmax.f32 %v6943, %v7032
    %v7102 = vmax.f32 %v6944, %v7034
    %v7103 = vmax.f32 %v6945, %v7036
    %v7104 = vmax.f32 %v6946, %v7038
    %v7105 = vmax.f32 %v6947, %v7040
    %v7106 = vmax.f32 %v6948, %v7042
    %v7107 = vmax.f32 %v6949, %v7044
    %v7108 = vmax.f32 %v6950, %v7046
    %v7109 = vmax.f32 %v6951, %v7043
    %v7110 = vmax.f32 %v6952, %v7045
    %v7111 = vpack.c.bf16 %v7081, %v7079
    %v7112 = vpack.c.bf16 %v7082, %v7080
    %v7113 = vpack.c.bf16 %v7085, %v7083
    %v7114 = vpack.c.bf16 %v7086, %v7084
    %v7115 = vpack.c.bf16 %v7089, %v7087
    %v7116 = vpack.c.bf16 %v7090, %v7088
    %v7117 = vpack.c.bf16 %v7093, %v7091
    %v7118 = vpack.c.bf16 %v7094, %v7092
    %v7119 = vpack.c.bf16 %v7097, %v7095
    %v7120 = vpack.c.bf16 %v7098, %v7096
    %v7121 = vpack.c.bf16 %v7101, %v7099
    %v7122 = vpack.c.bf16 %v7102, %v7100
    %v7123 = vpack.c.bf16 %v7105, %v7103
    %v7124 = vpack.c.bf16 %v7106, %v7104
    %v7125 = vpack.c.bf16 %v7109, %v7107
    %v7126 = vpack.c.bf16 %v7110, %v7108
    %v7127 = vld [vmem:[#allocation4] sm:$0xf]
    %v7128 = vld [vmem:[#allocation4 + $0x4] sm:$0xf]
    %v7129 = vld [vmem:[#allocation4 + $0x8] sm:$0xf]
    %v7130 = vld [vmem:[#allocation4 + $0xc] sm:$0xf]
    %v7131 = vld [vmem:[#allocation4 + $0x10] sm:$0xf]
    %v7132 = vld [vmem:[#allocation4 + $0x14] sm:$0xf]
    %v7133 = vld [vmem:[#allocation4 + $0x18] sm:$0xf]
    %v7134 = vld [vmem:[#allocation4 + $0x1c] sm:$0xf]
    %v7135 = vld [vmem:[#allocation4 + $0x20] sm:$0xf]
    %v7136 = vld [vmem:[#allocation4 + $0x24] sm:$0xf]
    %v7137 = vld [vmem:[#allocation4 + $0x28] sm:$0xf]
    %v7138 = vld [vmem:[#allocation4 + $0x2c] sm:$0xf]
    %v7139 = vld [vmem:[#allocation4 + $0x30] sm:$0xf]
    %v7140 = vld [vmem:[#allocation4 + $0x34] sm:$0xf]
    %v7141 = vld [vmem:[#allocation4 + $0x38] sm:$0xf]
    %v7142 = vld [vmem:[#allocation4 + $0x3c] sm:$0xf]
    %v7143 = vld [vmem:[#allocation4 + $0x40] sm:$0xf]
    %v7144 = vld [vmem:[#allocation4 + $0x44] sm:$0xf]
    %v7145 = vld [vmem:[#allocation4 + $0x48] sm:$0xf]
    %v7146 = vld [vmem:[#allocation4 + $0x4c] sm:$0xf]
    %v7147 = vld [vmem:[#allocation4 + $0x50] sm:$0xf]
    %v7148 = vld [vmem:[#allocation4 + $0x54] sm:$0xf]
    %v7149 = vld [vmem:[#allocation4 + $0x58] sm:$0xf]
    %v7150 = vld [vmem:[#allocation4 + $0x5c] sm:$0xf]
    %v7151 = vld [vmem:[#allocation4 + $0x60] sm:$0xf]
    %v7152 = vld [vmem:[#allocation4 + $0x64] sm:$0xf]
    %v7153 = vld [vmem:[#allocation4 + $0x68] sm:$0xf]
    %v7154 = vld [vmem:[#allocation4 + $0x6c] sm:$0xf]
    %s7155 = scalar_lea.vmem [#allocation4], 112
    %v7156 = vld [vmem:[%s7155] sm:$0xf]
    %v7157 = vld [vmem:[%s7155 + $0x4] sm:$0xf]
    %v7158 = vld [vmem:[%s7155 + $0x8] sm:$0xf]
    %v7159 = vld [vmem:[%s7155 + $0xc] sm:$0xf]
    %v7160 = vld [vmem:[%s7155 + $0x10] sm:$0xf]
    %v7161 = vld [vmem:[%s7155 + $0x14] sm:$0xf]
    %v7162 = vld [vmem:[%s7155 + $0x18] sm:$0xf]
    %v7163 = vld [vmem:[%s7155 + $0x1c] sm:$0xf]
    %v7164 = vld [vmem:[%s7155 + $0x20] sm:$0xf]
    %v7165 = vld [vmem:[%s7155 + $0x24] sm:$0xf]
    %v7166 = vld [vmem:[%s7155 + $0x28] sm:$0xf]
    %v7167 = vld [vmem:[%s7155 + $0x2c] sm:$0xf]
    %v7168 = vld [vmem:[%s7155 + $0x30] sm:$0xf]
    %v7169 = vld [vmem:[%s7155 + $0x34] sm:$0xf]
    %v7170 = vld [vmem:[%s7155 + $0x38] sm:$0xf]
    %v7171 = vld [vmem:[%s7155 + $0x3c] sm:$0xf]
    %v7172 = vld [vmem:[%s7155 + $0x40] sm:$0xf]
    %v7173 = vld [vmem:[%s7155 + $0x44] sm:$0xf]
    %v7174 = vld [vmem:[%s7155 + $0x48] sm:$0xf]
    %v7175 = vld [vmem:[%s7155 + $0x4c] sm:$0xf]
    %v7176 = vld [vmem:[%s7155 + $0x50] sm:$0xf]
    %v7177 = vld [vmem:[%s7155 + $0x54] sm:$0xf]
    %v7178 = vld [vmem:[%s7155 + $0x58] sm:$0xf]
    %v7179 = vld [vmem:[%s7155 + $0x5c] sm:$0xf]
    %v7180 = vld [vmem:[%s7155 + $0x60] sm:$0xf]
    %v7181 = vld [vmem:[%s7155 + $0x64] sm:$0xf]
    %v7182 = vld [vmem:[%s7155 + $0x68] sm:$0xf]
    %v7183 = vld [vmem:[%s7155 + $0x6c] sm:$0xf]
    %v7200 = vrot.slane %v7111, 2
    %v7201 = vrot.slane %v7113, 2
    %v7202 = vsel %vm4756, %v7200, %v7201
    %v7203 = vrot.slane %v7112, 2
    %v7204 = vrot.slane %v7114, 2
    %v7205 = vsel %vm4756, %v7203, %v7204
    %v7206 = vrot.slane %v7115, 2
    %v7207 = vsel %vm4756, %v7201, %v7206
    %v7208 = vrot.slane %v7116, 2
    %v7209 = vsel %vm4756, %v7204, %v7208
    %v7210 = vrot.slane %v7117, 2
    %v7211 = vsel %vm4756, %v7206, %v7210
    %v7212 = vrot.slane %v7118, 2
    %v7213 = vsel %vm4756, %v7208, %v7212
    %v7214 = vrot.slane %v7119, 2
    %v7215 = vsel %vm4756, %v7210, %v7214
    %v7216 = vrot.slane %v7120, 2
    %v7217 = vsel %vm4756, %v7212, %v7216
    %v7218 = vrot.slane %v7121, 2
    %v7219 = vsel %vm4756, %v7214, %v7218
    %v7220 = vrot.slane %v7122, 2
    %v7221 = vsel %vm4756, %v7216, %v7220
    %v7222 = vrot.slane %v7123, 2
    %v7223 = vsel %vm4756, %v7218, %v7222
    %v7224 = vrot.slane %v7124, 2
    %v7225 = vsel %vm4756, %v7220, %v7224
    %v7226 = vrot.slane %v7125, 2
    %v7227 = vsel %vm4756, %v7222, %v7226
    %v7228 = vrot.slane %v7126, 2
    %v7229 = vsel %vm4756, %v7224, %v7228
    %v7266 = vunpack.c.l.b16 %v7156
    %v7267 = vunpack.c.l.b16 %v7157
    %v7268 = vunpack.c.l.b16 %v7158
    %v7269 = vunpack.c.l.b16 %v7159
    %v7270 = vunpack.c.l.b16 %v7160
    %v7271 = vunpack.c.l.b16 %v7161
    %v7272 = vunpack.c.l.b16 %v7162
    %v7273 = vunpack.c.l.b16 %v7163
    %v7274 = vunpack.c.l.b16 %v7164
    %v7275 = vunpack.c.l.b16 %v7165
    %v7276 = vunpack.c.l.b16 %v7166
    %v7277 = vunpack.c.l.b16 %v7167
    %v7278 = vunpack.c.l.b16 %v7168
    %v7279 = vunpack.c.l.b16 %v7169
    %v7280 = vunpack.c.l.b16 %v7170
    %v7281 = vunpack.c.l.b16 %v7171
    %v7282 = vunpack.c.l.b16 %v7172
    %v7283 = vunpack.c.l.b16 %v7173
    %v7284 = vunpack.c.l.b16 %v7174
    %v7285 = vunpack.c.l.b16 %v7175
    %v7286 = vunpack.c.l.b16 %v7176
    %v7287 = vunpack.c.l.b16 %v7177
    %v7288 = vunpack.c.l.b16 %v7178
    %v7289 = vunpack.c.l.b16 %v7179
    %v7290 = vunpack.c.l.b16 %v7180
    %v7291 = vunpack.c.l.b16 %v7181
    %v7292 = vunpack.c.l.b16 %v7182
    %v7293 = vunpack.c.l.b16 %v7183
    %v7294 = vpack.c.b16 %v7267, %v7266
    %v7295 = vpack.c.b16 %v7269, %v7268
    %v7296 = vpack.c.b16 %v7271, %v7270
    %v7297 = vpack.c.b16 %v7273, %v7272
    %v7298 = vpack.c.b16 %v7275, %v7274
    %v7299 = vpack.c.b16 %v7277, %v7276
    %v7300 = vpack.c.b16 %v7279, %v7278
    %v7301 = vpack.c.b16 %v7281, %v7280
    %v7302 = vpack.c.b16 %v7283, %v7282
    %v7303 = vpack.c.b16 %v7285, %v7284
    %v7304 = vpack.c.b16 %v7287, %v7286
    %v7305 = vpack.c.b16 %v7289, %v7288
    %v7306 = vpack.c.b16 %v7291, %v7290
    %v7307 = vpack.c.b16 %v7293, %v7292
    %v7323 = vsel %vm6872, %v7205, 0
    %v7326 = vsel %vm6872, %v7209, 0
    %v7329 = vsel %vm6872, %v7213, 0
    %v7332 = vsel %vm6872, %v7217, 0
    %v7335 = vsel %vm6872, %v7221, 0
    %v7338 = vsel %vm6872, %v7225, 0
    %v7341 = vsel %vm6872, %v7229, 0
    %v7344 = vsel %vm6872, %v7228, 0
    %7346 = vmatprep.subr.bf16.mxu0 0
    %7347 = vmatpush1.bf16.msra.mxu0 %v7301
    %7348 = vmatprep.subr.bf16.mxu0 0
    %7349 = vmatpush1.bf16.msra.mxu0 %v7300
    %7350 = vmatprep.subr.bf16.mxu0 0
    %7351 = vmatpush1.bf16.msra.mxu0 %v7299
    %7352 = vmatprep.subr.bf16.mxu0 0
    %7353 = vmatpush1.bf16.msra.mxu0 %v7298
    %7354 = vmatprep.subr.bf16.mxu0 0
    %7355 = vmatpush1.bf16.msra.mxu0 %v7297
    %7356 = vmatprep.subr.bf16.mxu0 0
    %7357 = vmatpush1.bf16.msra.mxu0 %v7296
    %7358 = vmatprep.subr.bf16.mxu0 0
    %7359 = vmatpush1.bf16.msra.mxu0 %v7295
    %7360 = vmatprep.subr.bf16.mxu0 0
    %7361 = vmatpush1.bf16.msra.mxu0 %v7294
    %7362 = vmatprep.subr.bf16.mxu0 0
    %7363 = vmatpush2.bf16.msra.mxu0 0
    %7364 = vmatprep.subr.bf16.mxu0 0
    %7365 = vmatpush2.bf16.msra.mxu0 0
    %7366 = vmatprep.subr.bf16.mxu0 0
    %7367 = vmatpush2.bf16.msra.mxu0 %v7307
    %7368 = vmatprep.subr.bf16.mxu0 0
    %7369 = vmatpush2.bf16.msra.mxu0 %v7306
    %7370 = vmatprep.subr.bf16.mxu0 0
    %7371 = vmatpush2.bf16.msra.mxu0 %v7305
    %7372 = vmatprep.subr.bf16.mxu0 0
    %7373 = vmatpush2.bf16.msra.mxu0 %v7304
    %7374 = vmatprep.subr.bf16.mxu0 0
    %7375 = vmatpush2.bf16.msra.mxu0 %v7303
    %7376 = vmatprep.subr.bf16.mxu0 0
    %7377 = vmatpush2.bf16.msra.mxu0 %v7302
    %7378 = vmatprep.mubr.bf16.mxu0 %v7323
    %7379 = vmatmul.mubr.bf16.gmra.mxu0 %v7202
    %v7380 = vpop.f32.mrf.mxu0
    %v7381 = vadd.f32 0.0, %v7380
    %v7382 = vpop.f32.mrf.mxu0
    %v7383 = vpop.f32.mrf.mxu0
    %v7384 = vadd.f32 0.0, %v7383
    %v7385 = vpop.f32.mrf.mxu0
    %7386 = vmatprep.mubr.bf16.mxu0 %v7326
    %7387 = vmatmul.mubr.bf16.gmra.mxu0 %v7207
    %v7388 = vpop.f32.mrf.mxu0
    %v7389 = vadd.f32 0.0, %v7388
    %v7390 = vpop.f32.mrf.mxu0
    %v7391 = vpop.f32.mrf.mxu0
    %v7392 = vadd.f32 0.0, %v7391
    %v7393 = vpop.f32.mrf.mxu0
    %7394 = vmatprep.mubr.bf16.mxu0 %v7329
    %7395 = vmatmul.mubr.bf16.gmra.mxu0 %v7211
    %v7396 = vpop.f32.mrf.mxu0
    %v7397 = vadd.f32 0.0, %v7396
    %v7398 = vpop.f32.mrf.mxu0
    %v7399 = vpop.f32.mrf.mxu0
    %v7400 = vadd.f32 0.0, %v7399
    %v7401 = vpop.f32.mrf.mxu0
    %7402 = vmatprep.mubr.bf16.mxu0 %v7332
    %7403 = vmatmul.mubr.bf16.gmra.mxu0 %v7215
    %v7404 = vpop.f32.mrf.mxu0
    %v7405 = vadd.f32 0.0, %v7404
    %v7406 = vpop.f32.mrf.mxu0
    %v7407 = vpop.f32.mrf.mxu0
    %v7408 = vadd.f32 0.0, %v7407
    %v7409 = vpop.f32.mrf.mxu0
    %7410 = vmatprep.mubr.bf16.mxu0 %v7335
    %7411 = vmatmul.mubr.bf16.gmra.mxu0 %v7219
    %v7412 = vpop.f32.mrf.mxu0
    %v7413 = vadd.f32 0.0, %v7412
    %v7414 = vpop.f32.mrf.mxu0
    %v7415 = vpop.f32.mrf.mxu0
    %v7416 = vadd.f32 0.0, %v7415
    %v7417 = vpop.f32.mrf.mxu0
    %7418 = vmatprep.mubr.bf16.mxu0 %v7338
    %7419 = vmatmul.mubr.bf16.gmra.mxu0 %v7223
    %v7420 = vpop.f32.mrf.mxu0
    %v7421 = vadd.f32 0.0, %v7420
    %v7422 = vpop.f32.mrf.mxu0
    %v7423 = vpop.f32.mrf.mxu0
    %v7424 = vadd.f32 0.0, %v7423
    %v7425 = vpop.f32.mrf.mxu0
    %7426 = vmatprep.mubr.bf16.mxu0 %v7341
    %7427 = vmatmul.mubr.bf16.gmra.mxu0 %v7227
    %v7428 = vpop.f32.mrf.mxu0
    %v7429 = vadd.f32 0.0, %v7428
    %v7430 = vpop.f32.mrf.mxu0
    %v7431 = vpop.f32.mrf.mxu0
    %v7432 = vadd.f32 0.0, %v7431
    %v7433 = vpop.f32.mrf.mxu0
    %7434 = vmatprep.mubr.bf16.mxu0 %v7344
    %7435 = vmatmul.mubr.bf16.gmra.mxu0 %v7226
    %v7436 = vpop.f32.mrf.mxu0
    %v7437 = vadd.f32 0.0, %v7436
    %v7438 = vpop.f32.mrf.mxu0
    %v7439 = vpop.f32.mrf.mxu0
    %v7440 = vpop.f32.mrf.mxu0
    %7441 = vdwg.mxu0
    %v7470 = vunpack.c.l.b16 %v7127
    %v7471 = vunpack.c.l.b16 %v7128
    %v7472 = vunpack.c.l.b16 %v7129
    %v7473 = vunpack.c.l.b16 %v7130
    %v7474 = vunpack.c.l.b16 %v7131
    %v7475 = vunpack.c.l.b16 %v7132
    %v7476 = vunpack.c.l.b16 %v7133
    %v7477 = vunpack.c.l.b16 %v7134
    %v7478 = vunpack.c.l.b16 %v7135
    %v7479 = vunpack.c.l.b16 %v7136
    %v7480 = vunpack.c.l.b16 %v7137
    %v7481 = vunpack.c.l.b16 %v7138
    %v7482 = vunpack.c.l.b16 %v7139
    %v7483 = vunpack.c.l.b16 %v7140
    %v7484 = vunpack.c.l.b16 %v7141
    %v7485 = vunpack.c.l.b16 %v7142
    %v7486 = vunpack.c.l.b16 %v7143
    %v7487 = vunpack.c.l.b16 %v7144
    %v7488 = vunpack.c.l.b16 %v7145
    %v7489 = vunpack.c.l.b16 %v7146
    %v7490 = vunpack.c.l.b16 %v7147
    %v7491 = vunpack.c.l.b16 %v7148
    %v7492 = vunpack.c.l.b16 %v7149
    %v7493 = vunpack.c.l.b16 %v7150
    %v7494 = vunpack.c.l.b16 %v7151
    %v7495 = vunpack.c.l.b16 %v7152
    %v7496 = vunpack.c.l.b16 %v7153
    %v7497 = vunpack.c.l.b16 %v7154
    %v7498 = vpack.c.b16 %v7471, %v7470
    %v7499 = vpack.c.b16 %v7473, %v7472
    %v7500 = vpack.c.b16 %v7475, %v7474
    %v7501 = vpack.c.b16 %v7477, %v7476
    %v7502 = vpack.c.b16 %v7479, %v7478
    %v7503 = vpack.c.b16 %v7481, %v7480
    %v7504 = vpack.c.b16 %v7483, %v7482
    %v7505 = vpack.c.b16 %v7485, %v7484
    %v7506 = vpack.c.b16 %v7487, %v7486
    %v7507 = vpack.c.b16 %v7489, %v7488
    %v7508 = vpack.c.b16 %v7491, %v7490
    %v7509 = vpack.c.b16 %v7493, %v7492
    %v7510 = vpack.c.b16 %v7495, %v7494
    %v7511 = vpack.c.b16 %v7497, %v7496
    %v7527 = vsel %vm6872, %v7112, 0
    %v7530 = vsel %vm6872, %v7114, 0
    %v7533 = vsel %vm6872, %v7116, 0
    %v7536 = vsel %vm6872, %v7118, 0
    %v7539 = vsel %vm6872, %v7120, 0
    %v7542 = vsel %vm6872, %v7122, 0
    %v7545 = vsel %vm6872, %v7124, 0
    %v7548 = vsel %vm6872, %v7126, 0
    %7550 = vmatprep.subr.bf16.mxu0 0
    %7551 = vmatpush1.bf16.msra.mxu0 %v7505
    %7552 = vmatprep.subr.bf16.mxu0 0
    %7553 = vmatpush1.bf16.msra.mxu0 %v7504
    %7554 = vmatprep.subr.bf16.mxu0 0
    %7555 = vmatpush1.bf16.msra.mxu0 %v7503
    %7556 = vmatprep.subr.bf16.mxu0 0
    %7557 = vmatpush1.bf16.msra.mxu0 %v7502
    %7558 = vmatprep.subr.bf16.mxu0 0
    %7559 = vmatpush1.bf16.msra.mxu0 %v7501
    %7560 = vmatprep.subr.bf16.mxu0 0
    %7561 = vmatpush1.bf16.msra.mxu0 %v7500
    %7562 = vmatprep.subr.bf16.mxu0 0
    %7563 = vmatpush1.bf16.msra.mxu0 %v7499
    %7564 = vmatprep.subr.bf16.mxu0 0
    %7565 = vmatpush1.bf16.msra.mxu0 %v7498
    %7566 = vmatprep.subr.bf16.mxu0 0
    %7567 = vmatpush2.bf16.msra.mxu0 0
    %7568 = vmatprep.subr.bf16.mxu0 0
    %7569 = vmatpush2.bf16.msra.mxu0 0
    %7570 = vmatprep.subr.bf16.mxu0 0
    %7571 = vmatpush2.bf16.msra.mxu0 %v7511
    %7572 = vmatprep.subr.bf16.mxu0 0
    %7573 = vmatpush2.bf16.msra.mxu0 %v7510
    %7574 = vmatprep.subr.bf16.mxu0 0
    %7575 = vmatpush2.bf16.msra.mxu0 %v7509
    %7576 = vmatprep.subr.bf16.mxu0 0
    %7577 = vmatpush2.bf16.msra.mxu0 %v7508
    %7578 = vmatprep.subr.bf16.mxu0 0
    %7579 = vmatpush2.bf16.msra.mxu0 %v7507
    %7580 = vmatprep.subr.bf16.mxu0 0
    %7581 = vmatpush2.bf16.msra.mxu0 %v7506
    %7582 = vmatprep.mubr.bf16.mxu0 %v7527
    %7583 = vmatmul.mubr.bf16.gmra.mxu0 %v7111
    %v7584 = vpop.f32.mrf.mxu0
    %v7585 = vadd.f32 %v7381, %v7584
    %v7586 = vpop.f32.mrf.mxu0
    %v7587 = vpop.f32.mrf.mxu0
    %v7588 = vadd.f32 %v7384, %v7587
    %v7589 = vpop.f32.mrf.mxu0
    %7590 = vmatprep.mubr.bf16.mxu0 %v7530
    %7591 = vmatmul.mubr.bf16.gmra.mxu0 %v7113
    %v7592 = vpop.f32.mrf.mxu0
    %v7593 = vadd.f32 %v7389, %v7592
    %v7594 = vpop.f32.mrf.mxu0
    %v7595 = vpop.f32.mrf.mxu0
    %v7596 = vadd.f32 %v7392, %v7595
    %v7597 = vpop.f32.mrf.mxu0
    %7598 = vmatprep.mubr.bf16.mxu0 %v7533
    %7599 = vmatmul.mubr.bf16.gmra.mxu0 %v7115
    %v7600 = vpop.f32.mrf.mxu0
    %v7601 = vadd.f32 %v7397, %v7600
    %v7602 = vpop.f32.mrf.mxu0
    %v7603 = vpop.f32.mrf.mxu0
    %v7604 = vadd.f32 %v7400, %v7603
    %v7605 = vpop.f32.mrf.mxu0
    %7606 = vmatprep.mubr.bf16.mxu0 %v7536
    %7607 = vmatmul.mubr.bf16.gmra.mxu0 %v7117
    %v7608 = vpop.f32.mrf.mxu0
    %v7609 = vadd.f32 %v7405, %v7608
    %v7610 = vpop.f32.mrf.mxu0
    %v7611 = vpop.f32.mrf.mxu0
    %v7612 = vadd.f32 %v7408, %v7611
    %v7613 = vpop.f32.mrf.mxu0
    %7614 = vmatprep.mubr.bf16.mxu0 %v7539
    %7615 = vmatmul.mubr.bf16.gmra.mxu0 %v7119
    %v7616 = vpop.f32.mrf.mxu0
    %v7617 = vadd.f32 %v7413, %v7616
    %v7618 = vpop.f32.mrf.mxu0
    %v7619 = vpop.f32.mrf.mxu0
    %v7620 = vadd.f32 %v7416, %v7619
    %v7621 = vpop.f32.mrf.mxu0
    %7622 = vmatprep.mubr.bf16.mxu0 %v7542
    %7623 = vmatmul.mubr.bf16.gmra.mxu0 %v7121
    %v7624 = vpop.f32.mrf.mxu0
    %v7625 = vadd.f32 %v7421, %v7624
    %v7626 = vpop.f32.mrf.mxu0
    %v7627 = vpop.f32.mrf.mxu0
    %v7628 = vadd.f32 %v7424, %v7627
    %v7629 = vpop.f32.mrf.mxu0
    %7630 = vmatprep.mubr.bf16.mxu0 %v7545
    %7631 = vmatmul.mubr.bf16.gmra.mxu0 %v7123
    %v7632 = vpop.f32.mrf.mxu0
    %v7633 = vadd.f32 %v7429, %v7632
    %v7634 = vpop.f32.mrf.mxu0
    %v7635 = vpop.f32.mrf.mxu0
    %v7636 = vadd.f32 %v7432, %v7635
    %v7637 = vpop.f32.mrf.mxu0
    %7638 = vmatprep.mubr.bf16.mxu0 %v7548
    %7639 = vmatmul.mubr.bf16.gmra.mxu0 %v7125
    %v7640 = vpop.f32.mrf.mxu0
    %v7641 = vadd.f32 %v7437, %v7640
    %v7642 = vpop.f32.mrf.mxu0
    %v7643 = vpop.f32.mrf.mxu0
    %v7644 = vpop.f32.mrf.mxu0
    %7645 = vdwg.mxu0
    %s7646 = scalar_lea.vmem [#allocation4], 224
    %v7647 = vld [vmem:[%s7646] sm:$0xf]
    %v7648 = vld [vmem:[%s7646 + $0x4] sm:$0xf]
    %v7649 = vld [vmem:[%s7646 + $0x8] sm:$0xf]
    %v7650 = vld [vmem:[%s7646 + $0xc] sm:$0xf]
    %v7651 = vld [vmem:[%s7646 + $0x10] sm:$0xf]
    %v7652 = vld [vmem:[%s7646 + $0x14] sm:$0xf]
    %v7653 = vld [vmem:[%s7646 + $0x18] sm:$0xf]
    %v7654 = vld [vmem:[%s7646 + $0x1c] sm:$0xf]
    %v7655 = vld [vmem:[%s7646 + $0x20] sm:$0xf]
    %v7656 = vld [vmem:[%s7646 + $0x24] sm:$0xf]
    %v7657 = vld [vmem:[%s7646 + $0x28] sm:$0xf]
    %v7658 = vld [vmem:[%s7646 + $0x2c] sm:$0xf]
    %v7659 = vld [vmem:[%s7646 + $0x30] sm:$0xf]
    %v7660 = vld [vmem:[%s7646 + $0x34] sm:$0xf]
    %v7661 = vld [vmem:[%s7646 + $0x38] sm:$0xf]
    %v7662 = vld [vmem:[%s7646 + $0x3c] sm:$0xf]
    %v7663 = vld [vmem:[%s7646 + $0x40] sm:$0xf]
    %v7664 = vld [vmem:[%s7646 + $0x44] sm:$0xf]
    %v7665 = vld [vmem:[%s7646 + $0x48] sm:$0xf]
    %v7666 = vld [vmem:[%s7646 + $0x4c] sm:$0xf]
    %v7667 = vld [vmem:[%s7646 + $0x50] sm:$0xf]
    %v7668 = vld [vmem:[%s7646 + $0x54] sm:$0xf]
    %v7669 = vld [vmem:[%s7646 + $0x58] sm:$0xf]
    %v7670 = vld [vmem:[%s7646 + $0x5c] sm:$0xf]
    %v7671 = vld [vmem:[%s7646 + $0x60] sm:$0xf]
    %v7672 = vld [vmem:[%s7646 + $0x64] sm:$0xf]
    %v7673 = vld [vmem:[%s7646 + $0x68] sm:$0xf]
    %v7674 = vld [vmem:[%s7646 + $0x6c] sm:$0xf]
    %v7675 = vrot.slane %v7111, 4
    %v7676 = vrot.slane %v7113, 4
    %v7677 = vsel %vm6052, %v7675, %v7676
    %v7678 = vrot.slane %v7112, 4
    %v7679 = vrot.slane %v7114, 4
    %v7680 = vsel %vm6052, %v7678, %v7679
    %v7681 = vrot.slane %v7115, 4
    %v7682 = vsel %vm6052, %v7676, %v7681
    %v7683 = vrot.slane %v7116, 4
    %v7684 = vsel %vm6052, %v7679, %v7683
    %v7685 = vrot.slane %v7117, 4
    %v7686 = vsel %vm6052, %v7681, %v7685
    %v7687 = vrot.slane %v7118, 4
    %v7688 = vsel %vm6052, %v7683, %v7687
    %v7689 = vrot.slane %v7119, 4
    %v7690 = vsel %vm6052, %v7685, %v7689
    %v7691 = vrot.slane %v7120, 4
    %v7692 = vsel %vm6052, %v7687, %v7691
    %v7693 = vrot.slane %v7121, 4
    %v7694 = vsel %vm6052, %v7689, %v7693
    %v7695 = vrot.slane %v7122, 4
    %v7696 = vsel %vm6052, %v7691, %v7695
    %v7697 = vrot.slane %v7123, 4
    %v7698 = vsel %vm6052, %v7693, %v7697
    %v7699 = vrot.slane %v7124, 4
    %v7700 = vsel %vm6052, %v7695, %v7699
    %v7701 = vrot.slane %v7125, 4
    %v7702 = vsel %vm6052, %v7697, %v7701
    %v7703 = vrot.slane %v7126, 4
    %v7704 = vsel %vm6052, %v7699, %v7703
    %v7741 = vunpack.c.l.b16 %v7647
    %v7742 = vunpack.c.l.b16 %v7648
    %v7743 = vunpack.c.l.b16 %v7649
    %v7744 = vunpack.c.l.b16 %v7650
    %v7745 = vunpack.c.l.b16 %v7651
    %v7746 = vunpack.c.l.b16 %v7652
    %v7747 = vunpack.c.l.b16 %v7653
    %v7748 = vunpack.c.l.b16 %v7654
    %v7749 = vunpack.c.l.b16 %v7655
    %v7750 = vunpack.c.l.b16 %v7656
    %v7751 = vunpack.c.l.b16 %v7657
    %v7752 = vunpack.c.l.b16 %v7658
    %v7753 = vunpack.c.l.b16 %v7659
    %v7754 = vunpack.c.l.b16 %v7660
    %v7755 = vunpack.c.l.b16 %v7661
    %v7756 = vunpack.c.l.b16 %v7662
    %v7757 = vunpack.c.l.b16 %v7663
    %v7758 = vunpack.c.l.b16 %v7664
    %v7759 = vunpack.c.l.b16 %v7665
    %v7760 = vunpack.c.l.b16 %v7666
    %v7761 = vunpack.c.l.b16 %v7667
    %v7762 = vunpack.c.l.b16 %v7668
    %v7763 = vunpack.c.l.b16 %v7669
    %v7764 = vunpack.c.l.b16 %v7670
    %v7765 = vunpack.c.l.b16 %v7671
    %v7766 = vunpack.c.l.b16 %v7672
    %v7767 = vunpack.c.l.b16 %v7673
    %v7768 = vunpack.c.l.b16 %v7674
    %v7769 = vpack.c.b16 %v7742, %v7741
    %v7770 = vpack.c.b16 %v7744, %v7743
    %v7771 = vpack.c.b16 %v7746, %v7745
    %v7772 = vpack.c.b16 %v7748, %v7747
    %v7773 = vpack.c.b16 %v7750, %v7749
    %v7774 = vpack.c.b16 %v7752, %v7751
    %v7775 = vpack.c.b16 %v7754, %v7753
    %v7776 = vpack.c.b16 %v7756, %v7755
    %v7777 = vpack.c.b16 %v7758, %v7757
    %v7778 = vpack.c.b16 %v7760, %v7759
    %v7779 = vpack.c.b16 %v7762, %v7761
    %v7780 = vpack.c.b16 %v7764, %v7763
    %v7781 = vpack.c.b16 %v7766, %v7765
    %v7782 = vpack.c.b16 %v7768, %v7767
    %v7798 = vsel %vm6872, %v7680, 0
    %v7801 = vsel %vm6872, %v7684, 0
    %v7804 = vsel %vm6872, %v7688, 0
    %v7807 = vsel %vm6872, %v7692, 0
    %v7810 = vsel %vm6872, %v7696, 0
    %v7813 = vsel %vm6872, %v7700, 0
    %v7816 = vsel %vm6872, %v7704, 0
    %v7819 = vsel %vm6872, %v7703, 0
    %7821 = vmatprep.subr.bf16.mxu0 0
    %7822 = vmatpush1.bf16.msra.mxu0 %v7776
    %7823 = vmatprep.subr.bf16.mxu0 0
    %7824 = vmatpush1.bf16.msra.mxu0 %v7775
    %7825 = vmatprep.subr.bf16.mxu0 0
    %7826 = vmatpush1.bf16.msra.mxu0 %v7774
    %7827 = vmatprep.subr.bf16.mxu0 0
    %7828 = vmatpush1.bf16.msra.mxu0 %v7773
    %7829 = vmatprep.subr.bf16.mxu0 0
    %7830 = vmatpush1.bf16.msra.mxu0 %v7772
    %7831 = vmatprep.subr.bf16.mxu0 0
    %7832 = vmatpush1.bf16.msra.mxu0 %v7771
    %7833 = vmatprep.subr.bf16.mxu0 0
    %7834 = vmatpush1.bf16.msra.mxu0 %v7770
    %7835 = vmatprep.subr.bf16.mxu0 0
    %7836 = vmatpush1.bf16.msra.mxu0 %v7769
    %7837 = vmatprep.subr.bf16.mxu0 0
    %7838 = vmatpush2.bf16.msra.mxu0 0
    %7839 = vmatprep.subr.bf16.mxu0 0
    %7840 = vmatpush2.bf16.msra.mxu0 0
    %7841 = vmatprep.subr.bf16.mxu0 0
    %7842 = vmatpush2.bf16.msra.mxu0 %v7782
    %7843 = vmatprep.subr.bf16.mxu0 0
    %7844 = vmatpush2.bf16.msra.mxu0 %v7781
    %7845 = vmatprep.subr.bf16.mxu0 0
    %7846 = vmatpush2.bf16.msra.mxu0 %v7780
    %7847 = vmatprep.subr.bf16.mxu0 0
    %7848 = vmatpush2.bf16.msra.mxu0 %v7779
    %7849 = vmatprep.subr.bf16.mxu0 0
    %7850 = vmatpush2.bf16.msra.mxu0 %v7778
    %7851 = vmatprep.subr.bf16.mxu0 0
    %7852 = vmatpush2.bf16.msra.mxu0 %v7777
    %7853 = vmatprep.mubr.bf16.mxu0 %v7798
    %7854 = vmatmul.mubr.bf16.gmra.mxu0 %v7677
    %v7855 = vpop.f32.mrf.mxu0
    %v7856 = vadd.f32 0.0, %v7855
    %v7857 = vpop.f32.mrf.mxu0
    %v7858 = vpop.f32.mrf.mxu0
    %v7859 = vadd.f32 0.0, %v7858
    %v7860 = vpop.f32.mrf.mxu0
    %7861 = vmatprep.mubr.bf16.mxu0 %v7801
    %7862 = vmatmul.mubr.bf16.gmra.mxu0 %v7682
    %v7863 = vpop.f32.mrf.mxu0
    %v7864 = vadd.f32 0.0, %v7863
    %v7865 = vpop.f32.mrf.mxu0
    %v7866 = vpop.f32.mrf.mxu0
    %v7867 = vadd.f32 0.0, %v7866
    %v7868 = vpop.f32.mrf.mxu0
    %7869 = vmatprep.mubr.bf16.mxu0 %v7804
    %7870 = vmatmul.mubr.bf16.gmra.mxu0 %v7686
    %v7871 = vpop.f32.mrf.mxu0
    %v7872 = vadd.f32 0.0, %v7871
    %v7873 = vpop.f32.mrf.mxu0
    %v7874 = vpop.f32.mrf.mxu0
    %v7875 = vadd.f32 0.0, %v7874
    %v7876 = vpop.f32.mrf.mxu0
    %7877 = vmatprep.mubr.bf16.mxu0 %v7807
    %7878 = vmatmul.mubr.bf16.gmra.mxu0 %v7690
    %v7879 = vpop.f32.mrf.mxu0
    %v7880 = vadd.f32 0.0, %v7879
    %v7881 = vpop.f32.mrf.mxu0
    %v7882 = vpop.f32.mrf.mxu0
    %v7883 = vadd.f32 0.0, %v7882
    %v7884 = vpop.f32.mrf.mxu0
    %7885 = vmatprep.mubr.bf16.mxu0 %v7810
    %7886 = vmatmul.mubr.bf16.gmra.mxu0 %v7694
    %v7887 = vpop.f32.mrf.mxu0
    %v7888 = vadd.f32 0.0, %v7887
    %v7889 = vpop.f32.mrf.mxu0
    %v7890 = vpop.f32.mrf.mxu0
    %v7891 = vadd.f32 0.0, %v7890
    %v7892 = vpop.f32.mrf.mxu0
    %7893 = vmatprep.mubr.bf16.mxu0 %v7813
    %7894 = vmatmul.mubr.bf16.gmra.mxu0 %v7698
    %v7895 = vpop.f32.mrf.mxu0
    %v7896 = vadd.f32 0.0, %v7895
    %v7897 = vpop.f32.mrf.mxu0
    %v7898 = vpop.f32.mrf.mxu0
    %v7899 = vadd.f32 0.0, %v7898
    %v7900 = vpop.f32.mrf.mxu0
    %7901 = vmatprep.mubr.bf16.mxu0 %v7816
    %7902 = vmatmul.mubr.bf16.gmra.mxu0 %v7702
    %v7903 = vpop.f32.mrf.mxu0
    %v7904 = vadd.f32 0.0, %v7903
    %v7905 = vpop.f32.mrf.mxu0
    %v7906 = vpop.f32.mrf.mxu0
    %v7907 = vadd.f32 0.0, %v7906
    %v7908 = vpop.f32.mrf.mxu0
    %7909 = vmatprep.mubr.bf16.mxu0 %v7819
    %7910 = vmatmul.mubr.bf16.gmra.mxu0 %v7701
    %v7911 = vpop.f32.mrf.mxu0
    %v7912 = vadd.f32 0.0, %v7911
    %v7913 = vpop.f32.mrf.mxu0
    %v7914 = vpop.f32.mrf.mxu0
    %v7915 = vpop.f32.mrf.mxu0
    %7916 = vdwg.mxu0
    %v7917 = vadd.f32 %v7585, %v7856
    %v7918 = vadd.f32 %v7588, %v7859
    %v7919 = vadd.f32 %v7593, %v7864
    %v7920 = vadd.f32 %v7596, %v7867
    %v7921 = vadd.f32 %v7601, %v7872
    %v7922 = vadd.f32 %v7604, %v7875
    %v7923 = vadd.f32 %v7609, %v7880
    %v7924 = vadd.f32 %v7612, %v7883
    %v7925 = vadd.f32 %v7617, %v7888
    %v7926 = vadd.f32 %v7620, %v7891
    %v7927 = vadd.f32 %v7625, %v7896
    %v7928 = vadd.f32 %v7628, %v7899
    %v7929 = vadd.f32 %v7633, %v7904
    %v7930 = vadd.f32 %v7636, %v7907
    %v7931 = vadd.f32 %v7641, %v7912
    %s7932 = scalar_lea.vmem [#allocation4], 336
    %v7933 = vld [vmem:[%s7932] sm:$0xf]
    %v7934 = vld [vmem:[%s7932 + $0x4] sm:$0xf]
    %v7935 = vld [vmem:[%s7932 + $0x8] sm:$0xf]
    %v7936 = vld [vmem:[%s7932 + $0xc] sm:$0xf]
    %v7937 = vld [vmem:[%s7932 + $0x10] sm:$0xf]
    %v7938 = vld [vmem:[%s7932 + $0x14] sm:$0xf]
    %v7939 = vld [vmem:[%s7932 + $0x18] sm:$0xf]
    %v7940 = vld [vmem:[%s7932 + $0x1c] sm:$0xf]
    %v7941 = vld [vmem:[%s7932 + $0x20] sm:$0xf]
    %v7942 = vld [vmem:[%s7932 + $0x24] sm:$0xf]
    %v7943 = vld [vmem:[%s7932 + $0x28] sm:$0xf]
    %v7944 = vld [vmem:[%s7932 + $0x2c] sm:$0xf]
    %v7945 = vld [vmem:[%s7932 + $0x30] sm:$0xf]
    %v7946 = vld [vmem:[%s7932 + $0x34] sm:$0xf]
    %v7947 = vld [vmem:[%s7932 + $0x38] sm:$0xf]
    %v7948 = vld [vmem:[%s7932 + $0x3c] sm:$0xf]
    %v7949 = vld [vmem:[%s7932 + $0x40] sm:$0xf]
    %v7950 = vld [vmem:[%s7932 + $0x44] sm:$0xf]
    %v7951 = vld [vmem:[%s7932 + $0x48] sm:$0xf]
    %v7952 = vld [vmem:[%s7932 + $0x4c] sm:$0xf]
    %v7953 = vld [vmem:[%s7932 + $0x50] sm:$0xf]
    %v7954 = vld [vmem:[%s7932 + $0x54] sm:$0xf]
    %v7955 = vld [vmem:[%s7932 + $0x58] sm:$0xf]
    %v7956 = vld [vmem:[%s7932 + $0x5c] sm:$0xf]
    %v7957 = vld [vmem:[%s7932 + $0x60] sm:$0xf]
    %v7958 = vld [vmem:[%s7932 + $0x64] sm:$0xf]
    %v7959 = vld [vmem:[%s7932 + $0x68] sm:$0xf]
    %v7960 = vld [vmem:[%s7932 + $0x6c] sm:$0xf]
    %vm7961 = vcmask 1041408
    %v7962 = vrot.slane %v7111, 6
    %v7963 = vrot.slane %v7113, 6
    %v7964 = vsel %vm7961, %v7962, %v7963
    %v7965 = vrot.slane %v7112, 6
    %v7966 = vrot.slane %v7114, 6
    %v7967 = vsel %vm7961, %v7965, %v7966
    %v7968 = vrot.slane %v7115, 6
    %v7969 = vsel %vm7961, %v7963, %v7968
    %v7970 = vrot.slane %v7116, 6
    %v7971 = vsel %vm7961, %v7966, %v7970
    %v7972 = vrot.slane %v7117, 6
    %v7973 = vsel %vm7961, %v7968, %v7972
    %v7974 = vrot.slane %v7118, 6
    %v7975 = vsel %vm7961, %v7970, %v7974
    %v7976 = vrot.slane %v7119, 6
    %v7977 = vsel %vm7961, %v7972, %v7976
    %v7978 = vrot.slane %v7120, 6
    %v7979 = vsel %vm7961, %v7974, %v7978
    %v7980 = vrot.slane %v7121, 6
    %v7981 = vsel %vm7961, %v7976, %v7980
    %v7982 = vrot.slane %v7122, 6
    %v7983 = vsel %vm7961, %v7978, %v7982
    %v7984 = vrot.slane %v7123, 6
    %v7985 = vsel %vm7961, %v7980, %v7984
    %v7986 = vrot.slane %v7124, 6
    %v7987 = vsel %vm7961, %v7982, %v7986
    %v7988 = vrot.slane %v7125, 6
    %v7989 = vsel %vm7961, %v7984, %v7988
    %v7990 = vrot.slane %v7126, 6
    %v7991 = vsel %vm7961, %v7986, %v7990
    %v8028 = vunpack.c.l.b16 %v7933
    %v8029 = vunpack.c.l.b16 %v7934
    %v8030 = vunpack.c.l.b16 %v7935
    %v8031 = vunpack.c.l.b16 %v7936
    %v8032 = vunpack.c.l.b16 %v7937
    %v8033 = vunpack.c.l.b16 %v7938
    %v8034 = vunpack.c.l.b16 %v7939
    %v8035 = vunpack.c.l.b16 %v7940
    %v8036 = vunpack.c.l.b16 %v7941
    %v8037 = vunpack.c.l.b16 %v7942
    %v8038 = vunpack.c.l.b16 %v7943
    %v8039 = vunpack.c.l.b16 %v7944
    %v8040 = vunpack.c.l.b16 %v7945
    %v8041 = vunpack.c.l.b16 %v7946
    %v8042 = vunpack.c.l.b16 %v7947
    %v8043 = vunpack.c.l.b16 %v7948
    %v8044 = vunpack.c.l.b16 %v7949
    %v8045 = vunpack.c.l.b16 %v7950
    %v8046 = vunpack.c.l.b16 %v7951
    %v8047 = vunpack.c.l.b16 %v7952
    %v8048 = vunpack.c.l.b16 %v7953
    %v8049 = vunpack.c.l.b16 %v7954
    %v8050 = vunpack.c.l.b16 %v7955
    %v8051 = vunpack.c.l.b16 %v7956
    %v8052 = vunpack.c.l.b16 %v7957
    %v8053 = vunpack.c.l.b16 %v7958
    %v8054 = vunpack.c.l.b16 %v7959
    %v8055 = vunpack.c.l.b16 %v7960
    %v8056 = vpack.c.b16 %v8029, %v8028
    %v8057 = vpack.c.b16 %v8031, %v8030
    %v8058 = vpack.c.b16 %v8033, %v8032
    %v8059 = vpack.c.b16 %v8035, %v8034
    %v8060 = vpack.c.b16 %v8037, %v8036
    %v8061 = vpack.c.b16 %v8039, %v8038
    %v8062 = vpack.c.b16 %v8041, %v8040
    %v8063 = vpack.c.b16 %v8043, %v8042
    %v8064 = vpack.c.b16 %v8045, %v8044
    %v8065 = vpack.c.b16 %v8047, %v8046
    %v8066 = vpack.c.b16 %v8049, %v8048
    %v8067 = vpack.c.b16 %v8051, %v8050
    %v8068 = vpack.c.b16 %v8053, %v8052
    %v8069 = vpack.c.b16 %v8055, %v8054
    %v8085 = vsel %vm6872, %v7967, 0
    %v8088 = vsel %vm6872, %v7971, 0
    %v8091 = vsel %vm6872, %v7975, 0
    %v8094 = vsel %vm6872, %v7979, 0
    %v8097 = vsel %vm6872, %v7983, 0
    %v8100 = vsel %vm6872, %v7987, 0
    %v8103 = vsel %vm6872, %v7991, 0
    %v8106 = vsel %vm6872, %v7990, 0
    %8108 = vmatprep.subr.bf16.mxu0 0
    %8109 = vmatpush1.bf16.msra.mxu0 %v8063
    %8110 = vmatprep.subr.bf16.mxu0 0
    %8111 = vmatpush1.bf16.msra.mxu0 %v8062
    %8112 = vmatprep.subr.bf16.mxu0 0
    %8113 = vmatpush1.bf16.msra.mxu0 %v8061
    %8114 = vmatprep.subr.bf16.mxu0 0
    %8115 = vmatpush1.bf16.msra.mxu0 %v8060
    %8116 = vmatprep.subr.bf16.mxu0 0
    %8117 = vmatpush1.bf16.msra.mxu0 %v8059
    %8118 = vmatprep.subr.bf16.mxu0 0
    %8119 = vmatpush1.bf16.msra.mxu0 %v8058
    %8120 = vmatprep.subr.bf16.mxu0 0
    %8121 = vmatpush1.bf16.msra.mxu0 %v8057
    %8122 = vmatprep.subr.bf16.mxu0 0
    %8123 = vmatpush1.bf16.msra.mxu0 %v8056
    %8124 = vmatprep.subr.bf16.mxu0 0
    %8125 = vmatpush2.bf16.msra.mxu0 0
    %8126 = vmatprep.subr.bf16.mxu0 0
    %8127 = vmatpush2.bf16.msra.mxu0 0
    %8128 = vmatprep.subr.bf16.mxu0 0
    %8129 = vmatpush2.bf16.msra.mxu0 %v8069
    %8130 = vmatprep.subr.bf16.mxu0 0
    %8131 = vmatpush2.bf16.msra.mxu0 %v8068
    %8132 = vmatprep.subr.bf16.mxu0 0
    %8133 = vmatpush2.bf16.msra.mxu0 %v8067
    %8134 = vmatprep.subr.bf16.mxu0 0
    %8135 = vmatpush2.bf16.msra.mxu0 %v8066
    %8136 = vmatprep.subr.bf16.mxu0 0
    %8137 = vmatpush2.bf16.msra.mxu0 %v8065
    %8138 = vmatprep.subr.bf16.mxu0 0
    %8139 = vmatpush2.bf16.msra.mxu0 %v8064
    %8140 = vmatprep.mubr.bf16.mxu0 %v8085
    %8141 = vmatmul.mubr.bf16.gmra.mxu0 %v7964
    %v8142 = vpop.f32.mrf.mxu0
    %v8143 = vadd.f32 0.0, %v8142
    %v8144 = vpop.f32.mrf.mxu0
    %v8145 = vpop.f32.mrf.mxu0
    %v8146 = vadd.f32 0.0, %v8145
    %v8147 = vpop.f32.mrf.mxu0
    %8148 = vmatprep.mubr.bf16.mxu0 %v8088
    %8149 = vmatmul.mubr.bf16.gmra.mxu0 %v7969
    %v8150 = vpop.f32.mrf.mxu0
    %v8151 = vadd.f32 0.0, %v8150
    %v8152 = vpop.f32.mrf.mxu0
    %v8153 = vpop.f32.mrf.mxu0
    %v8154 = vadd.f32 0.0, %v8153
    %v8155 = vpop.f32.mrf.mxu0
    %8156 = vmatprep.mubr.bf16.mxu0 %v8091
    %8157 = vmatmul.mubr.bf16.gmra.mxu0 %v7973
    %v8158 = vpop.f32.mrf.mxu0
    %v8159 = vadd.f32 0.0, %v8158
    %v8160 = vpop.f32.mrf.mxu0
    %v8161 = vpop.f32.mrf.mxu0
    %v8162 = vadd.f32 0.0, %v8161
    %v8163 = vpop.f32.mrf.mxu0
    %8164 = vmatprep.mubr.bf16.mxu0 %v8094
    %8165 = vmatmul.mubr.bf16.gmra.mxu0 %v7977
    %v8166 = vpop.f32.mrf.mxu0
    %v8167 = vadd.f32 0.0, %v8166
    %v8168 = vpop.f32.mrf.mxu0
    %v8169 = vpop.f32.mrf.mxu0
    %v8170 = vadd.f32 0.0, %v8169
    %v8171 = vpop.f32.mrf.mxu0
    %8172 = vmatprep.mubr.bf16.mxu0 %v8097
    %8173 = vmatmul.mubr.bf16.gmra.mxu0 %v7981
    %v8174 = vpop.f32.mrf.mxu0
    %v8175 = vadd.f32 0.0, %v8174
    %v8176 = vpop.f32.mrf.mxu0
    %v8177 = vpop.f32.mrf.mxu0
    %v8178 = vadd.f32 0.0, %v8177
    %v8179 = vpop.f32.mrf.mxu0
    %8180 = vmatprep.mubr.bf16.mxu0 %v8100
    %8181 = vmatmul.mubr.bf16.gmra.mxu0 %v7985
    %v8182 = vpop.f32.mrf.mxu0
    %v8183 = vadd.f32 0.0, %v8182
    %v8184 = vpop.f32.mrf.mxu0
    %v8185 = vpop.f32.mrf.mxu0
    %v8186 = vadd.f32 0.0, %v8185
    %v8187 = vpop.f32.mrf.mxu0
    %8188 = vmatprep.mubr.bf16.mxu0 %v8103
    %8189 = vmatmul.mubr.bf16.gmra.mxu0 %v7989
    %v8190 = vpop.f32.mrf.mxu0
    %v8191 = vadd.f32 0.0, %v8190
    %v8192 = vpop.f32.mrf.mxu0
    %v8193 = vpop.f32.mrf.mxu0
    %v8194 = vadd.f32 0.0, %v8193
    %v8195 = vpop.f32.mrf.mxu0
    %8196 = vmatprep.mubr.bf16.mxu0 %v8106
    %8197 = vmatmul.mubr.bf16.gmra.mxu0 %v7988
    %v8198 = vpop.f32.mrf.mxu0
    %v8199 = vadd.f32 0.0, %v8198
    %v8200 = vpop.f32.mrf.mxu0
    %v8201 = vpop.f32.mrf.mxu0
    %v8202 = vpop.f32.mrf.mxu0
    %8203 = vdwg.mxu0
    %v8204 = vadd.f32 %v7917, %v8143
    %v8205 = vadd.f32 %v7918, %v8146
    %v8206 = vadd.f32 %v7919, %v8151
    %v8207 = vadd.f32 %v7920, %v8154
    %v8208 = vadd.f32 %v7921, %v8159
    %v8209 = vadd.f32 %v7922, %v8162
    %v8210 = vadd.f32 %v7923, %v8167
    %v8211 = vadd.f32 %v7924, %v8170
    %v8212 = vadd.f32 %v7925, %v8175
    %v8213 = vadd.f32 %v7926, %v8178
    %v8214 = vadd.f32 %v7927, %v8183
    %v8215 = vadd.f32 %v7928, %v8186
    %v8216 = vadd.f32 %v7929, %v8191
    %v8217 = vadd.f32 %v7930, %v8194
    %v8218 = vadd.f32 %v7931, %v8199
    %v8219 = vld [vmem:[%s6] sm:$0x1]
    %v8221 = vlaneseq
    %v8222 = vshrl.u32 %v8221, 7
    %v8223 = vsub.s32 0, %v8222
    %v8224 = vrot.slane %v8219, %v8223
    %v8226 = vadd.f32 %v8204, %v8224
    %v8227 = vadd.f32 %v8205, %v8224
    %v8228 = vadd.f32 %v8206, %v8224
    %v8229 = vadd.f32 %v8207, %v8224
    %v8230 = vadd.f32 %v8208, %v8224
    %v8231 = vadd.f32 %v8209, %v8224
    %v8232 = vadd.f32 %v8210, %v8224
    %v8233 = vadd.f32 %v8211, %v8224
    %v8234 = vadd.f32 %v8212, %v8224
    %v8235 = vadd.f32 %v8213, %v8224
    %v8236 = vadd.f32 %v8214, %v8224
    %v8237 = vadd.f32 %v8215, %v8224
    %v8238 = vadd.f32 %v8216, %v8224
    %v8239 = vadd.f32 %v8217, %v8224
    %v8240 = vadd.f32 %v8218, %v8224
    %v8241 = vpack.c.bf16 %v8227, %v8226
    %v8242 = vpack.c.bf16 %v8229, %v8228
    %v8243 = vpack.c.bf16 %v8231, %v8230
    %v8244 = vpack.c.bf16 %v8233, %v8232
    %v8245 = vpack.c.bf16 %v8235, %v8234
    %v8246 = vpack.c.bf16 %v8237, %v8236
    %v8247 = vpack.c.bf16 %v8239, %v8238
    %v8248 = vpack.c.bf16 %v8240, %v8240
    %v8249 = vld [vmem:[%s7] sm:$0xf]
    %v8250 = vld [vmem:[%s7 + $0x4] sm:$0xf]
    %v8251 = vld [vmem:[%s7 + $0x8] sm:$0xf]
    %v8252 = vld [vmem:[%s7 + $0xc] sm:$0xf]
    %v8253 = vld [vmem:[%s7 + $0x10] sm:$0xf]
    %v8254 = vld [vmem:[%s7 + $0x14] sm:$0xf]
    %v8255 = vld [vmem:[%s7 + $0x18] sm:$0xf]
    %v8256 = vld [vmem:[%s7 + $0x1c] sm:$0xf]
    %v8257 = vld [vmem:[%s7 + $0x20] sm:$0xf]
    %v8258 = vld [vmem:[%s7 + $0x24] sm:$0xf]
    %v8259 = vld [vmem:[%s7 + $0x28] sm:$0xf]
    %v8260 = vld [vmem:[%s7 + $0x2c] sm:$0xf]
    %v8261 = vld [vmem:[%s7 + $0x30] sm:$0xf]
    %v8262 = vld [vmem:[%s7 + $0x34] sm:$0xf]
    %v8263 = vld [vmem:[%s7 + $0x38] sm:$0xf]
    %v8264 = vld [vmem:[%s7 + $0x3c] sm:$0xf]
    %v8265 = vld [vmem:[%s8] sm:$0x1]
    %v8267 = vlaneseq
    %v8268 = vshrl.u32 %v8267, 7
    %v8269 = vsub.s32 0, %v8268
    %v8270 = vrot.slane %v8265, %v8269
    %v8288 = vunpack.c.l.b16 %v8249
    %v8289 = vunpack.c.l.b16 %v8250
    %v8290 = vunpack.c.l.b16 %v8251
    %v8291 = vunpack.c.l.b16 %v8252
    %v8292 = vunpack.c.l.b16 %v8253
    %v8293 = vunpack.c.l.b16 %v8254
    %v8294 = vunpack.c.l.b16 %v8255
    %v8295 = vunpack.c.l.b16 %v8256
    %v8296 = vunpack.c.l.b16 %v8257
    %v8297 = vunpack.c.l.b16 %v8258
    %v8298 = vunpack.c.l.b16 %v8259
    %v8299 = vunpack.c.l.b16 %v8260
    %v8300 = vunpack.c.l.b16 %v8261
    %v8301 = vunpack.c.l.b16 %v8262
    %v8302 = vunpack.c.l.b16 %v8263
    %v8303 = vunpack.c.l.b16 %v8264
    %v8304 = vpack.c.b16 %v8289, %v8288
    %v8305 = vpack.c.b16 %v8291, %v8290
    %v8306 = vpack.c.b16 %v8293, %v8292
    %v8307 = vpack.c.b16 %v8295, %v8294
    %v8308 = vpack.c.b16 %v8297, %v8296
    %v8309 = vpack.c.b16 %v8299, %v8298
    %v8310 = vpack.c.b16 %v8301, %v8300
    %v8311 = vpack.c.b16 %v8303, %v8302
    %8320 = vmatprep.subr.bf16.mxu0 0
    %8321 = vmatpush1.bf16.msra.mxu0 %v8311
    %8322 = vmatprep.subr.bf16.mxu0 0
    %8323 = vmatpush1.bf16.msra.mxu0 %v8310
    %8324 = vmatprep.subr.bf16.mxu0 0
    %8325 = vmatpush1.bf16.msra.mxu0 %v8309
    %8326 = vmatprep.subr.bf16.mxu0 0
    %8327 = vmatpush1.bf16.msra.mxu0 %v8308
    %8328 = vmatprep.subr.bf16.mxu0 0
    %8329 = vmatpush1.bf16.msra.mxu0 %v8307
    %8330 = vmatprep.subr.bf16.mxu0 0
    %8331 = vmatpush1.bf16.msra.mxu0 %v8306
    %8332 = vmatprep.subr.bf16.mxu0 0
    %8333 = vmatpush1.bf16.msra.mxu0 %v8305
    %8334 = vmatprep.subr.bf16.mxu0 0
    %8335 = vmatpush1.bf16.msra.mxu0 %v8304
    %8336 = vmatprep.subr.bf16.mxu0 0
    %8337 = vmatpush2.bf16.msra.mxu0 0
    %8338 = vmatprep.subr.bf16.mxu0 0
    %8339 = vmatpush2.bf16.msra.mxu0 0
    %8340 = vmatprep.subr.bf16.mxu0 0
    %8341 = vmatpush2.bf16.msra.mxu0 0
    %8342 = vmatprep.subr.bf16.mxu0 0
    %8343 = vmatpush2.bf16.msra.mxu0 0
    %8344 = vmatprep.subr.bf16.mxu0 0
    %8345 = vmatpush2.bf16.msra.mxu0 0
    %8346 = vmatprep.subr.bf16.mxu0 0
    %8347 = vmatpush2.bf16.msra.mxu0 0
    %8348 = vmatprep.subr.bf16.mxu0 0
    %8349 = vmatpush2.bf16.msra.mxu0 0
    %8350 = vmatprep.subr.bf16.mxu0 0
    %8351 = vmatpush2.bf16.msra.mxu0 0
    %8352 = vmatprep.mubr.bf16.mxu0 0
    %8353 = vmatmul.mubr.bf16.gmra.mxu0 %v8241
    %v8354 = vpop.f32.mrf.mxu0
    %v8355 = vadd.f32 %v8270, %v8354
    %v8356 = vpop.f32.mrf.mxu0
    %v8357 = vpop.f32.mrf.mxu0
    %v8358 = vadd.f32 %v8270, %v8357
    %v8359 = vpop.f32.mrf.mxu0
    %8360 = vmatprep.mubr.bf16.mxu0 0
    %8361 = vmatmul.mubr.bf16.gmra.mxu0 %v8242
    %v8362 = vpop.f32.mrf.mxu0
    %v8363 = vadd.f32 %v8270, %v8362
    %v8364 = vpop.f32.mrf.mxu0
    %v8365 = vpop.f32.mrf.mxu0
    %v8366 = vadd.f32 %v8270, %v8365
    %v8367 = vpop.f32.mrf.mxu0
    %8368 = vmatprep.mubr.bf16.mxu0 0
    %8369 = vmatmul.mubr.bf16.gmra.mxu0 %v8243
    %v8370 = vpop.f32.mrf.mxu0
    %v8371 = vadd.f32 %v8270, %v8370
    %v8372 = vpop.f32.mrf.mxu0
    %v8373 = vpop.f32.mrf.mxu0
    %v8374 = vadd.f32 %v8270, %v8373
    %v8375 = vpop.f32.mrf.mxu0
    %8376 = vmatprep.mubr.bf16.mxu0 0
    %8377 = vmatmul.mubr.bf16.gmra.mxu0 %v8244
    %v8378 = vpop.f32.mrf.mxu0
    %v8379 = vadd.f32 %v8270, %v8378
    %v8380 = vpop.f32.mrf.mxu0
    %v8381 = vpop.f32.mrf.mxu0
    %v8382 = vadd.f32 %v8270, %v8381
    %v8383 = vpop.f32.mrf.mxu0
    %8384 = vmatprep.mubr.bf16.mxu0 0
    %8385 = vmatmul.mubr.bf16.gmra.mxu0 %v8245
    %v8386 = vpop.f32.mrf.mxu0
    %v8387 = vadd.f32 %v8270, %v8386
    %v8388 = vpop.f32.mrf.mxu0
    %v8389 = vpop.f32.mrf.mxu0
    %v8390 = vadd.f32 %v8270, %v8389
    %v8391 = vpop.f32.mrf.mxu0
    %8392 = vmatprep.mubr.bf16.mxu0 0
    %8393 = vmatmul.mubr.bf16.gmra.mxu0 %v8246
    %v8394 = vpop.f32.mrf.mxu0
    %v8395 = vadd.f32 %v8270, %v8394
    %v8396 = vpop.f32.mrf.mxu0
    %v8397 = vpop.f32.mrf.mxu0
    %v8398 = vadd.f32 %v8270, %v8397
    %v8399 = vpop.f32.mrf.mxu0
    %8400 = vmatprep.mubr.bf16.mxu0 0
    %8401 = vmatmul.mubr.bf16.gmra.mxu0 %v8247
    %v8402 = vpop.f32.mrf.mxu0
    %v8403 = vadd.f32 %v8270, %v8402
    %v8404 = vpop.f32.mrf.mxu0
    %v8405 = vpop.f32.mrf.mxu0
    %v8406 = vadd.f32 %v8270, %v8405
    %v8407 = vpop.f32.mrf.mxu0
    %8408 = vmatprep.mubr.bf16.mxu0 0
    %8409 = vmatmul.mubr.bf16.gmra.mxu0 %v8248
    %v8410 = vpop.f32.mrf.mxu0
    %v8411 = vadd.f32 %v8270, %v8410
    %v8412 = vpop.f32.mrf.mxu0
    %v8413 = vpop.f32.mrf.mxu0
    %v8414 = vpop.f32.mrf.mxu0
    %8415 = vdwg.mxu0
    %v8416 = vpack.c.bf16 %v8358, %v8355
    %v8417 = vpack.c.bf16 %v8366, %v8363
    %v8418 = vpack.c.bf16 %v8374, %v8371
    %v8419 = vpack.c.bf16 %v8382, %v8379
    %v8420 = vpack.c.bf16 %v8390, %v8387
    %v8421 = vpack.c.bf16 %v8398, %v8395
    %v8422 = vpack.c.bf16 %v8406, %v8403
    %v8423 = vpack.c.bf16 %v8411, %v8411
    %v8424 = vld [vmem:[%s9] sm:$0xf]
    %v8425 = vld [vmem:[%s9 + $0x4] sm:$0xf]
    %v8426 = vld [vmem:[%s9 + $0x8] sm:$0xf]
    %v8427 = vld [vmem:[%s9 + $0xc] sm:$0xf]
    %v8428 = vld [vmem:[%s9 + $0x10] sm:$0xf]
    %v8429 = vld [vmem:[%s9 + $0x14] sm:$0xf]
    %v8430 = vld [vmem:[%s9 + $0x18] sm:$0xf]
    %v8431 = vld [vmem:[%s9 + $0x1c] sm:$0xf]
    %v8432 = vld [vmem:[%s10] sm:$0x1]
    %v8434 = vlaneseq
    %v8435 = vshrl.u32 %v8434, 7
    %v8436 = vsub.s32 0, %v8435
    %v8437 = vrot.slane %v8432, %v8436
    %v8447 = vunpack.c.l.b16 %v8424
    %v8448 = vunpack.c.l.b16 %v8425
    %v8449 = vunpack.c.l.b16 %v8426
    %v8450 = vunpack.c.l.b16 %v8427
    %v8451 = vunpack.c.l.b16 %v8428
    %v8452 = vunpack.c.l.b16 %v8429
    %v8453 = vunpack.c.l.b16 %v8430
    %v8454 = vunpack.c.l.b16 %v8431
    %v8455 = vpack.c.b16 %v8448, %v8447
    %v8456 = vpack.c.b16 %v8450, %v8449
    %v8457 = vpack.c.b16 %v8452, %v8451
    %v8458 = vpack.c.b16 %v8454, %v8453
    %vm8463 = vcmask 523264
    %v8465 = vsel %vm8463, %v8416, 0
    %v8468 = vsel %vm8463, %v8417, 0
    %v8471 = vsel %vm8463, %v8418, 0
    %v8474 = vsel %vm8463, %v8419, 0
    %v8477 = vsel %vm8463, %v8420, 0
    %v8480 = vsel %vm8463, %v8421, 0
    %v8483 = vsel %vm8463, %v8422, 0
    %v8486 = vsel %vm8463, %v8423, 0
    %8488 = vmatprep.subr.bf16.mxu0 0
    %8489 = vmatpush1.bf16.msra.mxu0 0
    %8490 = vmatprep.subr.bf16.mxu0 0
    %8491 = vmatpush1.bf16.msra.mxu0 0
    %8492 = vmatprep.subr.bf16.mxu0 0
    %8493 = vmatpush1.bf16.msra.mxu0 0
    %8494 = vmatprep.subr.bf16.mxu0 0
    %8495 = vmatpush1.bf16.msra.mxu0 0
    %8496 = vmatprep.subr.bf16.mxu0 0
    %8497 = vmatpush1.bf16.msra.mxu0 %v8458
    %8498 = vmatprep.subr.bf16.mxu0 0
    %8499 = vmatpush1.bf16.msra.mxu0 %v8457
    %8500 = vmatprep.subr.bf16.mxu0 0
    %8501 = vmatpush1.bf16.msra.mxu0 %v8456
    %8502 = vmatprep.subr.bf16.mxu0 0
    %8503 = vmatpush1.bf16.msra.mxu0 %v8455
    %8504 = vmatprep.subr.bf16.mxu0 0
    %8505 = vmatpush2.bf16.msra.mxu0 0
    %8506 = vmatprep.subr.bf16.mxu0 0
    %8507 = vmatpush2.bf16.msra.mxu0 0
    %8508 = vmatprep.subr.bf16.mxu0 0
    %8509 = vmatpush2.bf16.msra.mxu0 0
    %8510 = vmatprep.subr.bf16.mxu0 0
    %8511 = vmatpush2.bf16.msra.mxu0 0
    %8512 = vmatprep.subr.bf16.mxu0 0
    %8513 = vmatpush2.bf16.msra.mxu0 0
    %8514 = vmatprep.subr.bf16.mxu0 0
    %8515 = vmatpush2.bf16.msra.mxu0 0
    %8516 = vmatprep.subr.bf16.mxu0 0
    %8517 = vmatpush2.bf16.msra.mxu0 0
    %8518 = vmatprep.subr.bf16.mxu0 0
    %8519 = vmatpush2.bf16.msra.mxu0 0
    %8520 = vmatprep.mubr.bf16.mxu0 0
    %8521 = vmatmul.mubr.bf16.gmra.mxu0 %v8465
    %v8522 = vpop.f32.mrf.mxu0
    %v8523 = vadd.f32 %v8437, %v8522
    %v8524 = vpop.f32.mrf.mxu0
    %v8525 = vpop.f32.mrf.mxu0
    %v8526 = vadd.f32 %v8437, %v8525
    %v8527 = vpop.f32.mrf.mxu0
    %8528 = vmatprep.mubr.bf16.mxu0 0
    %8529 = vmatmul.mubr.bf16.gmra.mxu0 %v8468
    %v8530 = vpop.f32.mrf.mxu0
    %v8531 = vadd.f32 %v8437, %v8530
    %v8532 = vpop.f32.mrf.mxu0
    %v8533 = vpop.f32.mrf.mxu0
    %v8534 = vadd.f32 %v8437, %v8533
    %v8535 = vpop.f32.mrf.mxu0
    %8536 = vmatprep.mubr.bf16.mxu0 0
    %8537 = vmatmul.mubr.bf16.gmra.mxu0 %v8471
    %v8538 = vpop.f32.mrf.mxu0
    %v8539 = vadd.f32 %v8437, %v8538
    %v8540 = vpop.f32.mrf.mxu0
    %v8541 = vpop.f32.mrf.mxu0
    %v8542 = vadd.f32 %v8437, %v8541
    %v8543 = vpop.f32.mrf.mxu0
    %8544 = vmatprep.mubr.bf16.mxu0 0
    %8545 = vmatmul.mubr.bf16.gmra.mxu0 %v8474
    %v8546 = vpop.f32.mrf.mxu0
    %v8547 = vadd.f32 %v8437, %v8546
    %v8548 = vpop.f32.mrf.mxu0
    %v8549 = vpop.f32.mrf.mxu0
    %v8550 = vadd.f32 %v8437, %v8549
    %v8551 = vpop.f32.mrf.mxu0
    %8552 = vmatprep.mubr.bf16.mxu0 0
    %8553 = vmatmul.mubr.bf16.gmra.mxu0 %v8477
    %v8554 = vpop.f32.mrf.mxu0
    %v8555 = vadd.f32 %v8437, %v8554
    %v8556 = vpop.f32.mrf.mxu0
    %v8557 = vpop.f32.mrf.mxu0
    %v8558 = vadd.f32 %v8437, %v8557
    %v8559 = vpop.f32.mrf.mxu0
    %8560 = vmatprep.mubr.bf16.mxu0 0
    %8561 = vmatmul.mubr.bf16.gmra.mxu0 %v8480
    %v8562 = vpop.f32.mrf.mxu0
    %v8563 = vadd.f32 %v8437, %v8562
    %v8564 = vpop.f32.mrf.mxu0
    %v8565 = vpop.f32.mrf.mxu0
    %v8566 = vadd.f32 %v8437, %v8565
    %v8567 = vpop.f32.mrf.mxu0
    %8568 = vmatprep.mubr.bf16.mxu0 0
    %8569 = vmatmul.mubr.bf16.gmra.mxu0 %v8483
    %v8570 = vpop.f32.mrf.mxu0
    %v8571 = vadd.f32 %v8437, %v8570
    %v8572 = vpop.f32.mrf.mxu0
    %v8573 = vpop.f32.mrf.mxu0
    %v8574 = vadd.f32 %v8437, %v8573
    %v8575 = vpop.f32.mrf.mxu0
    %8576 = vmatprep.mubr.bf16.mxu0 0
    %8577 = vmatmul.mubr.bf16.gmra.mxu0 %v8486
    %v8578 = vpop.f32.mrf.mxu0
    %v8579 = vadd.f32 %v8437, %v8578
    %v8580 = vpop.f32.mrf.mxu0
    %v8581 = vpop.f32.mrf.mxu0
    %v8582 = vpop.f32.mrf.mxu0
    %8583 = vdwg.mxu0
    %vm8584 = vcmask 1041408
    %v8585 = vsel %vm8584, %v8579, 0.0
    %8586 = vst [vmem:[%s11] sm:$0xff] %v8523
    %8587 = vst [vmem:[%s11 + $0x8] sm:$0xff] %v8526
    %8588 = vst [vmem:[%s11 + $0x10] sm:$0xff] %v8531
    %8589 = vst [vmem:[%s11 + $0x18] sm:$0xff] %v8534
    %8590 = vst [vmem:[%s11 + $0x20] sm:$0xff] %v8539
    %8591 = vst [vmem:[%s11 + $0x28] sm:$0xff] %v8542
    %8592 = vst [vmem:[%s11 + $0x30] sm:$0xff] %v8547
    %8593 = vst [vmem:[%s11 + $0x38] sm:$0xff] %v8550
    %8594 = vst [vmem:[%s11 + $0x40] sm:$0xff] %v8555
    %8595 = vst [vmem:[%s11 + $0x48] sm:$0xff] %v8558
    %8596 = vst [vmem:[%s11 + $0x50] sm:$0xff] %v8563
    %8597 = vst [vmem:[%s11 + $0x58] sm:$0xff] %v8566
    %8598 = vst [vmem:[%s11 + $0x60] sm:$0xff] %v8571
    %8599 = vst [vmem:[%s11 + $0x68] sm:$0xff] %v8574
    %8600 = vst [vmem:[%s11 + $0x70] sm:$0xff] %v8585
    %8601 = vst [vmem:[%s11 + $0x78] sm:$0xff] 0.0
    // Predicated region
    $region54: #{net_forward.1} parent=1 // pred_check
      _
    $region55: #{net_forward.1} parent=1 // pred_check_branch
      %8603 = sbr.rel (0) target = $region57
    $region56: #{net_forward.1} parent=1 // pred_region
      _
    $region57: #{net_forward.1} parent=1 // pred_fallthru
      _
    // Predicated region
    $region58: #{net_forward.1} parent=1 // pred_check
      _
    $region59: #{net_forward.1} parent=1 // pred_check_branch
      %8605 = sbr.rel (0) target = $region61
    $region60: #{net_forward.1} parent=1 // pred_region
      _
    $region61: #{net_forward.1} parent=1 // pred_fallthru
      _
    %8606 = vsyncpa [#allocation3], 1
    %8607 = vsyncpa [#allocation5], 1

</llo_original>
